<compile_context>
chip_gen: v7x
topology: tpu7x:2x2x1
jax: 0.10.0
libtpu: 0.0.40
codegen_flags: <defaults>
</compile_context>

<pallas_src>
import jax
import jax.numpy as jnp
from jax import lax
from jax.experimental import pallas as pl
from jax.experimental.pallas import tpu as pltpu


# ----------------------------------------------------------------------------
# In-kernel helper: im2col over a zero-padded (h+2, w+2, C) activation.
# Tap-major (a*3+b), channel-minor column order.
# ----------------------------------------------------------------------------
def _im2col9(x, h, w):
    c = x.shape[-1]
    cols = [x[a:a + h, b:b + w, :] for a in range(3) for b in range(3)]
    return jnp.concatenate(cols, axis=-1).reshape(h * w, 9 * c)


# ----------------------------------------------------------------------------
# The fused decoder kernel (one grid step == one image)
# ----------------------------------------------------------------------------
def _decoder_kernel(xp_ref, w1_ref, b1_ref, w3_ref, w1x1_ref,
                    wd1_ref, bd1_ref, wd2_ref, bd2_ref,
                    out_ref, pbuf_ref, ypb_ref):
    _, Hp, Wp, Cin = xp_ref.shape
    H, W = Hp - 2, Wp - 2
    CH = w1_ref.shape[-1]           # num_hiddens
    L = w3_ref.shape[0]             # num residual layers
    C4 = wd1_ref.shape[-1]          # 4 * (num_hiddens // 2)  (phase-factored)
    NOUT = wd2_ref.shape[-1]        # 16 * 3 (phase-factored final channels)

    f32, bf16 = jnp.float32, jnp.bfloat16

    # Zero the padded scratch buffers; borders are never written again and the
    # interiors are always fully overwritten before being read.
    pbuf_ref[...] = jnp.zeros_like(pbuf_ref)
    ypb_ref[...] = jnp.zeros_like(ypb_ref)

    # ---- conv1: ONE matmul, K = 9*Cin --------------------------------------
    x3 = xp_ref[...].reshape(Hp, Wp, Cin)                      # bf16
    lhs0 = _im2col9(x3, H, W)                                  # (H*W, 9*Cin)
    x_cur = jnp.dot(lhs0, w1_ref[...],
                    preferred_element_type=f32) + b1_ref[...]  # (H*W, CH) f32

    # ---- residual stack: relu -> 3x3 (K=9*CH) -> relu -> 1x1 -> skip add ---
    # (static unroll is fine for L<=4; switch to lax.fori_loop with w3_ref[l]
    #  dynamic indexing if num_residual_layers grows.)
    for l in range(L):
        pbuf_ref[1:H + 1, 1:W + 1, :] = (
            jnp.maximum(x_cur, 0.0).astype(bf16).reshape(H, W, CH))
        lhs3 = _im2col9(pbuf_ref[...], H, W)                   # (H*W, 9*CH) bf16
        h = jnp.dot(lhs3, w3_ref[l], preferred_element_type=f32)
        h = jnp.maximum(h, 0.0).astype(bf16)
        x_cur = x_cur + jnp.dot(h, w1x1_ref[l], preferred_element_type=f32)

    # ---- final stack ReLU, written (padded, bf16) straight into pbuf -------
    pbuf_ref[1:H + 1, 1:W + 1, :] = (
        jnp.maximum(x_cur, 0.0).astype(bf16).reshape(H, W, CH))

    # ---- ConvTranspose #1: all 4 output phases in ONE matmul ---------------
    lhs1 = _im2col9(pbuf_ref[...], H, W)                       # (H*W, 9*CH)
    r1 = jnp.dot(lhs1, wd1_ref[...],
                 preferred_element_type=f32) + bd1_ref[...]    # (H*W, 4*C1)
    # ReLU; keep phase-factored (channel block k = 2p+q) and pad into scratch.
    ypb_ref[1:H + 1, 1:W + 1, :] = (
        jnp.maximum(r1, 0.0).astype(bf16).reshape(H, W, C4))

    # ---- ConvTranspose #2: all 16 output phases x 3 channels in ONE matmul -
    lhs2 = _im2col9(ypb_ref[...], H, W)                        # (H*W, 36*C1)
    r2 = jnp.dot(lhs2, wd2_ref[...],
                 preferred_element_type=f32) + bd2_ref[...]    # (H*W, 48)
    out_ref[...] = r2.reshape(1, H, W, NOUT)


# ----------------------------------------------------------------------------
# Wrapper-side weight restructuring
# ----------------------------------------------------------------------------
def _conv3x3_rhs(w_hwio):
    """(3,3,Cin,Cout) HWIO -> (9*Cin, Cout), matching _im2col9 column order."""
    kh, kw, cin, cout = w_hwio.shape
    return w_hwio.reshape(kh * kw * cin, cout)


def _deconv1_rhs(t1):
    """PyTorch ConvTranspose2d weight (Cin, Cout, 4, 4) -> combined (9*Cin, 4*Cout).

    out[2m+p, 2n+q, co] = sum_{sy,sx,ci} xpad[m+p+sy, n+q+sx, ci]
                              * t1[ci, co, 3-p-2*sy, 3-q-2*sx]
    Column block k = 2p+q.  Rows are (window offset a,b in {0,1,2})*Cin + ci.
    """
    cin, cout = t1.shape[0], t1.shape[1]
    R = jnp.zeros((3, 3, cin, 2, 2, cout), t1.dtype)
    for p in range(2):
        for q in range(2):
            for sy in range(2):
                for sx in range(2):
                    a, b = p + sy, q + sx
                    R = R.at[a, b, :, p, q, :].set(
                        t1[:, :, 3 - p - 2 * sy, 3 - q - 2 * sx])
    return R.reshape(9 * cin, 4 * cout)


# t = p1 + p2 + sy  ->  (window offset into padded phase-factored y1, row phase)
_TMAP = {0: (0, 1), 1: (1, 0), 2: (1, 1), 3: (2, 0)}


def _deconv2_rhs(t2):
    """PyTorch (C1, 3, 4, 4) -> combined (9*4*C1, 16*3) acting directly on the
    padded, PHASE-FACTORED deconv1 output (channel blocks j = (2*rp+cp)*C1+co).

    Final output phase (P, Q) with P = 2*p1 + p2, Q = 2*q1 + q2; column
    e = (P*4 + Q)*3 + c.
    """
    cin, cout = t2.shape[0], t2.shape[1]
    R = jnp.zeros((3, 3, 2, 2, cin, 4, 4, cout), t2.dtype)
    for p1 in range(2):
        for p2 in range(2):
            for q1 in range(2):
                for q2 in range(2):
                    P, Q = 2 * p1 + p2, 2 * q1 + q2
                    for sy in range(2):
                        for sx in range(2):
                            a, rp = _TMAP[p1 + p2 + sy]
                            b, cp = _TMAP[q1 + q2 + sx]
                            R = R.at[a, b, rp, cp, :, P, Q, :].set(
                                t2[:, :, 3 - p2 - 2 * sy, 3 - q2 - 2 * sx])
    return R.reshape(9 * 4 * cin, 16 * cout)


# ----------------------------------------------------------------------------
# Decoder forward (Pallas path)
# ----------------------------------------------------------------------------
def decoder_forward(x_nchw, params):
    f32, bf16 = jnp.float32, jnp.bfloat16
    B, Cin, H, W = x_nchw.shape
    CH = params["w1"].shape[-1]
    Chid = params["res"][0][0].shape[-1]
    L = len(params["res"])
    C1 = params["wt1"].shape[1]          # num_hiddens // 2
    CF = params["wt2"].shape[1]          # 3
    C4, NOUT = 4 * C1, 16 * CF

    # NHWC, zero-pad by 1 once (tiny input tensor), cast once to bf16.
    x = jnp.transpose(x_nchw, (0, 2, 3, 1))
    xp = jnp.pad(x, ((0, 0), (1, 1), (1, 1), (0, 0))).astype(bf16)

    w1 = _conv3x3_rhs(params["w1"]).astype(bf16)                      # (9Cin, CH)
    b1 = params["b1"].reshape(1, CH).astype(f32)
    w3 = jnp.stack([_conv3x3_rhs(a) for (a, _) in params["res"]], 0).astype(bf16)
    w1x1 = jnp.stack([b.reshape(Chid, CH) for (_, b) in params["res"]],
                     0).astype(bf16)
    wd1 = _deconv1_rhs(params["wt1"]).astype(bf16)                    # (9CH, 4C1)
    bd1 = jnp.tile(params["bt1"], 4).reshape(1, C4).astype(f32)
    wd2 = _deconv2_rhs(params["wt2"]).astype(bf16)                    # (36C1, 48)
    bd2 = jnp.tile(params["bt2"], 16).reshape(1, NOUT).astype(f32)

    flops = 2 * B * H * W * (9 * Cin * CH
                             + L * (9 * CH * Chid + Chid * CH)
                             + 9 * CH * C4 + 36 * C1 * NOUT)
    bytes_accessed = (xp.size * 2 + B * H * W * NOUT * 4
                      + (w1.size + w3.size + w1x1.size + wd1.size + wd2.size) * 2
                      + (b1.size + bd1.size + bd2.size) * 4)

    out = pl.pallas_call(
        _decoder_kernel,
        grid=(B,),
        in_specs=[
            pl.BlockSpec((1, H + 2, W + 2, Cin), lambda b: (b, 0, 0, 0)),
            pl.BlockSpec(w1.shape, lambda b: (0, 0)),
            pl.BlockSpec(b1.shape, lambda b: (0, 0)),
            pl.BlockSpec(w3.shape, lambda b: (0, 0, 0)),
            pl.BlockSpec(w1x1.shape, lambda b: (0, 0, 0)),
            pl.BlockSpec(wd1.shape, lambda b: (0, 0)),
            pl.BlockSpec(bd1.shape, lambda b: (0, 0)),
            pl.BlockSpec(wd2.shape, lambda b: (0, 0)),
            pl.BlockSpec(bd2.shape, lambda b: (0, 0)),
        ],
        out_specs=pl.BlockSpec((1, H, W, NOUT), lambda b: (b, 0, 0, 0)),
        out_shape=jax.ShapeDtypeStruct((B, H, W, NOUT), f32),
        scratch_shapes=[
            pltpu.VMEM((H + 2, W + 2, CH), bf16),   # padded head / residual act
            pltpu.VMEM((H + 2, W + 2, C4), bf16),   # padded phase-factored y1
        ],
        compiler_params=pltpu.CompilerParams(
            dimension_semantics=("parallel",),
            vmem_limit_bytes=32 * 1024 * 1024),
        cost_estimate=pl.CostEstimate(flops=flops, transcendentals=0,
                                      bytes_accessed=bytes_accessed),
    )(xp, w1, b1, w3, w1x1, wd1, bd1, wd2, bd2)

    # Phase-factored (B, H, W, 4, 4, 3) -> NCHW: one fused transpose (replaces
    # the NHWC->NCHW transpose that would be needed anyway).
    out = out.reshape(B, H, W, 4, 4, CF)
    out = jnp.transpose(out, (0, 5, 1, 3, 2, 4)).reshape(B, CF, 4 * H, 4 * W)
    return out


# ----------------------------------------------------------------------------
# Pure-JAX (f32, XLA convs) reference for the correctness check
# ----------------------------------------------------------------------------
def decoder_reference(x_nchw, params):
    dn = ("NHWC", "HWIO", "NHWC")
    x = jnp.transpose(x_nchw, (0, 2, 3, 1))
    x = lax.conv_general_dilated(x, params["w1"], (1, 1), [(1, 1), (1, 1)],
                                 dimension_numbers=dn) + params["b1"]
    for w3, w1x1 in params["res"]:
        h = jax.nn.relu(x)
        h = lax.conv_general_dilated(h, w3, (1, 1), [(1, 1), (1, 1)],
                                     dimension_numbers=dn)
        h = jax.nn.relu(h)
        h = lax.conv_general_dilated(h, w1x1, (1, 1), [(0, 0), (0, 0)],
                                     dimension_numbers=dn)
        x = x + h
    x = jax.nn.relu(x)
    wt1c = jnp.flip(jnp.transpose(params["wt1"], (2, 3, 0, 1)), axis=(0, 1))
    x = lax.conv_general_dilated(x, wt1c, (1, 1), [(2, 2), (2, 2)],
                                 lhs_dilation=(2, 2),
                                 dimension_numbers=dn) + params["bt1"]
    x = jax.nn.relu(x)
    wt2c = jnp.flip(jnp.transpose(params["wt2"], (2, 3, 0, 1)), axis=(0, 1))
    x = lax.conv_general_dilated(x, wt2c, (1, 1), [(2, 2), (2, 2)],
                                 lhs_dilation=(2, 2),
                                 dimension_numbers=dn) + params["bt2"]
    return jnp.transpose(x, (0, 3, 1, 2))


# ----------------------------------------------------------------------------
# Deterministic parameter construction
# ----------------------------------------------------------------------------
def make_params(key, in_channels, num_hiddens, num_residual_layers,
                num_residual_hiddens):
    n_keys = 6 + 2 * num_residual_layers
    keys = list(jax.random.split(key, n_keys))
    scale = 0.1

    def nrm(k, shape):
        return scale * jax.random.normal(k, shape, dtype=jnp.float32)

    params = {}
    params["w1"] = nrm(keys.pop(0), (3, 3, in_channels, num_hiddens))
    params["b1"] = nrm(keys.pop(0), (num_hiddens,))
    res = []
    for _ in range(num_residual_layers):
        w3 = nrm(keys.pop(0), (3, 3, num_hiddens, num_residual_hiddens))
        w1x1 = nrm(keys.pop(0), (1, 1, num_residual_hiddens, num_hiddens))
        res.append((w3, w1x1))
    params["res"] = res
    params["wt1"] = nrm(keys.pop(0), (num_hiddens, num_hiddens // 2, 4, 4))
    params["bt1"] = nrm(keys.pop(0), (num_hiddens // 2,))
    params["wt2"] = nrm(keys.pop(0), (num_hiddens // 2, 3, 4, 4))
    params["bt2"] = nrm(keys.pop(0), (3,))
    return params


if __name__ == "__main__":
    in_channels = 4
    num_hiddens = 32
    num_residual_layers = 2
    num_residual_hiddens = 8
    B, H, W = 2, 16, 16

    key = jax.random.PRNGKey(0)
    k_x, k_p = jax.random.split(key)
    x = jax.random.normal(k_x, (B, in_channels, H, W), dtype=jnp.float32)
    params = make_params(k_p, in_channels, num_hiddens, num_residual_layers,
                         num_residual_hiddens)

    fwd = jax.jit(decoder_forward)
    out = jax.block_until_ready(fwd(x, params))
    assert out.shape == (B, 3, 4 * H, 4 * W), out.shape

    ref = jax.block_until_ready(jax.jit(decoder_reference)(x, params))
    scale_ref = float(jnp.max(jnp.abs(ref)))
    err = float(jnp.max(jnp.abs(out - ref)))
    # Tightened vs. the previous 6%: bf16 MXU operands with f32 accumulation
    # across 6 matmul layers compound to ~1-2% relative error, so 3% of the
    # reference scale is a bug-detecting but numerically safe bound.
    assert err < 0.03 * scale_ref + 2e-3, (
        f"max abs error {err} vs reference scale {scale_ref}")

    print("KERNEL_OK")
</pallas_src>

<mosaic_0001>
module attributes {stable_mosaic.version = 11 : i64} {
  func.func @_decoder_kernel(%arg0: i32, %arg1: memref<1x18x18x4xbf16, #tpu.memory_space<vmem>>, %arg2: memref<36x32xbf16, #tpu.memory_space<vmem>>, %arg3: memref<1x32xf32, #tpu.memory_space<vmem>>, %arg4: memref<2x288x8xbf16, #tpu.memory_space<vmem>>, %arg5: memref<2x8x32xbf16, #tpu.memory_space<vmem>>, %arg6: memref<288x64xbf16, #tpu.memory_space<vmem>>, %arg7: memref<1x64xf32, #tpu.memory_space<vmem>>, %arg8: memref<576x48xbf16, #tpu.memory_space<vmem>>, %arg9: memref<1x48xf32, #tpu.memory_space<vmem>>, %arg10: memref<1x16x16x48xf32, #tpu.memory_space<vmem>>, %arg11: memref<18x18x32xbf16, #tpu.memory_space<vmem>>, %arg12: memref<18x18x64xbf16, #tpu.memory_space<vmem>>) attributes {dimension_semantics = [#tpu.dimension_semantics<parallel>], iteration_bounds = array<i64: 2>, scalar_prefetch = 0 : i64, scratch_operands = 2 : i64, tpu.core_type = #tpu.core_type<tc>, window_params = [{transform_indices = @transform_0, window_bounds = array<i64: 1, 18, 18, 4>}, {pipeline_mode = #tpu.pipeline_mode<synchronous>, transform_indices = @transform_1, window_bounds = array<i64: 36, 32>}, {pipeline_mode = #tpu.pipeline_mode<synchronous>, transform_indices = @transform_2, window_bounds = array<i64: 1, 32>}, {pipeline_mode = #tpu.pipeline_mode<synchronous>, transform_indices = @transform_3, window_bounds = array<i64: 2, 288, 8>}, {pipeline_mode = #tpu.pipeline_mode<synchronous>, transform_indices = @transform_4, window_bounds = array<i64: 2, 8, 32>}, {pipeline_mode = #tpu.pipeline_mode<synchronous>, transform_indices = @transform_5, window_bounds = array<i64: 288, 64>}, {pipeline_mode = #tpu.pipeline_mode<synchronous>, transform_indices = @transform_6, window_bounds = array<i64: 1, 64>}, {pipeline_mode = #tpu.pipeline_mode<synchronous>, transform_indices = @transform_7, window_bounds = array<i64: 576, 48>}, {pipeline_mode = #tpu.pipeline_mode<synchronous>, transform_indices = @transform_8, window_bounds = array<i64: 1, 48>}, {transform_indices = @transform_9, window_bounds = array<i64: 1, 16, 16, 48>}]} {
    %cst = arith.constant 0.000000e+00 : bf16
    %0 = vector.broadcast %cst : bf16 to vector<18x18x32xbf16>
    %c0 = arith.constant 0 : index
    %c0_0 = arith.constant 0 : index
    %c0_1 = arith.constant 0 : index
    %1 = vector.load %arg11[%c0, %c0_0, %c0_1] : memref<18x18x32xbf16, #tpu.memory_space<vmem>>, vector<18x18x32xbf16>
    tpu.vector_store %arg11[%c0, %c0_0, %c0_1], %0 {strides = array<i32>} : memref<18x18x32xbf16, #tpu.memory_space<vmem>>, vector<18x18x32xbf16>,
    %cst_2 = arith.constant 0.000000e+00 : bf16
    %2 = vector.broadcast %cst_2 : bf16 to vector<18x18x64xbf16>
    %c0_3 = arith.constant 0 : index
    %c0_4 = arith.constant 0 : index
    %c0_5 = arith.constant 0 : index
    %3 = vector.load %arg12[%c0_3, %c0_4, %c0_5] : memref<18x18x64xbf16, #tpu.memory_space<vmem>>, vector<18x18x64xbf16>
    tpu.vector_store %arg12[%c0_3, %c0_4, %c0_5], %2 {strides = array<i32>} : memref<18x18x64xbf16, #tpu.memory_space<vmem>>, vector<18x18x64xbf16>,
    %c0_6 = arith.constant 0 : index
    %c0_7 = arith.constant 0 : index
    %c0_8 = arith.constant 0 : index
    %c0_9 = arith.constant 0 : index
    %4 = vector.load %arg1[%c0_6, %c0_7, %c0_8, %c0_9] : memref<1x18x18x4xbf16, #tpu.memory_space<vmem>>, vector<1x18x18x4xbf16>
    %5 = vector.shape_cast %4 : vector<1x18x18x4xbf16> to vector<18x18x4xbf16>
    %6 = vector.extract_strided_slice %5 {offsets = [0, 0, 0], sizes = [16, 16, 4], strides = [1, 1, 1]} : vector<18x18x4xbf16> to vector<16x16x4xbf16>
    %7 = vector.extract_strided_slice %5 {offsets = [0, 1, 0], sizes = [16, 16, 4], strides = [1, 1, 1]} : vector<18x18x4xbf16> to vector<16x16x4xbf16>
    %8 = vector.extract_strided_slice %5 {offsets = [0, 2, 0], sizes = [16, 16, 4], strides = [1, 1, 1]} : vector<18x18x4xbf16> to vector<16x16x4xbf16>
    %9 = vector.extract_strided_slice %5 {offsets = [1, 0, 0], sizes = [16, 16, 4], strides = [1, 1, 1]} : vector<18x18x4xbf16> to vector<16x16x4xbf16>
    %10 = vector.extract_strided_slice %5 {offsets = [1, 1, 0], sizes = [16, 16, 4], strides = [1, 1, 1]} : vector<18x18x4xbf16> to vector<16x16x4xbf16>
    %11 = vector.extract_strided_slice %5 {offsets = [1, 2, 0], sizes = [16, 16, 4], strides = [1, 1, 1]} : vector<18x18x4xbf16> to vector<16x16x4xbf16>
    %12 = vector.extract_strided_slice %5 {offsets = [2, 0, 0], sizes = [16, 16, 4], strides = [1, 1, 1]} : vector<18x18x4xbf16> to vector<16x16x4xbf16>
    %13 = vector.extract_strided_slice %5 {offsets = [2, 1, 0], sizes = [16, 16, 4], strides = [1, 1, 1]} : vector<18x18x4xbf16> to vector<16x16x4xbf16>
    %14 = vector.extract_strided_slice %5 {offsets = [2, 2, 0], sizes = [16, 16, 4], strides = [1, 1, 1]} : vector<18x18x4xbf16> to vector<16x16x4xbf16>
    %15 = tpu.concatenate %6, %7, %8, %9, %10, %11, %12, %13, %14 in 2 : vector<16x16x4xbf16>, vector<16x16x4xbf16>, vector<16x16x4xbf16>, vector<16x16x4xbf16>, vector<16x16x4xbf16>, vector<16x16x4xbf16>, vector<16x16x4xbf16>, vector<16x16x4xbf16>, vector<16x16x4xbf16> -> vector<16x16x36xbf16>
    %16 = vector.shape_cast %15 : vector<16x16x36xbf16> to vector<256x36xbf16>
    %c0_10 = arith.constant 0 : index
    %c0_11 = arith.constant 0 : index
    %17 = vector.load %arg2[%c0_10, %c0_11] : memref<36x32xbf16, #tpu.memory_space<vmem>>, vector<36x32xbf16>
    %cst_12 = arith.constant dense<0.000000e+00> : vector<256x32xf32>
    %18 = tpu.matmul %16, %17, %cst_12 {dimension_numbers = #tpu.dot_dimension_numbers<[1], [0], [0], [1], [0, 0, 1, 1], [], []>} : vector<256x36xbf16>, vector<36x32xbf16>, vector<256x32xf32> -> vector<256x32xf32>
    %c0_13 = arith.constant 0 : index
    %c0_14 = arith.constant 0 : index
    %19 = vector.load %arg3[%c0_13, %c0_14] : memref<1x32xf32, #tpu.memory_space<vmem>>, vector<1x32xf32>
    %20 = vector.broadcast %19 : vector<1x32xf32> to vector<256x32xf32>
    %21 = arith.addf %18, %20 : vector<256x32xf32>
    %cst_15 = arith.constant 0.000000e+00 : f32
    %22 = vector.broadcast %cst_15 : f32 to vector<256x32xf32>
    %23 = arith.maximumf %21, %22 : vector<256x32xf32>
    %24 = arith.truncf %23 : vector<256x32xf32> to vector<256x32xbf16>
    %25 = vector.shape_cast %24 : vector<256x32xbf16> to vector<16x16x32xbf16>
    %c1 = arith.constant 1 : index
    %c1_16 = arith.constant 1 : index
    %c0_17 = arith.constant 0 : index
    %26 = vector.load %arg11[%c1, %c1_16, %c0_17] : memref<18x18x32xbf16, #tpu.memory_space<vmem>>, vector<16x16x32xbf16>
    tpu.vector_store %arg11[%c1, %c1_16, %c0_17], %25 {strides = array<i32>} : memref<18x18x32xbf16, #tpu.memory_space<vmem>>, vector<16x16x32xbf16>,
    %c0_18 = arith.constant 0 : index
    %c0_19 = arith.constant 0 : index
    %c0_20 = arith.constant 0 : index
    %27 = vector.load %arg11[%c0_18, %c0_19, %c0_20] : memref<18x18x32xbf16, #tpu.memory_space<vmem>>, vector<18x18x32xbf16>
    %28 = vector.extract_strided_slice %27 {offsets = [0, 0, 0], sizes = [16, 16, 32], strides = [1, 1, 1]} : vector<18x18x32xbf16> to vector<16x16x32xbf16>
    %29 = vector.extract_strided_slice %27 {offsets = [0, 1, 0], sizes = [16, 16, 32], strides = [1, 1, 1]} : vector<18x18x32xbf16> to vector<16x16x32xbf16>
    %30 = vector.extract_strided_slice %27 {offsets = [0, 2, 0], sizes = [16, 16, 32], strides = [1, 1, 1]} : vector<18x18x32xbf16> to vector<16x16x32xbf16>
    %31 = vector.extract_strided_slice %27 {offsets = [1, 0, 0], sizes = [16, 16, 32], strides = [1, 1, 1]} : vector<18x18x32xbf16> to vector<16x16x32xbf16>
    %32 = vector.extract_strided_slice %27 {offsets = [1, 1, 0], sizes = [16, 16, 32], strides = [1, 1, 1]} : vector<18x18x32xbf16> to vector<16x16x32xbf16>
    %33 = vector.extract_strided_slice %27 {offsets = [1, 2, 0], sizes = [16, 16, 32], strides = [1, 1, 1]} : vector<18x18x32xbf16> to vector<16x16x32xbf16>
    %34 = vector.extract_strided_slice %27 {offsets = [2, 0, 0], sizes = [16, 16, 32], strides = [1, 1, 1]} : vector<18x18x32xbf16> to vector<16x16x32xbf16>
    %35 = vector.extract_strided_slice %27 {offsets = [2, 1, 0], sizes = [16, 16, 32], strides = [1, 1, 1]} : vector<18x18x32xbf16> to vector<16x16x32xbf16>
    %36 = vector.extract_strided_slice %27 {offsets = [2, 2, 0], sizes = [16, 16, 32], strides = [1, 1, 1]} : vector<18x18x32xbf16> to vector<16x16x32xbf16>
    %37 = tpu.concatenate %28, %29, %30, %31, %32, %33, %34, %35, %36 in 2 : vector<16x16x32xbf16>, vector<16x16x32xbf16>, vector<16x16x32xbf16>, vector<16x16x32xbf16>, vector<16x16x32xbf16>, vector<16x16x32xbf16>, vector<16x16x32xbf16>, vector<16x16x32xbf16>, vector<16x16x32xbf16> -> vector<16x16x288xbf16>
    %38 = vector.shape_cast %37 : vector<16x16x288xbf16> to vector<256x288xbf16>
    %c0_21 = arith.constant 0 : index
    %c0_22 = arith.constant 0 : index
    %c0_23 = arith.constant 0 : index
    %39 = vector.load %arg4[%c0_21, %c0_22, %c0_23] : memref<2x288x8xbf16, #tpu.memory_space<vmem>>, vector<1x288x8xbf16>
    %40 = vector.shape_cast %39 : vector<1x288x8xbf16> to vector<288x8xbf16>
    %cst_24 = arith.constant dense<0.000000e+00> : vector<256x8xf32>
    %41 = tpu.matmul %38, %40, %cst_24 {dimension_numbers = #tpu.dot_dimension_numbers<[1], [0], [0], [1], [0, 0, 1, 1], [], []>} : vector<256x288xbf16>, vector<288x8xbf16>, vector<256x8xf32> -> vector<256x8xf32>
    %cst_25 = arith.constant 0.000000e+00 : f32
    %42 = vector.broadcast %cst_25 : f32 to vector<256x8xf32>
    %43 = arith.maximumf %41, %42 : vector<256x8xf32>
    %44 = arith.truncf %43 : vector<256x8xf32> to vector<256x8xbf16>
    %c0_26 = arith.constant 0 : index
    %c0_27 = arith.constant 0 : index
    %c0_28 = arith.constant 0 : index
    %45 = vector.load %arg5[%c0_26, %c0_27, %c0_28] : memref<2x8x32xbf16, #tpu.memory_space<vmem>>, vector<1x8x32xbf16>
    %46 = vector.shape_cast %45 : vector<1x8x32xbf16> to vector<8x32xbf16>
    %cst_29 = arith.constant dense<0.000000e+00> : vector<256x32xf32>
    %47 = tpu.matmul %44, %46, %cst_29 {dimension_numbers = #tpu.dot_dimension_numbers<[1], [0], [0], [1], [0, 0, 1, 1], [], []>} : vector<256x8xbf16>, vector<8x32xbf16>, vector<256x32xf32> -> vector<256x32xf32>
    %48 = arith.addf %21, %47 : vector<256x32xf32>
    %cst_30 = arith.constant 0.000000e+00 : f32
    %49 = vector.broadcast %cst_30 : f32 to vector<256x32xf32>
    %50 = arith.maximumf %48, %49 : vector<256x32xf32>
    %51 = arith.truncf %50 : vector<256x32xf32> to vector<256x32xbf16>
    %52 = vector.shape_cast %51 : vector<256x32xbf16> to vector<16x16x32xbf16>
    %c1_31 = arith.constant 1 : index
    %c1_32 = arith.constant 1 : index
    %c0_33 = arith.constant 0 : index
    %53 = vector.load %arg11[%c1_31, %c1_32, %c0_33] : memref<18x18x32xbf16, #tpu.memory_space<vmem>>, vector<16x16x32xbf16>
    tpu.vector_store %arg11[%c1_31, %c1_32, %c0_33], %52 {strides = array<i32>} : memref<18x18x32xbf16, #tpu.memory_space<vmem>>, vector<16x16x32xbf16>,
    %c0_34 = arith.constant 0 : index
    %c0_35 = arith.constant 0 : index
    %c0_36 = arith.constant 0 : index
    %54 = vector.load %arg11[%c0_34, %c0_35, %c0_36] : memref<18x18x32xbf16, #tpu.memory_space<vmem>>, vector<18x18x32xbf16>
    %55 = vector.extract_strided_slice %54 {offsets = [0, 0, 0], sizes = [16, 16, 32], strides = [1, 1, 1]} : vector<18x18x32xbf16> to vector<16x16x32xbf16>
    %56 = vector.extract_strided_slice %54 {offsets = [0, 1, 0], sizes = [16, 16, 32], strides = [1, 1, 1]} : vector<18x18x32xbf16> to vector<16x16x32xbf16>
    %57 = vector.extract_strided_slice %54 {offsets = [0, 2, 0], sizes = [16, 16, 32], strides = [1, 1, 1]} : vector<18x18x32xbf16> to vector<16x16x32xbf16>
    %58 = vector.extract_strided_slice %54 {offsets = [1, 0, 0], sizes = [16, 16, 32], strides = [1, 1, 1]} : vector<18x18x32xbf16> to vector<16x16x32xbf16>
    %59 = vector.extract_strided_slice %54 {offsets = [1, 1, 0], sizes = [16, 16, 32], strides = [1, 1, 1]} : vector<18x18x32xbf16> to vector<16x16x32xbf16>
    %60 = vector.extract_strided_slice %54 {offsets = [1, 2, 0], sizes = [16, 16, 32], strides = [1, 1, 1]} : vector<18x18x32xbf16> to vector<16x16x32xbf16>
    %61 = vector.extract_strided_slice %54 {offsets = [2, 0, 0], sizes = [16, 16, 32], strides = [1, 1, 1]} : vector<18x18x32xbf16> to vector<16x16x32xbf16>
    %62 = vector.extract_strided_slice %54 {offsets = [2, 1, 0], sizes = [16, 16, 32], strides = [1, 1, 1]} : vector<18x18x32xbf16> to vector<16x16x32xbf16>
    %63 = vector.extract_strided_slice %54 {offsets = [2, 2, 0], sizes = [16, 16, 32], strides = [1, 1, 1]} : vector<18x18x32xbf16> to vector<16x16x32xbf16>
    %64 = tpu.concatenate %55, %56, %57, %58, %59, %60, %61, %62, %63 in 2 : vector<16x16x32xbf16>, vector<16x16x32xbf16>, vector<16x16x32xbf16>, vector<16x16x32xbf16>, vector<16x16x32xbf16>, vector<16x16x32xbf16>, vector<16x16x32xbf16>, vector<16x16x32xbf16>, vector<16x16x32xbf16> -> vector<16x16x288xbf16>
    %65 = vector.shape_cast %64 : vector<16x16x288xbf16> to vector<256x288xbf16>
    %c1_37 = arith.constant 1 : index
    %c0_38 = arith.constant 0 : index
    %c0_39 = arith.constant 0 : index
    %66 = vector.load %arg4[%c1_37, %c0_38, %c0_39] : memref<2x288x8xbf16, #tpu.memory_space<vmem>>, vector<1x288x8xbf16>
    %67 = vector.shape_cast %66 : vector<1x288x8xbf16> to vector<288x8xbf16>
    %cst_40 = arith.constant dense<0.000000e+00> : vector<256x8xf32>
    %68 = tpu.matmul %65, %67, %cst_40 {dimension_numbers = #tpu.dot_dimension_numbers<[1], [0], [0], [1], [0, 0, 1, 1], [], []>} : vector<256x288xbf16>, vector<288x8xbf16>, vector<256x8xf32> -> vector<256x8xf32>
    %cst_41 = arith.constant 0.000000e+00 : f32
    %69 = vector.broadcast %cst_41 : f32 to vector<256x8xf32>
    %70 = arith.maximumf %68, %69 : vector<256x8xf32>
    %71 = arith.truncf %70 : vector<256x8xf32> to vector<256x8xbf16>
    %c1_42 = arith.constant 1 : index
    %c0_43 = arith.constant 0 : index
    %c0_44 = arith.constant 0 : index
    %72 = vector.load %arg5[%c1_42, %c0_43, %c0_44] : memref<2x8x32xbf16, #tpu.memory_space<vmem>>, vector<1x8x32xbf16>
    %73 = vector.shape_cast %72 : vector<1x8x32xbf16> to vector<8x32xbf16>
    %cst_45 = arith.constant dense<0.000000e+00> : vector<256x32xf32>
    %74 = tpu.matmul %71, %73, %cst_45 {dimension_numbers = #tpu.dot_dimension_numbers<[1], [0], [0], [1], [0, 0, 1, 1], [], []>} : vector<256x8xbf16>, vector<8x32xbf16>, vector<256x32xf32> -> vector<256x32xf32>
    %75 = arith.addf %48, %74 : vector<256x32xf32>
    %cst_46 = arith.constant 0.000000e+00 : f32
    %76 = vector.broadcast %cst_46 : f32 to vector<256x32xf32>
    %77 = arith.maximumf %75, %76 : vector<256x32xf32>
    %78 = arith.truncf %77 : vector<256x32xf32> to vector<256x32xbf16>
    %79 = vector.shape_cast %78 : vector<256x32xbf16> to vector<16x16x32xbf16>
    %c1_47 = arith.constant 1 : index
    %c1_48 = arith.constant 1 : index
    %c0_49 = arith.constant 0 : index
    %80 = vector.load %arg11[%c1_47, %c1_48, %c0_49] : memref<18x18x32xbf16, #tpu.memory_space<vmem>>, vector<16x16x32xbf16>
    tpu.vector_store %arg11[%c1_47, %c1_48, %c0_49], %79 {strides = array<i32>} : memref<18x18x32xbf16, #tpu.memory_space<vmem>>, vector<16x16x32xbf16>,
    %c0_50 = arith.constant 0 : index
    %c0_51 = arith.constant 0 : index
    %c0_52 = arith.constant 0 : index
    %81 = vector.load %arg11[%c0_50, %c0_51, %c0_52] : memref<18x18x32xbf16, #tpu.memory_space<vmem>>, vector<18x18x32xbf16>
    %82 = vector.extract_strided_slice %81 {offsets = [0, 0, 0], sizes = [16, 16, 32], strides = [1, 1, 1]} : vector<18x18x32xbf16> to vector<16x16x32xbf16>
    %83 = vector.extract_strided_slice %81 {offsets = [0, 1, 0], sizes = [16, 16, 32], strides = [1, 1, 1]} : vector<18x18x32xbf16> to vector<16x16x32xbf16>
    %84 = vector.extract_strided_slice %81 {offsets = [0, 2, 0], sizes = [16, 16, 32], strides = [1, 1, 1]} : vector<18x18x32xbf16> to vector<16x16x32xbf16>
    %85 = vector.extract_strided_slice %81 {offsets = [1, 0, 0], sizes = [16, 16, 32], strides = [1, 1, 1]} : vector<18x18x32xbf16> to vector<16x16x32xbf16>
    %86 = vector.extract_strided_slice %81 {offsets = [1, 1, 0], sizes = [16, 16, 32], strides = [1, 1, 1]} : vector<18x18x32xbf16> to vector<16x16x32xbf16>
    %87 = vector.extract_strided_slice %81 {offsets = [1, 2, 0], sizes = [16, 16, 32], strides = [1, 1, 1]} : vector<18x18x32xbf16> to vector<16x16x32xbf16>
    %88 = vector.extract_strided_slice %81 {offsets = [2, 0, 0], sizes = [16, 16, 32], strides = [1, 1, 1]} : vector<18x18x32xbf16> to vector<16x16x32xbf16>
    %89 = vector.extract_strided_slice %81 {offsets = [2, 1, 0], sizes = [16, 16, 32], strides = [1, 1, 1]} : vector<18x18x32xbf16> to vector<16x16x32xbf16>
    %90 = vector.extract_strided_slice %81 {offsets = [2, 2, 0], sizes = [16, 16, 32], strides = [1, 1, 1]} : vector<18x18x32xbf16> to vector<16x16x32xbf16>
    %91 = tpu.concatenate %82, %83, %84, %85, %86, %87, %88, %89, %90 in 2 : vector<16x16x32xbf16>, vector<16x16x32xbf16>, vector<16x16x32xbf16>, vector<16x16x32xbf16>, vector<16x16x32xbf16>, vector<16x16x32xbf16>, vector<16x16x32xbf16>, vector<16x16x32xbf16>, vector<16x16x32xbf16> -> vector<16x16x288xbf16>
    %92 = vector.shape_cast %91 : vector<16x16x288xbf16> to vector<256x288xbf16>
    %c0_53 = arith.constant 0 : index
    %c0_54 = arith.constant 0 : index
    %93 = vector.load %arg6[%c0_53, %c0_54] : memref<288x64xbf16, #tpu.memory_space<vmem>>, vector<288x64xbf16>
    %cst_55 = arith.constant dense<0.000000e+00> : vector<256x64xf32>
    %94 = tpu.matmul %92, %93, %cst_55 {dimension_numbers = #tpu.dot_dimension_numbers<[1], [0], [0], [1], [0, 0, 1, 1], [], []>} : vector<256x288xbf16>, vector<288x64xbf16>, vector<256x64xf32> -> vector<256x64xf32>
    %c0_56 = arith.constant 0 : index
    %c0_57 = arith.constant 0 : index
    %95 = vector.load %arg7[%c0_56, %c0_57] : memref<1x64xf32, #tpu.memory_space<vmem>>, vector<1x64xf32>
    %96 = vector.broadcast %95 : vector<1x64xf32> to vector<256x64xf32>
    %97 = arith.addf %94, %96 : vector<256x64xf32>
    %cst_58 = arith.constant 0.000000e+00 : f32
    %98 = vector.broadcast %cst_58 : f32 to vector<256x64xf32>
    %99 = arith.maximumf %97, %98 : vector<256x64xf32>
    %100 = arith.truncf %99 : vector<256x64xf32> to vector<256x64xbf16>
    %101 = vector.shape_cast %100 : vector<256x64xbf16> to vector<16x16x64xbf16>
    %c1_59 = arith.constant 1 : index
    %c1_60 = arith.constant 1 : index
    %c0_61 = arith.constant 0 : index
    %102 = vector.load %arg12[%c1_59, %c1_60, %c0_61] : memref<18x18x64xbf16, #tpu.memory_space<vmem>>, vector<16x16x64xbf16>
    tpu.vector_store %arg12[%c1_59, %c1_60, %c0_61], %101 {strides = array<i32>} : memref<18x18x64xbf16, #tpu.memory_space<vmem>>, vector<16x16x64xbf16>,
    %c0_62 = arith.constant 0 : index
    %c0_63 = arith.constant 0 : index
    %c0_64 = arith.constant 0 : index
    %103 = vector.load %arg12[%c0_62, %c0_63, %c0_64] : memref<18x18x64xbf16, #tpu.memory_space<vmem>>, vector<18x18x64xbf16>
    %104 = vector.extract_strided_slice %103 {offsets = [0, 0, 0], sizes = [16, 16, 64], strides = [1, 1, 1]} : vector<18x18x64xbf16> to vector<16x16x64xbf16>
    %105 = vector.extract_strided_slice %103 {offsets = [0, 1, 0], sizes = [16, 16, 64], strides = [1, 1, 1]} : vector<18x18x64xbf16> to vector<16x16x64xbf16>
    %106 = vector.extract_strided_slice %103 {offsets = [0, 2, 0], sizes = [16, 16, 64], strides = [1, 1, 1]} : vector<18x18x64xbf16> to vector<16x16x64xbf16>
    %107 = vector.extract_strided_slice %103 {offsets = [1, 0, 0], sizes = [16, 16, 64], strides = [1, 1, 1]} : vector<18x18x64xbf16> to vector<16x16x64xbf16>
    %108 = vector.extract_strided_slice %103 {offsets = [1, 1, 0], sizes = [16, 16, 64], strides = [1, 1, 1]} : vector<18x18x64xbf16> to vector<16x16x64xbf16>
    %109 = vector.extract_strided_slice %103 {offsets = [1, 2, 0], sizes = [16, 16, 64], strides = [1, 1, 1]} : vector<18x18x64xbf16> to vector<16x16x64xbf16>
    %110 = vector.extract_strided_slice %103 {offsets = [2, 0, 0], sizes = [16, 16, 64], strides = [1, 1, 1]} : vector<18x18x64xbf16> to vector<16x16x64xbf16>
    %111 = vector.extract_strided_slice %103 {offsets = [2, 1, 0], sizes = [16, 16, 64], strides = [1, 1, 1]} : vector<18x18x64xbf16> to vector<16x16x64xbf16>
    %112 = vector.extract_strided_slice %103 {offsets = [2, 2, 0], sizes = [16, 16, 64], strides = [1, 1, 1]} : vector<18x18x64xbf16> to vector<16x16x64xbf16>
    %113 = tpu.concatenate %104, %105, %106, %107, %108, %109, %110, %111, %112 in 2 : vector<16x16x64xbf16>, vector<16x16x64xbf16>, vector<16x16x64xbf16>, vector<16x16x64xbf16>, vector<16x16x64xbf16>, vector<16x16x64xbf16>, vector<16x16x64xbf16>, vector<16x16x64xbf16>, vector<16x16x64xbf16> -> vector<16x16x576xbf16>
    %114 = vector.shape_cast %113 : vector<16x16x576xbf16> to vector<256x576xbf16>
    %c0_65 = arith.constant 0 : index
    %c0_66 = arith.constant 0 : index
    %115 = vector.load %arg8[%c0_65, %c0_66] : memref<576x48xbf16, #tpu.memory_space<vmem>>, vector<576x48xbf16>
    %cst_67 = arith.constant dense<0.000000e+00> : vector<256x48xf32>
    %116 = tpu.matmul %114, %115, %cst_67 {dimension_numbers = #tpu.dot_dimension_numbers<[1], [0], [0], [1], [0, 0, 1, 1], [], []>} : vector<256x576xbf16>, vector<576x48xbf16>, vector<256x48xf32> -> vector<256x48xf32>
    %c0_68 = arith.constant 0 : index
    %c0_69 = arith.constant 0 : index
    %117 = vector.load %arg9[%c0_68, %c0_69] : memref<1x48xf32, #tpu.memory_space<vmem>>, vector<1x48xf32>
    %118 = vector.broadcast %117 : vector<1x48xf32> to vector<256x48xf32>
    %119 = arith.addf %116, %118 : vector<256x48xf32>
    %120 = vector.shape_cast %119 : vector<256x48xf32> to vector<1x16x16x48xf32>
    %c0_70 = arith.constant 0 : index
    %c0_71 = arith.constant 0 : index
    %c0_72 = arith.constant 0 : index
    %c0_73 = arith.constant 0 : index
    %121 = vector.load %arg10[%c0_70, %c0_71, %c0_72, %c0_73] : memref<1x16x16x48xf32, #tpu.memory_space<vmem>>, vector<1x16x16x48xf32>
    tpu.vector_store %arg10[%c0_70, %c0_71, %c0_72, %c0_73], %120 {strides = array<i32>} : memref<1x16x16x48xf32, #tpu.memory_space<vmem>>, vector<1x16x16x48xf32>,
    return
  }
  func.func @transform_0(%arg0: i32) -> (i32, i32, i32, i32) {
    %c0_i32 = arith.constant 0 : i32
    %c0_i32_0 = arith.constant 0 : i32
    %c0_i32_1 = arith.constant 0 : i32
    %c0_i32_2 = arith.constant 0 : i32
    return %arg0, %c0_i32, %c0_i32_0, %c0_i32_1 : i32, i32, i32, i32
  }
  func.func @transform_1(%arg0: i32) -> (i32, i32) {
    %c0_i32 = arith.constant 0 : i32
    %c0_i32_0 = arith.constant 0 : i32
    %c0_i32_1 = arith.constant 0 : i32
    return %c0_i32, %c0_i32_0 : i32, i32
  }
  func.func @transform_2(%arg0: i32) -> (i32, i32) {
    %c0_i32 = arith.constant 0 : i32
    %c0_i32_0 = arith.constant 0 : i32
    %c0_i32_1 = arith.constant 0 : i32
    return %c0_i32, %c0_i32_0 : i32, i32
  }
  func.func @transform_3(%arg0: i32) -> (i32, i32, i32) {
    %c0_i32 = arith.constant 0 : i32
    %c0_i32_0 = arith.constant 0 : i32
    %c0_i32_1 = arith.constant 0 : i32
    %c0_i32_2 = arith.constant 0 : i32
    return %c0_i32, %c0_i32_0, %c0_i32_1 : i32, i32, i32
  }
  func.func @transform_4(%arg0: i32) -> (i32, i32, i32) {
    %c0_i32 = arith.constant 0 : i32
    %c0_i32_0 = arith.constant 0 : i32
    %c0_i32_1 = arith.constant 0 : i32
    %c0_i32_2 = arith.constant 0 : i32
    return %c0_i32, %c0_i32_0, %c0_i32_1 : i32, i32, i32
  }
  func.func @transform_5(%arg0: i32) -> (i32, i32) {
    %c0_i32 = arith.constant 0 : i32
    %c0_i32_0 = arith.constant 0 : i32
    %c0_i32_1 = arith.constant 0 : i32
    return %c0_i32, %c0_i32_0 : i32, i32
  }
  func.func @transform_6(%arg0: i32) -> (i32, i32) {
    %c0_i32 = arith.constant 0 : i32
    %c0_i32_0 = arith.constant 0 : i32
    %c0_i32_1 = arith.constant 0 : i32
    return %c0_i32, %c0_i32_0 : i32, i32
  }
  func.func @transform_7(%arg0: i32) -> (i32, i32) {
    %c0_i32 = arith.constant 0 : i32
    %c0_i32_0 = arith.constant 0 : i32
    %c0_i32_1 = arith.constant 0 : i32
    return %c0_i32, %c0_i32_0 : i32, i32
  }
  func.func @transform_8(%arg0: i32) -> (i32, i32) {
    %c0_i32 = arith.constant 0 : i32
    %c0_i32_0 = arith.constant 0 : i32
    %c0_i32_1 = arith.constant 0 : i32
    return %c0_i32, %c0_i32_0 : i32, i32
  }
  func.func @transform_9(%arg0: i32) -> (i32, i32, i32, i32) {
    %c0_i32 = arith.constant 0 : i32
    %c0_i32_0 = arith.constant 0 : i32
    %c0_i32_1 = arith.constant 0 : i32
    %c0_i32_2 = arith.constant 0 : i32
    return %arg0, %c0_i32, %c0_i32_0, %c0_i32_1 : i32, i32, i32, i32
  }
}

</mosaic_0001>

<llo_original>
// kernel: tile.14
$region0: #{tile.14}
  %s0 = inlined_call_operand.vmem [shape: f32[4,16], index: 0, kind: input, shape index: {}]
  %s1 = inlined_call_operand.vmem [shape: f32[1,64], index: 1, kind: output, shape index: {}]
  $region1: #{tile.14} parent=0
    #allocation0 [shape = 'u8[4096]{0}', space=vmem, size = 0x1000, scoped, tag = 'scoped mem for output reshape']
    #allocation1 [shape = 'u8[4096]{0}', space=vmem, size = 0x1000, scoped, tag = 'scoped mem for input reshape']
    %s3 = sshllo.u32 0, 4
    %v4 = vld [vmem:[%s0] sm:%s3]
    %5 = vst [vmem:[#allocation1] sm:%s3] %v4
    %v6 = vld [vmem:[#allocation1] sm:$0x1]
    %vm7 = vcmask 130048
    %8 = vst.msk [vmem:[#allocation0] sm:$0x1] %vm7, %v6
    %s9 = scalar_lea.vmem [#allocation1], 3
    %v10 = vld [vmem:[%s9] sm:$0x1]
    %11 = vrot.lane.b32.xlu0 %v10, 48
    %v12 = vpop.permute.xlu0 %11
    %vm13 = vcmask 523648
    %14 = vst.msk [vmem:[#allocation0] sm:$0x1] %vm13, %v12
    %s15 = scalar_lea.vmem [#allocation1], 2
    %v16 = vld [vmem:[%s15] sm:$0x1]
    %17 = vrot.lane.b32.xlu0 %v16, 32
    %v18 = vpop.permute.xlu0 %17
    %vm19 = vcmask 392448
    %20 = vst.msk [vmem:[#allocation0] sm:$0x1] %vm19, %v18
    %s21 = scalar_lea.vmem [#allocation1], 1
    %v22 = vld [vmem:[%s21] sm:$0x1]
    %23 = vrot.lane.b32.xlu0 %v22, 16
    %v24 = vpop.permute.xlu0 %23
    %vm25 = vcmask 261248
    %26 = vst.msk [vmem:[#allocation0] sm:$0x1] %vm25, %v24
    %s28 = sshllo.u32 0, 1
    %v30 = vld [vmem:[#allocation0] sm:%s28]
    %s31 = sshllo.u32 0, 1
    %32 = vst [vmem:[%s1] sm:%s31] %v30

// kernel: tile.13
$region0: #{tile.13}
  #allocation2 [shape = 's32[1]{0}', space=sflag, size = 0x4, scoped, tag = 'scoped memory for tile.13']
  %s0 = inlined_call_operand.hbm [shape: f32[16], index: 0, kind: input, shape index: {}]
  %s1 = inlined_call_operand.vmem [shape: f32[4,16], index: 1, kind: output, shape index: {}]
  $region1: #{tile.13} parent=0
    #allocation0 [shape = 'u8[512]{0}', space=vmem, size = 0x400, scoped, tag = 'operand span for operand 0']
    #allocation1 [shape = 's32[1]{0}', space=sflag, size = 0x4, scoped, tag = 'scoped memory for tile.13']
    %2 = vsyncpa [#allocation1], 0
    // Predicated region
    $region2: #{tile.13} parent=1 // pred_check
      _
    $region3: #{tile.13} parent=1 // pred_check_branch
      %4 = sbr.rel (0) target = $region5
    $region4: #{tile.13} parent=1 // pred_region
      %s6 = ssub.s32 16, 16
      %7 = vsyncadd [#allocation1], %s6
      %s9 = sshll.u32 [#allocation0], 4
      %s10 = int_to_ptr.vmem [resolvable:$true] %s9
      %12 = dma.hbm_to_vmem [thread:$0]  %s0, 16, %s10, [#allocation1]
    $region5: #{tile.13} parent=1 // pred_fallthru
      _
    // Predicated region
    $region6: #{tile.13} parent=1 // pred_check
      _
    $region7: #{tile.13} parent=1 // pred_check_branch
      %14 = sbr.rel (0) target = $region9
    $region8: #{tile.13} parent=1 // pred_region
      %15 = dma.done [#allocation1], 16
    $region9: #{tile.13} parent=1 // pred_fallthru
      _
    %v16 = vld [vmem:[#allocation0] ss:$0 sm:$0xff]
    %17 = vst [vmem:[%s1] sm:$0xf] %v16
    %18 = vsyncpa [#allocation1], 1

// kernel: tile.19
$region0: #{tile.19}
  %s0 = inlined_call_operand.vmem [shape: f32[16,3], index: 0, kind: input, shape index: {}]
  %s1 = inlined_call_operand.vmem [shape: f32[1,48], index: 1, kind: output, shape index: {}]
  $region1: #{tile.19} parent=0
    #allocation0 [shape = 'u8[4096]{0}', space=vmem, size = 0x1000, scoped, tag = 'scoped mem for output reshape']
    %v2 = vld [vmem:[%s0] sm:$0x1]
    %vm3 = vcmask 23552
    %4 = vst.msk [vmem:[#allocation0] sm:$0x1] %vm3, %v2
    %s5 = scalar_lea.vmem %s0, 15
    %v6 = vld [vmem:[%s5] sm:$0x1]
    %7 = vrot.lane.b32.xlu0 %v6, 45
    %v8 = vpop.permute.xlu0 %7
    %vm9 = vcmask 392552
    %10 = vst.msk [vmem:[#allocation0] sm:$0x1] %vm9, %v8
    %s11 = scalar_lea.vmem %s0, 14
    %v12 = vld [vmem:[%s11] sm:$0x1]
    %13 = vrot.lane.b32.xlu0 %v12, 42
    %v14 = vpop.permute.xlu0 %13
    %vm15 = vcmask 367952
    %16 = vst.msk [vmem:[#allocation0] sm:$0x1] %vm15, %v14
    %s17 = scalar_lea.vmem %s0, 13
    %v18 = vld [vmem:[%s17] sm:$0x1]
    %19 = vrot.lane.b32.xlu0 %v18, 39
    %v20 = vpop.permute.xlu0 %19
    %vm21 = vcmask 343352
    %22 = vst.msk [vmem:[#allocation0] sm:$0x1] %vm21, %v20
    %s23 = scalar_lea.vmem %s0, 12
    %v24 = vld [vmem:[%s23] sm:$0x1]
    %25 = vrot.lane.b32.xlu0 %v24, 36
    %v26 = vpop.permute.xlu0 %25
    %vm27 = vcmask 318752
    %28 = vst.msk [vmem:[#allocation0] sm:$0x1] %vm27, %v26
    %s29 = scalar_lea.vmem %s0, 11
    %v30 = vld [vmem:[%s29] sm:$0x1]
    %31 = vrot.lane.b32.xlu0 %v30, 33
    %v32 = vpop.permute.xlu0 %31
    %vm33 = vcmask 294152
    %34 = vst.msk [vmem:[#allocation0] sm:$0x1] %vm33, %v32
    %s35 = scalar_lea.vmem %s0, 10
    %v36 = vld [vmem:[%s35] sm:$0x1]
    %37 = vrot.lane.b32.xlu0 %v36, 30
    %v38 = vpop.permute.xlu0 %37
    %vm39 = vcmask 269552
    %40 = vst.msk [vmem:[#allocation0] sm:$0x1] %vm39, %v38
    %s41 = scalar_lea.vmem %s0, 9
    %v42 = vld [vmem:[%s41] sm:$0x1]
    %43 = vrot.lane.b32.xlu0 %v42, 27
    %v44 = vpop.permute.xlu0 %43
    %vm45 = vcmask 244952
    %46 = vst.msk [vmem:[#allocation0] sm:$0x1] %vm45, %v44
    %s47 = scalar_lea.vmem %s0, 8
    %v48 = vld [vmem:[%s47] sm:$0x1]
    %49 = vrot.lane.b32.xlu0 %v48, 24
    %v50 = vpop.permute.xlu0 %49
    %vm51 = vcmask 220352
    %52 = vst.msk [vmem:[#allocation0] sm:$0x1] %vm51, %v50
    %s53 = scalar_lea.vmem %s0, 7
    %v54 = vld [vmem:[%s53] sm:$0x1]
    %55 = vrot.lane.b32.xlu0 %v54, 21
    %v56 = vpop.permute.xlu0 %55
    %vm57 = vcmask 195752
    %58 = vst.msk [vmem:[#allocation0] sm:$0x1] %vm57, %v56
    %s59 = scalar_lea.vmem %s0, 6
    %v60 = vld [vmem:[%s59] sm:$0x1]
    %61 = vrot.lane.b32.xlu0 %v60, 18
    %v62 = vpop.permute.xlu0 %61
    %vm63 = vcmask 171152
    %64 = vst.msk [vmem:[#allocation0] sm:$0x1] %vm63, %v62
    %s65 = scalar_lea.vmem %s0, 5
    %v66 = vld [vmem:[%s65] sm:$0x1]
    %67 = vrot.lane.b32.xlu0 %v66, 15
    %v68 = vpop.permute.xlu0 %67
    %vm69 = vcmask 146552
    %70 = vst.msk [vmem:[#allocation0] sm:$0x1] %vm69, %v68
    %s71 = scalar_lea.vmem %s0, 4
    %v72 = vld [vmem:[%s71] sm:$0x1]
    %73 = vrot.lane.b32.xlu0 %v72, 12
    %v74 = vpop.permute.xlu0 %73
    %vm75 = vcmask 121952
    %76 = vst.msk [vmem:[#allocation0] sm:$0x1] %vm75, %v74
    %s77 = scalar_lea.vmem %s0, 3
    %v78 = vld [vmem:[%s77] sm:$0x1]
    %79 = vrot.lane.b32.xlu0 %v78, 9
    %v80 = vpop.permute.xlu0 %79
    %vm81 = vcmask 97352
    %82 = vst.msk [vmem:[#allocation0] sm:$0x1] %vm81, %v80
    %s83 = scalar_lea.vmem %s0, 2
    %v84 = vld [vmem:[%s83] sm:$0x1]
    %85 = vrot.lane.b32.xlu0 %v84, 6
    %v86 = vpop.permute.xlu0 %85
    %vm87 = vcmask 72752
    %88 = vst.msk [vmem:[#allocation0] sm:$0x1] %vm87, %v86
    %s89 = scalar_lea.vmem %s0, 1
    %v90 = vld [vmem:[%s89] sm:$0x1]
    %91 = vrot.lane.b32.xlu0 %v90, 3
    %v92 = vpop.permute.xlu0 %91
    %vm93 = vcmask 48152
    %94 = vst.msk [vmem:[#allocation0] sm:$0x1] %vm93, %v92
    %s96 = sshllo.u32 0, 1
    %v98 = vld [vmem:[#allocation0] sm:%s96]
    %s99 = sshllo.u32 0, 1
    %100 = vst [vmem:[%s1] sm:%s99] %v98

// kernel: tile.18
$region0: #{tile.18}
  #allocation2 [shape = 's32[1]{0}', space=sflag, size = 0x4, scoped, tag = 'scoped memory for tile.18']
  %s0 = inlined_call_operand.hbm [shape: f32[3], index: 0, kind: input, shape index: {}]
  %s1 = inlined_call_operand.vmem [shape: f32[16,3], index: 1, kind: output, shape index: {}]
  $region1: #{tile.18} parent=0
    #allocation0 [shape = 'u8[512]{0}', space=vmem, size = 0x400, scoped, tag = 'operand span for operand 0']
    #allocation1 [shape = 's32[1]{0}', space=sflag, size = 0x4, scoped, tag = 'scoped memory for tile.18']
    %2 = vsyncpa [#allocation1], 0
    // Predicated region
    $region2: #{tile.18} parent=1 // pred_check
      _
    $region3: #{tile.18} parent=1 // pred_check_branch
      %4 = sbr.rel (0) target = $region5
    $region4: #{tile.18} parent=1 // pred_region
      %s6 = ssub.s32 16, 16
      %7 = vsyncadd [#allocation1], %s6
      %s9 = sshll.u32 [#allocation0], 4
      %s10 = int_to_ptr.vmem [resolvable:$true] %s9
      %12 = dma.hbm_to_vmem [thread:$0]  %s0, 16, %s10, [#allocation1]
    $region5: #{tile.18} parent=1 // pred_fallthru
      _
    // Predicated region
    $region6: #{tile.18} parent=1 // pred_check
      _
    $region7: #{tile.18} parent=1 // pred_check_branch
      %14 = sbr.rel (0) target = $region9
    $region8: #{tile.18} parent=1 // pred_region
      %15 = dma.done [#allocation1], 16
    $region9: #{tile.18} parent=1 // pred_fallthru
      _
    %v16 = vld [vmem:[#allocation0] ss:$0 sm:$0xff]
    %17 = vst [vmem:[%s1] sm:$0xff] %v16
    %s18 = scalar_lea.vmem %s1, 8
    %19 = vst [vmem:[%s18] sm:$0xff] %v16
    %20 = vsyncpa [#allocation1], 1

// kernel: decoder_forward.1
$region0: #{decoder_forward.1}
  #allocation0 [shape = 'u32[]', space=smem, size = 0x4, offset = 0x4, fixed_abs, tag = 'smem constant byte address 0x4 - core index']
  #allocation1 [shape = 'u32[144,128]{1,0:T(1,128)}', space=vmem, size = 0x12000, scoped, tag = 'internal scratch']
  #allocation2 [shape = 'bf16[18,18,32]{2,1,0:T(8,128)(2,1)}', space=vmem, size = 0x1b000, scoped, tag = 'scratch operand']
  #allocation3 [shape = 'bf16[18,18,64]{2,1,0:T(8,128)(2,1)}', space=vmem, size = 0x1b000, scoped, tag = 'scratch operand']
  %s0 = inlined_call_operand.vmem [shape: bf16[2,18,18,4], index: 0, kind: input, shape index: {}]
  %s1 = inlined_call_operand.vmem [shape: bf16[36,32], index: 1, kind: input, shape index: {}]
  %s2 = inlined_call_operand.vmem [shape: f32[1,32], index: 2, kind: input, shape index: {}]
  %s3 = inlined_call_operand.vmem [shape: bf16[2,288,8], index: 3, kind: input, shape index: {}]
  %s4 = inlined_call_operand.vmem [shape: bf16[2,8,32], index: 4, kind: input, shape index: {}]
  %s5 = inlined_call_operand.vmem [shape: bf16[288,64], index: 5, kind: input, shape index: {}]
  %s6 = inlined_call_operand.vmem [shape: f32[1,64], index: 6, kind: input, shape index: {}]
  %s7 = inlined_call_operand.vmem [shape: bf16[576,48], index: 7, kind: input, shape index: {}]
  %s8 = inlined_call_operand.vmem [shape: f32[1,48], index: 8, kind: input, shape index: {}]
  %s9 = inlined_call_operand.vmem [shape: f32[2,16,16,48], index: 9, kind: output, shape index: {}]
  %s10 = sld [smem:[#allocation0]]
  $region69: #{decoder_forward.1} parent=0
    _
  %s12 = ssub.s32 1, %s10
  %s13 = scalar_select 0, %s12, %s10
  loop: start=0, step=1, limit=4
  $region2: #{decoder_forward.1} parent=0 // loop_pre_header
    _
  $region3: #{decoder_forward.1} parent=0 // loop_header
    %s15 = sphi 0, %s19
    %p16 = scmp.ge.s32.totalorder %s15, 4
    %s25 = sphi 0, %s27
    %s28 = sphi 0, %s25
    %s29 = sphi 0, %s28
    %s45 = sphi 0, %s29
    %s49 = sphi 0, %s49
    %s51 = sphi 0, %s49
    %s52 = sphi 0, %s51
    %s66 = sphi 0, %s52
    %s70 = sphi 0, %s70
    %s72 = sphi 0, %s70
    %s73 = sphi 0, %s72
    %s87 = sphi 0, %s73
    %s91 = sphi 0, %s91
    %s93 = sphi 0, %s91
    %s94 = sphi 0, %s93
    %s108 = sphi 0, %s94
    %s112 = sphi 0, %s112
    %s114 = sphi 0, %s112
    %s115 = sphi 0, %s114
    %s129 = sphi 0, %s115
    %s133 = sphi 0, %s133
    %s135 = sphi 0, %s133
    %s136 = sphi 0, %s135
    %s150 = sphi 0, %s136
    %s154 = sphi 0, %s154
    %s156 = sphi 0, %s154
    %s157 = sphi 0, %s156
    %s171 = sphi 0, %s157
    %s175 = sphi 0, %s175
    %s177 = sphi 0, %s175
    %s178 = sphi 0, %s177
    %s192 = sphi 0, %s178
    %s196 = sphi 0, %s196
    %s198 = sphi 0, %s196
    %s199 = sphi 0, %s198
    %s213 = sphi 0, %s199
    %s219 = sphi 0, %s221
    %s222 = sphi 0, %s219
    %s223 = sphi 0, %s222
    %s239 = sphi 0, %s223
  $region4: #{decoder_forward.1} parent=0 // loop_header_branch
    %18 = sbr.rel (%p16) target = $region8
  $region5: #{decoder_forward.1} parent=0 // loop_body
    %s20 = ssub.s32 %s15, 1
    %s21 = ssub.s32 %s15, 2
    %s22 = sadd.s32 %s15, 1
    %s23 = ssub.s32 %s15, %s22
    %p24 = scmp.eq.s32.totalorder %s23, 0
    %s26 = sadd.s32 %s25, 1
    %s27 = scalar_select %p24, %s25, %s26
    %p30 = pneg %p24
    %p31 = scmp.eq.s32.totalorder %s15, 1
    %p32 = por %p30, %p31
    %p33 = scmp.ne.s32.totalorder %s25, %s28
    %p34 = scmp.eq.s32.totalorder %s15, 0
    %p35 = por %p33, %p34
    %p36 = scmp.ne.s32.totalorder %s25, %s28
    %p37 = scmp.eq.s32.totalorder %s20, 1
    %p38 = por %p36, %p37
    %p39 = scmp.ne.s32.totalorder %s28, %s29
    %p40 = scmp.eq.s32.totalorder %s20, 0
    %p41 = por %p39, %p40
    %p42 = scmp.ne.s32.totalorder %s28, %s29
    %p43 = scmp.eq.s32.totalorder %s21, 1
    %p44 = por %p42, %p43
    %p46 = scmp.ne.s32.totalorder %s29, %s45
    %p47 = scmp.eq.s32.totalorder %s21, 0
    %p48 = por %p46, %p47
    %s50 = sadd.s32 %s49, 1
    %p53 = scmp.eq.s32.totalorder %s15, 1
    %p54 = scmp.ne.s32.totalorder %s49, %s51
    %p55 = scmp.eq.s32.totalorder %s15, 0
    %p56 = por %p54, %p55
    %p57 = scmp.ne.s32.totalorder %s49, %s51
    %p58 = scmp.eq.s32.totalorder %s20, 1
    %p59 = por %p57, %p58
    %p60 = scmp.ne.s32.totalorder %s51, %s52
    %p61 = scmp.eq.s32.totalorder %s20, 0
    %p62 = por %p60, %p61
    %p63 = scmp.ne.s32.totalorder %s51, %s52
    %p64 = scmp.eq.s32.totalorder %s21, 1
    %p65 = por %p63, %p64
    %p67 = scmp.ne.s32.totalorder %s52, %s66
    %p68 = scmp.eq.s32.totalorder %s21, 0
    %p69 = por %p67, %p68
    %s71 = sadd.s32 %s70, 1
    %p74 = scmp.eq.s32.totalorder %s15, 1
    %p75 = scmp.ne.s32.totalorder %s70, %s72
    %p76 = scmp.eq.s32.totalorder %s15, 0
    %p77 = por %p75, %p76
    %p78 = scmp.ne.s32.totalorder %s70, %s72
    %p79 = scmp.eq.s32.totalorder %s20, 1
    %p80 = por %p78, %p79
    %p81 = scmp.ne.s32.totalorder %s72, %s73
    %p82 = scmp.eq.s32.totalorder %s20, 0
    %p83 = por %p81, %p82
    %p84 = scmp.ne.s32.totalorder %s72, %s73
    %p85 = scmp.eq.s32.totalorder %s21, 1
    %p86 = por %p84, %p85
    %p88 = scmp.ne.s32.totalorder %s73, %s87
    %p89 = scmp.eq.s32.totalorder %s21, 0
    %p90 = por %p88, %p89
    %s92 = sadd.s32 %s91, 1
    %p95 = scmp.eq.s32.totalorder %s15, 1
    %p96 = scmp.ne.s32.totalorder %s91, %s93
    %p97 = scmp.eq.s32.totalorder %s15, 0
    %p98 = por %p96, %p97
    %p99 = scmp.ne.s32.totalorder %s91, %s93
    %p100 = scmp.eq.s32.totalorder %s20, 1
    %p101 = por %p99, %p100
    %p102 = scmp.ne.s32.totalorder %s93, %s94
    %p103 = scmp.eq.s32.totalorder %s20, 0
    %p104 = por %p102, %p103
    %p105 = scmp.ne.s32.totalorder %s93, %s94
    %p106 = scmp.eq.s32.totalorder %s21, 1
    %p107 = por %p105, %p106
    %p109 = scmp.ne.s32.totalorder %s94, %s108
    %p110 = scmp.eq.s32.totalorder %s21, 0
    %p111 = por %p109, %p110
    %s113 = sadd.s32 %s112, 1
    %p116 = scmp.eq.s32.totalorder %s15, 1
    %p117 = scmp.ne.s32.totalorder %s112, %s114
    %p118 = scmp.eq.s32.totalorder %s15, 0
    %p119 = por %p117, %p118
    %p120 = scmp.ne.s32.totalorder %s112, %s114
    %p121 = scmp.eq.s32.totalorder %s20, 1
    %p122 = por %p120, %p121
    %p123 = scmp.ne.s32.totalorder %s114, %s115
    %p124 = scmp.eq.s32.totalorder %s20, 0
    %p125 = por %p123, %p124
    %p126 = scmp.ne.s32.totalorder %s114, %s115
    %p127 = scmp.eq.s32.totalorder %s21, 1
    %p128 = por %p126, %p127
    %p130 = scmp.ne.s32.totalorder %s115, %s129
    %p131 = scmp.eq.s32.totalorder %s21, 0
    %p132 = por %p130, %p131
    %s134 = sadd.s32 %s133, 1
    %p137 = scmp.eq.s32.totalorder %s15, 1
    %p138 = scmp.ne.s32.totalorder %s133, %s135
    %p139 = scmp.eq.s32.totalorder %s15, 0
    %p140 = por %p138, %p139
    %p141 = scmp.ne.s32.totalorder %s133, %s135
    %p142 = scmp.eq.s32.totalorder %s20, 1
    %p143 = por %p141, %p142
    %p144 = scmp.ne.s32.totalorder %s135, %s136
    %p145 = scmp.eq.s32.totalorder %s20, 0
    %p146 = por %p144, %p145
    %p147 = scmp.ne.s32.totalorder %s135, %s136
    %p148 = scmp.eq.s32.totalorder %s21, 1
    %p149 = por %p147, %p148
    %p151 = scmp.ne.s32.totalorder %s136, %s150
    %p152 = scmp.eq.s32.totalorder %s21, 0
    %p153 = por %p151, %p152
    %s155 = sadd.s32 %s154, 1
    %p158 = scmp.eq.s32.totalorder %s15, 1
    %p159 = scmp.ne.s32.totalorder %s154, %s156
    %p160 = scmp.eq.s32.totalorder %s15, 0
    %p161 = por %p159, %p160
    %p162 = scmp.ne.s32.totalorder %s154, %s156
    %p163 = scmp.eq.s32.totalorder %s20, 1
    %p164 = por %p162, %p163
    %p165 = scmp.ne.s32.totalorder %s156, %s157
    %p166 = scmp.eq.s32.totalorder %s20, 0
    %p167 = por %p165, %p166
    %p168 = scmp.ne.s32.totalorder %s156, %s157
    %p169 = scmp.eq.s32.totalorder %s21, 1
    %p170 = por %p168, %p169
    %p172 = scmp.ne.s32.totalorder %s157, %s171
    %p173 = scmp.eq.s32.totalorder %s21, 0
    %p174 = por %p172, %p173
    %s176 = sadd.s32 %s175, 1
    %p179 = scmp.eq.s32.totalorder %s15, 1
    %p180 = scmp.ne.s32.totalorder %s175, %s177
    %p181 = scmp.eq.s32.totalorder %s15, 0
    %p182 = por %p180, %p181
    %p183 = scmp.ne.s32.totalorder %s175, %s177
    %p184 = scmp.eq.s32.totalorder %s20, 1
    %p185 = por %p183, %p184
    %p186 = scmp.ne.s32.totalorder %s177, %s178
    %p187 = scmp.eq.s32.totalorder %s20, 0
    %p188 = por %p186, %p187
    %p189 = scmp.ne.s32.totalorder %s177, %s178
    %p190 = scmp.eq.s32.totalorder %s21, 1
    %p191 = por %p189, %p190
    %p193 = scmp.ne.s32.totalorder %s178, %s192
    %p194 = scmp.eq.s32.totalorder %s21, 0
    %p195 = por %p193, %p194
    %s197 = sadd.s32 %s196, 1
    %p200 = scmp.eq.s32.totalorder %s15, 1
    %p201 = scmp.ne.s32.totalorder %s196, %s198
    %p202 = scmp.eq.s32.totalorder %s15, 0
    %p203 = por %p201, %p202
    %p204 = scmp.ne.s32.totalorder %s196, %s198
    %p205 = scmp.eq.s32.totalorder %s20, 1
    %p206 = por %p204, %p205
    %p207 = scmp.ne.s32.totalorder %s198, %s199
    %p208 = scmp.eq.s32.totalorder %s20, 0
    %p209 = por %p207, %p208
    %p210 = scmp.ne.s32.totalorder %s198, %s199
    %p211 = scmp.eq.s32.totalorder %s21, 1
    %p212 = por %p210, %p211
    %p214 = scmp.ne.s32.totalorder %s199, %s213
    %p215 = scmp.eq.s32.totalorder %s21, 0
    %p216 = por %p214, %p215
    %s217 = ssub.s32 %s15, %s22
    %p218 = scmp.eq.s32.totalorder %s217, 0
    %s220 = sadd.s32 %s219, 1
    %s221 = scalar_select %p218, %s219, %s220
    %p224 = pneg %p218
    %p225 = scmp.eq.s32.totalorder %s15, 1
    %p226 = por %p224, %p225
    %p227 = scmp.ne.s32.totalorder %s219, %s222
    %p228 = scmp.eq.s32.totalorder %s15, 0
    %p229 = por %p227, %p228
    %p230 = scmp.ne.s32.totalorder %s219, %s222
    %p231 = scmp.eq.s32.totalorder %s20, 1
    %p232 = por %p230, %p231
    %p233 = scmp.ne.s32.totalorder %s222, %s223
    %p234 = scmp.eq.s32.totalorder %s20, 0
    %p235 = por %p233, %p234
    %p236 = scmp.ne.s32.totalorder %s222, %s223
    %p237 = scmp.eq.s32.totalorder %s21, 1
    %p238 = por %p236, %p237
    %p240 = scmp.ne.s32.totalorder %s223, %s239
    %p241 = scmp.eq.s32.totalorder %s21, 0
    %p242 = por %p240, %p241
    %p243 = scmp.le.s32.totalorder 1, %s15
    %p244 = scmp.lt.s32.totalorder %s15, 3
    %p245 = pnand %p243, %p244
    %p246 = pneg %p245
    // Predicated region
    $region9: #{decoder_forward.1} parent=5 // pred_check
      _
    $region10: #{decoder_forward.1} parent=5 // pred_check_branch
      %248 = sbr.rel (%p245) target = $region12
    $region11: #{decoder_forward.1} parent=5 // pred_region
      %s249 = ssub.s32 %s15, 1
      // Predicated region
      $region13: #{decoder_forward.1} parent=11 // pred_check
        %p250 = pneg %p62
      $region14: #{decoder_forward.1} parent=11 // pred_check_branch
        %252 = sbr.rel (%p250) target = $region16
      $region15: #{decoder_forward.1} parent=11 // pred_region
        _
      $region16: #{decoder_forward.1} parent=11 // pred_fallthru
        _
      // Predicated region
      $region17: #{decoder_forward.1} parent=11 // pred_check
        %p253 = pneg %p83
      $region18: #{decoder_forward.1} parent=11 // pred_check_branch
        %255 = sbr.rel (%p253) target = $region20
      $region19: #{decoder_forward.1} parent=11 // pred_region
        _
      $region20: #{decoder_forward.1} parent=11 // pred_fallthru
        _
      // Predicated region
      $region21: #{decoder_forward.1} parent=11 // pred_check
        %p256 = pneg %p104
      $region22: #{decoder_forward.1} parent=11 // pred_check_branch
        %258 = sbr.rel (%p256) target = $region24
      $region23: #{decoder_forward.1} parent=11 // pred_region
        _
      $region24: #{decoder_forward.1} parent=11 // pred_fallthru
        _
      // Predicated region
      $region25: #{decoder_forward.1} parent=11 // pred_check
        %p259 = pneg %p125
      $region26: #{decoder_forward.1} parent=11 // pred_check_branch
        %261 = sbr.rel (%p259) target = $region28
      $region27: #{decoder_forward.1} parent=11 // pred_region
        _
      $region28: #{decoder_forward.1} parent=11 // pred_fallthru
        _
      // Predicated region
      $region29: #{decoder_forward.1} parent=11 // pred_check
        %p262 = pneg %p146
      $region30: #{decoder_forward.1} parent=11 // pred_check_branch
        %264 = sbr.rel (%p262) target = $region32
      $region31: #{decoder_forward.1} parent=11 // pred_region
        _
      $region32: #{decoder_forward.1} parent=11 // pred_fallthru
        _
      // Predicated region
      $region33: #{decoder_forward.1} parent=11 // pred_check
        %p265 = pneg %p167
      $region34: #{decoder_forward.1} parent=11 // pred_check_branch
        %267 = sbr.rel (%p265) target = $region36
      $region35: #{decoder_forward.1} parent=11 // pred_region
        _
      $region36: #{decoder_forward.1} parent=11 // pred_fallthru
        _
      // Predicated region
      $region37: #{decoder_forward.1} parent=11 // pred_check
        %p268 = pneg %p188
      $region38: #{decoder_forward.1} parent=11 // pred_check_branch
        %270 = sbr.rel (%p268) target = $region40
      $region39: #{decoder_forward.1} parent=11 // pred_region
        _
      $region40: #{decoder_forward.1} parent=11 // pred_fallthru
        _
      // Predicated region
      $region41: #{decoder_forward.1} parent=11 // pred_check
        %p271 = pneg %p209
      $region42: #{decoder_forward.1} parent=11 // pred_check_branch
        %273 = sbr.rel (%p271) target = $region44
      $region43: #{decoder_forward.1} parent=11 // pred_region
        _
      $region44: #{decoder_forward.1} parent=11 // pred_fallthru
        _
    $region12: #{decoder_forward.1} parent=5 // pred_fallthru
      _
    %p274 = scmp.lt.s32.totalorder %s15, 2
    // Predicated region
    $region45: #{decoder_forward.1} parent=5 // pred_check
      %p275 = pneg %p274
    $region46: #{decoder_forward.1} parent=5 // pred_check_branch
      %277 = sbr.rel (%p275) target = $region48
    $region47: #{decoder_forward.1} parent=5 // pred_region
      // Predicated region
      $region49: #{decoder_forward.1} parent=47 // pred_check
        %p278 = pneg %p35
      $region50: #{decoder_forward.1} parent=47 // pred_check_branch
        %280 = sbr.rel (%p278) target = $region52
      $region51: #{decoder_forward.1} parent=47 // pred_region
        %p281 = scmp.lt.s32.totalorder %s15, 1
        %s282 = scalar_select %p281, %s15, 1
        %s283 = smul.addr %s282, 54
        %s284 = smul.addr %s283, 4
        %s285 = scalar_lea.vmem %s0, %s284
      $region52: #{decoder_forward.1} parent=47 // pred_fallthru
        _
    $region48: #{decoder_forward.1} parent=5 // pred_fallthru
      _
    %p286 = scmp.le.s32.totalorder 1, %s15
    %p287 = scmp.lt.s32.totalorder %s15, 3
    %p288 = pnand %p286, %p287
    %p289 = pneg %p288
    // Predicated region
    $region53: #{decoder_forward.1} parent=5 // pred_check
      _
    $region54: #{decoder_forward.1} parent=5 // pred_check_branch
      %291 = sbr.rel (%p288) target = $region56
    $region55: #{decoder_forward.1} parent=5 // pred_region
      %s292 = ssub.s32 %s15, 1
      %p293 = scmp.lt.s32.totalorder %s20, 1
      %s294 = scalar_select %p293, %s20, 1
      %s295 = smul.addr %s294, 54
      %s296 = smul.addr %s295, 4
      %s297 = scalar_lea.vmem %s0, %s296
      %p298 = pneg %p41
      %p299 = pneg %p38
      %p300 = pneg %p62
      %p301 = pneg %p59
      %p302 = pneg %p83
      %p303 = pneg %p80
      %p304 = pneg %p104
      %p305 = pneg %p101
      %p306 = pneg %p125
      %p307 = pneg %p122
      %p308 = pneg %p146
      %p309 = pneg %p143
      %p310 = pneg %p167
      %p311 = pneg %p164
      %p312 = pneg %p188
      %p313 = pneg %p185
      %p314 = pneg %p209
      %p315 = pneg %p206
      %p316 = pneg %p235
      %p317 = pneg %p232
      %p318 = scmp.lt.s32.totalorder %s20, 1
      %s319 = scalar_select %p318, %s20, 1
      %s320 = smul.addr %s319, 32
      %s321 = smul.addr %s320, 8
      %s322 = scalar_lea.vmem %s9, %s321
      %p323 = scmp.lt.s32.totalorder %s20, 1
      %s324 = scalar_select %p323, %s20, 1
      %s325 = smul.addr %s324, 54
      %s326 = smul.addr %s325, 4
      %s327 = scalar_lea.vmem %s0, %s326
      %p328 = scmp.lt.s32.totalorder %s20, 1
      %s329 = scalar_select %p328, %s20, 1
      %s330 = smul.addr %s329, 32
      %s331 = smul.addr %s330, 8
      %s332 = scalar_lea.vmem %s9, %s331
      %vm334 = vcmask 257024
      %335 = vst.msk [vmem:[#allocation2] sm:$0xf] %vm334, 0
      %336 = vst.msk [vmem:[#allocation2 + $0x4] sm:$0xf] %vm334, 0
      %vm337 = vcmask 253952
      %338 = vst.msk [vmem:[#allocation2 + $0x8] sm:$0x1] %vm337, 0
      %339 = vst.msk [vmem:[#allocation2 + $0xc] sm:$0xf] %vm334, 0
      %340 = vst.msk [vmem:[#allocation2 + $0x10] sm:$0xf] %vm334, 0
      %341 = vst.msk [vmem:[#allocation2 + $0x14] sm:$0x1] %vm337, 0
      %342 = vst.msk [vmem:[#allocation2 + $0x18] sm:$0xf] %vm334, 0
      %343 = vst.msk [vmem:[#allocation2 + $0x1c] sm:$0xf] %vm334, 0
      %344 = vst.msk [vmem:[#allocation2 + $0x20] sm:$0x1] %vm337, 0
      %345 = vst.msk [vmem:[#allocation2 + $0x24] sm:$0xf] %vm334, 0
      %346 = vst.msk [vmem:[#allocation2 + $0x28] sm:$0xf] %vm334, 0
      %347 = vst.msk [vmem:[#allocation2 + $0x2c] sm:$0x1] %vm337, 0
      %348 = vst.msk [vmem:[#allocation2 + $0x30] sm:$0xf] %vm334, 0
      %349 = vst.msk [vmem:[#allocation2 + $0x34] sm:$0xf] %vm334, 0
      %350 = vst.msk [vmem:[#allocation2 + $0x38] sm:$0x1] %vm337, 0
      %351 = vst.msk [vmem:[#allocation2 + $0x3c] sm:$0xf] %vm334, 0
      %352 = vst.msk [vmem:[#allocation2 + $0x40] sm:$0xf] %vm334, 0
      %353 = vst.msk [vmem:[#allocation2 + $0x44] sm:$0x1] %vm337, 0
      %354 = vst.msk [vmem:[#allocation2 + $0x48] sm:$0xf] %vm334, 0
      %355 = vst.msk [vmem:[#allocation2 + $0x4c] sm:$0xf] %vm334, 0
      %356 = vst.msk [vmem:[#allocation2 + $0x50] sm:$0x1] %vm337, 0
      %357 = vst.msk [vmem:[#allocation2 + $0x54] sm:$0xf] %vm334, 0
      %358 = vst.msk [vmem:[#allocation2 + $0x58] sm:$0xf] %vm334, 0
      %359 = vst.msk [vmem:[#allocation2 + $0x5c] sm:$0x1] %vm337, 0
      %360 = vst.msk [vmem:[#allocation2 + $0x60] sm:$0xf] %vm334, 0
      %361 = vst.msk [vmem:[#allocation2 + $0x64] sm:$0xf] %vm334, 0
      %362 = vst.msk [vmem:[#allocation2 + $0x68] sm:$0x1] %vm337, 0
      %363 = vst.msk [vmem:[#allocation2 + $0x6c] sm:$0xf] %vm334, 0
      %364 = vst.msk [vmem:[#allocation2 + $0x70] sm:$0xf] %vm334, 0
      %365 = vst.msk [vmem:[#allocation2 + $0x74] sm:$0x1] %vm337, 0
      %366 = vst.msk [vmem:[#allocation2 + $0x78] sm:$0xf] %vm334, 0
      %367 = vst.msk [vmem:[#allocation2 + $0x7c] sm:$0xf] %vm334, 0
      %368 = vst.msk [vmem:[#allocation2 + $0x80] sm:$0x1] %vm337, 0
      %369 = vst.msk [vmem:[#allocation2 + $0x84] sm:$0xf] %vm334, 0
      %370 = vst.msk [vmem:[#allocation2 + $0x88] sm:$0xf] %vm334, 0
      %371 = vst.msk [vmem:[#allocation2 + $0x8c] sm:$0x1] %vm337, 0
      %372 = vst.msk [vmem:[#allocation2 + $0x90] sm:$0xf] %vm334, 0
      %373 = vst.msk [vmem:[#allocation2 + $0x94] sm:$0xf] %vm334, 0
      %374 = vst.msk [vmem:[#allocation2 + $0x98] sm:$0x1] %vm337, 0
      %375 = vst.msk [vmem:[#allocation2 + $0x9c] sm:$0xf] %vm334, 0
      %376 = vst.msk [vmem:[#allocation2 + $0xa0] sm:$0xf] %vm334, 0
      %377 = vst.msk [vmem:[#allocation2 + $0xa4] sm:$0x1] %vm337, 0
      %378 = vst.msk [vmem:[#allocation2 + $0xa8] sm:$0xf] %vm334, 0
      %379 = vst.msk [vmem:[#allocation2 + $0xac] sm:$0xf] %vm334, 0
      %380 = vst.msk [vmem:[#allocation2 + $0xb0] sm:$0x1] %vm337, 0
      %381 = vst.msk [vmem:[#allocation2 + $0xb4] sm:$0xf] %vm334, 0
      %382 = vst.msk [vmem:[#allocation2 + $0xb8] sm:$0xf] %vm334, 0
      %383 = vst.msk [vmem:[#allocation2 + $0xbc] sm:$0x1] %vm337, 0
      %384 = vst.msk [vmem:[#allocation2 + $0xc0] sm:$0xf] %vm334, 0
      %385 = vst.msk [vmem:[#allocation2 + $0xc4] sm:$0xf] %vm334, 0
      %386 = vst.msk [vmem:[#allocation2 + $0xc8] sm:$0x1] %vm337, 0
      %387 = vst.msk [vmem:[#allocation2 + $0xcc] sm:$0xf] %vm334, 0
      %388 = vst.msk [vmem:[#allocation2 + $0xd0] sm:$0xf] %vm334, 0
      %389 = vst.msk [vmem:[#allocation2 + $0xd4] sm:$0x1] %vm337, 0
      %vm390 = vcmask 519168
      %391 = vst.msk [vmem:[#allocation3] sm:$0xf] %vm390, 0
      %392 = vst.msk [vmem:[#allocation3 + $0x4] sm:$0xf] %vm390, 0
      %vm393 = vcmask 516096
      %394 = vst.msk [vmem:[#allocation3 + $0x8] sm:$0x1] %vm393, 0
      %395 = vst.msk [vmem:[#allocation3 + $0xc] sm:$0xf] %vm390, 0
      %396 = vst.msk [vmem:[#allocation3 + $0x10] sm:$0xf] %vm390, 0
      %397 = vst.msk [vmem:[#allocation3 + $0x14] sm:$0x1] %vm393, 0
      %398 = vst.msk [vmem:[#allocation3 + $0x18] sm:$0xf] %vm390, 0
      %399 = vst.msk [vmem:[#allocation3 + $0x1c] sm:$0xf] %vm390, 0
      %400 = vst.msk [vmem:[#allocation3 + $0x20] sm:$0x1] %vm393, 0
      %401 = vst.msk [vmem:[#allocation3 + $0x24] sm:$0xf] %vm390, 0
      %402 = vst.msk [vmem:[#allocation3 + $0x28] sm:$0xf] %vm390, 0
      %403 = vst.msk [vmem:[#allocation3 + $0x2c] sm:$0x1] %vm393, 0
      %404 = vst.msk [vmem:[#allocation3 + $0x30] sm:$0xf] %vm390, 0
      %405 = vst.msk [vmem:[#allocation3 + $0x34] sm:$0xf] %vm390, 0
      %406 = vst.msk [vmem:[#allocation3 + $0x38] sm:$0x1] %vm393, 0
      %407 = vst.msk [vmem:[#allocation3 + $0x3c] sm:$0xf] %vm390, 0
      %408 = vst.msk [vmem:[#allocation3 + $0x40] sm:$0xf] %vm390, 0
      %409 = vst.msk [vmem:[#allocation3 + $0x44] sm:$0x1] %vm393, 0
      %410 = vst.msk [vmem:[#allocation3 + $0x48] sm:$0xf] %vm390, 0
      %411 = vst.msk [vmem:[#allocation3 + $0x4c] sm:$0xf] %vm390, 0
      %412 = vst.msk [vmem:[#allocation3 + $0x50] sm:$0x1] %vm393, 0
      %413 = vst.msk [vmem:[#allocation3 + $0x54] sm:$0xf] %vm390, 0
      %414 = vst.msk [vmem:[#allocation3 + $0x58] sm:$0xf] %vm390, 0
      %415 = vst.msk [vmem:[#allocation3 + $0x5c] sm:$0x1] %vm393, 0
      %416 = vst.msk [vmem:[#allocation3 + $0x60] sm:$0xf] %vm390, 0
      %417 = vst.msk [vmem:[#allocation3 + $0x64] sm:$0xf] %vm390, 0
      %418 = vst.msk [vmem:[#allocation3 + $0x68] sm:$0x1] %vm393, 0
      %419 = vst.msk [vmem:[#allocation3 + $0x6c] sm:$0xf] %vm390, 0
      %420 = vst.msk [vmem:[#allocation3 + $0x70] sm:$0xf] %vm390, 0
      %421 = vst.msk [vmem:[#allocation3 + $0x74] sm:$0x1] %vm393, 0
      %422 = vst.msk [vmem:[#allocation3 + $0x78] sm:$0xf] %vm390, 0
      %423 = vst.msk [vmem:[#allocation3 + $0x7c] sm:$0xf] %vm390, 0
      %424 = vst.msk [vmem:[#allocation3 + $0x80] sm:$0x1] %vm393, 0
      %425 = vst.msk [vmem:[#allocation3 + $0x84] sm:$0xf] %vm390, 0
      %426 = vst.msk [vmem:[#allocation3 + $0x88] sm:$0xf] %vm390, 0
      %427 = vst.msk [vmem:[#allocation3 + $0x8c] sm:$0x1] %vm393, 0
      %428 = vst.msk [vmem:[#allocation3 + $0x90] sm:$0xf] %vm390, 0
      %429 = vst.msk [vmem:[#allocation3 + $0x94] sm:$0xf] %vm390, 0
      %430 = vst.msk [vmem:[#allocation3 + $0x98] sm:$0x1] %vm393, 0
      %431 = vst.msk [vmem:[#allocation3 + $0x9c] sm:$0xf] %vm390, 0
      %432 = vst.msk [vmem:[#allocation3 + $0xa0] sm:$0xf] %vm390, 0
      %433 = vst.msk [vmem:[#allocation3 + $0xa4] sm:$0x1] %vm393, 0
      %434 = vst.msk [vmem:[#allocation3 + $0xa8] sm:$0xf] %vm390, 0
      %435 = vst.msk [vmem:[#allocation3 + $0xac] sm:$0xf] %vm390, 0
      %436 = vst.msk [vmem:[#allocation3 + $0xb0] sm:$0x1] %vm393, 0
      %437 = vst.msk [vmem:[#allocation3 + $0xb4] sm:$0xf] %vm390, 0
      %438 = vst.msk [vmem:[#allocation3 + $0xb8] sm:$0xf] %vm390, 0
      %439 = vst.msk [vmem:[#allocation3 + $0xbc] sm:$0x1] %vm393, 0
      %440 = vst.msk [vmem:[#allocation3 + $0xc0] sm:$0xf] %vm390, 0
      %441 = vst.msk [vmem:[#allocation3 + $0xc4] sm:$0xf] %vm390, 0
      %442 = vst.msk [vmem:[#allocation3 + $0xc8] sm:$0x1] %vm393, 0
      %443 = vst.msk [vmem:[#allocation3 + $0xcc] sm:$0xf] %vm390, 0
      %444 = vst.msk [vmem:[#allocation3 + $0xd0] sm:$0xf] %vm390, 0
      %445 = vst.msk [vmem:[#allocation3 + $0xd4] sm:$0x1] %vm393, 0
      %v446 = vld [vmem:[%s327] sm:$0xf]
      %v447 = vld [vmem:[%s327 + $0x4] sm:$0xf]
      %v448 = vld [vmem:[%s327 + $0x8] sm:$0x1]
      %v449 = vld [vmem:[%s327 + $0xc] sm:$0xf]
      %v450 = vld [vmem:[%s327 + $0x10] sm:$0xf]
      %v451 = vld [vmem:[%s327 + $0x14] sm:$0x1]
      %v452 = vld [vmem:[%s327 + $0x18] sm:$0xf]
      %v453 = vld [vmem:[%s327 + $0x1c] sm:$0xf]
      %v454 = vld [vmem:[%s327 + $0x20] sm:$0x1]
      %v455 = vld [vmem:[%s327 + $0x24] sm:$0xf]
      %v456 = vld [vmem:[%s327 + $0x28] sm:$0xf]
      %v457 = vld [vmem:[%s327 + $0x2c] sm:$0x1]
      %v458 = vld [vmem:[%s327 + $0x30] sm:$0xf]
      %v459 = vld [vmem:[%s327 + $0x34] sm:$0xf]
      %v460 = vld [vmem:[%s327 + $0x38] sm:$0x1]
      %v461 = vld [vmem:[%s327 + $0x3c] sm:$0xf]
      %v462 = vld [vmem:[%s327 + $0x40] sm:$0xf]
      %v463 = vld [vmem:[%s327 + $0x44] sm:$0x1]
      %v464 = vld [vmem:[%s327 + $0x48] sm:$0xf]
      %v465 = vld [vmem:[%s327 + $0x4c] sm:$0xf]
      %v466 = vld [vmem:[%s327 + $0x50] sm:$0x1]
      %v467 = vld [vmem:[%s327 + $0x54] sm:$0xf]
      %v468 = vld [vmem:[%s327 + $0x58] sm:$0xf]
      %v469 = vld [vmem:[%s327 + $0x5c] sm:$0x1]
      %v470 = vld [vmem:[%s327 + $0x60] sm:$0xf]
      %v471 = vld [vmem:[%s327 + $0x64] sm:$0xf]
      %v472 = vld [vmem:[%s327 + $0x68] sm:$0x1]
      %v473 = vld [vmem:[%s327 + $0x6c] sm:$0xf]
      %v474 = vld [vmem:[%s327 + $0x70] sm:$0xf]
      %v475 = vld [vmem:[%s327 + $0x74] sm:$0x1]
      %v476 = vld [vmem:[%s327 + $0x78] sm:$0xf]
      %v477 = vld [vmem:[%s327 + $0x7c] sm:$0xf]
      %v478 = vld [vmem:[%s327 + $0x80] sm:$0x1]
      %v479 = vld [vmem:[%s327 + $0x84] sm:$0xf]
      %v480 = vld [vmem:[%s327 + $0x88] sm:$0xf]
      %v481 = vld [vmem:[%s327 + $0x8c] sm:$0x1]
      %v482 = vld [vmem:[%s327 + $0x90] sm:$0xf]
      %v483 = vld [vmem:[%s327 + $0x94] sm:$0xf]
      %v484 = vld [vmem:[%s327 + $0x98] sm:$0x1]
      %v485 = vld [vmem:[%s327 + $0x9c] sm:$0xf]
      %v486 = vld [vmem:[%s327 + $0xa0] sm:$0xf]
      %v487 = vld [vmem:[%s327 + $0xa4] sm:$0x1]
      %v488 = vld [vmem:[%s327 + $0xa8] sm:$0xf]
      %v489 = vld [vmem:[%s327 + $0xac] sm:$0xf]
      %v490 = vld [vmem:[%s327 + $0xb0] sm:$0x1]
      %v491 = vld [vmem:[%s327 + $0xb4] sm:$0xf]
      %v492 = vld [vmem:[%s327 + $0xb8] sm:$0xf]
      %v493 = vld [vmem:[%s327 + $0xbc] sm:$0x1]
      %v494 = vld [vmem:[%s327 + $0xc0] sm:$0xf]
      %v495 = vld [vmem:[%s327 + $0xc4] sm:$0xf]
      %v496 = vld [vmem:[%s327 + $0xc8] sm:$0x1]
      %v497 = vld [vmem:[%s327 + $0xcc] sm:$0xf]
      %v498 = vld [vmem:[%s327 + $0xd0] sm:$0xf]
      %v499 = vld [vmem:[%s327 + $0xd4] sm:$0x1]
      %v532 = vunpack.c.l.b16 %v446
      %v533 = vunpack.c.l.b16 %v447
      %v534 = vunpack.c.l.b16 %v449
      %v535 = vunpack.c.l.b16 %v450
      %v536 = vunpack.c.l.b16 %v452
      %v537 = vunpack.c.l.b16 %v453
      %v538 = vunpack.c.l.b16 %v455
      %v539 = vunpack.c.l.b16 %v456
      %v540 = vunpack.c.l.b16 %v458
      %v541 = vunpack.c.l.b16 %v459
      %v542 = vunpack.c.l.b16 %v461
      %v543 = vunpack.c.l.b16 %v462
      %v544 = vunpack.c.l.b16 %v464
      %v545 = vunpack.c.l.b16 %v465
      %v546 = vunpack.c.l.b16 %v467
      %v547 = vunpack.c.l.b16 %v468
      %v548 = vunpack.c.l.b16 %v470
      %v549 = vunpack.c.l.b16 %v471
      %v550 = vunpack.c.l.b16 %v473
      %v551 = vunpack.c.l.b16 %v474
      %v552 = vunpack.c.l.b16 %v476
      %v553 = vunpack.c.l.b16 %v477
      %v554 = vunpack.c.l.b16 %v479
      %v555 = vunpack.c.l.b16 %v480
      %v556 = vunpack.c.l.b16 %v482
      %v557 = vunpack.c.l.b16 %v483
      %v558 = vunpack.c.l.b16 %v485
      %v559 = vunpack.c.l.b16 %v486
      %v560 = vunpack.c.l.b16 %v488
      %v561 = vunpack.c.l.b16 %v489
      %v562 = vunpack.c.l.b16 %v491
      %v563 = vunpack.c.l.b16 %v492
      %v564 = vpack.c.b16 %v533, %v532
      %v565 = vpack.c.b16 %v535, %v534
      %v566 = vpack.c.b16 %v537, %v536
      %v567 = vpack.c.b16 %v539, %v538
      %v568 = vpack.c.b16 %v541, %v540
      %v569 = vpack.c.b16 %v543, %v542
      %v570 = vpack.c.b16 %v545, %v544
      %v571 = vpack.c.b16 %v547, %v546
      %v572 = vpack.c.b16 %v549, %v548
      %v573 = vpack.c.b16 %v551, %v550
      %v574 = vpack.c.b16 %v553, %v552
      %v575 = vpack.c.b16 %v555, %v554
      %v576 = vpack.c.b16 %v557, %v556
      %v577 = vpack.c.b16 %v559, %v558
      %v578 = vpack.c.b16 %v561, %v560
      %v579 = vpack.c.b16 %v563, %v562
      %v596 = vunpack.c.l.b16 %v448
      %v597 = vunpack.c.l.b16 %v451
      %v598 = vunpack.c.l.b16 %v454
      %v599 = vunpack.c.l.b16 %v457
      %v600 = vunpack.c.l.b16 %v460
      %v601 = vunpack.c.l.b16 %v463
      %v602 = vunpack.c.l.b16 %v466
      %v603 = vunpack.c.l.b16 %v469
      %v604 = vunpack.c.l.b16 %v472
      %v605 = vunpack.c.l.b16 %v475
      %v606 = vunpack.c.l.b16 %v478
      %v607 = vunpack.c.l.b16 %v481
      %v608 = vunpack.c.l.b16 %v484
      %v609 = vunpack.c.l.b16 %v487
      %v610 = vunpack.c.l.b16 %v490
      %v611 = vunpack.c.l.b16 %v493
      %v612 = vpack.c.b16 %v596, %v596
      %v613 = vpack.c.b16 %v597, %v597
      %v614 = vpack.c.b16 %v598, %v598
      %v615 = vpack.c.b16 %v599, %v599
      %v616 = vpack.c.b16 %v600, %v600
      %v617 = vpack.c.b16 %v601, %v601
      %v618 = vpack.c.b16 %v602, %v602
      %v619 = vpack.c.b16 %v603, %v603
      %v620 = vpack.c.b16 %v604, %v604
      %v621 = vpack.c.b16 %v605, %v605
      %v622 = vpack.c.b16 %v606, %v606
      %v623 = vpack.c.b16 %v607, %v607
      %v624 = vpack.c.b16 %v608, %v608
      %v625 = vpack.c.b16 %v609, %v609
      %v626 = vpack.c.b16 %v610, %v610
      %v627 = vpack.c.b16 %v611, %v611
      %vm628 = vsmask.f32 7424
      %v630 = vshrl.u32 %v564, 16
      %v632 = vshll.u32 %v564, 16
      %v634 = vrot.slane %v632, 1
      %v635 = vor.u32 %v630, %v634
      %v637 = vshll.u32 %v612, 16
      %v639 = vrot.slane %v637, 1
      %v640 = vsel %vm628, %v635, %v639
      %v642 = vshrl.u32 %v565, 16
      %v644 = vshll.u32 %v565, 16
      %v646 = vrot.slane %v644, 1
      %v647 = vor.u32 %v642, %v646
      %v649 = vshll.u32 %v613, 16
      %v651 = vrot.slane %v649, 1
      %v652 = vsel %vm628, %v647, %v651
      %v654 = vshrl.u32 %v566, 16
      %v656 = vshll.u32 %v566, 16
      %v658 = vrot.slane %v656, 1
      %v659 = vor.u32 %v654, %v658
      %v661 = vshll.u32 %v614, 16
      %v663 = vrot.slane %v661, 1
      %v664 = vsel %vm628, %v659, %v663
      %v666 = vshrl.u32 %v567, 16
      %v668 = vshll.u32 %v567, 16
      %v670 = vrot.slane %v668, 1
      %v671 = vor.u32 %v666, %v670
      %v673 = vshll.u32 %v615, 16
      %v675 = vrot.slane %v673, 1
      %v676 = vsel %vm628, %v671, %v675
      %v678 = vshrl.u32 %v568, 16
      %v680 = vshll.u32 %v568, 16
      %v682 = vrot.slane %v680, 1
      %v683 = vor.u32 %v678, %v682
      %v685 = vshll.u32 %v616, 16
      %v687 = vrot.slane %v685, 1
      %v688 = vsel %vm628, %v683, %v687
      %v690 = vshrl.u32 %v569, 16
      %v692 = vshll.u32 %v569, 16
      %v694 = vrot.slane %v692, 1
      %v695 = vor.u32 %v690, %v694
      %v697 = vshll.u32 %v617, 16
      %v699 = vrot.slane %v697, 1
      %v700 = vsel %vm628, %v695, %v699
      %v702 = vshrl.u32 %v570, 16
      %v704 = vshll.u32 %v570, 16
      %v706 = vrot.slane %v704, 1
      %v707 = vor.u32 %v702, %v706
      %v709 = vshll.u32 %v618, 16
      %v711 = vrot.slane %v709, 1
      %v712 = vsel %vm628, %v707, %v711
      %v714 = vshrl.u32 %v571, 16
      %v716 = vshll.u32 %v571, 16
      %v718 = vrot.slane %v716, 1
      %v719 = vor.u32 %v714, %v718
      %v721 = vshll.u32 %v619, 16
      %v723 = vrot.slane %v721, 1
      %v724 = vsel %vm628, %v719, %v723
      %v726 = vshrl.u32 %v572, 16
      %v728 = vshll.u32 %v572, 16
      %v730 = vrot.slane %v728, 1
      %v731 = vor.u32 %v726, %v730
      %v733 = vshll.u32 %v620, 16
      %v735 = vrot.slane %v733, 1
      %v736 = vsel %vm628, %v731, %v735
      %v738 = vshrl.u32 %v573, 16
      %v740 = vshll.u32 %v573, 16
      %v742 = vrot.slane %v740, 1
      %v743 = vor.u32 %v738, %v742
      %v745 = vshll.u32 %v621, 16
      %v747 = vrot.slane %v745, 1
      %v748 = vsel %vm628, %v743, %v747
      %v750 = vshrl.u32 %v574, 16
      %v752 = vshll.u32 %v574, 16
      %v754 = vrot.slane %v752, 1
      %v755 = vor.u32 %v750, %v754
      %v757 = vshll.u32 %v622, 16
      %v759 = vrot.slane %v757, 1
      %v760 = vsel %vm628, %v755, %v759
      %v762 = vshrl.u32 %v575, 16
      %v764 = vshll.u32 %v575, 16
      %v766 = vrot.slane %v764, 1
      %v767 = vor.u32 %v762, %v766
      %v769 = vshll.u32 %v623, 16
      %v771 = vrot.slane %v769, 1
      %v772 = vsel %vm628, %v767, %v771
      %v774 = vshrl.u32 %v576, 16
      %v776 = vshll.u32 %v576, 16
      %v778 = vrot.slane %v776, 1
      %v779 = vor.u32 %v774, %v778
      %v781 = vshll.u32 %v624, 16
      %v783 = vrot.slane %v781, 1
      %v784 = vsel %vm628, %v779, %v783
      %v786 = vshrl.u32 %v577, 16
      %v788 = vshll.u32 %v577, 16
      %v790 = vrot.slane %v788, 1
      %v791 = vor.u32 %v786, %v790
      %v793 = vshll.u32 %v625, 16
      %v795 = vrot.slane %v793, 1
      %v796 = vsel %vm628, %v791, %v795
      %v798 = vshrl.u32 %v578, 16
      %v800 = vshll.u32 %v578, 16
      %v802 = vrot.slane %v800, 1
      %v803 = vor.u32 %v798, %v802
      %v805 = vshll.u32 %v626, 16
      %v807 = vrot.slane %v805, 1
      %v808 = vsel %vm628, %v803, %v807
      %v810 = vshrl.u32 %v579, 16
      %v812 = vshll.u32 %v579, 16
      %v814 = vrot.slane %v812, 1
      %v815 = vor.u32 %v810, %v814
      %v817 = vshll.u32 %v627, 16
      %v819 = vrot.slane %v817, 1
      %v820 = vsel %vm628, %v815, %v819
      %821 = vrot.lane.b32.xlu0 %v640, 4
      %v822 = vpop.permute.xlu0 %821
      %823 = vrot.lane.b32.xlu0 %v652, 4
      %v824 = vpop.permute.xlu0 %823
      %825 = vrot.lane.b32.xlu0 %v664, 4
      %v826 = vpop.permute.xlu0 %825
      %827 = vrot.lane.b32.xlu0 %v676, 4
      %v828 = vpop.permute.xlu0 %827
      %829 = vrot.lane.b32.xlu0 %v688, 4
      %v830 = vpop.permute.xlu0 %829
      %831 = vrot.lane.b32.xlu0 %v700, 4
      %v832 = vpop.permute.xlu0 %831
      %833 = vrot.lane.b32.xlu0 %v712, 4
      %v834 = vpop.permute.xlu0 %833
      %835 = vrot.lane.b32.xlu0 %v724, 4
      %v836 = vpop.permute.xlu0 %835
      %837 = vrot.lane.b32.xlu0 %v736, 4
      %v838 = vpop.permute.xlu0 %837
      %839 = vrot.lane.b32.xlu0 %v748, 4
      %v840 = vpop.permute.xlu0 %839
      %841 = vrot.lane.b32.xlu0 %v760, 4
      %v842 = vpop.permute.xlu0 %841
      %843 = vrot.lane.b32.xlu0 %v772, 4
      %v844 = vpop.permute.xlu0 %843
      %845 = vrot.lane.b32.xlu0 %v784, 4
      %v846 = vpop.permute.xlu0 %845
      %847 = vrot.lane.b32.xlu0 %v796, 4
      %v848 = vpop.permute.xlu0 %847
      %849 = vrot.lane.b32.xlu0 %v808, 4
      %v850 = vpop.permute.xlu0 %849
      %851 = vrot.lane.b32.xlu0 %v820, 4
      %v852 = vpop.permute.xlu0 %851
      %vm853 = vcmask 1046528
      %v854 = vrot.slane %v564, 1
      %v855 = vrot.slane %v612, 1
      %v856 = vsel %vm853, %v854, %v855
      %v857 = vrot.slane %v565, 1
      %v858 = vrot.slane %v613, 1
      %v859 = vsel %vm853, %v857, %v858
      %v860 = vrot.slane %v566, 1
      %v861 = vrot.slane %v614, 1
      %v862 = vsel %vm853, %v860, %v861
      %v863 = vrot.slane %v567, 1
      %v864 = vrot.slane %v615, 1
      %v865 = vsel %vm853, %v863, %v864
      %v866 = vrot.slane %v568, 1
      %v867 = vrot.slane %v616, 1
      %v868 = vsel %vm853, %v866, %v867
      %v869 = vrot.slane %v569, 1
      %v870 = vrot.slane %v617, 1
      %v871 = vsel %vm853, %v869, %v870
      %v872 = vrot.slane %v570, 1
      %v873 = vrot.slane %v618, 1
      %v874 = vsel %vm853, %v872, %v873
      %v875 = vrot.slane %v571, 1
      %v876 = vrot.slane %v619, 1
      %v877 = vsel %vm853, %v875, %v876
      %v878 = vrot.slane %v572, 1
      %v879 = vrot.slane %v620, 1
      %v880 = vsel %vm853, %v878, %v879
      %v881 = vrot.slane %v573, 1
      %v882 = vrot.slane %v621, 1
      %v883 = vsel %vm853, %v881, %v882
      %v884 = vrot.slane %v574, 1
      %v885 = vrot.slane %v622, 1
      %v886 = vsel %vm853, %v884, %v885
      %v887 = vrot.slane %v575, 1
      %v888 = vrot.slane %v623, 1
      %v889 = vsel %vm853, %v887, %v888
      %v890 = vrot.slane %v576, 1
      %v891 = vrot.slane %v624, 1
      %v892 = vsel %vm853, %v890, %v891
      %v893 = vrot.slane %v577, 1
      %v894 = vrot.slane %v625, 1
      %v895 = vsel %vm853, %v893, %v894
      %v896 = vrot.slane %v578, 1
      %v897 = vrot.slane %v626, 1
      %v898 = vsel %vm853, %v896, %v897
      %v899 = vrot.slane %v579, 1
      %v900 = vrot.slane %v627, 1
      %v901 = vsel %vm853, %v899, %v900
      %902 = vrot.lane.b32.xlu0 %v856, 8
      %v903 = vpop.permute.xlu0 %902
      %904 = vrot.lane.b32.xlu0 %v859, 8
      %v905 = vpop.permute.xlu0 %904
      %906 = vrot.lane.b32.xlu0 %v862, 8
      %v907 = vpop.permute.xlu0 %906
      %908 = vrot.lane.b32.xlu0 %v865, 8
      %v909 = vpop.permute.xlu0 %908
      %910 = vrot.lane.b32.xlu0 %v868, 8
      %v911 = vpop.permute.xlu0 %910
      %912 = vrot.lane.b32.xlu0 %v871, 8
      %v913 = vpop.permute.xlu0 %912
      %914 = vrot.lane.b32.xlu0 %v874, 8
      %v915 = vpop.permute.xlu0 %914
      %916 = vrot.lane.b32.xlu0 %v877, 8
      %v917 = vpop.permute.xlu0 %916
      %918 = vrot.lane.b32.xlu0 %v880, 8
      %v919 = vpop.permute.xlu0 %918
      %920 = vrot.lane.b32.xlu0 %v883, 8
      %v921 = vpop.permute.xlu0 %920
      %922 = vrot.lane.b32.xlu0 %v886, 8
      %v923 = vpop.permute.xlu0 %922
      %924 = vrot.lane.b32.xlu0 %v889, 8
      %v925 = vpop.permute.xlu0 %924
      %926 = vrot.lane.b32.xlu0 %v892, 8
      %v927 = vpop.permute.xlu0 %926
      %928 = vrot.lane.b32.xlu0 %v895, 8
      %v929 = vpop.permute.xlu0 %928
      %930 = vrot.lane.b32.xlu0 %v898, 8
      %v931 = vpop.permute.xlu0 %930
      %932 = vrot.lane.b32.xlu0 %v901, 8
      %v933 = vpop.permute.xlu0 %932
      %v936 = vunpack.c.l.b16 %v494
      %v937 = vunpack.c.l.b16 %v495
      %v938 = vpack.c.b16 %v937, %v936
      %939 = vrot.lane.b32.xlu0 %v565, 12
      %v940 = vpop.permute.xlu0 %939
      %941 = vrot.lane.b32.xlu0 %v566, 12
      %v942 = vpop.permute.xlu0 %941
      %943 = vrot.lane.b32.xlu0 %v567, 12
      %v944 = vpop.permute.xlu0 %943
      %945 = vrot.lane.b32.xlu0 %v568, 12
      %v946 = vpop.permute.xlu0 %945
      %947 = vrot.lane.b32.xlu0 %v569, 12
      %v948 = vpop.permute.xlu0 %947
      %949 = vrot.lane.b32.xlu0 %v570, 12
      %v950 = vpop.permute.xlu0 %949
      %951 = vrot.lane.b32.xlu0 %v571, 12
      %v952 = vpop.permute.xlu0 %951
      %953 = vrot.lane.b32.xlu0 %v572, 12
      %v954 = vpop.permute.xlu0 %953
      %955 = vrot.lane.b32.xlu0 %v573, 12
      %v956 = vpop.permute.xlu0 %955
      %957 = vrot.lane.b32.xlu0 %v574, 12
      %v958 = vpop.permute.xlu0 %957
      %959 = vrot.lane.b32.xlu0 %v575, 12
      %v960 = vpop.permute.xlu0 %959
      %961 = vrot.lane.b32.xlu0 %v576, 12
      %v962 = vpop.permute.xlu0 %961
      %963 = vrot.lane.b32.xlu0 %v577, 12
      %v964 = vpop.permute.xlu0 %963
      %965 = vrot.lane.b32.xlu0 %v578, 12
      %v966 = vpop.permute.xlu0 %965
      %967 = vrot.lane.b32.xlu0 %v579, 12
      %v968 = vpop.permute.xlu0 %967
      %969 = vrot.lane.b32.xlu0 %v938, 12
      %v970 = vpop.permute.xlu0 %969
      %v972 = vunpack.c.l.b16 %v496
      %v973 = vpack.c.b16 %v972, %v972
      %v975 = vshrl.u32 %v938, 16
      %v977 = vshll.u32 %v938, 16
      %v979 = vrot.slane %v977, 1
      %v980 = vor.u32 %v975, %v979
      %v982 = vshll.u32 %v973, 16
      %v984 = vrot.slane %v982, 1
      %v985 = vsel %vm628, %v980, %v984
      %986 = vrot.lane.b32.xlu0 %v652, 16
      %v987 = vpop.permute.xlu0 %986
      %988 = vrot.lane.b32.xlu0 %v664, 16
      %v989 = vpop.permute.xlu0 %988
      %990 = vrot.lane.b32.xlu0 %v676, 16
      %v991 = vpop.permute.xlu0 %990
      %992 = vrot.lane.b32.xlu0 %v688, 16
      %v993 = vpop.permute.xlu0 %992
      %994 = vrot.lane.b32.xlu0 %v700, 16
      %v995 = vpop.permute.xlu0 %994
      %996 = vrot.lane.b32.xlu0 %v712, 16
      %v997 = vpop.permute.xlu0 %996
      %998 = vrot.lane.b32.xlu0 %v724, 16
      %v999 = vpop.permute.xlu0 %998
      %1000 = vrot.lane.b32.xlu0 %v736, 16
      %v1001 = vpop.permute.xlu0 %1000
      %1002 = vrot.lane.b32.xlu0 %v748, 16
      %v1003 = vpop.permute.xlu0 %1002
      %1004 = vrot.lane.b32.xlu0 %v760, 16
      %v1005 = vpop.permute.xlu0 %1004
      %1006 = vrot.lane.b32.xlu0 %v772, 16
      %v1007 = vpop.permute.xlu0 %1006
      %1008 = vrot.lane.b32.xlu0 %v784, 16
      %v1009 = vpop.permute.xlu0 %1008
      %1010 = vrot.lane.b32.xlu0 %v796, 16
      %v1011 = vpop.permute.xlu0 %1010
      %1012 = vrot.lane.b32.xlu0 %v808, 16
      %v1013 = vpop.permute.xlu0 %1012
      %1014 = vrot.lane.b32.xlu0 %v820, 16
      %v1015 = vpop.permute.xlu0 %1014
      %1016 = vrot.lane.b32.xlu0 %v985, 16
      %v1017 = vpop.permute.xlu0 %1016
      %v1018 = vrot.slane %v938, 1
      %v1019 = vrot.slane %v973, 1
      %v1020 = vsel %vm853, %v1018, %v1019
      %1021 = vrot.lane.b32.xlu0 %v859, 20
      %v1022 = vpop.permute.xlu0 %1021
      %1023 = vrot.lane.b32.xlu0 %v862, 20
      %v1024 = vpop.permute.xlu0 %1023
      %1025 = vrot.lane.b32.xlu0 %v865, 20
      %v1026 = vpop.permute.xlu0 %1025
      %1027 = vrot.lane.b32.xlu0 %v868, 20
      %v1028 = vpop.permute.xlu0 %1027
      %1029 = vrot.lane.b32.xlu0 %v871, 20
      %v1030 = vpop.permute.xlu0 %1029
      %1031 = vrot.lane.b32.xlu0 %v874, 20
      %v1032 = vpop.permute.xlu0 %1031
      %1033 = vrot.lane.b32.xlu0 %v877, 20
      %v1034 = vpop.permute.xlu0 %1033
      %1035 = vrot.lane.b32.xlu0 %v880, 20
      %v1036 = vpop.permute.xlu0 %1035
      %1037 = vrot.lane.b32.xlu0 %v883, 20
      %v1038 = vpop.permute.xlu0 %1037
      %1039 = vrot.lane.b32.xlu0 %v886, 20
      %v1040 = vpop.permute.xlu0 %1039
      %1041 = vrot.lane.b32.xlu0 %v889, 20
      %v1042 = vpop.permute.xlu0 %1041
      %1043 = vrot.lane.b32.xlu0 %v892, 20
      %v1044 = vpop.permute.xlu0 %1043
      %1045 = vrot.lane.b32.xlu0 %v895, 20
      %v1046 = vpop.permute.xlu0 %1045
      %1047 = vrot.lane.b32.xlu0 %v898, 20
      %v1048 = vpop.permute.xlu0 %1047
      %1049 = vrot.lane.b32.xlu0 %v901, 20
      %v1050 = vpop.permute.xlu0 %1049
      %1051 = vrot.lane.b32.xlu0 %v1020, 20
      %v1052 = vpop.permute.xlu0 %1051
      %v1055 = vunpack.c.l.b16 %v497
      %v1056 = vunpack.c.l.b16 %v498
      %v1057 = vpack.c.b16 %v1056, %v1055
      %1058 = vrot.lane.b32.xlu0 %v566, 24
      %v1059 = vpop.permute.xlu0 %1058
      %1060 = vrot.lane.b32.xlu0 %v567, 24
      %v1061 = vpop.permute.xlu0 %1060
      %1062 = vrot.lane.b32.xlu0 %v568, 24
      %v1063 = vpop.permute.xlu0 %1062
      %1064 = vrot.lane.b32.xlu0 %v569, 24
      %v1065 = vpop.permute.xlu0 %1064
      %1066 = vrot.lane.b32.xlu0 %v570, 24
      %v1067 = vpop.permute.xlu0 %1066
      %1068 = vrot.lane.b32.xlu0 %v571, 24
      %v1069 = vpop.permute.xlu0 %1068
      %1070 = vrot.lane.b32.xlu0 %v572, 24
      %v1071 = vpop.permute.xlu0 %1070
      %1072 = vrot.lane.b32.xlu0 %v573, 24
      %v1073 = vpop.permute.xlu0 %1072
      %1074 = vrot.lane.b32.xlu0 %v574, 24
      %v1075 = vpop.permute.xlu0 %1074
      %1076 = vrot.lane.b32.xlu0 %v575, 24
      %v1077 = vpop.permute.xlu0 %1076
      %1078 = vrot.lane.b32.xlu0 %v576, 24
      %v1079 = vpop.permute.xlu0 %1078
      %1080 = vrot.lane.b32.xlu0 %v577, 24
      %v1081 = vpop.permute.xlu0 %1080
      %1082 = vrot.lane.b32.xlu0 %v578, 24
      %v1083 = vpop.permute.xlu0 %1082
      %1084 = vrot.lane.b32.xlu0 %v579, 24
      %v1085 = vpop.permute.xlu0 %1084
      %1086 = vrot.lane.b32.xlu0 %v938, 24
      %v1087 = vpop.permute.xlu0 %1086
      %1088 = vrot.lane.b32.xlu0 %v1057, 24
      %v1089 = vpop.permute.xlu0 %1088
      %v1091 = vunpack.c.l.b16 %v499
      %v1092 = vpack.c.b16 %v1091, %v1091
      %v1094 = vshrl.u32 %v1057, 16
      %v1096 = vshll.u32 %v1057, 16
      %v1098 = vrot.slane %v1096, 1
      %v1099 = vor.u32 %v1094, %v1098
      %v1101 = vshll.u32 %v1092, 16
      %v1103 = vrot.slane %v1101, 1
      %v1104 = vsel %vm628, %v1099, %v1103
      %1105 = vrot.lane.b32.xlu0 %v664, 28
      %v1106 = vpop.permute.xlu0 %1105
      %1107 = vrot.lane.b32.xlu0 %v676, 28
      %v1108 = vpop.permute.xlu0 %1107
      %1109 = vrot.lane.b32.xlu0 %v688, 28
      %v1110 = vpop.permute.xlu0 %1109
      %1111 = vrot.lane.b32.xlu0 %v700, 28
      %v1112 = vpop.permute.xlu0 %1111
      %1113 = vrot.lane.b32.xlu0 %v712, 28
      %v1114 = vpop.permute.xlu0 %1113
      %1115 = vrot.lane.b32.xlu0 %v724, 28
      %v1116 = vpop.permute.xlu0 %1115
      %1117 = vrot.lane.b32.xlu0 %v736, 28
      %v1118 = vpop.permute.xlu0 %1117
      %1119 = vrot.lane.b32.xlu0 %v748, 28
      %v1120 = vpop.permute.xlu0 %1119
      %1121 = vrot.lane.b32.xlu0 %v760, 28
      %v1122 = vpop.permute.xlu0 %1121
      %1123 = vrot.lane.b32.xlu0 %v772, 28
      %v1124 = vpop.permute.xlu0 %1123
      %1125 = vrot.lane.b32.xlu0 %v784, 28
      %v1126 = vpop.permute.xlu0 %1125
      %1127 = vrot.lane.b32.xlu0 %v796, 28
      %v1128 = vpop.permute.xlu0 %1127
      %1129 = vrot.lane.b32.xlu0 %v808, 28
      %v1130 = vpop.permute.xlu0 %1129
      %1131 = vrot.lane.b32.xlu0 %v820, 28
      %v1132 = vpop.permute.xlu0 %1131
      %1133 = vrot.lane.b32.xlu0 %v985, 28
      %v1134 = vpop.permute.xlu0 %1133
      %1135 = vrot.lane.b32.xlu0 %v1104, 28
      %v1136 = vpop.permute.xlu0 %1135
      %v1137 = vrot.slane %v1057, 1
      %v1138 = vrot.slane %v1092, 1
      %v1139 = vsel %vm853, %v1137, %v1138
      %1140 = vrot.lane.b32.xlu0 %v862, 32
      %v1141 = vpop.permute.xlu0 %1140
      %1142 = vrot.lane.b32.xlu0 %v865, 32
      %v1143 = vpop.permute.xlu0 %1142
      %1144 = vrot.lane.b32.xlu0 %v868, 32
      %v1145 = vpop.permute.xlu0 %1144
      %1146 = vrot.lane.b32.xlu0 %v871, 32
      %v1147 = vpop.permute.xlu0 %1146
      %1148 = vrot.lane.b32.xlu0 %v874, 32
      %v1149 = vpop.permute.xlu0 %1148
      %1150 = vrot.lane.b32.xlu0 %v877, 32
      %v1151 = vpop.permute.xlu0 %1150
      %1152 = vrot.lane.b32.xlu0 %v880, 32
      %v1153 = vpop.permute.xlu0 %1152
      %1154 = vrot.lane.b32.xlu0 %v883, 32
      %v1155 = vpop.permute.xlu0 %1154
      %1156 = vrot.lane.b32.xlu0 %v886, 32
      %v1157 = vpop.permute.xlu0 %1156
      %1158 = vrot.lane.b32.xlu0 %v889, 32
      %v1159 = vpop.permute.xlu0 %1158
      %1160 = vrot.lane.b32.xlu0 %v892, 32
      %v1161 = vpop.permute.xlu0 %1160
      %1162 = vrot.lane.b32.xlu0 %v895, 32
      %v1163 = vpop.permute.xlu0 %1162
      %1164 = vrot.lane.b32.xlu0 %v898, 32
      %v1165 = vpop.permute.xlu0 %1164
      %1166 = vrot.lane.b32.xlu0 %v901, 32
      %v1167 = vpop.permute.xlu0 %1166
      %1168 = vrot.lane.b32.xlu0 %v1020, 32
      %v1169 = vpop.permute.xlu0 %1168
      %1170 = vrot.lane.b32.xlu0 %v1139, 32
      %v1171 = vpop.permute.xlu0 %1170
      %vm1172 = vcmask 31744
      %v1174 = vsel %vm1172, %v564, %v822
      %v1176 = vsel %vm1172, %v565, %v824
      %v1178 = vsel %vm1172, %v566, %v826
      %v1180 = vsel %vm1172, %v567, %v828
      %v1182 = vsel %vm1172, %v568, %v830
      %v1184 = vsel %vm1172, %v569, %v832
      %v1186 = vsel %vm1172, %v570, %v834
      %v1188 = vsel %vm1172, %v571, %v836
      %v1190 = vsel %vm1172, %v572, %v838
      %v1192 = vsel %vm1172, %v573, %v840
      %v1194 = vsel %vm1172, %v574, %v842
      %v1196 = vsel %vm1172, %v575, %v844
      %v1198 = vsel %vm1172, %v576, %v846
      %v1200 = vsel %vm1172, %v577, %v848
      %v1202 = vsel %vm1172, %v578, %v850
      %v1204 = vsel %vm1172, %v579, %v852
      %vm1205 = vcmask 64512
      %v1207 = vsel %vm1205, %v1174, %v903
      %v1209 = vsel %vm1205, %v1176, %v905
      %v1211 = vsel %vm1205, %v1178, %v907
      %v1213 = vsel %vm1205, %v1180, %v909
      %v1215 = vsel %vm1205, %v1182, %v911
      %v1217 = vsel %vm1205, %v1184, %v913
      %v1219 = vsel %vm1205, %v1186, %v915
      %v1221 = vsel %vm1205, %v1188, %v917
      %v1223 = vsel %vm1205, %v1190, %v919
      %v1225 = vsel %vm1205, %v1192, %v921
      %v1227 = vsel %vm1205, %v1194, %v923
      %v1229 = vsel %vm1205, %v1196, %v925
      %v1231 = vsel %vm1205, %v1198, %v927
      %v1233 = vsel %vm1205, %v1200, %v929
      %v1235 = vsel %vm1205, %v1202, %v931
      %v1237 = vsel %vm1205, %v1204, %v933
      %vm1238 = vcmask 97280
      %v1240 = vsel %vm1238, %v1207, %v940
      %v1242 = vsel %vm1238, %v1209, %v942
      %v1244 = vsel %vm1238, %v1211, %v944
      %v1246 = vsel %vm1238, %v1213, %v946
      %v1248 = vsel %vm1238, %v1215, %v948
      %v1250 = vsel %vm1238, %v1217, %v950
      %v1252 = vsel %vm1238, %v1219, %v952
      %v1254 = vsel %vm1238, %v1221, %v954
      %v1256 = vsel %vm1238, %v1223, %v956
      %v1258 = vsel %vm1238, %v1225, %v958
      %v1260 = vsel %vm1238, %v1227, %v960
      %v1262 = vsel %vm1238, %v1229, %v962
      %v1264 = vsel %vm1238, %v1231, %v964
      %v1266 = vsel %vm1238, %v1233, %v966
      %v1268 = vsel %vm1238, %v1235, %v968
      %v1270 = vsel %vm1238, %v1237, %v970
      %vm1271 = vcmask 130048
      %v1273 = vsel %vm1271, %v1240, %v987
      %v1275 = vsel %vm1271, %v1242, %v989
      %v1277 = vsel %vm1271, %v1244, %v991
      %v1279 = vsel %vm1271, %v1246, %v993
      %v1281 = vsel %vm1271, %v1248, %v995
      %v1283 = vsel %vm1271, %v1250, %v997
      %v1285 = vsel %vm1271, %v1252, %v999
      %v1287 = vsel %vm1271, %v1254, %v1001
      %v1289 = vsel %vm1271, %v1256, %v1003
      %v1291 = vsel %vm1271, %v1258, %v1005
      %v1293 = vsel %vm1271, %v1260, %v1007
      %v1295 = vsel %vm1271, %v1262, %v1009
      %v1297 = vsel %vm1271, %v1264, %v1011
      %v1299 = vsel %vm1271, %v1266, %v1013
      %v1301 = vsel %vm1271, %v1268, %v1015
      %v1303 = vsel %vm1271, %v1270, %v1017
      %vm1304 = vcmask 162816
      %v1306 = vsel %vm1304, %v1273, %v1022
      %v1308 = vsel %vm1304, %v1275, %v1024
      %v1310 = vsel %vm1304, %v1277, %v1026
      %v1312 = vsel %vm1304, %v1279, %v1028
      %v1314 = vsel %vm1304, %v1281, %v1030
      %v1316 = vsel %vm1304, %v1283, %v1032
      %v1318 = vsel %vm1304, %v1285, %v1034
      %v1320 = vsel %vm1304, %v1287, %v1036
      %v1322 = vsel %vm1304, %v1289, %v1038
      %v1324 = vsel %vm1304, %v1291, %v1040
      %v1326 = vsel %vm1304, %v1293, %v1042
      %v1328 = vsel %vm1304, %v1295, %v1044
      %v1330 = vsel %vm1304, %v1297, %v1046
      %v1332 = vsel %vm1304, %v1299, %v1048
      %v1334 = vsel %vm1304, %v1301, %v1050
      %v1336 = vsel %vm1304, %v1303, %v1052
      %vm1337 = vcmask 195584
      %v1339 = vsel %vm1337, %v1306, %v1059
      %v1341 = vsel %vm1337, %v1308, %v1061
      %v1343 = vsel %vm1337, %v1310, %v1063
      %v1345 = vsel %vm1337, %v1312, %v1065
      %v1347 = vsel %vm1337, %v1314, %v1067
      %v1349 = vsel %vm1337, %v1316, %v1069
      %v1351 = vsel %vm1337, %v1318, %v1071
      %v1353 = vsel %vm1337, %v1320, %v1073
      %v1355 = vsel %vm1337, %v1322, %v1075
      %v1357 = vsel %vm1337, %v1324, %v1077
      %v1359 = vsel %vm1337, %v1326, %v1079
      %v1361 = vsel %vm1337, %v1328, %v1081
      %v1363 = vsel %vm1337, %v1330, %v1083
      %v1365 = vsel %vm1337, %v1332, %v1085
      %v1367 = vsel %vm1337, %v1334, %v1087
      %v1369 = vsel %vm1337, %v1336, %v1089
      %vm1370 = vcmask 228352
      %v1372 = vsel %vm1370, %v1339, %v1106
      %v1374 = vsel %vm1370, %v1341, %v1108
      %v1376 = vsel %vm1370, %v1343, %v1110
      %v1378 = vsel %vm1370, %v1345, %v1112
      %v1380 = vsel %vm1370, %v1347, %v1114
      %v1382 = vsel %vm1370, %v1349, %v1116
      %v1384 = vsel %vm1370, %v1351, %v1118
      %v1386 = vsel %vm1370, %v1353, %v1120
      %v1388 = vsel %vm1370, %v1355, %v1122
      %v1390 = vsel %vm1370, %v1357, %v1124
      %v1392 = vsel %vm1370, %v1359, %v1126
      %v1394 = vsel %vm1370, %v1361, %v1128
      %v1396 = vsel %vm1370, %v1363, %v1130
      %v1398 = vsel %vm1370, %v1365, %v1132
      %v1400 = vsel %vm1370, %v1367, %v1134
      %v1402 = vsel %vm1370, %v1369, %v1136
      %vm1403 = vcmask 261120
      %v1405 = vsel %vm1403, %v1372, %v1141
      %v1407 = vsel %vm1403, %v1374, %v1143
      %v1409 = vsel %vm1403, %v1376, %v1145
      %v1411 = vsel %vm1403, %v1378, %v1147
      %v1413 = vsel %vm1403, %v1380, %v1149
      %v1415 = vsel %vm1403, %v1382, %v1151
      %v1417 = vsel %vm1403, %v1384, %v1153
      %v1419 = vsel %vm1403, %v1386, %v1155
      %v1421 = vsel %vm1403, %v1388, %v1157
      %v1423 = vsel %vm1403, %v1390, %v1159
      %v1425 = vsel %vm1403, %v1392, %v1161
      %v1427 = vsel %vm1403, %v1394, %v1163
      %v1429 = vsel %vm1403, %v1396, %v1165
      %v1431 = vsel %vm1403, %v1398, %v1167
      %v1433 = vsel %vm1403, %v1400, %v1169
      %v1435 = vsel %vm1403, %v1402, %v1171
      %v1436 = vld [vmem:[%s1] sm:$0xf]
      %v1437 = vld [vmem:[%s1 + $0x4] sm:$0xf]
      %v1438 = vld [vmem:[%s1 + $0x8] sm:$0xf]
      %v1439 = vld [vmem:[%s1 + $0xc] sm:$0xf]
      %v1440 = vld [vmem:[%s1 + $0x10] sm:$0x3]
      %v1441 = vld [vmem:[%s2] sm:$0x1]
      %v1443 = vlaneseq
      %v1444 = vshrl.u32 %v1443, 7
      %v1445 = vsub.s32 0, %v1444
      %v1446 = vrot.slane %v1441, %v1445
      %v1453 = vunpack.c.l.b16 %v1436
      %v1454 = vunpack.c.l.b16 %v1437
      %v1455 = vunpack.c.l.b16 %v1438
      %v1456 = vunpack.c.l.b16 %v1439
      %v1457 = vunpack.c.l.b16 %v1440
      %v1458 = vpack.c.b16 %v1454, %v1453
      %v1459 = vpack.c.b16 %v1456, %v1455
      %v1460 = vpack.c.b16 %v1457, %v1457
      %vm1463 = vcmask 293888
      %v1464 = vsel %vm1463, %v1405, 0
      %v1466 = vsel %vm1463, %v1407, 0
      %v1468 = vsel %vm1463, %v1409, 0
      %v1470 = vsel %vm1463, %v1411, 0
      %v1472 = vsel %vm1463, %v1413, 0
      %v1474 = vsel %vm1463, %v1415, 0
      %v1476 = vsel %vm1463, %v1417, 0
      %v1478 = vsel %vm1463, %v1419, 0
      %v1480 = vsel %vm1463, %v1421, 0
      %v1482 = vsel %vm1463, %v1423, 0
      %v1484 = vsel %vm1463, %v1425, 0
      %v1486 = vsel %vm1463, %v1427, 0
      %v1488 = vsel %vm1463, %v1429, 0
      %v1490 = vsel %vm1463, %v1431, 0
      %v1492 = vsel %vm1463, %v1433, 0
      %v1494 = vsel %vm1463, %v1435, 0
      %vm1496 = vcmask 1041408
      %v1498 = vsel %vm1496, %v1460, 0
      %1500 = vmatprep.subr.bf16.mxu0 0
      %1501 = vmatpush1.bf16.msra.mxu0 %v1458
      %1502 = vmatprep.subr.bf16.mxu0 0
      %1503 = vmatpush1.bf16.msra.mxu0 %v1459
      %1504 = vmatprep.subr.bf16.mxu0 0
      %1505 = vmatpush1.bf16.msra.mxu0 %v1498
      %1506 = vmatprep.subr.bf16.mxu0 0
      %1507 = vmatpush1.bf16.msra.mxu0 0
      %1508 = vmatprep.subr.bf16.mxu0 0
      %1509 = vmatpush1.bf16.msra.mxu0 0
      %1510 = vmatprep.subr.bf16.mxu0 0
      %1511 = vmatpush1.bf16.msra.mxu0 0
      %1512 = vmatprep.subr.bf16.mxu0 0
      %1513 = vmatpush1.bf16.msra.mxu0 0
      %1514 = vmatprep.subr.bf16.mxu0 0
      %1515 = vmatpush1.bf16.msra.mxu0 0
      %1516 = vmatprep.subr.bf16.mxu0 0
      %1517 = vmatpush1.bf16.msra.mxu0 0
      %1518 = vmatprep.subr.bf16.mxu0 0
      %1519 = vmatpush1.bf16.msra.mxu0 0
      %1520 = vmatprep.subr.bf16.mxu0 0
      %1521 = vmatpush1.bf16.msra.mxu0 0
      %1522 = vmatprep.subr.bf16.mxu0 0
      %1523 = vmatpush1.bf16.msra.mxu0 0
      %1524 = vmatprep.subr.bf16.mxu0 0
      %1525 = vmatpush1.bf16.msra.mxu0 0
      %1526 = vmatprep.subr.bf16.mxu0 0
      %1527 = vmatpush1.bf16.msra.mxu0 0
      %1528 = vmatprep.subr.bf16.mxu0 0
      %1529 = vmatpush1.bf16.msra.mxu0 0
      %1530 = vmatprep.subr.bf16.mxu0 0
      %1531 = vmatpush1.bf16.msra.mxu0 0
      %1532 = vmatprep.mubr.bf16.mxu0 0
      %1533 = vmatmul.mubr.bf16.gmra.mrb[0].mxu0 %v1464
      %v1534 = vpop.f32.mrb[0].mxu0
      %v1535 = vadd.f32 %v1446, %v1534
      %v1536 = vpop.f32.mrb[0].mxu0
      %v1537 = vpop.f32.mrb[0].mxu0
      %v1538 = vadd.f32 %v1446, %v1537
      %v1539 = vpop.f32.mrb[0].mxu0
      %1540 = vmatprep.mubr.bf16.mxu0 0
      %1541 = vmatmul.mubr.bf16.gmra.mrb[0].mxu0 %v1466
      %v1542 = vpop.f32.mrb[0].mxu0
      %v1543 = vadd.f32 %v1446, %v1542
      %v1544 = vpop.f32.mrb[0].mxu0
      %v1545 = vpop.f32.mrb[0].mxu0
      %v1546 = vadd.f32 %v1446, %v1545
      %v1547 = vpop.f32.mrb[0].mxu0
      %1548 = vmatprep.mubr.bf16.mxu0 0
      %1549 = vmatmul.mubr.bf16.gmra.mrb[0].mxu0 %v1468
      %v1550 = vpop.f32.mrb[0].mxu0
      %v1551 = vadd.f32 %v1446, %v1550
      %v1552 = vpop.f32.mrb[0].mxu0
      %v1553 = vpop.f32.mrb[0].mxu0
      %v1554 = vadd.f32 %v1446, %v1553
      %v1555 = vpop.f32.mrb[0].mxu0
      %1556 = vmatprep.mubr.bf16.mxu0 0
      %1557 = vmatmul.mubr.bf16.gmra.mrb[0].mxu0 %v1470
      %v1558 = vpop.f32.mrb[0].mxu0
      %v1559 = vadd.f32 %v1446, %v1558
      %v1560 = vpop.f32.mrb[0].mxu0
      %v1561 = vpop.f32.mrb[0].mxu0
      %v1562 = vadd.f32 %v1446, %v1561
      %v1563 = vpop.f32.mrb[0].mxu0
      %1564 = vmatprep.mubr.bf16.mxu0 0
      %1565 = vmatmul.mubr.bf16.gmra.mrb[0].mxu0 %v1472
      %v1566 = vpop.f32.mrb[0].mxu0
      %v1567 = vadd.f32 %v1446, %v1566
      %v1568 = vpop.f32.mrb[0].mxu0
      %v1569 = vpop.f32.mrb[0].mxu0
      %v1570 = vadd.f32 %v1446, %v1569
      %v1571 = vpop.f32.mrb[0].mxu0
      %1572 = vmatprep.mubr.bf16.mxu0 0
      %1573 = vmatmul.mubr.bf16.gmra.mrb[0].mxu0 %v1474
      %v1574 = vpop.f32.mrb[0].mxu0
      %v1575 = vadd.f32 %v1446, %v1574
      %v1576 = vpop.f32.mrb[0].mxu0
      %v1577 = vpop.f32.mrb[0].mxu0
      %v1578 = vadd.f32 %v1446, %v1577
      %v1579 = vpop.f32.mrb[0].mxu0
      %1580 = vmatprep.mubr.bf16.mxu0 0
      %1581 = vmatmul.mubr.bf16.gmra.mrb[0].mxu0 %v1476
      %v1582 = vpop.f32.mrb[0].mxu0
      %v1583 = vadd.f32 %v1446, %v1582
      %v1584 = vpop.f32.mrb[0].mxu0
      %v1585 = vpop.f32.mrb[0].mxu0
      %v1586 = vadd.f32 %v1446, %v1585
      %v1587 = vpop.f32.mrb[0].mxu0
      %1588 = vmatprep.mubr.bf16.mxu0 0
      %1589 = vmatmul.mubr.bf16.gmra.mrb[0].mxu0 %v1478
      %v1590 = vpop.f32.mrb[0].mxu0
      %v1591 = vadd.f32 %v1446, %v1590
      %v1592 = vpop.f32.mrb[0].mxu0
      %v1593 = vpop.f32.mrb[0].mxu0
      %v1594 = vadd.f32 %v1446, %v1593
      %v1595 = vpop.f32.mrb[0].mxu0
      %1596 = vmatprep.mubr.bf16.mxu0 0
      %1597 = vmatmul.mubr.bf16.gmra.mrb[0].mxu0 %v1480
      %v1598 = vpop.f32.mrb[0].mxu0
      %v1599 = vadd.f32 %v1446, %v1598
      %v1600 = vpop.f32.mrb[0].mxu0
      %v1601 = vpop.f32.mrb[0].mxu0
      %v1602 = vadd.f32 %v1446, %v1601
      %v1603 = vpop.f32.mrb[0].mxu0
      %1604 = vmatprep.mubr.bf16.mxu0 0
      %1605 = vmatmul.mubr.bf16.gmra.mrb[0].mxu0 %v1482
      %v1606 = vpop.f32.mrb[0].mxu0
      %v1607 = vadd.f32 %v1446, %v1606
      %v1608 = vpop.f32.mrb[0].mxu0
      %v1609 = vpop.f32.mrb[0].mxu0
      %v1610 = vadd.f32 %v1446, %v1609
      %v1611 = vpop.f32.mrb[0].mxu0
      %1612 = vmatprep.mubr.bf16.mxu0 0
      %1613 = vmatmul.mubr.bf16.gmra.mrb[0].mxu0 %v1484
      %v1614 = vpop.f32.mrb[0].mxu0
      %v1615 = vadd.f32 %v1446, %v1614
      %v1616 = vpop.f32.mrb[0].mxu0
      %v1617 = vpop.f32.mrb[0].mxu0
      %v1618 = vadd.f32 %v1446, %v1617
      %v1619 = vpop.f32.mrb[0].mxu0
      %1620 = vmatprep.mubr.bf16.mxu0 0
      %1621 = vmatmul.mubr.bf16.gmra.mrb[0].mxu0 %v1486
      %v1622 = vpop.f32.mrb[0].mxu0
      %v1623 = vadd.f32 %v1446, %v1622
      %v1624 = vpop.f32.mrb[0].mxu0
      %v1625 = vpop.f32.mrb[0].mxu0
      %v1626 = vadd.f32 %v1446, %v1625
      %v1627 = vpop.f32.mrb[0].mxu0
      %1628 = vmatprep.mubr.bf16.mxu0 0
      %1629 = vmatmul.mubr.bf16.gmra.mrb[0].mxu0 %v1488
      %v1630 = vpop.f32.mrb[0].mxu0
      %v1631 = vadd.f32 %v1446, %v1630
      %v1632 = vpop.f32.mrb[0].mxu0
      %v1633 = vpop.f32.mrb[0].mxu0
      %v1634 = vadd.f32 %v1446, %v1633
      %v1635 = vpop.f32.mrb[0].mxu0
      %1636 = vmatprep.mubr.bf16.mxu0 0
      %1637 = vmatmul.mubr.bf16.gmra.mrb[0].mxu0 %v1490
      %v1638 = vpop.f32.mrb[0].mxu0
      %v1639 = vadd.f32 %v1446, %v1638
      %v1640 = vpop.f32.mrb[0].mxu0
      %v1641 = vpop.f32.mrb[0].mxu0
      %v1642 = vadd.f32 %v1446, %v1641
      %v1643 = vpop.f32.mrb[0].mxu0
      %1644 = vmatprep.mubr.bf16.mxu0 0
      %1645 = vmatmul.mubr.bf16.gmra.mrb[0].mxu0 %v1492
      %v1646 = vpop.f32.mrb[0].mxu0
      %v1647 = vadd.f32 %v1446, %v1646
      %v1648 = vpop.f32.mrb[0].mxu0
      %v1649 = vpop.f32.mrb[0].mxu0
      %v1650 = vadd.f32 %v1446, %v1649
      %v1651 = vpop.f32.mrb[0].mxu0
      %1652 = vmatprep.mubr.bf16.mxu0 0
      %1653 = vmatmul.mubr.bf16.gmra.mrb[0].mxu0 %v1494
      %v1654 = vpop.f32.mrb[0].mxu0
      %v1655 = vadd.f32 %v1446, %v1654
      %v1656 = vpop.f32.mrb[0].mxu0
      %v1657 = vpop.f32.mrb[0].mxu0
      %v1658 = vadd.f32 %v1446, %v1657
      %v1659 = vpop.f32.mrb[0].mxu0
      %1660 = vdwg.mxu0
      %v1661 = vmax.f32 %v1535, 0.0
      %v1662 = vmax.f32 %v1538, 0.0
      %v1663 = vmax.f32 %v1543, 0.0
      %v1664 = vmax.f32 %v1546, 0.0
      %v1665 = vmax.f32 %v1551, 0.0
      %v1666 = vmax.f32 %v1554, 0.0
      %v1667 = vmax.f32 %v1559, 0.0
      %v1668 = vmax.f32 %v1562, 0.0
      %v1669 = vmax.f32 %v1567, 0.0
      %v1670 = vmax.f32 %v1570, 0.0
      %v1671 = vmax.f32 %v1575, 0.0
      %v1672 = vmax.f32 %v1578, 0.0
      %v1673 = vmax.f32 %v1583, 0.0
      %v1674 = vmax.f32 %v1586, 0.0
      %v1675 = vmax.f32 %v1591, 0.0
      %v1676 = vmax.f32 %v1594, 0.0
      %v1677 = vmax.f32 %v1599, 0.0
      %v1678 = vmax.f32 %v1602, 0.0
      %v1679 = vmax.f32 %v1607, 0.0
      %v1680 = vmax.f32 %v1610, 0.0
      %v1681 = vmax.f32 %v1615, 0.0
      %v1682 = vmax.f32 %v1618, 0.0
      %v1683 = vmax.f32 %v1623, 0.0
      %v1684 = vmax.f32 %v1626, 0.0
      %v1685 = vmax.f32 %v1631, 0.0
      %v1686 = vmax.f32 %v1634, 0.0
      %v1687 = vmax.f32 %v1639, 0.0
      %v1688 = vmax.f32 %v1642, 0.0
      %v1689 = vmax.f32 %v1647, 0.0
      %v1690 = vmax.f32 %v1650, 0.0
      %v1691 = vmax.f32 %v1655, 0.0
      %v1692 = vmax.f32 %v1658, 0.0
      %v1693 = vpack.c.bf16 %v1662, %v1661
      %v1694 = vpack.c.bf16 %v1664, %v1663
      %v1695 = vpack.c.bf16 %v1666, %v1665
      %v1696 = vpack.c.bf16 %v1668, %v1667
      %v1697 = vpack.c.bf16 %v1670, %v1669
      %v1698 = vpack.c.bf16 %v1672, %v1671
      %v1699 = vpack.c.bf16 %v1674, %v1673
      %v1700 = vpack.c.bf16 %v1676, %v1675
      %v1701 = vpack.c.bf16 %v1678, %v1677
      %v1702 = vpack.c.bf16 %v1680, %v1679
      %v1703 = vpack.c.bf16 %v1682, %v1681
      %v1704 = vpack.c.bf16 %v1684, %v1683
      %v1705 = vpack.c.bf16 %v1686, %v1685
      %v1706 = vpack.c.bf16 %v1688, %v1687
      %v1707 = vpack.c.bf16 %v1690, %v1689
      %v1708 = vpack.c.bf16 %v1692, %v1691
      %v1725 = vunpack.c.l.b16 %v1693
      %v1726 = vunpack.c.h.b16 %v1693
      %v1727 = vunpack.c.l.b16 %v1694
      %v1728 = vunpack.c.h.b16 %v1694
      %v1729 = vunpack.c.l.b16 %v1695
      %v1730 = vunpack.c.h.b16 %v1695
      %v1731 = vunpack.c.l.b16 %v1696
      %v1732 = vunpack.c.h.b16 %v1696
      %v1733 = vunpack.c.l.b16 %v1697
      %v1734 = vunpack.c.h.b16 %v1697
      %v1735 = vunpack.c.l.b16 %v1698
      %v1736 = vunpack.c.h.b16 %v1698
      %v1737 = vunpack.c.l.b16 %v1699
      %v1738 = vunpack.c.h.b16 %v1699
      %v1739 = vunpack.c.l.b16 %v1700
      %v1740 = vunpack.c.h.b16 %v1700
      %v1741 = vunpack.c.l.b16 %v1701
      %v1742 = vunpack.c.h.b16 %v1701
      %v1743 = vunpack.c.l.b16 %v1702
      %v1744 = vunpack.c.h.b16 %v1702
      %v1745 = vunpack.c.l.b16 %v1703
      %v1746 = vunpack.c.h.b16 %v1703
      %v1747 = vunpack.c.l.b16 %v1704
      %v1748 = vunpack.c.h.b16 %v1704
      %v1749 = vunpack.c.l.b16 %v1705
      %v1750 = vunpack.c.h.b16 %v1705
      %v1751 = vunpack.c.l.b16 %v1706
      %v1752 = vunpack.c.h.b16 %v1706
      %v1753 = vunpack.c.l.b16 %v1707
      %v1754 = vunpack.c.h.b16 %v1707
      %v1755 = vunpack.c.l.b16 %v1708
      %v1756 = vunpack.c.h.b16 %v1708
      %v1757 = vpack.c.b16 %v1725, %v1725
      %v1758 = vpack.c.b16 %v1726, %v1726
      %v1759 = vpack.c.b16 %v1727, %v1727
      %v1760 = vpack.c.b16 %v1728, %v1728
      %v1761 = vpack.c.b16 %v1729, %v1729
      %v1762 = vpack.c.b16 %v1730, %v1730
      %v1763 = vpack.c.b16 %v1731, %v1731
      %v1764 = vpack.c.b16 %v1732, %v1732
      %v1765 = vpack.c.b16 %v1733, %v1733
      %v1766 = vpack.c.b16 %v1734, %v1734
      %v1767 = vpack.c.b16 %v1735, %v1735
      %v1768 = vpack.c.b16 %v1736, %v1736
      %v1769 = vpack.c.b16 %v1737, %v1737
      %v1770 = vpack.c.b16 %v1738, %v1738
      %v1771 = vpack.c.b16 %v1739, %v1739
      %v1772 = vpack.c.b16 %v1740, %v1740
      %v1773 = vpack.c.b16 %v1741, %v1741
      %v1774 = vpack.c.b16 %v1742, %v1742
      %v1775 = vpack.c.b16 %v1743, %v1743
      %v1776 = vpack.c.b16 %v1744, %v1744
      %v1777 = vpack.c.b16 %v1745, %v1745
      %v1778 = vpack.c.b16 %v1746, %v1746
      %v1779 = vpack.c.b16 %v1747, %v1747
      %v1780 = vpack.c.b16 %v1748, %v1748
      %v1781 = vpack.c.b16 %v1749, %v1749
      %v1782 = vpack.c.b16 %v1750, %v1750
      %v1783 = vpack.c.b16 %v1751, %v1751
      %v1784 = vpack.c.b16 %v1752, %v1752
      %v1785 = vpack.c.b16 %v1753, %v1753
      %v1786 = vpack.c.b16 %v1754, %v1754
      %v1787 = vpack.c.b16 %v1755, %v1755
      %v1788 = vpack.c.b16 %v1756, %v1756
      %vm1789 = vsmask.f32 256
      %vm1790 = vsmask.f32 4368
      %vm1791 = vmor %vm1789, %vm1790
      %v1793 = vshrl.u32 %v1757, 16
      %v1795 = vrot.slane %v1793, 7
      %v1796 = vshll.u32 %v1757, 16
      %v1798 = vor.u32 %v1795, %v1796
      %v1799 = vrot.slane %v1795, 4
      %v1801 = vshrl.u32 %v1758, 16
      %v1803 = vrot.slane %v1801, 7
      %v1804 = vshll.u32 %v1758, 16
      %v1806 = vor.u32 %v1803, %v1804
      %v1807 = vsel %vm1791, %v1799, %v1806
      %v1808 = vrot.slane %v1803, 4
      %v1810 = vshrl.u32 %v1759, 16
      %v1812 = vrot.slane %v1810, 7
      %v1813 = vshll.u32 %v1759, 16
      %v1815 = vor.u32 %v1812, %v1813
      %v1816 = vrot.slane %v1812, 4
      %v1818 = vshrl.u32 %v1760, 16
      %v1820 = vrot.slane %v1818, 7
      %v1821 = vshll.u32 %v1760, 16
      %v1823 = vor.u32 %v1820, %v1821
      %v1824 = vsel %vm1791, %v1816, %v1823
      %v1825 = vrot.slane %v1820, 4
      %v1827 = vshrl.u32 %v1761, 16
      %v1829 = vrot.slane %v1827, 7
      %v1830 = vshll.u32 %v1761, 16
      %v1832 = vor.u32 %v1829, %v1830
      %v1833 = vrot.slane %v1829, 4
      %v1835 = vshrl.u32 %v1762, 16
      %v1837 = vrot.slane %v1835, 7
      %v1838 = vshll.u32 %v1762, 16
      %v1840 = vor.u32 %v1837, %v1838
      %v1841 = vsel %vm1791, %v1833, %v1840
      %v1842 = vrot.slane %v1837, 4
      %v1844 = vshrl.u32 %v1763, 16
      %v1846 = vrot.slane %v1844, 7
      %v1847 = vshll.u32 %v1763, 16
      %v1849 = vor.u32 %v1846, %v1847
      %v1850 = vrot.slane %v1846, 4
      %v1852 = vshrl.u32 %v1764, 16
      %v1854 = vrot.slane %v1852, 7
      %v1855 = vshll.u32 %v1764, 16
      %v1857 = vor.u32 %v1854, %v1855
      %v1858 = vsel %vm1791, %v1850, %v1857
      %v1859 = vrot.slane %v1854, 4
      %v1861 = vshrl.u32 %v1765, 16
      %v1863 = vrot.slane %v1861, 7
      %v1864 = vshll.u32 %v1765, 16
      %v1866 = vor.u32 %v1863, %v1864
      %v1867 = vrot.slane %v1863, 4
      %v1869 = vshrl.u32 %v1766, 16
      %v1871 = vrot.slane %v1869, 7
      %v1872 = vshll.u32 %v1766, 16
      %v1874 = vor.u32 %v1871, %v1872
      %v1875 = vsel %vm1791, %v1867, %v1874
      %v1876 = vrot.slane %v1871, 4
      %v1878 = vshrl.u32 %v1767, 16
      %v1880 = vrot.slane %v1878, 7
      %v1881 = vshll.u32 %v1767, 16
      %v1883 = vor.u32 %v1880, %v1881
      %v1884 = vrot.slane %v1880, 4
      %v1886 = vshrl.u32 %v1768, 16
      %v1888 = vrot.slane %v1886, 7
      %v1889 = vshll.u32 %v1768, 16
      %v1891 = vor.u32 %v1888, %v1889
      %v1892 = vsel %vm1791, %v1884, %v1891
      %v1893 = vrot.slane %v1888, 4
      %v1895 = vshrl.u32 %v1769, 16
      %v1897 = vrot.slane %v1895, 7
      %v1898 = vshll.u32 %v1769, 16
      %v1900 = vor.u32 %v1897, %v1898
      %v1901 = vrot.slane %v1897, 4
      %v1903 = vshrl.u32 %v1770, 16
      %v1905 = vrot.slane %v1903, 7
      %v1906 = vshll.u32 %v1770, 16
      %v1908 = vor.u32 %v1905, %v1906
      %v1909 = vsel %vm1791, %v1901, %v1908
      %v1910 = vrot.slane %v1905, 4
      %v1912 = vshrl.u32 %v1771, 16
      %v1914 = vrot.slane %v1912, 7
      %v1915 = vshll.u32 %v1771, 16
      %v1917 = vor.u32 %v1914, %v1915
      %v1918 = vrot.slane %v1914, 4
      %v1920 = vshrl.u32 %v1772, 16
      %v1922 = vrot.slane %v1920, 7
      %v1923 = vshll.u32 %v1772, 16
      %v1925 = vor.u32 %v1922, %v1923
      %v1926 = vsel %vm1791, %v1918, %v1925
      %v1927 = vrot.slane %v1922, 4
      %v1929 = vshrl.u32 %v1773, 16
      %v1931 = vrot.slane %v1929, 7
      %v1932 = vshll.u32 %v1773, 16
      %v1934 = vor.u32 %v1931, %v1932
      %v1935 = vrot.slane %v1931, 4
      %v1937 = vshrl.u32 %v1774, 16
      %v1939 = vrot.slane %v1937, 7
      %v1940 = vshll.u32 %v1774, 16
      %v1942 = vor.u32 %v1939, %v1940
      %v1943 = vsel %vm1791, %v1935, %v1942
      %v1944 = vrot.slane %v1939, 4
      %v1946 = vshrl.u32 %v1775, 16
      %v1948 = vrot.slane %v1946, 7
      %v1949 = vshll.u32 %v1775, 16
      %v1951 = vor.u32 %v1948, %v1949
      %v1952 = vrot.slane %v1948, 4
      %v1954 = vshrl.u32 %v1776, 16
      %v1956 = vrot.slane %v1954, 7
      %v1957 = vshll.u32 %v1776, 16
      %v1959 = vor.u32 %v1956, %v1957
      %v1960 = vsel %vm1791, %v1952, %v1959
      %v1961 = vrot.slane %v1956, 4
      %v1963 = vshrl.u32 %v1777, 16
      %v1965 = vrot.slane %v1963, 7
      %v1966 = vshll.u32 %v1777, 16
      %v1968 = vor.u32 %v1965, %v1966
      %v1969 = vrot.slane %v1965, 4
      %v1971 = vshrl.u32 %v1778, 16
      %v1973 = vrot.slane %v1971, 7
      %v1974 = vshll.u32 %v1778, 16
      %v1976 = vor.u32 %v1973, %v1974
      %v1977 = vsel %vm1791, %v1969, %v1976
      %v1978 = vrot.slane %v1973, 4
      %v1980 = vshrl.u32 %v1779, 16
      %v1982 = vrot.slane %v1980, 7
      %v1983 = vshll.u32 %v1779, 16
      %v1985 = vor.u32 %v1982, %v1983
      %v1986 = vrot.slane %v1982, 4
      %v1988 = vshrl.u32 %v1780, 16
      %v1990 = vrot.slane %v1988, 7
      %v1991 = vshll.u32 %v1780, 16
      %v1993 = vor.u32 %v1990, %v1991
      %v1994 = vsel %vm1791, %v1986, %v1993
      %v1995 = vrot.slane %v1990, 4
      %v1997 = vshrl.u32 %v1781, 16
      %v1999 = vrot.slane %v1997, 7
      %v2000 = vshll.u32 %v1781, 16
      %v2002 = vor.u32 %v1999, %v2000
      %v2003 = vrot.slane %v1999, 4
      %v2005 = vshrl.u32 %v1782, 16
      %v2007 = vrot.slane %v2005, 7
      %v2008 = vshll.u32 %v1782, 16
      %v2010 = vor.u32 %v2007, %v2008
      %v2011 = vsel %vm1791, %v2003, %v2010
      %v2012 = vrot.slane %v2007, 4
      %v2014 = vshrl.u32 %v1783, 16
      %v2016 = vrot.slane %v2014, 7
      %v2017 = vshll.u32 %v1783, 16
      %v2019 = vor.u32 %v2016, %v2017
      %v2020 = vrot.slane %v2016, 4
      %v2022 = vshrl.u32 %v1784, 16
      %v2024 = vrot.slane %v2022, 7
      %v2025 = vshll.u32 %v1784, 16
      %v2027 = vor.u32 %v2024, %v2025
      %v2028 = vsel %vm1791, %v2020, %v2027
      %v2029 = vrot.slane %v2024, 4
      %v2031 = vshrl.u32 %v1785, 16
      %v2033 = vrot.slane %v2031, 7
      %v2034 = vshll.u32 %v1785, 16
      %v2036 = vor.u32 %v2033, %v2034
      %v2037 = vrot.slane %v2033, 4
      %v2039 = vshrl.u32 %v1786, 16
      %v2041 = vrot.slane %v2039, 7
      %v2042 = vshll.u32 %v1786, 16
      %v2044 = vor.u32 %v2041, %v2042
      %v2045 = vsel %vm1791, %v2037, %v2044
      %v2046 = vrot.slane %v2041, 4
      %v2048 = vshrl.u32 %v1787, 16
      %v2050 = vrot.slane %v2048, 7
      %v2051 = vshll.u32 %v1787, 16
      %v2053 = vor.u32 %v2050, %v2051
      %v2054 = vrot.slane %v2050, 4
      %v2056 = vshrl.u32 %v1788, 16
      %v2058 = vrot.slane %v2056, 7
      %v2059 = vshll.u32 %v1788, 16
      %v2061 = vor.u32 %v2058, %v2059
      %v2062 = vsel %vm1791, %v2054, %v2061
      %v2063 = vrot.slane %v2058, 4
      %s2112 = scalar_lea.vmem [#allocation2], 12
      %vm2113 = vcmask 257024
      %vm2114 = vsmask.f32 7938
      %vm2115 = vmand %vm2113, %vm2114
      %v2116 = vld [vmem:[%s2112] sm:$0xf]
      %v2117 = vsel %vm2115, %v1798, %v2116
      %2118 = vst [vmem:[%s2112] sm:$0xf] %v2117
      %2119 = vst.msk [vmem:[%s2112 + $0x4] sm:$0xf] %vm334, %v1807
      %vm2120 = vcmask 253952
      %vm2121 = vmand %vm2120, %vm1789
      %v2122 = vld [vmem:[%s2112 + $0x8] sm:$0x1]
      %v2123 = vsel %vm2121, %v1808, %v2122
      %2124 = vst [vmem:[%s2112 + $0x8] sm:$0x1] %v2123
      %v2125 = vld [vmem:[%s2112 + $0xc] sm:$0xf]
      %v2126 = vsel %vm2115, %v1815, %v2125
      %2127 = vst [vmem:[%s2112 + $0xc] sm:$0xf] %v2126
      %2128 = vst.msk [vmem:[%s2112 + $0x10] sm:$0xf] %vm334, %v1824
      %v2129 = vld [vmem:[%s2112 + $0x14] sm:$0x1]
      %v2130 = vsel %vm2121, %v1825, %v2129
      %2131 = vst [vmem:[%s2112 + $0x14] sm:$0x1] %v2130
      %v2132 = vld [vmem:[%s2112 + $0x18] sm:$0xf]
      %v2133 = vsel %vm2115, %v1832, %v2132
      %2134 = vst [vmem:[%s2112 + $0x18] sm:$0xf] %v2133
      %2135 = vst.msk [vmem:[%s2112 + $0x1c] sm:$0xf] %vm334, %v1841
      %v2136 = vld [vmem:[%s2112 + $0x20] sm:$0x1]
      %v2137 = vsel %vm2121, %v1842, %v2136
      %2138 = vst [vmem:[%s2112 + $0x20] sm:$0x1] %v2137
      %v2139 = vld [vmem:[%s2112 + $0x24] sm:$0xf]
      %v2140 = vsel %vm2115, %v1849, %v2139
      %2141 = vst [vmem:[%s2112 + $0x24] sm:$0xf] %v2140
      %2142 = vst.msk [vmem:[%s2112 + $0x28] sm:$0xf] %vm334, %v1858
      %v2143 = vld [vmem:[%s2112 + $0x2c] sm:$0x1]
      %v2144 = vsel %vm2121, %v1859, %v2143
      %2145 = vst [vmem:[%s2112 + $0x2c] sm:$0x1] %v2144
      %v2146 = vld [vmem:[%s2112 + $0x30] sm:$0xf]
      %v2147 = vsel %vm2115, %v1866, %v2146
      %2148 = vst [vmem:[%s2112 + $0x30] sm:$0xf] %v2147
      %2149 = vst.msk [vmem:[%s2112 + $0x34] sm:$0xf] %vm334, %v1875
      %v2150 = vld [vmem:[%s2112 + $0x38] sm:$0x1]
      %v2151 = vsel %vm2121, %v1876, %v2150
      %2152 = vst [vmem:[%s2112 + $0x38] sm:$0x1] %v2151
      %v2153 = vld [vmem:[%s2112 + $0x3c] sm:$0xf]
      %v2154 = vsel %vm2115, %v1883, %v2153
      %2155 = vst [vmem:[%s2112 + $0x3c] sm:$0xf] %v2154
      %2156 = vst.msk [vmem:[%s2112 + $0x40] sm:$0xf] %vm334, %v1892
      %v2157 = vld [vmem:[%s2112 + $0x44] sm:$0x1]
      %v2158 = vsel %vm2121, %v1893, %v2157
      %2159 = vst [vmem:[%s2112 + $0x44] sm:$0x1] %v2158
      %v2160 = vld [vmem:[%s2112 + $0x48] sm:$0xf]
      %v2161 = vsel %vm2115, %v1900, %v2160
      %2162 = vst [vmem:[%s2112 + $0x48] sm:$0xf] %v2161
      %2163 = vst.msk [vmem:[%s2112 + $0x4c] sm:$0xf] %vm334, %v1909
      %v2164 = vld [vmem:[%s2112 + $0x50] sm:$0x1]
      %v2165 = vsel %vm2121, %v1910, %v2164
      %2166 = vst [vmem:[%s2112 + $0x50] sm:$0x1] %v2165
      %v2167 = vld [vmem:[%s2112 + $0x54] sm:$0xf]
      %v2168 = vsel %vm2115, %v1917, %v2167
      %2169 = vst [vmem:[%s2112 + $0x54] sm:$0xf] %v2168
      %2170 = vst.msk [vmem:[%s2112 + $0x58] sm:$0xf] %vm334, %v1926
      %v2171 = vld [vmem:[%s2112 + $0x5c] sm:$0x1]
      %v2172 = vsel %vm2121, %v1927, %v2171
      %2173 = vst [vmem:[%s2112 + $0x5c] sm:$0x1] %v2172
      %v2174 = vld [vmem:[%s2112 + $0x60] sm:$0xf]
      %v2175 = vsel %vm2115, %v1934, %v2174
      %2176 = vst [vmem:[%s2112 + $0x60] sm:$0xf] %v2175
      %2177 = vst.msk [vmem:[%s2112 + $0x64] sm:$0xf] %vm334, %v1943
      %v2178 = vld [vmem:[%s2112 + $0x68] sm:$0x1]
      %v2179 = vsel %vm2121, %v1944, %v2178
      %2180 = vst [vmem:[%s2112 + $0x68] sm:$0x1] %v2179
      %v2181 = vld [vmem:[%s2112 + $0x6c] sm:$0xf]
      %v2182 = vsel %vm2115, %v1951, %v2181
      %2183 = vst [vmem:[%s2112 + $0x6c] sm:$0xf] %v2182
      %2184 = vst.msk [vmem:[%s2112 + $0x70] sm:$0xf] %vm334, %v1960
      %v2185 = vld [vmem:[%s2112 + $0x74] sm:$0x1]
      %v2186 = vsel %vm2121, %v1961, %v2185
      %2187 = vst [vmem:[%s2112 + $0x74] sm:$0x1] %v2186
      %v2188 = vld [vmem:[%s2112 + $0x78] sm:$0xf]
      %v2189 = vsel %vm2115, %v1968, %v2188
      %2190 = vst [vmem:[%s2112 + $0x78] sm:$0xf] %v2189
      %2191 = vst.msk [vmem:[%s2112 + $0x7c] sm:$0xf] %vm334, %v1977
      %v2192 = vld [vmem:[%s2112 + $0x80] sm:$0x1]
      %v2193 = vsel %vm2121, %v1978, %v2192
      %2194 = vst [vmem:[%s2112 + $0x80] sm:$0x1] %v2193
      %v2195 = vld [vmem:[%s2112 + $0x84] sm:$0xf]
      %v2196 = vsel %vm2115, %v1985, %v2195
      %2197 = vst [vmem:[%s2112 + $0x84] sm:$0xf] %v2196
      %2198 = vst.msk [vmem:[%s2112 + $0x88] sm:$0xf] %vm334, %v1994
      %v2199 = vld [vmem:[%s2112 + $0x8c] sm:$0x1]
      %v2200 = vsel %vm2121, %v1995, %v2199
      %2201 = vst [vmem:[%s2112 + $0x8c] sm:$0x1] %v2200
      %v2202 = vld [vmem:[%s2112 + $0x90] sm:$0xf]
      %v2203 = vsel %vm2115, %v2002, %v2202
      %2204 = vst [vmem:[%s2112 + $0x90] sm:$0xf] %v2203
      %2205 = vst.msk [vmem:[%s2112 + $0x94] sm:$0xf] %vm334, %v2011
      %v2206 = vld [vmem:[%s2112 + $0x98] sm:$0x1]
      %v2207 = vsel %vm2121, %v2012, %v2206
      %2208 = vst [vmem:[%s2112 + $0x98] sm:$0x1] %v2207
      %v2209 = vld [vmem:[%s2112 + $0x9c] sm:$0xf]
      %v2210 = vsel %vm2115, %v2019, %v2209
      %2211 = vst [vmem:[%s2112 + $0x9c] sm:$0xf] %v2210
      %2212 = vst.msk [vmem:[%s2112 + $0xa0] sm:$0xf] %vm334, %v2028
      %v2213 = vld [vmem:[%s2112 + $0xa4] sm:$0x1]
      %v2214 = vsel %vm2121, %v2029, %v2213
      %2215 = vst [vmem:[%s2112 + $0xa4] sm:$0x1] %v2214
      %v2216 = vld [vmem:[%s2112 + $0xa8] sm:$0xf]
      %v2217 = vsel %vm2115, %v2036, %v2216
      %2218 = vst [vmem:[%s2112 + $0xa8] sm:$0xf] %v2217
      %2219 = vst.msk [vmem:[%s2112 + $0xac] sm:$0xf] %vm334, %v2045
      %v2220 = vld [vmem:[%s2112 + $0xb0] sm:$0x1]
      %v2221 = vsel %vm2121, %v2046, %v2220
      %2222 = vst [vmem:[%s2112 + $0xb0] sm:$0x1] %v2221
      %v2223 = vld [vmem:[%s2112 + $0xb4] sm:$0xf]
      %v2224 = vsel %vm2115, %v2053, %v2223
      %2225 = vst [vmem:[%s2112 + $0xb4] sm:$0xf] %v2224
      %2226 = vst.msk [vmem:[%s2112 + $0xb8] sm:$0xf] %vm334, %v2062
      %v2227 = vld [vmem:[%s2112 + $0xbc] sm:$0x1]
      %v2228 = vsel %vm2121, %v2063, %v2227
      %2229 = vst [vmem:[%s2112 + $0xbc] sm:$0x1] %v2228
      %v2230 = vld [vmem:[#allocation2] sm:$0xf]
      %v2231 = vld [vmem:[#allocation2 + $0x4] sm:$0xf]
      %v2232 = vld [vmem:[#allocation2 + $0x8] sm:$0x1]
      %v2233 = vld [vmem:[#allocation2 + $0xc] sm:$0xf]
      %v2234 = vld [vmem:[#allocation2 + $0x10] sm:$0xf]
      %v2235 = vld [vmem:[#allocation2 + $0x14] sm:$0x1]
      %v2236 = vld [vmem:[#allocation2 + $0x18] sm:$0xf]
      %v2237 = vld [vmem:[#allocation2 + $0x1c] sm:$0xf]
      %v2238 = vld [vmem:[#allocation2 + $0x20] sm:$0x1]
      %v2239 = vld [vmem:[#allocation2 + $0x24] sm:$0xf]
      %v2240 = vld [vmem:[#allocation2 + $0x28] sm:$0xf]
      %v2241 = vld [vmem:[#allocation2 + $0x2c] sm:$0x1]
      %v2242 = vld [vmem:[#allocation2 + $0x30] sm:$0xf]
      %v2243 = vld [vmem:[#allocation2 + $0x34] sm:$0xf]
      %v2244 = vld [vmem:[#allocation2 + $0x38] sm:$0x1]
      %v2245 = vld [vmem:[#allocation2 + $0x3c] sm:$0xf]
      %v2246 = vld [vmem:[#allocation2 + $0x40] sm:$0xf]
      %v2247 = vld [vmem:[#allocation2 + $0x44] sm:$0x1]
      %v2248 = vld [vmem:[#allocation2 + $0x48] sm:$0xf]
      %v2249 = vld [vmem:[#allocation2 + $0x4c] sm:$0xf]
      %v2250 = vld [vmem:[#allocation2 + $0x50] sm:$0x1]
      %v2251 = vld [vmem:[#allocation2 + $0x54] sm:$0xf]
      %v2252 = vld [vmem:[#allocation2 + $0x58] sm:$0xf]
      %v2253 = vld [vmem:[#allocation2 + $0x5c] sm:$0x1]
      %v2254 = vld [vmem:[#allocation2 + $0x60] sm:$0xf]
      %v2255 = vld [vmem:[#allocation2 + $0x64] sm:$0xf]
      %v2256 = vld [vmem:[#allocation2 + $0x68] sm:$0x1]
      %v2257 = vld [vmem:[#allocation2 + $0x6c] sm:$0xf]
      %v2258 = vld [vmem:[#allocation2 + $0x70] sm:$0xf]
      %v2259 = vld [vmem:[#allocation2 + $0x74] sm:$0x1]
      %v2260 = vld [vmem:[#allocation2 + $0x78] sm:$0xf]
      %v2261 = vld [vmem:[#allocation2 + $0x7c] sm:$0xf]
      %v2262 = vld [vmem:[#allocation2 + $0x80] sm:$0x1]
      %v2263 = vld [vmem:[#allocation2 + $0x84] sm:$0xf]
      %v2264 = vld [vmem:[#allocation2 + $0x88] sm:$0xf]
      %v2265 = vld [vmem:[#allocation2 + $0x8c] sm:$0x1]
      %v2266 = vld [vmem:[#allocation2 + $0x90] sm:$0xf]
      %v2267 = vld [vmem:[#allocation2 + $0x94] sm:$0xf]
      %v2268 = vld [vmem:[#allocation2 + $0x98] sm:$0x1]
      %v2269 = vld [vmem:[#allocation2 + $0x9c] sm:$0xf]
      %v2270 = vld [vmem:[#allocation2 + $0xa0] sm:$0xf]
      %v2271 = vld [vmem:[#allocation2 + $0xa4] sm:$0x1]
      %v2272 = vld [vmem:[#allocation2 + $0xa8] sm:$0xf]
      %v2273 = vld [vmem:[#allocation2 + $0xac] sm:$0xf]
      %v2274 = vld [vmem:[#allocation2 + $0xb0] sm:$0x1]
      %v2275 = vld [vmem:[#allocation2 + $0xb4] sm:$0xf]
      %v2276 = vld [vmem:[#allocation2 + $0xb8] sm:$0xf]
      %v2277 = vld [vmem:[#allocation2 + $0xbc] sm:$0x1]
      %v2278 = vld [vmem:[#allocation2 + $0xc0] sm:$0xf]
      %v2279 = vld [vmem:[#allocation2 + $0xc4] sm:$0xf]
      %v2280 = vld [vmem:[#allocation2 + $0xc8] sm:$0x1]
      %v2281 = vld [vmem:[#allocation2 + $0xcc] sm:$0xf]
      %v2282 = vld [vmem:[#allocation2 + $0xd0] sm:$0xf]
      %v2283 = vld [vmem:[#allocation2 + $0xd4] sm:$0x1]
      %v2316 = vunpack.c.l.b16 %v2230
      %v2317 = vunpack.c.l.b16 %v2231
      %v2318 = vunpack.c.l.b16 %v2233
      %v2319 = vunpack.c.l.b16 %v2234
      %v2320 = vunpack.c.l.b16 %v2236
      %v2321 = vunpack.c.l.b16 %v2237
      %v2322 = vunpack.c.l.b16 %v2239
      %v2323 = vunpack.c.l.b16 %v2240
      %v2324 = vunpack.c.l.b16 %v2242
      %v2325 = vunpack.c.l.b16 %v2243
      %v2326 = vunpack.c.l.b16 %v2245
      %v2327 = vunpack.c.l.b16 %v2246
      %v2328 = vunpack.c.l.b16 %v2248
      %v2329 = vunpack.c.l.b16 %v2249
      %v2330 = vunpack.c.l.b16 %v2251
      %v2331 = vunpack.c.l.b16 %v2252
      %v2332 = vunpack.c.l.b16 %v2254
      %v2333 = vunpack.c.l.b16 %v2255
      %v2334 = vunpack.c.l.b16 %v2257
      %v2335 = vunpack.c.l.b16 %v2258
      %v2336 = vunpack.c.l.b16 %v2260
      %v2337 = vunpack.c.l.b16 %v2261
      %v2338 = vunpack.c.l.b16 %v2263
      %v2339 = vunpack.c.l.b16 %v2264
      %v2340 = vunpack.c.l.b16 %v2266
      %v2341 = vunpack.c.l.b16 %v2267
      %v2342 = vunpack.c.l.b16 %v2269
      %v2343 = vunpack.c.l.b16 %v2270
      %v2344 = vunpack.c.l.b16 %v2272
      %v2345 = vunpack.c.l.b16 %v2273
      %v2346 = vunpack.c.l.b16 %v2275
      %v2347 = vunpack.c.l.b16 %v2276
      %v2348 = vpack.c.b16 %v2317, %v2316
      %v2349 = vpack.c.b16 %v2319, %v2318
      %v2350 = vpack.c.b16 %v2321, %v2320
      %v2351 = vpack.c.b16 %v2323, %v2322
      %v2352 = vpack.c.b16 %v2325, %v2324
      %v2353 = vpack.c.b16 %v2327, %v2326
      %v2354 = vpack.c.b16 %v2329, %v2328
      %v2355 = vpack.c.b16 %v2331, %v2330
      %v2356 = vpack.c.b16 %v2333, %v2332
      %v2357 = vpack.c.b16 %v2335, %v2334
      %v2358 = vpack.c.b16 %v2337, %v2336
      %v2359 = vpack.c.b16 %v2339, %v2338
      %v2360 = vpack.c.b16 %v2341, %v2340
      %v2361 = vpack.c.b16 %v2343, %v2342
      %v2362 = vpack.c.b16 %v2345, %v2344
      %v2363 = vpack.c.b16 %v2347, %v2346
      %v2380 = vunpack.c.l.b16 %v2232
      %v2381 = vunpack.c.l.b16 %v2235
      %v2382 = vunpack.c.l.b16 %v2238
      %v2383 = vunpack.c.l.b16 %v2241
      %v2384 = vunpack.c.l.b16 %v2244
      %v2385 = vunpack.c.l.b16 %v2247
      %v2386 = vunpack.c.l.b16 %v2250
      %v2387 = vunpack.c.l.b16 %v2253
      %v2388 = vunpack.c.l.b16 %v2256
      %v2389 = vunpack.c.l.b16 %v2259
      %v2390 = vunpack.c.l.b16 %v2262
      %v2391 = vunpack.c.l.b16 %v2265
      %v2392 = vunpack.c.l.b16 %v2268
      %v2393 = vunpack.c.l.b16 %v2271
      %v2394 = vunpack.c.l.b16 %v2274
      %v2395 = vunpack.c.l.b16 %v2277
      %v2396 = vpack.c.b16 %v2380, %v2380
      %v2397 = vpack.c.b16 %v2381, %v2381
      %v2398 = vpack.c.b16 %v2382, %v2382
      %v2399 = vpack.c.b16 %v2383, %v2383
      %v2400 = vpack.c.b16 %v2384, %v2384
      %v2401 = vpack.c.b16 %v2385, %v2385
      %v2402 = vpack.c.b16 %v2386, %v2386
      %v2403 = vpack.c.b16 %v2387, %v2387
      %v2404 = vpack.c.b16 %v2388, %v2388
      %v2405 = vpack.c.b16 %v2389, %v2389
      %v2406 = vpack.c.b16 %v2390, %v2390
      %v2407 = vpack.c.b16 %v2391, %v2391
      %v2408 = vpack.c.b16 %v2392, %v2392
      %v2409 = vpack.c.b16 %v2393, %v2393
      %v2410 = vpack.c.b16 %v2394, %v2394
      %v2411 = vpack.c.b16 %v2395, %v2395
      %v2413 = vshrl.u32 %v2348, 16
      %v2415 = vshll.u32 %v2348, 16
      %v2417 = vrot.slane %v2415, 1
      %v2418 = vor.u32 %v2413, %v2417
      %v2420 = vshll.u32 %v2396, 16
      %v2422 = vrot.slane %v2420, 1
      %v2423 = vsel %vm628, %v2418, %v2422
      %v2425 = vshrl.u32 %v2349, 16
      %v2427 = vshll.u32 %v2349, 16
      %v2429 = vrot.slane %v2427, 1
      %v2430 = vor.u32 %v2425, %v2429
      %v2432 = vshll.u32 %v2397, 16
      %v2434 = vrot.slane %v2432, 1
      %v2435 = vsel %vm628, %v2430, %v2434
      %v2437 = vshrl.u32 %v2350, 16
      %v2439 = vshll.u32 %v2350, 16
      %v2441 = vrot.slane %v2439, 1
      %v2442 = vor.u32 %v2437, %v2441
      %v2444 = vshll.u32 %v2398, 16
      %v2446 = vrot.slane %v2444, 1
      %v2447 = vsel %vm628, %v2442, %v2446
      %v2449 = vshrl.u32 %v2351, 16
      %v2451 = vshll.u32 %v2351, 16
      %v2453 = vrot.slane %v2451, 1
      %v2454 = vor.u32 %v2449, %v2453
      %v2456 = vshll.u32 %v2399, 16
      %v2458 = vrot.slane %v2456, 1
      %v2459 = vsel %vm628, %v2454, %v2458
      %v2461 = vshrl.u32 %v2352, 16
      %v2463 = vshll.u32 %v2352, 16
      %v2465 = vrot.slane %v2463, 1
      %v2466 = vor.u32 %v2461, %v2465
      %v2468 = vshll.u32 %v2400, 16
      %v2470 = vrot.slane %v2468, 1
      %v2471 = vsel %vm628, %v2466, %v2470
      %v2473 = vshrl.u32 %v2353, 16
      %v2475 = vshll.u32 %v2353, 16
      %v2477 = vrot.slane %v2475, 1
      %v2478 = vor.u32 %v2473, %v2477
      %v2480 = vshll.u32 %v2401, 16
      %v2482 = vrot.slane %v2480, 1
      %v2483 = vsel %vm628, %v2478, %v2482
      %v2485 = vshrl.u32 %v2354, 16
      %v2487 = vshll.u32 %v2354, 16
      %v2489 = vrot.slane %v2487, 1
      %v2490 = vor.u32 %v2485, %v2489
      %v2492 = vshll.u32 %v2402, 16
      %v2494 = vrot.slane %v2492, 1
      %v2495 = vsel %vm628, %v2490, %v2494
      %v2497 = vshrl.u32 %v2355, 16
      %v2499 = vshll.u32 %v2355, 16
      %v2501 = vrot.slane %v2499, 1
      %v2502 = vor.u32 %v2497, %v2501
      %v2504 = vshll.u32 %v2403, 16
      %v2506 = vrot.slane %v2504, 1
      %v2507 = vsel %vm628, %v2502, %v2506
      %v2509 = vshrl.u32 %v2356, 16
      %v2511 = vshll.u32 %v2356, 16
      %v2513 = vrot.slane %v2511, 1
      %v2514 = vor.u32 %v2509, %v2513
      %v2516 = vshll.u32 %v2404, 16
      %v2518 = vrot.slane %v2516, 1
      %v2519 = vsel %vm628, %v2514, %v2518
      %v2521 = vshrl.u32 %v2357, 16
      %v2523 = vshll.u32 %v2357, 16
      %v2525 = vrot.slane %v2523, 1
      %v2526 = vor.u32 %v2521, %v2525
      %v2528 = vshll.u32 %v2405, 16
      %v2530 = vrot.slane %v2528, 1
      %v2531 = vsel %vm628, %v2526, %v2530
      %v2533 = vshrl.u32 %v2358, 16
      %v2535 = vshll.u32 %v2358, 16
      %v2537 = vrot.slane %v2535, 1
      %v2538 = vor.u32 %v2533, %v2537
      %v2540 = vshll.u32 %v2406, 16
      %v2542 = vrot.slane %v2540, 1
      %v2543 = vsel %vm628, %v2538, %v2542
      %v2545 = vshrl.u32 %v2359, 16
      %v2547 = vshll.u32 %v2359, 16
      %v2549 = vrot.slane %v2547, 1
      %v2550 = vor.u32 %v2545, %v2549
      %v2552 = vshll.u32 %v2407, 16
      %v2554 = vrot.slane %v2552, 1
      %v2555 = vsel %vm628, %v2550, %v2554
      %v2557 = vshrl.u32 %v2360, 16
      %v2559 = vshll.u32 %v2360, 16
      %v2561 = vrot.slane %v2559, 1
      %v2562 = vor.u32 %v2557, %v2561
      %v2564 = vshll.u32 %v2408, 16
      %v2566 = vrot.slane %v2564, 1
      %v2567 = vsel %vm628, %v2562, %v2566
      %v2569 = vshrl.u32 %v2361, 16
      %v2571 = vshll.u32 %v2361, 16
      %v2573 = vrot.slane %v2571, 1
      %v2574 = vor.u32 %v2569, %v2573
      %v2576 = vshll.u32 %v2409, 16
      %v2578 = vrot.slane %v2576, 1
      %v2579 = vsel %vm628, %v2574, %v2578
      %v2581 = vshrl.u32 %v2362, 16
      %v2583 = vshll.u32 %v2362, 16
      %v2585 = vrot.slane %v2583, 1
      %v2586 = vor.u32 %v2581, %v2585
      %v2588 = vshll.u32 %v2410, 16
      %v2590 = vrot.slane %v2588, 1
      %v2591 = vsel %vm628, %v2586, %v2590
      %v2593 = vshrl.u32 %v2363, 16
      %v2595 = vshll.u32 %v2363, 16
      %v2597 = vrot.slane %v2595, 1
      %v2598 = vor.u32 %v2593, %v2597
      %v2600 = vshll.u32 %v2411, 16
      %v2602 = vrot.slane %v2600, 1
      %v2603 = vsel %vm628, %v2598, %v2602
      %2604 = vrot.lane.b32.xlu0 %v2423, 32
      %v2605 = vpop.permute.xlu0 %2604
      %2606 = vrot.lane.b32.xlu0 %v2435, 32
      %v2607 = vpop.permute.xlu0 %2606
      %2608 = vrot.lane.b32.xlu0 %v2447, 32
      %v2609 = vpop.permute.xlu0 %2608
      %2610 = vrot.lane.b32.xlu0 %v2459, 32
      %v2611 = vpop.permute.xlu0 %2610
      %2612 = vrot.lane.b32.xlu0 %v2471, 32
      %v2613 = vpop.permute.xlu0 %2612
      %2614 = vrot.lane.b32.xlu0 %v2483, 32
      %v2615 = vpop.permute.xlu0 %2614
      %2616 = vrot.lane.b32.xlu0 %v2495, 32
      %v2617 = vpop.permute.xlu0 %2616
      %2618 = vrot.lane.b32.xlu0 %v2507, 32
      %v2619 = vpop.permute.xlu0 %2618
      %2620 = vrot.lane.b32.xlu0 %v2519, 32
      %v2621 = vpop.permute.xlu0 %2620
      %2622 = vrot.lane.b32.xlu0 %v2531, 32
      %v2623 = vpop.permute.xlu0 %2622
      %2624 = vrot.lane.b32.xlu0 %v2543, 32
      %v2625 = vpop.permute.xlu0 %2624
      %2626 = vrot.lane.b32.xlu0 %v2555, 32
      %v2627 = vpop.permute.xlu0 %2626
      %2628 = vrot.lane.b32.xlu0 %v2567, 32
      %v2629 = vpop.permute.xlu0 %2628
      %2630 = vrot.lane.b32.xlu0 %v2579, 32
      %v2631 = vpop.permute.xlu0 %2630
      %2632 = vrot.lane.b32.xlu0 %v2591, 32
      %v2633 = vpop.permute.xlu0 %2632
      %2634 = vrot.lane.b32.xlu0 %v2603, 32
      %v2635 = vpop.permute.xlu0 %2634
      %v2636 = vrot.slane %v2348, 1
      %v2637 = vrot.slane %v2396, 1
      %v2638 = vsel %vm853, %v2636, %v2637
      %v2639 = vrot.slane %v2349, 1
      %v2640 = vrot.slane %v2397, 1
      %v2641 = vsel %vm853, %v2639, %v2640
      %v2642 = vrot.slane %v2350, 1
      %v2643 = vrot.slane %v2398, 1
      %v2644 = vsel %vm853, %v2642, %v2643
      %v2645 = vrot.slane %v2351, 1
      %v2646 = vrot.slane %v2399, 1
      %v2647 = vsel %vm853, %v2645, %v2646
      %v2648 = vrot.slane %v2352, 1
      %v2649 = vrot.slane %v2400, 1
      %v2650 = vsel %vm853, %v2648, %v2649
      %v2651 = vrot.slane %v2353, 1
      %v2652 = vrot.slane %v2401, 1
      %v2653 = vsel %vm853, %v2651, %v2652
      %v2654 = vrot.slane %v2354, 1
      %v2655 = vrot.slane %v2402, 1
      %v2656 = vsel %vm853, %v2654, %v2655
      %v2657 = vrot.slane %v2355, 1
      %v2658 = vrot.slane %v2403, 1
      %v2659 = vsel %vm853, %v2657, %v2658
      %v2660 = vrot.slane %v2356, 1
      %v2661 = vrot.slane %v2404, 1
      %v2662 = vsel %vm853, %v2660, %v2661
      %v2663 = vrot.slane %v2357, 1
      %v2664 = vrot.slane %v2405, 1
      %v2665 = vsel %vm853, %v2663, %v2664
      %v2666 = vrot.slane %v2358, 1
      %v2667 = vrot.slane %v2406, 1
      %v2668 = vsel %vm853, %v2666, %v2667
      %v2669 = vrot.slane %v2359, 1
      %v2670 = vrot.slane %v2407, 1
      %v2671 = vsel %vm853, %v2669, %v2670
      %v2672 = vrot.slane %v2360, 1
      %v2673 = vrot.slane %v2408, 1
      %v2674 = vsel %vm853, %v2672, %v2673
      %v2675 = vrot.slane %v2361, 1
      %v2676 = vrot.slane %v2409, 1
      %v2677 = vsel %vm853, %v2675, %v2676
      %v2678 = vrot.slane %v2362, 1
      %v2679 = vrot.slane %v2410, 1
      %v2680 = vsel %vm853, %v2678, %v2679
      %v2681 = vrot.slane %v2363, 1
      %v2682 = vrot.slane %v2411, 1
      %v2683 = vsel %vm853, %v2681, %v2682
      %2684 = vrot.lane.b32.xlu0 %v2638, 64
      %v2685 = vpop.permute.xlu0 %2684
      %2686 = vrot.lane.b32.xlu0 %v2641, 64
      %v2687 = vpop.permute.xlu0 %2686
      %2688 = vrot.lane.b32.xlu0 %v2644, 64
      %v2689 = vpop.permute.xlu0 %2688
      %2690 = vrot.lane.b32.xlu0 %v2647, 64
      %v2691 = vpop.permute.xlu0 %2690
      %2692 = vrot.lane.b32.xlu0 %v2650, 64
      %v2693 = vpop.permute.xlu0 %2692
      %2694 = vrot.lane.b32.xlu0 %v2653, 64
      %v2695 = vpop.permute.xlu0 %2694
      %2696 = vrot.lane.b32.xlu0 %v2656, 64
      %v2697 = vpop.permute.xlu0 %2696
      %2698 = vrot.lane.b32.xlu0 %v2659, 64
      %v2699 = vpop.permute.xlu0 %2698
      %2700 = vrot.lane.b32.xlu0 %v2662, 64
      %v2701 = vpop.permute.xlu0 %2700
      %2702 = vrot.lane.b32.xlu0 %v2665, 64
      %v2703 = vpop.permute.xlu0 %2702
      %2704 = vrot.lane.b32.xlu0 %v2668, 64
      %v2705 = vpop.permute.xlu0 %2704
      %2706 = vrot.lane.b32.xlu0 %v2671, 64
      %v2707 = vpop.permute.xlu0 %2706
      %2708 = vrot.lane.b32.xlu0 %v2674, 64
      %v2709 = vpop.permute.xlu0 %2708
      %2710 = vrot.lane.b32.xlu0 %v2677, 64
      %v2711 = vpop.permute.xlu0 %2710
      %2712 = vrot.lane.b32.xlu0 %v2680, 64
      %v2713 = vpop.permute.xlu0 %2712
      %2714 = vrot.lane.b32.xlu0 %v2683, 64
      %v2715 = vpop.permute.xlu0 %2714
      %v2718 = vunpack.c.l.b16 %v2278
      %v2719 = vunpack.c.l.b16 %v2279
      %v2720 = vpack.c.b16 %v2719, %v2718
      %2721 = vrot.lane.b32.xlu0 %v2349, 96
      %v2722 = vpop.permute.xlu0 %2721
      %2723 = vrot.lane.b32.xlu0 %v2350, 96
      %v2724 = vpop.permute.xlu0 %2723
      %2725 = vrot.lane.b32.xlu0 %v2351, 96
      %v2726 = vpop.permute.xlu0 %2725
      %2727 = vrot.lane.b32.xlu0 %v2352, 96
      %v2728 = vpop.permute.xlu0 %2727
      %2729 = vrot.lane.b32.xlu0 %v2353, 96
      %v2730 = vpop.permute.xlu0 %2729
      %2731 = vrot.lane.b32.xlu0 %v2354, 96
      %v2732 = vpop.permute.xlu0 %2731
      %2733 = vrot.lane.b32.xlu0 %v2355, 96
      %v2734 = vpop.permute.xlu0 %2733
      %2735 = vrot.lane.b32.xlu0 %v2356, 96
      %v2736 = vpop.permute.xlu0 %2735
      %2737 = vrot.lane.b32.xlu0 %v2357, 96
      %v2738 = vpop.permute.xlu0 %2737
      %2739 = vrot.lane.b32.xlu0 %v2358, 96
      %v2740 = vpop.permute.xlu0 %2739
      %2741 = vrot.lane.b32.xlu0 %v2359, 96
      %v2742 = vpop.permute.xlu0 %2741
      %2743 = vrot.lane.b32.xlu0 %v2360, 96
      %v2744 = vpop.permute.xlu0 %2743
      %2745 = vrot.lane.b32.xlu0 %v2361, 96
      %v2746 = vpop.permute.xlu0 %2745
      %2747 = vrot.lane.b32.xlu0 %v2362, 96
      %v2748 = vpop.permute.xlu0 %2747
      %2749 = vrot.lane.b32.xlu0 %v2363, 96
      %v2750 = vpop.permute.xlu0 %2749
      %2751 = vrot.lane.b32.xlu0 %v2720, 96
      %v2752 = vpop.permute.xlu0 %2751
      %v2754 = vunpack.c.l.b16 %v2280
      %v2755 = vpack.c.b16 %v2754, %v2754
      %v2757 = vshrl.u32 %v2720, 16
      %v2759 = vshll.u32 %v2720, 16
      %v2761 = vrot.slane %v2759, 1
      %v2762 = vor.u32 %v2757, %v2761
      %v2764 = vshll.u32 %v2755, 16
      %v2766 = vrot.slane %v2764, 1
      %v2767 = vsel %vm628, %v2762, %v2766
      %v2768 = vrot.slane %v2720, 1
      %v2769 = vrot.slane %v2755, 1
      %v2770 = vsel %vm853, %v2768, %v2769
      %2771 = vrot.lane.b32.xlu0 %v2641, 32
      %v2772 = vpop.permute.xlu0 %2771
      %2773 = vrot.lane.b32.xlu0 %v2644, 32
      %v2774 = vpop.permute.xlu0 %2773
      %2775 = vrot.lane.b32.xlu0 %v2647, 32
      %v2776 = vpop.permute.xlu0 %2775
      %2777 = vrot.lane.b32.xlu0 %v2650, 32
      %v2778 = vpop.permute.xlu0 %2777
      %2779 = vrot.lane.b32.xlu0 %v2653, 32
      %v2780 = vpop.permute.xlu0 %2779
      %2781 = vrot.lane.b32.xlu0 %v2656, 32
      %v2782 = vpop.permute.xlu0 %2781
      %2783 = vrot.lane.b32.xlu0 %v2659, 32
      %v2784 = vpop.permute.xlu0 %2783
      %2785 = vrot.lane.b32.xlu0 %v2662, 32
      %v2786 = vpop.permute.xlu0 %2785
      %2787 = vrot.lane.b32.xlu0 %v2665, 32
      %v2788 = vpop.permute.xlu0 %2787
      %2789 = vrot.lane.b32.xlu0 %v2668, 32
      %v2790 = vpop.permute.xlu0 %2789
      %2791 = vrot.lane.b32.xlu0 %v2671, 32
      %v2792 = vpop.permute.xlu0 %2791
      %2793 = vrot.lane.b32.xlu0 %v2674, 32
      %v2794 = vpop.permute.xlu0 %2793
      %2795 = vrot.lane.b32.xlu0 %v2677, 32
      %v2796 = vpop.permute.xlu0 %2795
      %2797 = vrot.lane.b32.xlu0 %v2680, 32
      %v2798 = vpop.permute.xlu0 %2797
      %2799 = vrot.lane.b32.xlu0 %v2683, 32
      %v2800 = vpop.permute.xlu0 %2799
      %2801 = vrot.lane.b32.xlu0 %v2770, 32
      %v2802 = vpop.permute.xlu0 %2801
      %v2805 = vunpack.c.l.b16 %v2281
      %v2806 = vunpack.c.l.b16 %v2282
      %v2807 = vpack.c.b16 %v2806, %v2805
      %2808 = vrot.lane.b32.xlu0 %v2350, 64
      %v2809 = vpop.permute.xlu0 %2808
      %2810 = vrot.lane.b32.xlu0 %v2351, 64
      %v2811 = vpop.permute.xlu0 %2810
      %2812 = vrot.lane.b32.xlu0 %v2352, 64
      %v2813 = vpop.permute.xlu0 %2812
      %2814 = vrot.lane.b32.xlu0 %v2353, 64
      %v2815 = vpop.permute.xlu0 %2814
      %2816 = vrot.lane.b32.xlu0 %v2354, 64
      %v2817 = vpop.permute.xlu0 %2816
      %2818 = vrot.lane.b32.xlu0 %v2355, 64
      %v2819 = vpop.permute.xlu0 %2818
      %2820 = vrot.lane.b32.xlu0 %v2356, 64
      %v2821 = vpop.permute.xlu0 %2820
      %2822 = vrot.lane.b32.xlu0 %v2357, 64
      %v2823 = vpop.permute.xlu0 %2822
      %2824 = vrot.lane.b32.xlu0 %v2358, 64
      %v2825 = vpop.permute.xlu0 %2824
      %2826 = vrot.lane.b32.xlu0 %v2359, 64
      %v2827 = vpop.permute.xlu0 %2826
      %2828 = vrot.lane.b32.xlu0 %v2360, 64
      %v2829 = vpop.permute.xlu0 %2828
      %2830 = vrot.lane.b32.xlu0 %v2361, 64
      %v2831 = vpop.permute.xlu0 %2830
      %2832 = vrot.lane.b32.xlu0 %v2362, 64
      %v2833 = vpop.permute.xlu0 %2832
      %2834 = vrot.lane.b32.xlu0 %v2363, 64
      %v2835 = vpop.permute.xlu0 %2834
      %2836 = vrot.lane.b32.xlu0 %v2720, 64
      %v2837 = vpop.permute.xlu0 %2836
      %2838 = vrot.lane.b32.xlu0 %v2807, 64
      %v2839 = vpop.permute.xlu0 %2838
      %v2841 = vunpack.c.l.b16 %v2283
      %v2842 = vpack.c.b16 %v2841, %v2841
      %v2844 = vshrl.u32 %v2807, 16
      %v2846 = vshll.u32 %v2807, 16
      %v2848 = vrot.slane %v2846, 1
      %v2849 = vor.u32 %v2844, %v2848
      %v2851 = vshll.u32 %v2842, 16
      %v2853 = vrot.slane %v2851, 1
      %v2854 = vsel %vm628, %v2849, %v2853
      %2855 = vrot.lane.b32.xlu0 %v2447, 96
      %v2856 = vpop.permute.xlu0 %2855
      %2857 = vrot.lane.b32.xlu0 %v2459, 96
      %v2858 = vpop.permute.xlu0 %2857
      %2859 = vrot.lane.b32.xlu0 %v2471, 96
      %v2860 = vpop.permute.xlu0 %2859
      %2861 = vrot.lane.b32.xlu0 %v2483, 96
      %v2862 = vpop.permute.xlu0 %2861
      %2863 = vrot.lane.b32.xlu0 %v2495, 96
      %v2864 = vpop.permute.xlu0 %2863
      %2865 = vrot.lane.b32.xlu0 %v2507, 96
      %v2866 = vpop.permute.xlu0 %2865
      %2867 = vrot.lane.b32.xlu0 %v2519, 96
      %v2868 = vpop.permute.xlu0 %2867
      %2869 = vrot.lane.b32.xlu0 %v2531, 96
      %v2870 = vpop.permute.xlu0 %2869
      %2871 = vrot.lane.b32.xlu0 %v2543, 96
      %v2872 = vpop.permute.xlu0 %2871
      %2873 = vrot.lane.b32.xlu0 %v2555, 96
      %v2874 = vpop.permute.xlu0 %2873
      %2875 = vrot.lane.b32.xlu0 %v2567, 96
      %v2876 = vpop.permute.xlu0 %2875
      %2877 = vrot.lane.b32.xlu0 %v2579, 96
      %v2878 = vpop.permute.xlu0 %2877
      %2879 = vrot.lane.b32.xlu0 %v2591, 96
      %v2880 = vpop.permute.xlu0 %2879
      %2881 = vrot.lane.b32.xlu0 %v2603, 96
      %v2882 = vpop.permute.xlu0 %2881
      %2883 = vrot.lane.b32.xlu0 %v2767, 96
      %v2884 = vpop.permute.xlu0 %2883
      %2885 = vrot.lane.b32.xlu0 %v2854, 96
      %v2886 = vpop.permute.xlu0 %2885
      %v2887 = vrot.slane %v2807, 1
      %v2888 = vrot.slane %v2842, 1
      %v2889 = vsel %vm853, %v2887, %v2888
      %v2891 = vsel %vm1403, %v2348, %v2605
      %v2893 = vsel %vm1403, %v2349, %v2607
      %v2895 = vsel %vm1403, %v2350, %v2609
      %v2897 = vsel %vm1403, %v2351, %v2611
      %v2899 = vsel %vm1403, %v2352, %v2613
      %v2901 = vsel %vm1403, %v2353, %v2615
      %v2903 = vsel %vm1403, %v2354, %v2617
      %v2905 = vsel %vm1403, %v2355, %v2619
      %v2907 = vsel %vm1403, %v2356, %v2621
      %v2909 = vsel %vm1403, %v2357, %v2623
      %v2911 = vsel %vm1403, %v2358, %v2625
      %v2913 = vsel %vm1403, %v2359, %v2627
      %v2915 = vsel %vm1403, %v2360, %v2629
      %v2917 = vsel %vm1403, %v2361, %v2631
      %v2919 = vsel %vm1403, %v2362, %v2633
      %v2921 = vsel %vm1403, %v2363, %v2635
      %vm2922 = vcmask 523264
      %v2924 = vsel %vm2922, %v2891, %v2685
      %v2926 = vsel %vm2922, %v2893, %v2687
      %v2928 = vsel %vm2922, %v2895, %v2689
      %v2930 = vsel %vm2922, %v2897, %v2691
      %v2932 = vsel %vm2922, %v2899, %v2693
      %v2934 = vsel %vm2922, %v2901, %v2695
      %v2936 = vsel %vm2922, %v2903, %v2697
      %v2938 = vsel %vm2922, %v2905, %v2699
      %v2940 = vsel %vm2922, %v2907, %v2701
      %v2942 = vsel %vm2922, %v2909, %v2703
      %v2944 = vsel %vm2922, %v2911, %v2705
      %v2946 = vsel %vm2922, %v2913, %v2707
      %v2948 = vsel %vm2922, %v2915, %v2709
      %v2950 = vsel %vm2922, %v2917, %v2711
      %v2952 = vsel %vm2922, %v2919, %v2713
      %v2954 = vsel %vm2922, %v2921, %v2715
      %vm2955 = vcmask 785408
      %v2957 = vsel %vm2955, %v2924, %v2722
      %v2960 = vsel %vm2955, %v2926, %v2724
      %v2963 = vsel %vm2955, %v2928, %v2726
      %v2966 = vsel %vm2955, %v2930, %v2728
      %v2969 = vsel %vm2955, %v2932, %v2730
      %v2972 = vsel %vm2955, %v2934, %v2732
      %v2975 = vsel %vm2955, %v2936, %v2734
      %v2978 = vsel %vm2955, %v2938, %v2736
      %v2981 = vsel %vm2955, %v2940, %v2738
      %v2984 = vsel %vm2955, %v2942, %v2740
      %v2987 = vsel %vm2955, %v2944, %v2742
      %v2990 = vsel %vm2955, %v2946, %v2744
      %v2993 = vsel %vm2955, %v2948, %v2746
      %v2996 = vsel %vm2955, %v2950, %v2748
      %v2999 = vsel %vm2955, %v2952, %v2750
      %v3002 = vsel %vm2955, %v2954, %v2752
      %v3006 = vsel %vm1403, %v2435, %v2772
      %v3009 = vsel %vm1403, %v2447, %v2774
      %v3012 = vsel %vm1403, %v2459, %v2776
      %v3015 = vsel %vm1403, %v2471, %v2778
      %v3018 = vsel %vm1403, %v2483, %v2780
      %v3021 = vsel %vm1403, %v2495, %v2782
      %v3024 = vsel %vm1403, %v2507, %v2784
      %v3027 = vsel %vm1403, %v2519, %v2786
      %v3030 = vsel %vm1403, %v2531, %v2788
      %v3033 = vsel %vm1403, %v2543, %v2790
      %v3036 = vsel %vm1403, %v2555, %v2792
      %v3039 = vsel %vm1403, %v2567, %v2794
      %v3042 = vsel %vm1403, %v2579, %v2796
      %v3045 = vsel %vm1403, %v2591, %v2798
      %v3048 = vsel %vm1403, %v2603, %v2800
      %v3051 = vsel %vm1403, %v2767, %v2802
      %v3053 = vsel %vm2922, %v3006, %v2809
      %v3055 = vsel %vm2922, %v3009, %v2811
      %v3057 = vsel %vm2922, %v3012, %v2813
      %v3059 = vsel %vm2922, %v3015, %v2815
      %v3061 = vsel %vm2922, %v3018, %v2817
      %v3063 = vsel %vm2922, %v3021, %v2819
      %v3065 = vsel %vm2922, %v3024, %v2821
      %v3067 = vsel %vm2922, %v3027, %v2823
      %v3069 = vsel %vm2922, %v3030, %v2825
      %v3071 = vsel %vm2922, %v3033, %v2827
      %v3073 = vsel %vm2922, %v3036, %v2829
      %v3075 = vsel %vm2922, %v3039, %v2831
      %v3077 = vsel %vm2922, %v3042, %v2833
      %v3079 = vsel %vm2922, %v3045, %v2835
      %v3081 = vsel %vm2922, %v3048, %v2837
      %v3083 = vsel %vm2922, %v3051, %v2839
      %v3085 = vsel %vm2955, %v3053, %v2856
      %v3088 = vsel %vm2955, %v3055, %v2858
      %v3091 = vsel %vm2955, %v3057, %v2860
      %v3094 = vsel %vm2955, %v3059, %v2862
      %v3097 = vsel %vm2955, %v3061, %v2864
      %v3100 = vsel %vm2955, %v3063, %v2866
      %v3103 = vsel %vm2955, %v3065, %v2868
      %v3106 = vsel %vm2955, %v3067, %v2870
      %v3109 = vsel %vm2955, %v3069, %v2872
      %v3112 = vsel %vm2955, %v3071, %v2874
      %v3115 = vsel %vm2955, %v3073, %v2876
      %v3118 = vsel %vm2955, %v3075, %v2878
      %v3121 = vsel %vm2955, %v3077, %v2880
      %v3124 = vsel %vm2955, %v3079, %v2882
      %v3127 = vsel %vm2955, %v3081, %v2884
      %v3130 = vsel %vm2955, %v3083, %v2886
      %v3132 = vld [vmem:[%s3] sm:$0xf]
      %v3133 = vld [vmem:[%s3 + $0x4] sm:$0xf]
      %v3134 = vld [vmem:[%s3 + $0x8] sm:$0xf]
      %v3135 = vld [vmem:[%s3 + $0xc] sm:$0xf]
      %v3136 = vld [vmem:[%s3 + $0x10] sm:$0xf]
      %v3137 = vld [vmem:[%s3 + $0x14] sm:$0xf]
      %v3138 = vld [vmem:[%s3 + $0x18] sm:$0xf]
      %v3139 = vld [vmem:[%s3 + $0x1c] sm:$0xf]
      %v3140 = vld [vmem:[%s3 + $0x20] sm:$0xf]
      %v3141 = vld [vmem:[%s3 + $0x24] sm:$0xf]
      %v3142 = vld [vmem:[%s3 + $0x28] sm:$0xf]
      %v3143 = vld [vmem:[%s3 + $0x2c] sm:$0xf]
      %v3144 = vld [vmem:[%s3 + $0x30] sm:$0xf]
      %v3145 = vld [vmem:[%s3 + $0x34] sm:$0xf]
      %v3146 = vld [vmem:[%s3 + $0x38] sm:$0xf]
      %v3147 = vld [vmem:[%s3 + $0x3c] sm:$0xf]
      %v3148 = vld [vmem:[%s3 + $0x40] sm:$0xf]
      %v3149 = vld [vmem:[%s3 + $0x44] sm:$0xf]
      %v3150 = vld [vmem:[%s3 + $0x48] sm:$0xf]
      %v3151 = vld [vmem:[%s3 + $0x4c] sm:$0xf]
      %v3152 = vld [vmem:[%s3 + $0x50] sm:$0xf]
      %v3153 = vld [vmem:[%s3 + $0x54] sm:$0xf]
      %v3154 = vld [vmem:[%s3 + $0x58] sm:$0xf]
      %v3155 = vld [vmem:[%s3 + $0x5c] sm:$0xf]
      %v3156 = vld [vmem:[%s3 + $0x60] sm:$0xf]
      %v3157 = vld [vmem:[%s3 + $0x64] sm:$0xf]
      %v3158 = vld [vmem:[%s3 + $0x68] sm:$0xf]
      %v3159 = vld [vmem:[%s3 + $0x6c] sm:$0xf]
      %v3160 = vld [vmem:[%s3 + $0x70] sm:$0xf]
      %v3161 = vld [vmem:[%s3 + $0x74] sm:$0xf]
      %v3162 = vld [vmem:[%s3 + $0x78] sm:$0xf]
      %v3163 = vld [vmem:[%s3 + $0x7c] sm:$0xf]
      %v3164 = vld [vmem:[%s3 + $0x80] sm:$0xf]
      %v3165 = vld [vmem:[%s3 + $0x84] sm:$0xf]
      %v3166 = vld [vmem:[%s3 + $0x88] sm:$0xf]
      %v3167 = vld [vmem:[%s3 + $0x8c] sm:$0xf]
      %v3204 = vunpack.c.l.b16 %v3132
      %v3205 = vunpack.c.l.b16 %v3133
      %v3206 = vunpack.c.l.b16 %v3134
      %v3207 = vunpack.c.l.b16 %v3135
      %v3208 = vunpack.c.l.b16 %v3136
      %v3209 = vunpack.c.l.b16 %v3137
      %v3210 = vunpack.c.l.b16 %v3138
      %v3211 = vunpack.c.l.b16 %v3139
      %v3212 = vunpack.c.l.b16 %v3140
      %v3213 = vunpack.c.l.b16 %v3141
      %v3214 = vunpack.c.l.b16 %v3142
      %v3215 = vunpack.c.l.b16 %v3143
      %v3216 = vunpack.c.l.b16 %v3144
      %v3217 = vunpack.c.l.b16 %v3145
      %v3218 = vunpack.c.l.b16 %v3146
      %v3219 = vunpack.c.l.b16 %v3147
      %v3220 = vunpack.c.l.b16 %v3148
      %v3221 = vunpack.c.l.b16 %v3149
      %v3222 = vunpack.c.l.b16 %v3150
      %v3223 = vunpack.c.l.b16 %v3151
      %v3224 = vunpack.c.l.b16 %v3152
      %v3225 = vunpack.c.l.b16 %v3153
      %v3226 = vunpack.c.l.b16 %v3154
      %v3227 = vunpack.c.l.b16 %v3155
      %v3228 = vunpack.c.l.b16 %v3156
      %v3229 = vunpack.c.l.b16 %v3157
      %v3230 = vunpack.c.l.b16 %v3158
      %v3231 = vunpack.c.l.b16 %v3159
      %v3232 = vunpack.c.l.b16 %v3160
      %v3233 = vunpack.c.l.b16 %v3161
      %v3234 = vunpack.c.l.b16 %v3162
      %v3235 = vunpack.c.l.b16 %v3163
      %v3236 = vunpack.c.l.b16 %v3164
      %v3237 = vunpack.c.l.b16 %v3165
      %v3238 = vunpack.c.l.b16 %v3166
      %v3239 = vunpack.c.l.b16 %v3167
      %v3240 = vpack.c.b16 %v3205, %v3204
      %v3241 = vpack.c.b16 %v3207, %v3206
      %v3242 = vpack.c.b16 %v3209, %v3208
      %v3243 = vpack.c.b16 %v3211, %v3210
      %v3244 = vpack.c.b16 %v3213, %v3212
      %v3245 = vpack.c.b16 %v3215, %v3214
      %v3246 = vpack.c.b16 %v3217, %v3216
      %v3247 = vpack.c.b16 %v3219, %v3218
      %v3248 = vpack.c.b16 %v3221, %v3220
      %v3249 = vpack.c.b16 %v3223, %v3222
      %v3250 = vpack.c.b16 %v3225, %v3224
      %v3251 = vpack.c.b16 %v3227, %v3226
      %v3252 = vpack.c.b16 %v3229, %v3228
      %v3253 = vpack.c.b16 %v3231, %v3230
      %v3254 = vpack.c.b16 %v3233, %v3232
      %v3255 = vpack.c.b16 %v3235, %v3234
      %v3256 = vpack.c.b16 %v3237, %v3236
      %v3257 = vpack.c.b16 %v3239, %v3238
      %v3277 = vsel %vm1403, %v2644, 0
      %v3280 = vsel %vm1403, %v2647, 0
      %v3283 = vsel %vm1403, %v2650, 0
      %v3286 = vsel %vm1403, %v2653, 0
      %v3289 = vsel %vm1403, %v2656, 0
      %v3292 = vsel %vm1403, %v2659, 0
      %v3295 = vsel %vm1403, %v2662, 0
      %v3298 = vsel %vm1403, %v2665, 0
      %v3301 = vsel %vm1403, %v2668, 0
      %v3304 = vsel %vm1403, %v2671, 0
      %v3307 = vsel %vm1403, %v2674, 0
      %v3310 = vsel %vm1403, %v2677, 0
      %v3313 = vsel %vm1403, %v2680, 0
      %v3316 = vsel %vm1403, %v2683, 0
      %v3319 = vsel %vm1403, %v2770, 0
      %v3322 = vsel %vm1403, %v2889, 0
      %3324 = vmatprep.subr.bf16.mxu0 0
      %3325 = vmatpush1.bf16.msra.mxu0 %v3240
      %3326 = vmatprep.subr.bf16.mxu0 0
      %3327 = vmatpush1.bf16.msra.mxu0 %v3241
      %3328 = vmatprep.subr.bf16.mxu0 0
      %3329 = vmatpush1.bf16.msra.mxu0 %v3242
      %3330 = vmatprep.subr.bf16.mxu0 0
      %3331 = vmatpush1.bf16.msra.mxu0 %v3243
      %3332 = vmatprep.subr.bf16.mxu0 0
      %3333 = vmatpush1.bf16.msra.mxu0 %v3244
      %3334 = vmatprep.subr.bf16.mxu0 0
      %3335 = vmatpush1.bf16.msra.mxu0 %v3245
      %3336 = vmatprep.subr.bf16.mxu0 0
      %3337 = vmatpush1.bf16.msra.mxu0 %v3246
      %3338 = vmatprep.subr.bf16.mxu0 0
      %3339 = vmatpush1.bf16.msra.mxu0 %v3247
      %3340 = vmatprep.subr.bf16.mxu0 0
      %3341 = vmatpush1.bf16.msra.mxu0 %v3248
      %3342 = vmatprep.subr.bf16.mxu0 0
      %3343 = vmatpush1.bf16.msra.mxu0 %v3249
      %3344 = vmatprep.subr.bf16.mxu0 0
      %3345 = vmatpush1.bf16.msra.mxu0 %v3250
      %3346 = vmatprep.subr.bf16.mxu0 0
      %3347 = vmatpush1.bf16.msra.mxu0 %v3251
      %3348 = vmatprep.subr.bf16.mxu0 0
      %3349 = vmatpush1.bf16.msra.mxu0 %v3252
      %3350 = vmatprep.subr.bf16.mxu0 0
      %3351 = vmatpush1.bf16.msra.mxu0 %v3253
      %3352 = vmatprep.subr.bf16.mxu0 0
      %3353 = vmatpush1.bf16.msra.mxu0 %v3254
      %3354 = vmatprep.subr.bf16.mxu0 0
      %3355 = vmatpush1.bf16.msra.mxu0 %v3255
      %3356 = vmatprep.mubr.bf16.mxu0 %v3085
      %3357 = vmatmul.mubr.bf16.gmra.mrb[0].mxu0 %v2957
      %v3358 = vpop.f32.mrb[0].mxu0
      %v3359 = vadd.f32 0.0, %v3358
      %v3360 = vpop.f32.mrb[0].mxu0
      %v3361 = vpop.f32.mrb[0].mxu0
      %v3362 = vadd.f32 0.0, %v3361
      %v3363 = vpop.f32.mrb[0].mxu0
      %3364 = vmatprep.mubr.bf16.mxu0 %v3088
      %3365 = vmatmul.mubr.bf16.gmra.mrb[0].mxu0 %v2960
      %v3366 = vpop.f32.mrb[0].mxu0
      %v3367 = vadd.f32 0.0, %v3366
      %v3368 = vpop.f32.mrb[0].mxu0
      %v3369 = vpop.f32.mrb[0].mxu0
      %v3370 = vadd.f32 0.0, %v3369
      %v3371 = vpop.f32.mrb[0].mxu0
      %3372 = vmatprep.mubr.bf16.mxu0 %v3091
      %3373 = vmatmul.mubr.bf16.gmra.mrb[0].mxu0 %v2963
      %v3374 = vpop.f32.mrb[0].mxu0
      %v3375 = vadd.f32 0.0, %v3374
      %v3376 = vpop.f32.mrb[0].mxu0
      %v3377 = vpop.f32.mrb[0].mxu0
      %v3378 = vadd.f32 0.0, %v3377
      %v3379 = vpop.f32.mrb[0].mxu0
      %3380 = vmatprep.mubr.bf16.mxu0 %v3094
      %3381 = vmatmul.mubr.bf16.gmra.mrb[0].mxu0 %v2966
      %v3382 = vpop.f32.mrb[0].mxu0
      %v3383 = vadd.f32 0.0, %v3382
      %v3384 = vpop.f32.mrb[0].mxu0
      %v3385 = vpop.f32.mrb[0].mxu0
      %v3386 = vadd.f32 0.0, %v3385
      %v3387 = vpop.f32.mrb[0].mxu0
      %3388 = vmatprep.mubr.bf16.mxu0 %v3097
      %3389 = vmatmul.mubr.bf16.gmra.mrb[0].mxu0 %v2969
      %v3390 = vpop.f32.mrb[0].mxu0
      %v3391 = vadd.f32 0.0, %v3390
      %v3392 = vpop.f32.mrb[0].mxu0
      %v3393 = vpop.f32.mrb[0].mxu0
      %v3394 = vadd.f32 0.0, %v3393
      %v3395 = vpop.f32.mrb[0].mxu0
      %3396 = vmatprep.mubr.bf16.mxu0 %v3100
      %3397 = vmatmul.mubr.bf16.gmra.mrb[0].mxu0 %v2972
      %v3398 = vpop.f32.mrb[0].mxu0
      %v3399 = vadd.f32 0.0, %v3398
      %v3400 = vpop.f32.mrb[0].mxu0
      %v3401 = vpop.f32.mrb[0].mxu0
      %v3402 = vadd.f32 0.0, %v3401
      %v3403 = vpop.f32.mrb[0].mxu0
      %3404 = vmatprep.mubr.bf16.mxu0 %v3103
      %3405 = vmatmul.mubr.bf16.gmra.mrb[0].mxu0 %v2975
      %v3406 = vpop.f32.mrb[0].mxu0
      %v3407 = vadd.f32 0.0, %v3406
      %v3408 = vpop.f32.mrb[0].mxu0
      %v3409 = vpop.f32.mrb[0].mxu0
      %v3410 = vadd.f32 0.0, %v3409
      %v3411 = vpop.f32.mrb[0].mxu0
      %3412 = vmatprep.mubr.bf16.mxu0 %v3106
      %3413 = vmatmul.mubr.bf16.gmra.mrb[0].mxu0 %v2978
      %v3414 = vpop.f32.mrb[0].mxu0
      %v3415 = vadd.f32 0.0, %v3414
      %v3416 = vpop.f32.mrb[0].mxu0
      %v3417 = vpop.f32.mrb[0].mxu0
      %v3418 = vadd.f32 0.0, %v3417
      %v3419 = vpop.f32.mrb[0].mxu0
      %3420 = vmatprep.mubr.bf16.mxu0 %v3109
      %3421 = vmatmul.mubr.bf16.gmra.mrb[0].mxu0 %v2981
      %v3422 = vpop.f32.mrb[0].mxu0
      %v3423 = vadd.f32 0.0, %v3422
      %v3424 = vpop.f32.mrb[0].mxu0
      %v3425 = vpop.f32.mrb[0].mxu0
      %v3426 = vadd.f32 0.0, %v3425
      %v3427 = vpop.f32.mrb[0].mxu0
      %3428 = vmatprep.mubr.bf16.mxu0 %v3112
      %3429 = vmatmul.mubr.bf16.gmra.mrb[0].mxu0 %v2984
      %v3430 = vpop.f32.mrb[0].mxu0
      %v3431 = vadd.f32 0.0, %v3430
      %v3432 = vpop.f32.mrb[0].mxu0
      %v3433 = vpop.f32.mrb[0].mxu0
      %v3434 = vadd.f32 0.0, %v3433
      %v3435 = vpop.f32.mrb[0].mxu0
      %3436 = vmatprep.mubr.bf16.mxu0 %v3115
      %3437 = vmatmul.mubr.bf16.gmra.mrb[0].mxu0 %v2987
      %v3438 = vpop.f32.mrb[0].mxu0
      %v3439 = vadd.f32 0.0, %v3438
      %v3440 = vpop.f32.mrb[0].mxu0
      %v3441 = vpop.f32.mrb[0].mxu0
      %v3442 = vadd.f32 0.0, %v3441
      %v3443 = vpop.f32.mrb[0].mxu0
      %3444 = vmatprep.mubr.bf16.mxu0 %v3118
      %3445 = vmatmul.mubr.bf16.gmra.mrb[0].mxu0 %v2990
      %v3446 = vpop.f32.mrb[0].mxu0
      %v3447 = vadd.f32 0.0, %v3446
      %v3448 = vpop.f32.mrb[0].mxu0
      %v3449 = vpop.f32.mrb[0].mxu0
      %v3450 = vadd.f32 0.0, %v3449
      %v3451 = vpop.f32.mrb[0].mxu0
      %3452 = vmatprep.mubr.bf16.mxu0 %v3121
      %3453 = vmatmul.mubr.bf16.gmra.mrb[0].mxu0 %v2993
      %v3454 = vpop.f32.mrb[0].mxu0
      %v3455 = vadd.f32 0.0, %v3454
      %v3456 = vpop.f32.mrb[0].mxu0
      %v3457 = vpop.f32.mrb[0].mxu0
      %v3458 = vadd.f32 0.0, %v3457
      %v3459 = vpop.f32.mrb[0].mxu0
      %3460 = vmatprep.mubr.bf16.mxu0 %v3124
      %3461 = vmatmul.mubr.bf16.gmra.mrb[0].mxu0 %v2996
      %v3462 = vpop.f32.mrb[0].mxu0
      %v3463 = vadd.f32 0.0, %v3462
      %v3464 = vpop.f32.mrb[0].mxu0
      %v3465 = vpop.f32.mrb[0].mxu0
      %v3466 = vadd.f32 0.0, %v3465
      %v3467 = vpop.f32.mrb[0].mxu0
      %3468 = vmatprep.mubr.bf16.mxu0 %v3127
      %3469 = vmatmul.mubr.bf16.gmra.mrb[0].mxu0 %v2999
      %v3470 = vpop.f32.mrb[0].mxu0
      %v3471 = vadd.f32 0.0, %v3470
      %v3472 = vpop.f32.mrb[0].mxu0
      %v3473 = vpop.f32.mrb[0].mxu0
      %v3474 = vadd.f32 0.0, %v3473
      %v3475 = vpop.f32.mrb[0].mxu0
      %3476 = vmatprep.mubr.bf16.mxu0 %v3130
      %3477 = vmatmul.mubr.bf16.gmra.mrb[0].mxu0 %v3002
      %v3478 = vpop.f32.mrb[0].mxu0
      %v3479 = vadd.f32 0.0, %v3478
      %v3480 = vpop.f32.mrb[0].mxu0
      %v3481 = vpop.f32.mrb[0].mxu0
      %v3482 = vadd.f32 0.0, %v3481
      %v3483 = vpop.f32.mrb[0].mxu0
      %3484 = vdwg.mxu0
      %3485 = vmatprep.subr.bf16.mxu0 0
      %3486 = vmatpush1.bf16.msra.mxu0 %v3256
      %3487 = vmatprep.subr.bf16.mxu0 0
      %3488 = vmatpush1.bf16.msra.mxu0 %v3257
      %3489 = vmatprep.subr.bf16.mxu0 0
      %3490 = vmatpush1.bf16.msra.mxu0 0
      %3491 = vmatprep.subr.bf16.mxu0 0
      %3492 = vmatpush1.bf16.msra.mxu0 0
      %3493 = vmatprep.subr.bf16.mxu0 0
      %3494 = vmatpush1.bf16.msra.mxu0 0
      %3495 = vmatprep.subr.bf16.mxu0 0
      %3496 = vmatpush1.bf16.msra.mxu0 0
      %3497 = vmatprep.subr.bf16.mxu0 0
      %3498 = vmatpush1.bf16.msra.mxu0 0
      %3499 = vmatprep.subr.bf16.mxu0 0
      %3500 = vmatpush1.bf16.msra.mxu0 0
      %3501 = vmatprep.subr.bf16.mxu0 0
      %3502 = vmatpush1.bf16.msra.mxu0 0
      %3503 = vmatprep.subr.bf16.mxu0 0
      %3504 = vmatpush1.bf16.msra.mxu0 0
      %3505 = vmatprep.subr.bf16.mxu0 0
      %3506 = vmatpush1.bf16.msra.mxu0 0
      %3507 = vmatprep.subr.bf16.mxu0 0
      %3508 = vmatpush1.bf16.msra.mxu0 0
      %3509 = vmatprep.subr.bf16.mxu0 0
      %3510 = vmatpush1.bf16.msra.mxu0 0
      %3511 = vmatprep.subr.bf16.mxu0 0
      %3512 = vmatpush1.bf16.msra.mxu0 0
      %3513 = vmatprep.subr.bf16.mxu0 0
      %3514 = vmatpush1.bf16.msra.mxu0 0
      %3515 = vmatprep.subr.bf16.mxu0 0
      %3516 = vmatpush1.bf16.msra.mxu0 0
      %3517 = vmatprep.mubr.bf16.mxu0 0
      %3518 = vmatmul.mubr.bf16.gmra.mrb[0].mxu0 %v3277
      %v3519 = vpop.f32.mrb[0].mxu0
      %v3520 = vadd.f32 %v3359, %v3519
      %v3521 = vpop.f32.mrb[0].mxu0
      %v3522 = vpop.f32.mrb[0].mxu0
      %v3523 = vadd.f32 %v3362, %v3522
      %v3524 = vpop.f32.mrb[0].mxu0
      %3525 = vmatprep.mubr.bf16.mxu0 0
      %3526 = vmatmul.mubr.bf16.gmra.mrb[0].mxu0 %v3280
      %v3527 = vpop.f32.mrb[0].mxu0
      %v3528 = vadd.f32 %v3367, %v3527
      %v3529 = vpop.f32.mrb[0].mxu0
      %v3530 = vpop.f32.mrb[0].mxu0
      %v3531 = vadd.f32 %v3370, %v3530
      %v3532 = vpop.f32.mrb[0].mxu0
      %3533 = vmatprep.mubr.bf16.mxu0 0
      %3534 = vmatmul.mubr.bf16.gmra.mrb[0].mxu0 %v3283
      %v3535 = vpop.f32.mrb[0].mxu0
      %v3536 = vadd.f32 %v3375, %v3535
      %v3537 = vpop.f32.mrb[0].mxu0
      %v3538 = vpop.f32.mrb[0].mxu0
      %v3539 = vadd.f32 %v3378, %v3538
      %v3540 = vpop.f32.mrb[0].mxu0
      %3541 = vmatprep.mubr.bf16.mxu0 0
      %3542 = vmatmul.mubr.bf16.gmra.mrb[0].mxu0 %v3286
      %v3543 = vpop.f32.mrb[0].mxu0
      %v3544 = vadd.f32 %v3383, %v3543
      %v3545 = vpop.f32.mrb[0].mxu0
      %v3546 = vpop.f32.mrb[0].mxu0
      %v3547 = vadd.f32 %v3386, %v3546
      %v3548 = vpop.f32.mrb[0].mxu0
      %3549 = vmatprep.mubr.bf16.mxu0 0
      %3550 = vmatmul.mubr.bf16.gmra.mrb[0].mxu0 %v3289
      %v3551 = vpop.f32.mrb[0].mxu0
      %v3552 = vadd.f32 %v3391, %v3551
      %v3553 = vpop.f32.mrb[0].mxu0
      %v3554 = vpop.f32.mrb[0].mxu0
      %v3555 = vadd.f32 %v3394, %v3554
      %v3556 = vpop.f32.mrb[0].mxu0
      %3557 = vmatprep.mubr.bf16.mxu0 0
      %3558 = vmatmul.mubr.bf16.gmra.mrb[0].mxu0 %v3292
      %v3559 = vpop.f32.mrb[0].mxu0
      %v3560 = vadd.f32 %v3399, %v3559
      %v3561 = vpop.f32.mrb[0].mxu0
      %v3562 = vpop.f32.mrb[0].mxu0
      %v3563 = vadd.f32 %v3402, %v3562
      %v3564 = vpop.f32.mrb[0].mxu0
      %3565 = vmatprep.mubr.bf16.mxu0 0
      %3566 = vmatmul.mubr.bf16.gmra.mrb[0].mxu0 %v3295
      %v3567 = vpop.f32.mrb[0].mxu0
      %v3568 = vadd.f32 %v3407, %v3567
      %v3569 = vpop.f32.mrb[0].mxu0
      %v3570 = vpop.f32.mrb[0].mxu0
      %v3571 = vadd.f32 %v3410, %v3570
      %v3572 = vpop.f32.mrb[0].mxu0
      %3573 = vmatprep.mubr.bf16.mxu0 0
      %3574 = vmatmul.mubr.bf16.gmra.mrb[0].mxu0 %v3298
      %v3575 = vpop.f32.mrb[0].mxu0
      %v3576 = vadd.f32 %v3415, %v3575
      %v3577 = vpop.f32.mrb[0].mxu0
      %v3578 = vpop.f32.mrb[0].mxu0
      %v3579 = vadd.f32 %v3418, %v3578
      %v3580 = vpop.f32.mrb[0].mxu0
      %3581 = vmatprep.mubr.bf16.mxu0 0
      %3582 = vmatmul.mubr.bf16.gmra.mrb[0].mxu0 %v3301
      %v3583 = vpop.f32.mrb[0].mxu0
      %v3584 = vadd.f32 %v3423, %v3583
      %v3585 = vpop.f32.mrb[0].mxu0
      %v3586 = vpop.f32.mrb[0].mxu0
      %v3587 = vadd.f32 %v3426, %v3586
      %v3588 = vpop.f32.mrb[0].mxu0
      %3589 = vmatprep.mubr.bf16.mxu0 0
      %3590 = vmatmul.mubr.bf16.gmra.mrb[0].mxu0 %v3304
      %v3591 = vpop.f32.mrb[0].mxu0
      %v3592 = vadd.f32 %v3431, %v3591
      %v3593 = vpop.f32.mrb[0].mxu0
      %v3594 = vpop.f32.mrb[0].mxu0
      %v3595 = vadd.f32 %v3434, %v3594
      %v3596 = vpop.f32.mrb[0].mxu0
      %3597 = vmatprep.mubr.bf16.mxu0 0
      %3598 = vmatmul.mubr.bf16.gmra.mrb[0].mxu0 %v3307
      %v3599 = vpop.f32.mrb[0].mxu0
      %v3600 = vadd.f32 %v3439, %v3599
      %v3601 = vpop.f32.mrb[0].mxu0
      %v3602 = vpop.f32.mrb[0].mxu0
      %v3603 = vadd.f32 %v3442, %v3602
      %v3604 = vpop.f32.mrb[0].mxu0
      %3605 = vmatprep.mubr.bf16.mxu0 0
      %3606 = vmatmul.mubr.bf16.gmra.mrb[0].mxu0 %v3310
      %v3607 = vpop.f32.mrb[0].mxu0
      %v3608 = vadd.f32 %v3447, %v3607
      %v3609 = vpop.f32.mrb[0].mxu0
      %v3610 = vpop.f32.mrb[0].mxu0
      %v3611 = vadd.f32 %v3450, %v3610
      %v3612 = vpop.f32.mrb[0].mxu0
      %3613 = vmatprep.mubr.bf16.mxu0 0
      %3614 = vmatmul.mubr.bf16.gmra.mrb[0].mxu0 %v3313
      %v3615 = vpop.f32.mrb[0].mxu0
      %v3616 = vadd.f32 %v3455, %v3615
      %v3617 = vpop.f32.mrb[0].mxu0
      %v3618 = vpop.f32.mrb[0].mxu0
      %v3619 = vadd.f32 %v3458, %v3618
      %v3620 = vpop.f32.mrb[0].mxu0
      %3621 = vmatprep.mubr.bf16.mxu0 0
      %3622 = vmatmul.mubr.bf16.gmra.mrb[0].mxu0 %v3316
      %v3623 = vpop.f32.mrb[0].mxu0
      %v3624 = vadd.f32 %v3463, %v3623
      %v3625 = vpop.f32.mrb[0].mxu0
      %v3626 = vpop.f32.mrb[0].mxu0
      %v3627 = vadd.f32 %v3466, %v3626
      %v3628 = vpop.f32.mrb[0].mxu0
      %3629 = vmatprep.mubr.bf16.mxu0 0
      %3630 = vmatmul.mubr.bf16.gmra.mrb[0].mxu0 %v3319
      %v3631 = vpop.f32.mrb[0].mxu0
      %v3632 = vadd.f32 %v3471, %v3631
      %v3633 = vpop.f32.mrb[0].mxu0
      %v3634 = vpop.f32.mrb[0].mxu0
      %v3635 = vadd.f32 %v3474, %v3634
      %v3636 = vpop.f32.mrb[0].mxu0
      %3637 = vmatprep.mubr.bf16.mxu0 0
      %3638 = vmatmul.mubr.bf16.gmra.mrb[0].mxu0 %v3322
      %v3639 = vpop.f32.mrb[0].mxu0
      %v3640 = vadd.f32 %v3479, %v3639
      %v3641 = vpop.f32.mrb[0].mxu0
      %v3642 = vpop.f32.mrb[0].mxu0
      %v3643 = vadd.f32 %v3482, %v3642
      %v3644 = vpop.f32.mrb[0].mxu0
      %3645 = vdwg.mxu0
      %v3646 = vmax.f32 %v3520, 0.0
      %v3647 = vmax.f32 %v3523, 0.0
      %v3648 = vmax.f32 %v3528, 0.0
      %v3649 = vmax.f32 %v3531, 0.0
      %v3650 = vmax.f32 %v3536, 0.0
      %v3651 = vmax.f32 %v3539, 0.0
      %v3652 = vmax.f32 %v3544, 0.0
      %v3653 = vmax.f32 %v3547, 0.0
      %v3654 = vmax.f32 %v3552, 0.0
      %v3655 = vmax.f32 %v3555, 0.0
      %v3656 = vmax.f32 %v3560, 0.0
      %v3657 = vmax.f32 %v3563, 0.0
      %v3658 = vmax.f32 %v3568, 0.0
      %v3659 = vmax.f32 %v3571, 0.0
      %v3660 = vmax.f32 %v3576, 0.0
      %v3661 = vmax.f32 %v3579, 0.0
      %v3662 = vmax.f32 %v3584, 0.0
      %v3663 = vmax.f32 %v3587, 0.0
      %v3664 = vmax.f32 %v3592, 0.0
      %v3665 = vmax.f32 %v3595, 0.0
      %v3666 = vmax.f32 %v3600, 0.0
      %v3667 = vmax.f32 %v3603, 0.0
      %v3668 = vmax.f32 %v3608, 0.0
      %v3669 = vmax.f32 %v3611, 0.0
      %v3670 = vmax.f32 %v3616, 0.0
      %v3671 = vmax.f32 %v3619, 0.0
      %v3672 = vmax.f32 %v3624, 0.0
      %v3673 = vmax.f32 %v3627, 0.0
      %v3674 = vmax.f32 %v3632, 0.0
      %v3675 = vmax.f32 %v3635, 0.0
      %v3676 = vmax.f32 %v3640, 0.0
      %v3677 = vmax.f32 %v3643, 0.0
      %v3678 = vpack.c.bf16 %v3647, %v3646
      %v3679 = vpack.c.bf16 %v3649, %v3648
      %v3680 = vpack.c.bf16 %v3651, %v3650
      %v3681 = vpack.c.bf16 %v3653, %v3652
      %v3682 = vpack.c.bf16 %v3655, %v3654
      %v3683 = vpack.c.bf16 %v3657, %v3656
      %v3684 = vpack.c.bf16 %v3659, %v3658
      %v3685 = vpack.c.bf16 %v3661, %v3660
      %v3686 = vpack.c.bf16 %v3663, %v3662
      %v3687 = vpack.c.bf16 %v3665, %v3664
      %v3688 = vpack.c.bf16 %v3667, %v3666
      %v3689 = vpack.c.bf16 %v3669, %v3668
      %v3690 = vpack.c.bf16 %v3671, %v3670
      %v3691 = vpack.c.bf16 %v3673, %v3672
      %v3692 = vpack.c.bf16 %v3675, %v3674
      %v3693 = vpack.c.bf16 %v3677, %v3676
      %v3694 = vld [vmem:[%s4] sm:$0xf]
      %v3696 = vsel %vm1205, %v3678, 0
      %v3699 = vsel %vm1205, %v3679, 0
      %v3702 = vsel %vm1205, %v3680, 0
      %v3705 = vsel %vm1205, %v3681, 0
      %v3708 = vsel %vm1205, %v3682, 0
      %v3711 = vsel %vm1205, %v3683, 0
      %v3714 = vsel %vm1205, %v3684, 0
      %v3717 = vsel %vm1205, %v3685, 0
      %v3720 = vsel %vm1205, %v3686, 0
      %v3723 = vsel %vm1205, %v3687, 0
      %v3726 = vsel %vm1205, %v3688, 0
      %v3729 = vsel %vm1205, %v3689, 0
      %v3732 = vsel %vm1205, %v3690, 0
      %v3735 = vsel %vm1205, %v3691, 0
      %v3738 = vsel %vm1205, %v3692, 0
      %v3741 = vsel %vm1205, %v3693, 0
      %vm3743 = vcmask 1043456
      %v3745 = vsel %vm3743, %v3694, 0
      %3747 = vmatprep.subr.bf16.mxu0 0
      %3748 = vmatpush1.bf16.msra.mxu0 %v3745
      %3749 = vmatprep.subr.bf16.mxu0 0
      %3750 = vmatpush1.bf16.msra.mxu0 0
      %3751 = vmatprep.subr.bf16.mxu0 0
      %3752 = vmatpush1.bf16.msra.mxu0 0
      %3753 = vmatprep.subr.bf16.mxu0 0
      %3754 = vmatpush1.bf16.msra.mxu0 0
      %3755 = vmatprep.subr.bf16.mxu0 0
      %3756 = vmatpush1.bf16.msra.mxu0 0
      %3757 = vmatprep.subr.bf16.mxu0 0
      %3758 = vmatpush1.bf16.msra.mxu0 0
      %3759 = vmatprep.subr.bf16.mxu0 0
      %3760 = vmatpush1.bf16.msra.mxu0 0
      %3761 = vmatprep.subr.bf16.mxu0 0
      %3762 = vmatpush1.bf16.msra.mxu0 0
      %3763 = vmatprep.subr.bf16.mxu0 0
      %3764 = vmatpush1.bf16.msra.mxu0 0
      %3765 = vmatprep.subr.bf16.mxu0 0
      %3766 = vmatpush1.bf16.msra.mxu0 0
      %3767 = vmatprep.subr.bf16.mxu0 0
      %3768 = vmatpush1.bf16.msra.mxu0 0
      %3769 = vmatprep.subr.bf16.mxu0 0
      %3770 = vmatpush1.bf16.msra.mxu0 0
      %3771 = vmatprep.subr.bf16.mxu0 0
      %3772 = vmatpush1.bf16.msra.mxu0 0
      %3773 = vmatprep.subr.bf16.mxu0 0
      %3774 = vmatpush1.bf16.msra.mxu0 0
      %3775 = vmatprep.subr.bf16.mxu0 0
      %3776 = vmatpush1.bf16.msra.mxu0 0
      %3777 = vmatprep.subr.bf16.mxu0 0
      %3778 = vmatpush1.bf16.msra.mxu0 0
      %3779 = vmatprep.mubr.bf16.mxu0 0
      %3780 = vmatmul.mubr.bf16.gmra.mrb[0].mxu0 %v3696
      %v3781 = vpop.f32.mrb[0].mxu0
      %v3782 = vadd.f32 0.0, %v3781
      %v3783 = vpop.f32.mrb[0].mxu0
      %v3784 = vpop.f32.mrb[0].mxu0
      %v3785 = vadd.f32 0.0, %v3784
      %v3786 = vpop.f32.mrb[0].mxu0
      %3787 = vmatprep.mubr.bf16.mxu0 0
      %3788 = vmatmul.mubr.bf16.gmra.mrb[0].mxu0 %v3699
      %v3789 = vpop.f32.mrb[0].mxu0
      %v3790 = vadd.f32 0.0, %v3789
      %v3791 = vpop.f32.mrb[0].mxu0
      %v3792 = vpop.f32.mrb[0].mxu0
      %v3793 = vadd.f32 0.0, %v3792
      %v3794 = vpop.f32.mrb[0].mxu0
      %3795 = vmatprep.mubr.bf16.mxu0 0
      %3796 = vmatmul.mubr.bf16.gmra.mrb[0].mxu0 %v3702
      %v3797 = vpop.f32.mrb[0].mxu0
      %v3798 = vadd.f32 0.0, %v3797
      %v3799 = vpop.f32.mrb[0].mxu0
      %v3800 = vpop.f32.mrb[0].mxu0
      %v3801 = vadd.f32 0.0, %v3800
      %v3802 = vpop.f32.mrb[0].mxu0
      %3803 = vmatprep.mubr.bf16.mxu0 0
      %3804 = vmatmul.mubr.bf16.gmra.mrb[0].mxu0 %v3705
      %v3805 = vpop.f32.mrb[0].mxu0
      %v3806 = vadd.f32 0.0, %v3805
      %v3807 = vpop.f32.mrb[0].mxu0
      %v3808 = vpop.f32.mrb[0].mxu0
      %v3809 = vadd.f32 0.0, %v3808
      %v3810 = vpop.f32.mrb[0].mxu0
      %3811 = vmatprep.mubr.bf16.mxu0 0
      %3812 = vmatmul.mubr.bf16.gmra.mrb[0].mxu0 %v3708
      %v3813 = vpop.f32.mrb[0].mxu0
      %v3814 = vadd.f32 0.0, %v3813
      %v3815 = vpop.f32.mrb[0].mxu0
      %v3816 = vpop.f32.mrb[0].mxu0
      %v3817 = vadd.f32 0.0, %v3816
      %v3818 = vpop.f32.mrb[0].mxu0
      %3819 = vmatprep.mubr.bf16.mxu0 0
      %3820 = vmatmul.mubr.bf16.gmra.mrb[0].mxu0 %v3711
      %v3821 = vpop.f32.mrb[0].mxu0
      %v3822 = vadd.f32 0.0, %v3821
      %v3823 = vpop.f32.mrb[0].mxu0
      %v3824 = vpop.f32.mrb[0].mxu0
      %v3825 = vadd.f32 0.0, %v3824
      %v3826 = vpop.f32.mrb[0].mxu0
      %3827 = vmatprep.mubr.bf16.mxu0 0
      %3828 = vmatmul.mubr.bf16.gmra.mrb[0].mxu0 %v3714
      %v3829 = vpop.f32.mrb[0].mxu0
      %v3830 = vadd.f32 0.0, %v3829
      %v3831 = vpop.f32.mrb[0].mxu0
      %v3832 = vpop.f32.mrb[0].mxu0
      %v3833 = vadd.f32 0.0, %v3832
      %v3834 = vpop.f32.mrb[0].mxu0
      %3835 = vmatprep.mubr.bf16.mxu0 0
      %3836 = vmatmul.mubr.bf16.gmra.mrb[0].mxu0 %v3717
      %v3837 = vpop.f32.mrb[0].mxu0
      %v3838 = vadd.f32 0.0, %v3837
      %v3839 = vpop.f32.mrb[0].mxu0
      %v3840 = vpop.f32.mrb[0].mxu0
      %v3841 = vadd.f32 0.0, %v3840
      %v3842 = vpop.f32.mrb[0].mxu0
      %3843 = vmatprep.mubr.bf16.mxu0 0
      %3844 = vmatmul.mubr.bf16.gmra.mrb[0].mxu0 %v3720
      %v3845 = vpop.f32.mrb[0].mxu0
      %v3846 = vadd.f32 0.0, %v3845
      %v3847 = vpop.f32.mrb[0].mxu0
      %v3848 = vpop.f32.mrb[0].mxu0
      %v3849 = vadd.f32 0.0, %v3848
      %v3850 = vpop.f32.mrb[0].mxu0
      %3851 = vmatprep.mubr.bf16.mxu0 0
      %3852 = vmatmul.mubr.bf16.gmra.mrb[0].mxu0 %v3723
      %v3853 = vpop.f32.mrb[0].mxu0
      %v3854 = vadd.f32 0.0, %v3853
      %v3855 = vpop.f32.mrb[0].mxu0
      %v3856 = vpop.f32.mrb[0].mxu0
      %v3857 = vadd.f32 0.0, %v3856
      %v3858 = vpop.f32.mrb[0].mxu0
      %3859 = vmatprep.mubr.bf16.mxu0 0
      %3860 = vmatmul.mubr.bf16.gmra.mrb[0].mxu0 %v3726
      %v3861 = vpop.f32.mrb[0].mxu0
      %v3862 = vadd.f32 0.0, %v3861
      %v3863 = vpop.f32.mrb[0].mxu0
      %v3864 = vpop.f32.mrb[0].mxu0
      %v3865 = vadd.f32 0.0, %v3864
      %v3866 = vpop.f32.mrb[0].mxu0
      %3867 = vmatprep.mubr.bf16.mxu0 0
      %3868 = vmatmul.mubr.bf16.gmra.mrb[0].mxu0 %v3729
      %v3869 = vpop.f32.mrb[0].mxu0
      %v3870 = vadd.f32 0.0, %v3869
      %v3871 = vpop.f32.mrb[0].mxu0
      %v3872 = vpop.f32.mrb[0].mxu0
      %v3873 = vadd.f32 0.0, %v3872
      %v3874 = vpop.f32.mrb[0].mxu0
      %3875 = vmatprep.mubr.bf16.mxu0 0
      %3876 = vmatmul.mubr.bf16.gmra.mrb[0].mxu0 %v3732
      %v3877 = vpop.f32.mrb[0].mxu0
      %v3878 = vadd.f32 0.0, %v3877
      %v3879 = vpop.f32.mrb[0].mxu0
      %v3880 = vpop.f32.mrb[0].mxu0
      %v3881 = vadd.f32 0.0, %v3880
      %v3882 = vpop.f32.mrb[0].mxu0
      %3883 = vmatprep.mubr.bf16.mxu0 0
      %3884 = vmatmul.mubr.bf16.gmra.mrb[0].mxu0 %v3735
      %v3885 = vpop.f32.mrb[0].mxu0
      %v3886 = vadd.f32 0.0, %v3885
      %v3887 = vpop.f32.mrb[0].mxu0
      %v3888 = vpop.f32.mrb[0].mxu0
      %v3889 = vadd.f32 0.0, %v3888
      %v3890 = vpop.f32.mrb[0].mxu0
      %3891 = vmatprep.mubr.bf16.mxu0 0
      %3892 = vmatmul.mubr.bf16.gmra.mrb[0].mxu0 %v3738
      %v3893 = vpop.f32.mrb[0].mxu0
      %v3894 = vadd.f32 0.0, %v3893
      %v3895 = vpop.f32.mrb[0].mxu0
      %v3896 = vpop.f32.mrb[0].mxu0
      %v3897 = vadd.f32 0.0, %v3896
      %v3898 = vpop.f32.mrb[0].mxu0
      %3899 = vmatprep.mubr.bf16.mxu0 0
      %3900 = vmatmul.mubr.bf16.gmra.mrb[0].mxu0 %v3741
      %v3901 = vpop.f32.mrb[0].mxu0
      %v3902 = vadd.f32 0.0, %v3901
      %v3903 = vpop.f32.mrb[0].mxu0
      %v3904 = vpop.f32.mrb[0].mxu0
      %v3905 = vadd.f32 0.0, %v3904
      %v3906 = vpop.f32.mrb[0].mxu0
      %3907 = vdwg.mxu0
      %v3908 = vadd.f32 %v1535, %v3782
      %v3909 = vadd.f32 %v1538, %v3785
      %v3910 = vadd.f32 %v1543, %v3790
      %v3911 = vadd.f32 %v1546, %v3793
      %v3912 = vadd.f32 %v1551, %v3798
      %v3913 = vadd.f32 %v1554, %v3801
      %v3914 = vadd.f32 %v1559, %v3806
      %v3915 = vadd.f32 %v1562, %v3809
      %v3916 = vadd.f32 %v1567, %v3814
      %v3917 = vadd.f32 %v1570, %v3817
      %v3918 = vadd.f32 %v1575, %v3822
      %v3919 = vadd.f32 %v1578, %v3825
      %v3920 = vadd.f32 %v1583, %v3830
      %v3921 = vadd.f32 %v1586, %v3833
      %v3922 = vadd.f32 %v1591, %v3838
      %v3923 = vadd.f32 %v1594, %v3841
      %v3924 = vadd.f32 %v1599, %v3846
      %v3925 = vadd.f32 %v1602, %v3849
      %v3926 = vadd.f32 %v1607, %v3854
      %v3927 = vadd.f32 %v1610, %v3857
      %v3928 = vadd.f32 %v1615, %v3862
      %v3929 = vadd.f32 %v1618, %v3865
      %v3930 = vadd.f32 %v1623, %v3870
      %v3931 = vadd.f32 %v1626, %v3873
      %v3932 = vadd.f32 %v1631, %v3878
      %v3933 = vadd.f32 %v1634, %v3881
      %v3934 = vadd.f32 %v1639, %v3886
      %v3935 = vadd.f32 %v1642, %v3889
      %v3936 = vadd.f32 %v1647, %v3894
      %v3937 = vadd.f32 %v1650, %v3897
      %v3938 = vadd.f32 %v1655, %v3902
      %v3939 = vadd.f32 %v1658, %v3905
      %v3940 = vmax.f32 %v3908, 0.0
      %v3941 = vmax.f32 %v3909, 0.0
      %v3942 = vmax.f32 %v3910, 0.0
      %v3943 = vmax.f32 %v3911, 0.0
      %v3944 = vmax.f32 %v3912, 0.0
      %v3945 = vmax.f32 %v3913, 0.0
      %v3946 = vmax.f32 %v3914, 0.0
      %v3947 = vmax.f32 %v3915, 0.0
      %v3948 = vmax.f32 %v3916, 0.0
      %v3949 = vmax.f32 %v3917, 0.0
      %v3950 = vmax.f32 %v3918, 0.0
      %v3951 = vmax.f32 %v3919, 0.0
      %v3952 = vmax.f32 %v3920, 0.0
      %v3953 = vmax.f32 %v3921, 0.0
      %v3954 = vmax.f32 %v3922, 0.0
      %v3955 = vmax.f32 %v3923, 0.0
      %v3956 = vmax.f32 %v3924, 0.0
      %v3957 = vmax.f32 %v3925, 0.0
      %v3958 = vmax.f32 %v3926, 0.0
      %v3959 = vmax.f32 %v3927, 0.0
      %v3960 = vmax.f32 %v3928, 0.0
      %v3961 = vmax.f32 %v3929, 0.0
      %v3962 = vmax.f32 %v3930, 0.0
      %v3963 = vmax.f32 %v3931, 0.0
      %v3964 = vmax.f32 %v3932, 0.0
      %v3965 = vmax.f32 %v3933, 0.0
      %v3966 = vmax.f32 %v3934, 0.0
      %v3967 = vmax.f32 %v3935, 0.0
      %v3968 = vmax.f32 %v3936, 0.0
      %v3969 = vmax.f32 %v3937, 0.0
      %v3970 = vmax.f32 %v3938, 0.0
      %v3971 = vmax.f32 %v3939, 0.0
      %v3972 = vpack.c.bf16 %v3941, %v3940
      %v3973 = vpack.c.bf16 %v3943, %v3942
      %v3974 = vpack.c.bf16 %v3945, %v3944
      %v3975 = vpack.c.bf16 %v3947, %v3946
      %v3976 = vpack.c.bf16 %v3949, %v3948
      %v3977 = vpack.c.bf16 %v3951, %v3950
      %v3978 = vpack.c.bf16 %v3953, %v3952
      %v3979 = vpack.c.bf16 %v3955, %v3954
      %v3980 = vpack.c.bf16 %v3957, %v3956
      %v3981 = vpack.c.bf16 %v3959, %v3958
      %v3982 = vpack.c.bf16 %v3961, %v3960
      %v3983 = vpack.c.bf16 %v3963, %v3962
      %v3984 = vpack.c.bf16 %v3965, %v3964
      %v3985 = vpack.c.bf16 %v3967, %v3966
      %v3986 = vpack.c.bf16 %v3969, %v3968
      %v3987 = vpack.c.bf16 %v3971, %v3970
      %v4004 = vunpack.c.l.b16 %v3972
      %v4005 = vunpack.c.h.b16 %v3972
      %v4006 = vunpack.c.l.b16 %v3973
      %v4007 = vunpack.c.h.b16 %v3973
      %v4008 = vunpack.c.l.b16 %v3974
      %v4009 = vunpack.c.h.b16 %v3974
      %v4010 = vunpack.c.l.b16 %v3975
      %v4011 = vunpack.c.h.b16 %v3975
      %v4012 = vunpack.c.l.b16 %v3976
      %v4013 = vunpack.c.h.b16 %v3976
      %v4014 = vunpack.c.l.b16 %v3977
      %v4015 = vunpack.c.h.b16 %v3977
      %v4016 = vunpack.c.l.b16 %v3978
      %v4017 = vunpack.c.h.b16 %v3978
      %v4018 = vunpack.c.l.b16 %v3979
      %v4019 = vunpack.c.h.b16 %v3979
      %v4020 = vunpack.c.l.b16 %v3980
      %v4021 = vunpack.c.h.b16 %v3980
      %v4022 = vunpack.c.l.b16 %v3981
      %v4023 = vunpack.c.h.b16 %v3981
      %v4024 = vunpack.c.l.b16 %v3982
      %v4025 = vunpack.c.h.b16 %v3982
      %v4026 = vunpack.c.l.b16 %v3983
      %v4027 = vunpack.c.h.b16 %v3983
      %v4028 = vunpack.c.l.b16 %v3984
      %v4029 = vunpack.c.h.b16 %v3984
      %v4030 = vunpack.c.l.b16 %v3985
      %v4031 = vunpack.c.h.b16 %v3985
      %v4032 = vunpack.c.l.b16 %v3986
      %v4033 = vunpack.c.h.b16 %v3986
      %v4034 = vunpack.c.l.b16 %v3987
      %v4035 = vunpack.c.h.b16 %v3987
      %v4036 = vpack.c.b16 %v4004, %v4004
      %v4037 = vpack.c.b16 %v4005, %v4005
      %v4038 = vpack.c.b16 %v4006, %v4006
      %v4039 = vpack.c.b16 %v4007, %v4007
      %v4040 = vpack.c.b16 %v4008, %v4008
      %v4041 = vpack.c.b16 %v4009, %v4009
      %v4042 = vpack.c.b16 %v4010, %v4010
      %v4043 = vpack.c.b16 %v4011, %v4011
      %v4044 = vpack.c.b16 %v4012, %v4012
      %v4045 = vpack.c.b16 %v4013, %v4013
      %v4046 = vpack.c.b16 %v4014, %v4014
      %v4047 = vpack.c.b16 %v4015, %v4015
      %v4048 = vpack.c.b16 %v4016, %v4016
      %v4049 = vpack.c.b16 %v4017, %v4017
      %v4050 = vpack.c.b16 %v4018, %v4018
      %v4051 = vpack.c.b16 %v4019, %v4019
      %v4052 = vpack.c.b16 %v4020, %v4020
      %v4053 = vpack.c.b16 %v4021, %v4021
      %v4054 = vpack.c.b16 %v4022, %v4022
      %v4055 = vpack.c.b16 %v4023, %v4023
      %v4056 = vpack.c.b16 %v4024, %v4024
      %v4057 = vpack.c.b16 %v4025, %v4025
      %v4058 = vpack.c.b16 %v4026, %v4026
      %v4059 = vpack.c.b16 %v4027, %v4027
      %v4060 = vpack.c.b16 %v4028, %v4028
      %v4061 = vpack.c.b16 %v4029, %v4029
      %v4062 = vpack.c.b16 %v4030, %v4030
      %v4063 = vpack.c.b16 %v4031, %v4031
      %v4064 = vpack.c.b16 %v4032, %v4032
      %v4065 = vpack.c.b16 %v4033, %v4033
      %v4066 = vpack.c.b16 %v4034, %v4034
      %v4067 = vpack.c.b16 %v4035, %v4035
      %v4069 = vshrl.u32 %v4036, 16
      %v4071 = vrot.slane %v4069, 7
      %v4072 = vshll.u32 %v4036, 16
      %v4074 = vor.u32 %v4071, %v4072
      %v4075 = vrot.slane %v4071, 4
      %v4077 = vshrl.u32 %v4037, 16
      %v4079 = vrot.slane %v4077, 7
      %v4080 = vshll.u32 %v4037, 16
      %v4082 = vor.u32 %v4079, %v4080
      %v4083 = vsel %vm1791, %v4075, %v4082
      %v4084 = vrot.slane %v4079, 4
      %v4086 = vshrl.u32 %v4038, 16
      %v4088 = vrot.slane %v4086, 7
      %v4089 = vshll.u32 %v4038, 16
      %v4091 = vor.u32 %v4088, %v4089
      %v4092 = vrot.slane %v4088, 4
      %v4094 = vshrl.u32 %v4039, 16
      %v4096 = vrot.slane %v4094, 7
      %v4097 = vshll.u32 %v4039, 16
      %v4099 = vor.u32 %v4096, %v4097
      %v4100 = vsel %vm1791, %v4092, %v4099
      %v4101 = vrot.slane %v4096, 4
      %v4103 = vshrl.u32 %v4040, 16
      %v4105 = vrot.slane %v4103, 7
      %v4106 = vshll.u32 %v4040, 16
      %v4108 = vor.u32 %v4105, %v4106
      %v4109 = vrot.slane %v4105, 4
      %v4111 = vshrl.u32 %v4041, 16
      %v4113 = vrot.slane %v4111, 7
      %v4114 = vshll.u32 %v4041, 16
      %v4116 = vor.u32 %v4113, %v4114
      %v4117 = vsel %vm1791, %v4109, %v4116
      %v4118 = vrot.slane %v4113, 4
      %v4120 = vshrl.u32 %v4042, 16
      %v4122 = vrot.slane %v4120, 7
      %v4123 = vshll.u32 %v4042, 16
      %v4125 = vor.u32 %v4122, %v4123
      %v4126 = vrot.slane %v4122, 4
      %v4128 = vshrl.u32 %v4043, 16
      %v4130 = vrot.slane %v4128, 7
      %v4131 = vshll.u32 %v4043, 16
      %v4133 = vor.u32 %v4130, %v4131
      %v4134 = vsel %vm1791, %v4126, %v4133
      %v4135 = vrot.slane %v4130, 4
      %v4137 = vshrl.u32 %v4044, 16
      %v4139 = vrot.slane %v4137, 7
      %v4140 = vshll.u32 %v4044, 16
      %v4142 = vor.u32 %v4139, %v4140
      %v4143 = vrot.slane %v4139, 4
      %v4145 = vshrl.u32 %v4045, 16
      %v4147 = vrot.slane %v4145, 7
      %v4148 = vshll.u32 %v4045, 16
      %v4150 = vor.u32 %v4147, %v4148
      %v4151 = vsel %vm1791, %v4143, %v4150
      %v4152 = vrot.slane %v4147, 4
      %v4154 = vshrl.u32 %v4046, 16
      %v4156 = vrot.slane %v4154, 7
      %v4157 = vshll.u32 %v4046, 16
      %v4159 = vor.u32 %v4156, %v4157
      %v4160 = vrot.slane %v4156, 4
      %v4162 = vshrl.u32 %v4047, 16
      %v4164 = vrot.slane %v4162, 7
      %v4165 = vshll.u32 %v4047, 16
      %v4167 = vor.u32 %v4164, %v4165
      %v4168 = vsel %vm1791, %v4160, %v4167
      %v4169 = vrot.slane %v4164, 4
      %v4171 = vshrl.u32 %v4048, 16
      %v4173 = vrot.slane %v4171, 7
      %v4174 = vshll.u32 %v4048, 16
      %v4176 = vor.u32 %v4173, %v4174
      %v4177 = vrot.slane %v4173, 4
      %v4179 = vshrl.u32 %v4049, 16
      %v4181 = vrot.slane %v4179, 7
      %v4182 = vshll.u32 %v4049, 16
      %v4184 = vor.u32 %v4181, %v4182
      %v4185 = vsel %vm1791, %v4177, %v4184
      %v4186 = vrot.slane %v4181, 4
      %v4188 = vshrl.u32 %v4050, 16
      %v4190 = vrot.slane %v4188, 7
      %v4191 = vshll.u32 %v4050, 16
      %v4193 = vor.u32 %v4190, %v4191
      %v4194 = vrot.slane %v4190, 4
      %v4196 = vshrl.u32 %v4051, 16
      %v4198 = vrot.slane %v4196, 7
      %v4199 = vshll.u32 %v4051, 16
      %v4201 = vor.u32 %v4198, %v4199
      %v4202 = vsel %vm1791, %v4194, %v4201
      %v4203 = vrot.slane %v4198, 4
      %v4205 = vshrl.u32 %v4052, 16
      %v4207 = vrot.slane %v4205, 7
      %v4208 = vshll.u32 %v4052, 16
      %v4210 = vor.u32 %v4207, %v4208
      %v4211 = vrot.slane %v4207, 4
      %v4213 = vshrl.u32 %v4053, 16
      %v4215 = vrot.slane %v4213, 7
      %v4216 = vshll.u32 %v4053, 16
      %v4218 = vor.u32 %v4215, %v4216
      %v4219 = vsel %vm1791, %v4211, %v4218
      %v4220 = vrot.slane %v4215, 4
      %v4222 = vshrl.u32 %v4054, 16
      %v4224 = vrot.slane %v4222, 7
      %v4225 = vshll.u32 %v4054, 16
      %v4227 = vor.u32 %v4224, %v4225
      %v4228 = vrot.slane %v4224, 4
      %v4230 = vshrl.u32 %v4055, 16
      %v4232 = vrot.slane %v4230, 7
      %v4233 = vshll.u32 %v4055, 16
      %v4235 = vor.u32 %v4232, %v4233
      %v4236 = vsel %vm1791, %v4228, %v4235
      %v4237 = vrot.slane %v4232, 4
      %v4239 = vshrl.u32 %v4056, 16
      %v4241 = vrot.slane %v4239, 7
      %v4242 = vshll.u32 %v4056, 16
      %v4244 = vor.u32 %v4241, %v4242
      %v4245 = vrot.slane %v4241, 4
      %v4247 = vshrl.u32 %v4057, 16
      %v4249 = vrot.slane %v4247, 7
      %v4250 = vshll.u32 %v4057, 16
      %v4252 = vor.u32 %v4249, %v4250
      %v4253 = vsel %vm1791, %v4245, %v4252
      %v4254 = vrot.slane %v4249, 4
      %v4256 = vshrl.u32 %v4058, 16
      %v4258 = vrot.slane %v4256, 7
      %v4259 = vshll.u32 %v4058, 16
      %v4261 = vor.u32 %v4258, %v4259
      %v4262 = vrot.slane %v4258, 4
      %v4264 = vshrl.u32 %v4059, 16
      %v4266 = vrot.slane %v4264, 7
      %v4267 = vshll.u32 %v4059, 16
      %v4269 = vor.u32 %v4266, %v4267
      %v4270 = vsel %vm1791, %v4262, %v4269
      %v4271 = vrot.slane %v4266, 4
      %v4273 = vshrl.u32 %v4060, 16
      %v4275 = vrot.slane %v4273, 7
      %v4276 = vshll.u32 %v4060, 16
      %v4278 = vor.u32 %v4275, %v4276
      %v4279 = vrot.slane %v4275, 4
      %v4281 = vshrl.u32 %v4061, 16
      %v4283 = vrot.slane %v4281, 7
      %v4284 = vshll.u32 %v4061, 16
      %v4286 = vor.u32 %v4283, %v4284
      %v4287 = vsel %vm1791, %v4279, %v4286
      %v4288 = vrot.slane %v4283, 4
      %v4290 = vshrl.u32 %v4062, 16
      %v4292 = vrot.slane %v4290, 7
      %v4293 = vshll.u32 %v4062, 16
      %v4295 = vor.u32 %v4292, %v4293
      %v4296 = vrot.slane %v4292, 4
      %v4298 = vshrl.u32 %v4063, 16
      %v4300 = vrot.slane %v4298, 7
      %v4301 = vshll.u32 %v4063, 16
      %v4303 = vor.u32 %v4300, %v4301
      %v4304 = vsel %vm1791, %v4296, %v4303
      %v4305 = vrot.slane %v4300, 4
      %v4307 = vshrl.u32 %v4064, 16
      %v4309 = vrot.slane %v4307, 7
      %v4310 = vshll.u32 %v4064, 16
      %v4312 = vor.u32 %v4309, %v4310
      %v4313 = vrot.slane %v4309, 4
      %v4315 = vshrl.u32 %v4065, 16
      %v4317 = vrot.slane %v4315, 7
      %v4318 = vshll.u32 %v4065, 16
      %v4320 = vor.u32 %v4317, %v4318
      %v4321 = vsel %vm1791, %v4313, %v4320
      %v4322 = vrot.slane %v4317, 4
      %v4324 = vshrl.u32 %v4066, 16
      %v4326 = vrot.slane %v4324, 7
      %v4327 = vshll.u32 %v4066, 16
      %v4329 = vor.u32 %v4326, %v4327
      %v4330 = vrot.slane %v4326, 4
      %v4332 = vshrl.u32 %v4067, 16
      %v4334 = vrot.slane %v4332, 7
      %v4335 = vshll.u32 %v4067, 16
      %v4337 = vor.u32 %v4334, %v4335
      %v4338 = vsel %vm1791, %v4330, %v4337
      %v4339 = vrot.slane %v4334, 4
      %v4388 = vld [vmem:[%s2112] sm:$0xf]
      %v4389 = vsel %vm2115, %v4074, %v4388
      %4390 = vst [vmem:[%s2112] sm:$0xf] %v4389
      %4391 = vst.msk [vmem:[%s2112 + $0x4] sm:$0xf] %vm334, %v4083
      %v4392 = vld [vmem:[%s2112 + $0x8] sm:$0x1]
      %v4393 = vsel %vm2121, %v4084, %v4392
      %4394 = vst [vmem:[%s2112 + $0x8] sm:$0x1] %v4393
      %v4395 = vld [vmem:[%s2112 + $0xc] sm:$0xf]
      %v4396 = vsel %vm2115, %v4091, %v4395
      %4397 = vst [vmem:[%s2112 + $0xc] sm:$0xf] %v4396
      %4398 = vst.msk [vmem:[%s2112 + $0x10] sm:$0xf] %vm334, %v4100
      %v4399 = vld [vmem:[%s2112 + $0x14] sm:$0x1]
      %v4400 = vsel %vm2121, %v4101, %v4399
      %4401 = vst [vmem:[%s2112 + $0x14] sm:$0x1] %v4400
      %v4402 = vld [vmem:[%s2112 + $0x18] sm:$0xf]
      %v4403 = vsel %vm2115, %v4108, %v4402
      %4404 = vst [vmem:[%s2112 + $0x18] sm:$0xf] %v4403
      %4405 = vst.msk [vmem:[%s2112 + $0x1c] sm:$0xf] %vm334, %v4117
      %v4406 = vld [vmem:[%s2112 + $0x20] sm:$0x1]
      %v4407 = vsel %vm2121, %v4118, %v4406
      %4408 = vst [vmem:[%s2112 + $0x20] sm:$0x1] %v4407
      %v4409 = vld [vmem:[%s2112 + $0x24] sm:$0xf]
      %v4410 = vsel %vm2115, %v4125, %v4409
      %4411 = vst [vmem:[%s2112 + $0x24] sm:$0xf] %v4410
      %4412 = vst.msk [vmem:[%s2112 + $0x28] sm:$0xf] %vm334, %v4134
      %v4413 = vld [vmem:[%s2112 + $0x2c] sm:$0x1]
      %v4414 = vsel %vm2121, %v4135, %v4413
      %4415 = vst [vmem:[%s2112 + $0x2c] sm:$0x1] %v4414
      %v4416 = vld [vmem:[%s2112 + $0x30] sm:$0xf]
      %v4417 = vsel %vm2115, %v4142, %v4416
      %4418 = vst [vmem:[%s2112 + $0x30] sm:$0xf] %v4417
      %4419 = vst.msk [vmem:[%s2112 + $0x34] sm:$0xf] %vm334, %v4151
      %v4420 = vld [vmem:[%s2112 + $0x38] sm:$0x1]
      %v4421 = vsel %vm2121, %v4152, %v4420
      %4422 = vst [vmem:[%s2112 + $0x38] sm:$0x1] %v4421
      %v4423 = vld [vmem:[%s2112 + $0x3c] sm:$0xf]
      %v4424 = vsel %vm2115, %v4159, %v4423
      %4425 = vst [vmem:[%s2112 + $0x3c] sm:$0xf] %v4424
      %4426 = vst.msk [vmem:[%s2112 + $0x40] sm:$0xf] %vm334, %v4168
      %v4427 = vld [vmem:[%s2112 + $0x44] sm:$0x1]
      %v4428 = vsel %vm2121, %v4169, %v4427
      %4429 = vst [vmem:[%s2112 + $0x44] sm:$0x1] %v4428
      %v4430 = vld [vmem:[%s2112 + $0x48] sm:$0xf]
      %v4431 = vsel %vm2115, %v4176, %v4430
      %4432 = vst [vmem:[%s2112 + $0x48] sm:$0xf] %v4431
      %4433 = vst.msk [vmem:[%s2112 + $0x4c] sm:$0xf] %vm334, %v4185
      %v4434 = vld [vmem:[%s2112 + $0x50] sm:$0x1]
      %v4435 = vsel %vm2121, %v4186, %v4434
      %4436 = vst [vmem:[%s2112 + $0x50] sm:$0x1] %v4435
      %v4437 = vld [vmem:[%s2112 + $0x54] sm:$0xf]
      %v4438 = vsel %vm2115, %v4193, %v4437
      %4439 = vst [vmem:[%s2112 + $0x54] sm:$0xf] %v4438
      %4440 = vst.msk [vmem:[%s2112 + $0x58] sm:$0xf] %vm334, %v4202
      %v4441 = vld [vmem:[%s2112 + $0x5c] sm:$0x1]
      %v4442 = vsel %vm2121, %v4203, %v4441
      %4443 = vst [vmem:[%s2112 + $0x5c] sm:$0x1] %v4442
      %v4444 = vld [vmem:[%s2112 + $0x60] sm:$0xf]
      %v4445 = vsel %vm2115, %v4210, %v4444
      %4446 = vst [vmem:[%s2112 + $0x60] sm:$0xf] %v4445
      %4447 = vst.msk [vmem:[%s2112 + $0x64] sm:$0xf] %vm334, %v4219
      %v4448 = vld [vmem:[%s2112 + $0x68] sm:$0x1]
      %v4449 = vsel %vm2121, %v4220, %v4448
      %4450 = vst [vmem:[%s2112 + $0x68] sm:$0x1] %v4449
      %v4451 = vld [vmem:[%s2112 + $0x6c] sm:$0xf]
      %v4452 = vsel %vm2115, %v4227, %v4451
      %4453 = vst [vmem:[%s2112 + $0x6c] sm:$0xf] %v4452
      %4454 = vst.msk [vmem:[%s2112 + $0x70] sm:$0xf] %vm334, %v4236
      %v4455 = vld [vmem:[%s2112 + $0x74] sm:$0x1]
      %v4456 = vsel %vm2121, %v4237, %v4455
      %4457 = vst [vmem:[%s2112 + $0x74] sm:$0x1] %v4456
      %v4458 = vld [vmem:[%s2112 + $0x78] sm:$0xf]
      %v4459 = vsel %vm2115, %v4244, %v4458
      %4460 = vst [vmem:[%s2112 + $0x78] sm:$0xf] %v4459
      %4461 = vst.msk [vmem:[%s2112 + $0x7c] sm:$0xf] %vm334, %v4253
      %v4462 = vld [vmem:[%s2112 + $0x80] sm:$0x1]
      %v4463 = vsel %vm2121, %v4254, %v4462
      %4464 = vst [vmem:[%s2112 + $0x80] sm:$0x1] %v4463
      %v4465 = vld [vmem:[%s2112 + $0x84] sm:$0xf]
      %v4466 = vsel %vm2115, %v4261, %v4465
      %4467 = vst [vmem:[%s2112 + $0x84] sm:$0xf] %v4466
      %4468 = vst.msk [vmem:[%s2112 + $0x88] sm:$0xf] %vm334, %v4270
      %v4469 = vld [vmem:[%s2112 + $0x8c] sm:$0x1]
      %v4470 = vsel %vm2121, %v4271, %v4469
      %4471 = vst [vmem:[%s2112 + $0x8c] sm:$0x1] %v4470
      %v4472 = vld [vmem:[%s2112 + $0x90] sm:$0xf]
      %v4473 = vsel %vm2115, %v4278, %v4472
      %4474 = vst [vmem:[%s2112 + $0x90] sm:$0xf] %v4473
      %4475 = vst.msk [vmem:[%s2112 + $0x94] sm:$0xf] %vm334, %v4287
      %v4476 = vld [vmem:[%s2112 + $0x98] sm:$0x1]
      %v4477 = vsel %vm2121, %v4288, %v4476
      %4478 = vst [vmem:[%s2112 + $0x98] sm:$0x1] %v4477
      %v4479 = vld [vmem:[%s2112 + $0x9c] sm:$0xf]
      %v4480 = vsel %vm2115, %v4295, %v4479
      %4481 = vst [vmem:[%s2112 + $0x9c] sm:$0xf] %v4480
      %4482 = vst.msk [vmem:[%s2112 + $0xa0] sm:$0xf] %vm334, %v4304
      %v4483 = vld [vmem:[%s2112 + $0xa4] sm:$0x1]
      %v4484 = vsel %vm2121, %v4305, %v4483
      %4485 = vst [vmem:[%s2112 + $0xa4] sm:$0x1] %v4484
      %v4486 = vld [vmem:[%s2112 + $0xa8] sm:$0xf]
      %v4487 = vsel %vm2115, %v4312, %v4486
      %4488 = vst [vmem:[%s2112 + $0xa8] sm:$0xf] %v4487
      %4489 = vst.msk [vmem:[%s2112 + $0xac] sm:$0xf] %vm334, %v4321
      %v4490 = vld [vmem:[%s2112 + $0xb0] sm:$0x1]
      %v4491 = vsel %vm2121, %v4322, %v4490
      %4492 = vst [vmem:[%s2112 + $0xb0] sm:$0x1] %v4491
      %v4493 = vld [vmem:[%s2112 + $0xb4] sm:$0xf]
      %v4494 = vsel %vm2115, %v4329, %v4493
      %4495 = vst [vmem:[%s2112 + $0xb4] sm:$0xf] %v4494
      %4496 = vst.msk [vmem:[%s2112 + $0xb8] sm:$0xf] %vm334, %v4338
      %v4497 = vld [vmem:[%s2112 + $0xbc] sm:$0x1]
      %v4498 = vsel %vm2121, %v4339, %v4497
      %4499 = vst [vmem:[%s2112 + $0xbc] sm:$0x1] %v4498
      %v4500 = vld [vmem:[#allocation2] sm:$0xf]
      %v4501 = vld [vmem:[#allocation2 + $0x4] sm:$0xf]
      %v4502 = vld [vmem:[#allocation2 + $0x8] sm:$0x1]
      %v4503 = vld [vmem:[#allocation2 + $0xc] sm:$0xf]
      %v4504 = vld [vmem:[#allocation2 + $0x10] sm:$0xf]
      %v4505 = vld [vmem:[#allocation2 + $0x14] sm:$0x1]
      %v4506 = vld [vmem:[#allocation2 + $0x18] sm:$0xf]
      %v4507 = vld [vmem:[#allocation2 + $0x1c] sm:$0xf]
      %v4508 = vld [vmem:[#allocation2 + $0x20] sm:$0x1]
      %v4509 = vld [vmem:[#allocation2 + $0x24] sm:$0xf]
      %v4510 = vld [vmem:[#allocation2 + $0x28] sm:$0xf]
      %v4511 = vld [vmem:[#allocation2 + $0x2c] sm:$0x1]
      %v4512 = vld [vmem:[#allocation2 + $0x30] sm:$0xf]
      %v4513 = vld [vmem:[#allocation2 + $0x34] sm:$0xf]
      %v4514 = vld [vmem:[#allocation2 + $0x38] sm:$0x1]
      %v4515 = vld [vmem:[#allocation2 + $0x3c] sm:$0xf]
      %v4516 = vld [vmem:[#allocation2 + $0x40] sm:$0xf]
      %v4517 = vld [vmem:[#allocation2 + $0x44] sm:$0x1]
      %v4518 = vld [vmem:[#allocation2 + $0x48] sm:$0xf]
      %v4519 = vld [vmem:[#allocation2 + $0x4c] sm:$0xf]
      %v4520 = vld [vmem:[#allocation2 + $0x50] sm:$0x1]
      %v4521 = vld [vmem:[#allocation2 + $0x54] sm:$0xf]
      %v4522 = vld [vmem:[#allocation2 + $0x58] sm:$0xf]
      %v4523 = vld [vmem:[#allocation2 + $0x5c] sm:$0x1]
      %v4524 = vld [vmem:[#allocation2 + $0x60] sm:$0xf]
      %v4525 = vld [vmem:[#allocation2 + $0x64] sm:$0xf]
      %v4526 = vld [vmem:[#allocation2 + $0x68] sm:$0x1]
      %v4527 = vld [vmem:[#allocation2 + $0x6c] sm:$0xf]
      %v4528 = vld [vmem:[#allocation2 + $0x70] sm:$0xf]
      %v4529 = vld [vmem:[#allocation2 + $0x74] sm:$0x1]
      %v4530 = vld [vmem:[#allocation2 + $0x78] sm:$0xf]
      %v4531 = vld [vmem:[#allocation2 + $0x7c] sm:$0xf]
      %v4532 = vld [vmem:[#allocation2 + $0x80] sm:$0x1]
      %v4533 = vld [vmem:[#allocation2 + $0x84] sm:$0xf]
      %v4534 = vld [vmem:[#allocation2 + $0x88] sm:$0xf]
      %v4535 = vld [vmem:[#allocation2 + $0x8c] sm:$0x1]
      %v4536 = vld [vmem:[#allocation2 + $0x90] sm:$0xf]
      %v4537 = vld [vmem:[#allocation2 + $0x94] sm:$0xf]
      %v4538 = vld [vmem:[#allocation2 + $0x98] sm:$0x1]
      %v4539 = vld [vmem:[#allocation2 + $0x9c] sm:$0xf]
      %v4540 = vld [vmem:[#allocation2 + $0xa0] sm:$0xf]
      %v4541 = vld [vmem:[#allocation2 + $0xa4] sm:$0x1]
      %v4542 = vld [vmem:[#allocation2 + $0xa8] sm:$0xf]
      %v4543 = vld [vmem:[#allocation2 + $0xac] sm:$0xf]
      %v4544 = vld [vmem:[#allocation2 + $0xb0] sm:$0x1]
      %v4545 = vld [vmem:[#allocation2 + $0xb4] sm:$0xf]
      %v4546 = vld [vmem:[#allocation2 + $0xb8] sm:$0xf]
      %v4547 = vld [vmem:[#allocation2 + $0xbc] sm:$0x1]
      %v4548 = vld [vmem:[#allocation2 + $0xc0] sm:$0xf]
      %v4549 = vld [vmem:[#allocation2 + $0xc4] sm:$0xf]
      %v4550 = vld [vmem:[#allocation2 + $0xc8] sm:$0x1]
      %v4551 = vld [vmem:[#allocation2 + $0xcc] sm:$0xf]
      %v4552 = vld [vmem:[#allocation2 + $0xd0] sm:$0xf]
      %v4553 = vld [vmem:[#allocation2 + $0xd4] sm:$0x1]
      %v4586 = vunpack.c.l.b16 %v4500
      %v4587 = vunpack.c.l.b16 %v4501
      %v4588 = vunpack.c.l.b16 %v4503
      %v4589 = vunpack.c.l.b16 %v4504
      %v4590 = vunpack.c.l.b16 %v4506
      %v4591 = vunpack.c.l.b16 %v4507
      %v4592 = vunpack.c.l.b16 %v4509
      %v4593 = vunpack.c.l.b16 %v4510
      %v4594 = vunpack.c.l.b16 %v4512
      %v4595 = vunpack.c.l.b16 %v4513
      %v4596 = vunpack.c.l.b16 %v4515
      %v4597 = vunpack.c.l.b16 %v4516
      %v4598 = vunpack.c.l.b16 %v4518
      %v4599 = vunpack.c.l.b16 %v4519
      %v4600 = vunpack.c.l.b16 %v4521
      %v4601 = vunpack.c.l.b16 %v4522
      %v4602 = vunpack.c.l.b16 %v4524
      %v4603 = vunpack.c.l.b16 %v4525
      %v4604 = vunpack.c.l.b16 %v4527
      %v4605 = vunpack.c.l.b16 %v4528
      %v4606 = vunpack.c.l.b16 %v4530
      %v4607 = vunpack.c.l.b16 %v4531
      %v4608 = vunpack.c.l.b16 %v4533
      %v4609 = vunpack.c.l.b16 %v4534
      %v4610 = vunpack.c.l.b16 %v4536
      %v4611 = vunpack.c.l.b16 %v4537
      %v4612 = vunpack.c.l.b16 %v4539
      %v4613 = vunpack.c.l.b16 %v4540
      %v4614 = vunpack.c.l.b16 %v4542
      %v4615 = vunpack.c.l.b16 %v4543
      %v4616 = vunpack.c.l.b16 %v4545
      %v4617 = vunpack.c.l.b16 %v4546
      %v4618 = vpack.c.b16 %v4587, %v4586
      %v4619 = vpack.c.b16 %v4589, %v4588
      %v4620 = vpack.c.b16 %v4591, %v4590
      %v4621 = vpack.c.b16 %v4593, %v4592
      %v4622 = vpack.c.b16 %v4595, %v4594
      %v4623 = vpack.c.b16 %v4597, %v4596
      %v4624 = vpack.c.b16 %v4599, %v4598
      %v4625 = vpack.c.b16 %v4601, %v4600
      %v4626 = vpack.c.b16 %v4603, %v4602
      %v4627 = vpack.c.b16 %v4605, %v4604
      %v4628 = vpack.c.b16 %v4607, %v4606
      %v4629 = vpack.c.b16 %v4609, %v4608
      %v4630 = vpack.c.b16 %v4611, %v4610
      %v4631 = vpack.c.b16 %v4613, %v4612
      %v4632 = vpack.c.b16 %v4615, %v4614
      %v4633 = vpack.c.b16 %v4617, %v4616
      %v4650 = vunpack.c.l.b16 %v4502
      %v4651 = vunpack.c.l.b16 %v4505
      %v4652 = vunpack.c.l.b16 %v4508
      %v4653 = vunpack.c.l.b16 %v4511
      %v4654 = vunpack.c.l.b16 %v4514
      %v4655 = vunpack.c.l.b16 %v4517
      %v4656 = vunpack.c.l.b16 %v4520
      %v4657 = vunpack.c.l.b16 %v4523
      %v4658 = vunpack.c.l.b16 %v4526
      %v4659 = vunpack.c.l.b16 %v4529
      %v4660 = vunpack.c.l.b16 %v4532
      %v4661 = vunpack.c.l.b16 %v4535
      %v4662 = vunpack.c.l.b16 %v4538
      %v4663 = vunpack.c.l.b16 %v4541
      %v4664 = vunpack.c.l.b16 %v4544
      %v4665 = vunpack.c.l.b16 %v4547
      %v4666 = vpack.c.b16 %v4650, %v4650
      %v4667 = vpack.c.b16 %v4651, %v4651
      %v4668 = vpack.c.b16 %v4652, %v4652
      %v4669 = vpack.c.b16 %v4653, %v4653
      %v4670 = vpack.c.b16 %v4654, %v4654
      %v4671 = vpack.c.b16 %v4655, %v4655
      %v4672 = vpack.c.b16 %v4656, %v4656
      %v4673 = vpack.c.b16 %v4657, %v4657
      %v4674 = vpack.c.b16 %v4658, %v4658
      %v4675 = vpack.c.b16 %v4659, %v4659
      %v4676 = vpack.c.b16 %v4660, %v4660
      %v4677 = vpack.c.b16 %v4661, %v4661
      %v4678 = vpack.c.b16 %v4662, %v4662
      %v4679 = vpack.c.b16 %v4663, %v4663
      %v4680 = vpack.c.b16 %v4664, %v4664
      %v4681 = vpack.c.b16 %v4665, %v4665
      %v4683 = vshrl.u32 %v4618, 16
      %v4685 = vshll.u32 %v4618, 16
      %v4687 = vrot.slane %v4685, 1
      %v4688 = vor.u32 %v4683, %v4687
      %v4690 = vshll.u32 %v4666, 16
      %v4692 = vrot.slane %v4690, 1
      %v4693 = vsel %vm628, %v4688, %v4692
      %v4695 = vshrl.u32 %v4619, 16
      %v4697 = vshll.u32 %v4619, 16
      %v4699 = vrot.slane %v4697, 1
      %v4700 = vor.u32 %v4695, %v4699
      %v4702 = vshll.u32 %v4667, 16
      %v4704 = vrot.slane %v4702, 1
      %v4705 = vsel %vm628, %v4700, %v4704
      %v4707 = vshrl.u32 %v4620, 16
      %v4709 = vshll.u32 %v4620, 16
      %v4711 = vrot.slane %v4709, 1
      %v4712 = vor.u32 %v4707, %v4711
      %v4714 = vshll.u32 %v4668, 16
      %v4716 = vrot.slane %v4714, 1
      %v4717 = vsel %vm628, %v4712, %v4716
      %v4719 = vshrl.u32 %v4621, 16
      %v4721 = vshll.u32 %v4621, 16
      %v4723 = vrot.slane %v4721, 1
      %v4724 = vor.u32 %v4719, %v4723
      %v4726 = vshll.u32 %v4669, 16
      %v4728 = vrot.slane %v4726, 1
      %v4729 = vsel %vm628, %v4724, %v4728
      %v4731 = vshrl.u32 %v4622, 16
      %v4733 = vshll.u32 %v4622, 16
      %v4735 = vrot.slane %v4733, 1
      %v4736 = vor.u32 %v4731, %v4735
      %v4738 = vshll.u32 %v4670, 16
      %v4740 = vrot.slane %v4738, 1
      %v4741 = vsel %vm628, %v4736, %v4740
      %v4743 = vshrl.u32 %v4623, 16
      %v4745 = vshll.u32 %v4623, 16
      %v4747 = vrot.slane %v4745, 1
      %v4748 = vor.u32 %v4743, %v4747
      %v4750 = vshll.u32 %v4671, 16
      %v4752 = vrot.slane %v4750, 1
      %v4753 = vsel %vm628, %v4748, %v4752
      %v4755 = vshrl.u32 %v4624, 16
      %v4757 = vshll.u32 %v4624, 16
      %v4759 = vrot.slane %v4757, 1
      %v4760 = vor.u32 %v4755, %v4759
      %v4762 = vshll.u32 %v4672, 16
      %v4764 = vrot.slane %v4762, 1
      %v4765 = vsel %vm628, %v4760, %v4764
      %v4767 = vshrl.u32 %v4625, 16
      %v4769 = vshll.u32 %v4625, 16
      %v4771 = vrot.slane %v4769, 1
      %v4772 = vor.u32 %v4767, %v4771
      %v4774 = vshll.u32 %v4673, 16
      %v4776 = vrot.slane %v4774, 1
      %v4777 = vsel %vm628, %v4772, %v4776
      %v4779 = vshrl.u32 %v4626, 16
      %v4781 = vshll.u32 %v4626, 16
      %v4783 = vrot.slane %v4781, 1
      %v4784 = vor.u32 %v4779, %v4783
      %v4786 = vshll.u32 %v4674, 16
      %v4788 = vrot.slane %v4786, 1
      %v4789 = vsel %vm628, %v4784, %v4788
      %v4791 = vshrl.u32 %v4627, 16
      %v4793 = vshll.u32 %v4627, 16
      %v4795 = vrot.slane %v4793, 1
      %v4796 = vor.u32 %v4791, %v4795
      %v4798 = vshll.u32 %v4675, 16
      %v4800 = vrot.slane %v4798, 1
      %v4801 = vsel %vm628, %v4796, %v4800
      %v4803 = vshrl.u32 %v4628, 16
      %v4805 = vshll.u32 %v4628, 16
      %v4807 = vrot.slane %v4805, 1
      %v4808 = vor.u32 %v4803, %v4807
      %v4810 = vshll.u32 %v4676, 16
      %v4812 = vrot.slane %v4810, 1
      %v4813 = vsel %vm628, %v4808, %v4812
      %v4815 = vshrl.u32 %v4629, 16
      %v4817 = vshll.u32 %v4629, 16
      %v4819 = vrot.slane %v4817, 1
      %v4820 = vor.u32 %v4815, %v4819
      %v4822 = vshll.u32 %v4677, 16
      %v4824 = vrot.slane %v4822, 1
      %v4825 = vsel %vm628, %v4820, %v4824
      %v4827 = vshrl.u32 %v4630, 16
      %v4829 = vshll.u32 %v4630, 16
      %v4831 = vrot.slane %v4829, 1
      %v4832 = vor.u32 %v4827, %v4831
      %v4834 = vshll.u32 %v4678, 16
      %v4836 = vrot.slane %v4834, 1
      %v4837 = vsel %vm628, %v4832, %v4836
      %v4839 = vshrl.u32 %v4631, 16
      %v4841 = vshll.u32 %v4631, 16
      %v4843 = vrot.slane %v4841, 1
      %v4844 = vor.u32 %v4839, %v4843
      %v4846 = vshll.u32 %v4679, 16
      %v4848 = vrot.slane %v4846, 1
      %v4849 = vsel %vm628, %v4844, %v4848
      %v4851 = vshrl.u32 %v4632, 16
      %v4853 = vshll.u32 %v4632, 16
      %v4855 = vrot.slane %v4853, 1
      %v4856 = vor.u32 %v4851, %v4855
      %v4858 = vshll.u32 %v4680, 16
      %v4860 = vrot.slane %v4858, 1
      %v4861 = vsel %vm628, %v4856, %v4860
      %v4863 = vshrl.u32 %v4633, 16
      %v4865 = vshll.u32 %v4633, 16
      %v4867 = vrot.slane %v4865, 1
      %v4868 = vor.u32 %v4863, %v4867
      %v4870 = vshll.u32 %v4681, 16
      %v4872 = vrot.slane %v4870, 1
      %v4873 = vsel %vm628, %v4868, %v4872
      %4874 = vrot.lane.b32.xlu0 %v4693, 32
      %v4875 = vpop.permute.xlu0 %4874
      %4876 = vrot.lane.b32.xlu0 %v4705, 32
      %v4877 = vpop.permute.xlu0 %4876
      %4878 = vrot.lane.b32.xlu0 %v4717, 32
      %v4879 = vpop.permute.xlu0 %4878
      %4880 = vrot.lane.b32.xlu0 %v4729, 32
      %v4881 = vpop.permute.xlu0 %4880
      %4882 = vrot.lane.b32.xlu0 %v4741, 32
      %v4883 = vpop.permute.xlu0 %4882
      %4884 = vrot.lane.b32.xlu0 %v4753, 32
      %v4885 = vpop.permute.xlu0 %4884
      %4886 = vrot.lane.b32.xlu0 %v4765, 32
      %v4887 = vpop.permute.xlu0 %4886
      %4888 = vrot.lane.b32.xlu0 %v4777, 32
      %v4889 = vpop.permute.xlu0 %4888
      %4890 = vrot.lane.b32.xlu0 %v4789, 32
      %v4891 = vpop.permute.xlu0 %4890
      %4892 = vrot.lane.b32.xlu0 %v4801, 32
      %v4893 = vpop.permute.xlu0 %4892
      %4894 = vrot.lane.b32.xlu0 %v4813, 32
      %v4895 = vpop.permute.xlu0 %4894
      %4896 = vrot.lane.b32.xlu0 %v4825, 32
      %v4897 = vpop.permute.xlu0 %4896
      %4898 = vrot.lane.b32.xlu0 %v4837, 32
      %v4899 = vpop.permute.xlu0 %4898
      %4900 = vrot.lane.b32.xlu0 %v4849, 32
      %v4901 = vpop.permute.xlu0 %4900
      %4902 = vrot.lane.b32.xlu0 %v4861, 32
      %v4903 = vpop.permute.xlu0 %4902
      %4904 = vrot.lane.b32.xlu0 %v4873, 32
      %v4905 = vpop.permute.xlu0 %4904
      %v4906 = vrot.slane %v4618, 1
      %v4907 = vrot.slane %v4666, 1
      %v4908 = vsel %vm853, %v4906, %v4907
      %v4909 = vrot.slane %v4619, 1
      %v4910 = vrot.slane %v4667, 1
      %v4911 = vsel %vm853, %v4909, %v4910
      %v4912 = vrot.slane %v4620, 1
      %v4913 = vrot.slane %v4668, 1
      %v4914 = vsel %vm853, %v4912, %v4913
      %v4915 = vrot.slane %v4621, 1
      %v4916 = vrot.slane %v4669, 1
      %v4917 = vsel %vm853, %v4915, %v4916
      %v4918 = vrot.slane %v4622, 1
      %v4919 = vrot.slane %v4670, 1
      %v4920 = vsel %vm853, %v4918, %v4919
      %v4921 = vrot.slane %v4623, 1
      %v4922 = vrot.slane %v4671, 1
      %v4923 = vsel %vm853, %v4921, %v4922
      %v4924 = vrot.slane %v4624, 1
      %v4925 = vrot.slane %v4672, 1
      %v4926 = vsel %vm853, %v4924, %v4925
      %v4927 = vrot.slane %v4625, 1
      %v4928 = vrot.slane %v4673, 1
      %v4929 = vsel %vm853, %v4927, %v4928
      %v4930 = vrot.slane %v4626, 1
      %v4931 = vrot.slane %v4674, 1
      %v4932 = vsel %vm853, %v4930, %v4931
      %v4933 = vrot.slane %v4627, 1
      %v4934 = vrot.slane %v4675, 1
      %v4935 = vsel %vm853, %v4933, %v4934
      %v4936 = vrot.slane %v4628, 1
      %v4937 = vrot.slane %v4676, 1
      %v4938 = vsel %vm853, %v4936, %v4937
      %v4939 = vrot.slane %v4629, 1
      %v4940 = vrot.slane %v4677, 1
      %v4941 = vsel %vm853, %v4939, %v4940
      %v4942 = vrot.slane %v4630, 1
      %v4943 = vrot.slane %v4678, 1
      %v4944 = vsel %vm853, %v4942, %v4943
      %v4945 = vrot.slane %v4631, 1
      %v4946 = vrot.slane %v4679, 1
      %v4947 = vsel %vm853, %v4945, %v4946
      %v4948 = vrot.slane %v4632, 1
      %v4949 = vrot.slane %v4680, 1
      %v4950 = vsel %vm853, %v4948, %v4949
      %v4951 = vrot.slane %v4633, 1
      %v4952 = vrot.slane %v4681, 1
      %v4953 = vsel %vm853, %v4951, %v4952
      %4954 = vrot.lane.b32.xlu0 %v4908, 64
      %v4955 = vpop.permute.xlu0 %4954
      %4956 = vrot.lane.b32.xlu0 %v4911, 64
      %v4957 = vpop.permute.xlu0 %4956
      %4958 = vrot.lane.b32.xlu0 %v4914, 64
      %v4959 = vpop.permute.xlu0 %4958
      %4960 = vrot.lane.b32.xlu0 %v4917, 64
      %v4961 = vpop.permute.xlu0 %4960
      %4962 = vrot.lane.b32.xlu0 %v4920, 64
      %v4963 = vpop.permute.xlu0 %4962
      %4964 = vrot.lane.b32.xlu0 %v4923, 64
      %v4965 = vpop.permute.xlu0 %4964
      %4966 = vrot.lane.b32.xlu0 %v4926, 64
      %v4967 = vpop.permute.xlu0 %4966
      %4968 = vrot.lane.b32.xlu0 %v4929, 64
      %v4969 = vpop.permute.xlu0 %4968
      %4970 = vrot.lane.b32.xlu0 %v4932, 64
      %v4971 = vpop.permute.xlu0 %4970
      %4972 = vrot.lane.b32.xlu0 %v4935, 64
      %v4973 = vpop.permute.xlu0 %4972
      %4974 = vrot.lane.b32.xlu0 %v4938, 64
      %v4975 = vpop.permute.xlu0 %4974
      %4976 = vrot.lane.b32.xlu0 %v4941, 64
      %v4977 = vpop.permute.xlu0 %4976
      %4978 = vrot.lane.b32.xlu0 %v4944, 64
      %v4979 = vpop.permute.xlu0 %4978
      %4980 = vrot.lane.b32.xlu0 %v4947, 64
      %v4981 = vpop.permute.xlu0 %4980
      %4982 = vrot.lane.b32.xlu0 %v4950, 64
      %v4983 = vpop.permute.xlu0 %4982
      %4984 = vrot.lane.b32.xlu0 %v4953, 64
      %v4985 = vpop.permute.xlu0 %4984
      %v4988 = vunpack.c.l.b16 %v4548
      %v4989 = vunpack.c.l.b16 %v4549
      %v4990 = vpack.c.b16 %v4989, %v4988
      %4991 = vrot.lane.b32.xlu0 %v4619, 96
      %v4992 = vpop.permute.xlu0 %4991
      %4993 = vrot.lane.b32.xlu0 %v4620, 96
      %v4994 = vpop.permute.xlu0 %4993
      %4995 = vrot.lane.b32.xlu0 %v4621, 96
      %v4996 = vpop.permute.xlu0 %4995
      %4997 = vrot.lane.b32.xlu0 %v4622, 96
      %v4998 = vpop.permute.xlu0 %4997
      %4999 = vrot.lane.b32.xlu0 %v4623, 96
      %v5000 = vpop.permute.xlu0 %4999
      %5001 = vrot.lane.b32.xlu0 %v4624, 96
      %v5002 = vpop.permute.xlu0 %5001
      %5003 = vrot.lane.b32.xlu0 %v4625, 96
      %v5004 = vpop.permute.xlu0 %5003
      %5005 = vrot.lane.b32.xlu0 %v4626, 96
      %v5006 = vpop.permute.xlu0 %5005
      %5007 = vrot.lane.b32.xlu0 %v4627, 96
      %v5008 = vpop.permute.xlu0 %5007
      %5009 = vrot.lane.b32.xlu0 %v4628, 96
      %v5010 = vpop.permute.xlu0 %5009
      %5011 = vrot.lane.b32.xlu0 %v4629, 96
      %v5012 = vpop.permute.xlu0 %5011
      %5013 = vrot.lane.b32.xlu0 %v4630, 96
      %v5014 = vpop.permute.xlu0 %5013
      %5015 = vrot.lane.b32.xlu0 %v4631, 96
      %v5016 = vpop.permute.xlu0 %5015
      %5017 = vrot.lane.b32.xlu0 %v4632, 96
      %v5018 = vpop.permute.xlu0 %5017
      %5019 = vrot.lane.b32.xlu0 %v4633, 96
      %v5020 = vpop.permute.xlu0 %5019
      %5021 = vrot.lane.b32.xlu0 %v4990, 96
      %v5022 = vpop.permute.xlu0 %5021
      %v5024 = vunpack.c.l.b16 %v4550
      %v5025 = vpack.c.b16 %v5024, %v5024
      %v5027 = vshrl.u32 %v4990, 16
      %v5029 = vshll.u32 %v4990, 16
      %v5031 = vrot.slane %v5029, 1
      %v5032 = vor.u32 %v5027, %v5031
      %v5034 = vshll.u32 %v5025, 16
      %v5036 = vrot.slane %v5034, 1
      %v5037 = vsel %vm628, %v5032, %v5036
      %v5038 = vrot.slane %v4990, 1
      %v5039 = vrot.slane %v5025, 1
      %v5040 = vsel %vm853, %v5038, %v5039
      %5041 = vrot.lane.b32.xlu0 %v4911, 32
      %v5042 = vpop.permute.xlu0 %5041
      %5043 = vrot.lane.b32.xlu0 %v4914, 32
      %v5044 = vpop.permute.xlu0 %5043
      %5045 = vrot.lane.b32.xlu0 %v4917, 32
      %v5046 = vpop.permute.xlu0 %5045
      %5047 = vrot.lane.b32.xlu0 %v4920, 32
      %v5048 = vpop.permute.xlu0 %5047
      %5049 = vrot.lane.b32.xlu0 %v4923, 32
      %v5050 = vpop.permute.xlu0 %5049
      %5051 = vrot.lane.b32.xlu0 %v4926, 32
      %v5052 = vpop.permute.xlu0 %5051
      %5053 = vrot.lane.b32.xlu0 %v4929, 32
      %v5054 = vpop.permute.xlu0 %5053
      %5055 = vrot.lane.b32.xlu0 %v4932, 32
      %v5056 = vpop.permute.xlu0 %5055
      %5057 = vrot.lane.b32.xlu0 %v4935, 32
      %v5058 = vpop.permute.xlu0 %5057
      %5059 = vrot.lane.b32.xlu0 %v4938, 32
      %v5060 = vpop.permute.xlu0 %5059
      %5061 = vrot.lane.b32.xlu0 %v4941, 32
      %v5062 = vpop.permute.xlu0 %5061
      %5063 = vrot.lane.b32.xlu0 %v4944, 32
      %v5064 = vpop.permute.xlu0 %5063
      %5065 = vrot.lane.b32.xlu0 %v4947, 32
      %v5066 = vpop.permute.xlu0 %5065
      %5067 = vrot.lane.b32.xlu0 %v4950, 32
      %v5068 = vpop.permute.xlu0 %5067
      %5069 = vrot.lane.b32.xlu0 %v4953, 32
      %v5070 = vpop.permute.xlu0 %5069
      %5071 = vrot.lane.b32.xlu0 %v5040, 32
      %v5072 = vpop.permute.xlu0 %5071
      %v5075 = vunpack.c.l.b16 %v4551
      %v5076 = vunpack.c.l.b16 %v4552
      %v5077 = vpack.c.b16 %v5076, %v5075
      %5078 = vrot.lane.b32.xlu0 %v4620, 64
      %v5079 = vpop.permute.xlu0 %5078
      %5080 = vrot.lane.b32.xlu0 %v4621, 64
      %v5081 = vpop.permute.xlu0 %5080
      %5082 = vrot.lane.b32.xlu0 %v4622, 64
      %v5083 = vpop.permute.xlu0 %5082
      %5084 = vrot.lane.b32.xlu0 %v4623, 64
      %v5085 = vpop.permute.xlu0 %5084
      %5086 = vrot.lane.b32.xlu0 %v4624, 64
      %v5087 = vpop.permute.xlu0 %5086
      %5088 = vrot.lane.b32.xlu0 %v4625, 64
      %v5089 = vpop.permute.xlu0 %5088
      %5090 = vrot.lane.b32.xlu0 %v4626, 64
      %v5091 = vpop.permute.xlu0 %5090
      %5092 = vrot.lane.b32.xlu0 %v4627, 64
      %v5093 = vpop.permute.xlu0 %5092
      %5094 = vrot.lane.b32.xlu0 %v4628, 64
      %v5095 = vpop.permute.xlu0 %5094
      %5096 = vrot.lane.b32.xlu0 %v4629, 64
      %v5097 = vpop.permute.xlu0 %5096
      %5098 = vrot.lane.b32.xlu0 %v4630, 64
      %v5099 = vpop.permute.xlu0 %5098
      %5100 = vrot.lane.b32.xlu0 %v4631, 64
      %v5101 = vpop.permute.xlu0 %5100
      %5102 = vrot.lane.b32.xlu0 %v4632, 64
      %v5103 = vpop.permute.xlu0 %5102
      %5104 = vrot.lane.b32.xlu0 %v4633, 64
      %v5105 = vpop.permute.xlu0 %5104
      %5106 = vrot.lane.b32.xlu0 %v4990, 64
      %v5107 = vpop.permute.xlu0 %5106
      %5108 = vrot.lane.b32.xlu0 %v5077, 64
      %v5109 = vpop.permute.xlu0 %5108
      %v5111 = vunpack.c.l.b16 %v4553
      %v5112 = vpack.c.b16 %v5111, %v5111
      %v5114 = vshrl.u32 %v5077, 16
      %v5116 = vshll.u32 %v5077, 16
      %v5118 = vrot.slane %v5116, 1
      %v5119 = vor.u32 %v5114, %v5118
      %v5121 = vshll.u32 %v5112, 16
      %v5123 = vrot.slane %v5121, 1
      %v5124 = vsel %vm628, %v5119, %v5123
      %5125 = vrot.lane.b32.xlu0 %v4717, 96
      %v5126 = vpop.permute.xlu0 %5125
      %5127 = vrot.lane.b32.xlu0 %v4729, 96
      %v5128 = vpop.permute.xlu0 %5127
      %5129 = vrot.lane.b32.xlu0 %v4741, 96
      %v5130 = vpop.permute.xlu0 %5129
      %5131 = vrot.lane.b32.xlu0 %v4753, 96
      %v5132 = vpop.permute.xlu0 %5131
      %5133 = vrot.lane.b32.xlu0 %v4765, 96
      %v5134 = vpop.permute.xlu0 %5133
      %5135 = vrot.lane.b32.xlu0 %v4777, 96
      %v5136 = vpop.permute.xlu0 %5135
      %5137 = vrot.lane.b32.xlu0 %v4789, 96
      %v5138 = vpop.permute.xlu0 %5137
      %5139 = vrot.lane.b32.xlu0 %v4801, 96
      %v5140 = vpop.permute.xlu0 %5139
      %5141 = vrot.lane.b32.xlu0 %v4813, 96
      %v5142 = vpop.permute.xlu0 %5141
      %5143 = vrot.lane.b32.xlu0 %v4825, 96
      %v5144 = vpop.permute.xlu0 %5143
      %5145 = vrot.lane.b32.xlu0 %v4837, 96
      %v5146 = vpop.permute.xlu0 %5145
      %5147 = vrot.lane.b32.xlu0 %v4849, 96
      %v5148 = vpop.permute.xlu0 %5147
      %5149 = vrot.lane.b32.xlu0 %v4861, 96
      %v5150 = vpop.permute.xlu0 %5149
      %5151 = vrot.lane.b32.xlu0 %v4873, 96
      %v5152 = vpop.permute.xlu0 %5151
      %5153 = vrot.lane.b32.xlu0 %v5037, 96
      %v5154 = vpop.permute.xlu0 %5153
      %5155 = vrot.lane.b32.xlu0 %v5124, 96
      %v5156 = vpop.permute.xlu0 %5155
      %v5157 = vrot.slane %v5077, 1
      %v5158 = vrot.slane %v5112, 1
      %v5159 = vsel %vm853, %v5157, %v5158
      %v5161 = vsel %vm1403, %v4618, %v4875
      %v5163 = vsel %vm1403, %v4619, %v4877
      %v5165 = vsel %vm1403, %v4620, %v4879
      %v5167 = vsel %vm1403, %v4621, %v4881
      %v5169 = vsel %vm1403, %v4622, %v4883
      %v5171 = vsel %vm1403, %v4623, %v4885
      %v5173 = vsel %vm1403, %v4624, %v4887
      %v5175 = vsel %vm1403, %v4625, %v4889
      %v5177 = vsel %vm1403, %v4626, %v4891
      %v5179 = vsel %vm1403, %v4627, %v4893
      %v5181 = vsel %vm1403, %v4628, %v4895
      %v5183 = vsel %vm1403, %v4629, %v4897
      %v5185 = vsel %vm1403, %v4630, %v4899
      %v5187 = vsel %vm1403, %v4631, %v4901
      %v5189 = vsel %vm1403, %v4632, %v4903
      %v5191 = vsel %vm1403, %v4633, %v4905
      %v5193 = vsel %vm2922, %v5161, %v4955
      %v5195 = vsel %vm2922, %v5163, %v4957
      %v5197 = vsel %vm2922, %v5165, %v4959
      %v5199 = vsel %vm2922, %v5167, %v4961
      %v5201 = vsel %vm2922, %v5169, %v4963
      %v5203 = vsel %vm2922, %v5171, %v4965
      %v5205 = vsel %vm2922, %v5173, %v4967
      %v5207 = vsel %vm2922, %v5175, %v4969
      %v5209 = vsel %vm2922, %v5177, %v4971
      %v5211 = vsel %vm2922, %v5179, %v4973
      %v5213 = vsel %vm2922, %v5181, %v4975
      %v5215 = vsel %vm2922, %v5183, %v4977
      %v5217 = vsel %vm2922, %v5185, %v4979
      %v5219 = vsel %vm2922, %v5187, %v4981
      %v5221 = vsel %vm2922, %v5189, %v4983
      %v5223 = vsel %vm2922, %v5191, %v4985
      %v5225 = vsel %vm2955, %v5193, %v4992
      %v5228 = vsel %vm2955, %v5195, %v4994
      %v5231 = vsel %vm2955, %v5197, %v4996
      %v5234 = vsel %vm2955, %v5199, %v4998
      %v5237 = vsel %vm2955, %v5201, %v5000
      %v5240 = vsel %vm2955, %v5203, %v5002
      %v5243 = vsel %vm2955, %v5205, %v5004
      %v5246 = vsel %vm2955, %v5207, %v5006
      %v5249 = vsel %vm2955, %v5209, %v5008
      %v5252 = vsel %vm2955, %v5211, %v5010
      %v5255 = vsel %vm2955, %v5213, %v5012
      %v5258 = vsel %vm2955, %v5215, %v5014
      %v5261 = vsel %vm2955, %v5217, %v5016
      %v5264 = vsel %vm2955, %v5219, %v5018
      %v5267 = vsel %vm2955, %v5221, %v5020
      %v5270 = vsel %vm2955, %v5223, %v5022
      %v5274 = vsel %vm1403, %v4705, %v5042
      %v5277 = vsel %vm1403, %v4717, %v5044
      %v5280 = vsel %vm1403, %v4729, %v5046
      %v5283 = vsel %vm1403, %v4741, %v5048
      %v5286 = vsel %vm1403, %v4753, %v5050
      %v5289 = vsel %vm1403, %v4765, %v5052
      %v5292 = vsel %vm1403, %v4777, %v5054
      %v5295 = vsel %vm1403, %v4789, %v5056
      %v5298 = vsel %vm1403, %v4801, %v5058
      %v5301 = vsel %vm1403, %v4813, %v5060
      %v5304 = vsel %vm1403, %v4825, %v5062
      %v5307 = vsel %vm1403, %v4837, %v5064
      %v5310 = vsel %vm1403, %v4849, %v5066
      %v5313 = vsel %vm1403, %v4861, %v5068
      %v5316 = vsel %vm1403, %v4873, %v5070
      %v5319 = vsel %vm1403, %v5037, %v5072
      %v5321 = vsel %vm2922, %v5274, %v5079
      %v5323 = vsel %vm2922, %v5277, %v5081
      %v5325 = vsel %vm2922, %v5280, %v5083
      %v5327 = vsel %vm2922, %v5283, %v5085
      %v5329 = vsel %vm2922, %v5286, %v5087
      %v5331 = vsel %vm2922, %v5289, %v5089
      %v5333 = vsel %vm2922, %v5292, %v5091
      %v5335 = vsel %vm2922, %v5295, %v5093
      %v5337 = vsel %vm2922, %v5298, %v5095
      %v5339 = vsel %vm2922, %v5301, %v5097
      %v5341 = vsel %vm2922, %v5304, %v5099
      %v5343 = vsel %vm2922, %v5307, %v5101
      %v5345 = vsel %vm2922, %v5310, %v5103
      %v5347 = vsel %vm2922, %v5313, %v5105
      %v5349 = vsel %vm2922, %v5316, %v5107
      %v5351 = vsel %vm2922, %v5319, %v5109
      %v5353 = vsel %vm2955, %v5321, %v5126
      %v5356 = vsel %vm2955, %v5323, %v5128
      %v5359 = vsel %vm2955, %v5325, %v5130
      %v5362 = vsel %vm2955, %v5327, %v5132
      %v5365 = vsel %vm2955, %v5329, %v5134
      %v5368 = vsel %vm2955, %v5331, %v5136
      %v5371 = vsel %vm2955, %v5333, %v5138
      %v5374 = vsel %vm2955, %v5335, %v5140
      %v5377 = vsel %vm2955, %v5337, %v5142
      %v5380 = vsel %vm2955, %v5339, %v5144
      %v5383 = vsel %vm2955, %v5341, %v5146
      %v5386 = vsel %vm2955, %v5343, %v5148
      %v5389 = vsel %vm2955, %v5345, %v5150
      %v5392 = vsel %vm2955, %v5347, %v5152
      %v5395 = vsel %vm2955, %v5349, %v5154
      %v5398 = vsel %vm2955, %v5351, %v5156
      %s5400 = scalar_lea.vmem %s3, 144
      %v5401 = vld [vmem:[%s5400] sm:$0xf]
      %v5402 = vld [vmem:[%s5400 + $0x4] sm:$0xf]
      %v5403 = vld [vmem:[%s5400 + $0x8] sm:$0xf]
      %v5404 = vld [vmem:[%s5400 + $0xc] sm:$0xf]
      %v5405 = vld [vmem:[%s5400 + $0x10] sm:$0xf]
      %v5406 = vld [vmem:[%s5400 + $0x14] sm:$0xf]
      %v5407 = vld [vmem:[%s5400 + $0x18] sm:$0xf]
      %v5408 = vld [vmem:[%s5400 + $0x1c] sm:$0xf]
      %v5409 = vld [vmem:[%s5400 + $0x20] sm:$0xf]
      %v5410 = vld [vmem:[%s5400 + $0x24] sm:$0xf]
      %v5411 = vld [vmem:[%s5400 + $0x28] sm:$0xf]
      %v5412 = vld [vmem:[%s5400 + $0x2c] sm:$0xf]
      %v5413 = vld [vmem:[%s5400 + $0x30] sm:$0xf]
      %v5414 = vld [vmem:[%s5400 + $0x34] sm:$0xf]
      %v5415 = vld [vmem:[%s5400 + $0x38] sm:$0xf]
      %v5416 = vld [vmem:[%s5400 + $0x3c] sm:$0xf]
      %v5417 = vld [vmem:[%s5400 + $0x40] sm:$0xf]
      %v5418 = vld [vmem:[%s5400 + $0x44] sm:$0xf]
      %v5419 = vld [vmem:[%s5400 + $0x48] sm:$0xf]
      %v5420 = vld [vmem:[%s5400 + $0x4c] sm:$0xf]
      %v5421 = vld [vmem:[%s5400 + $0x50] sm:$0xf]
      %v5422 = vld [vmem:[%s5400 + $0x54] sm:$0xf]
      %v5423 = vld [vmem:[%s5400 + $0x58] sm:$0xf]
      %v5424 = vld [vmem:[%s5400 + $0x5c] sm:$0xf]
      %v5425 = vld [vmem:[%s5400 + $0x60] sm:$0xf]
      %v5426 = vld [vmem:[%s5400 + $0x64] sm:$0xf]
      %v5427 = vld [vmem:[%s5400 + $0x68] sm:$0xf]
      %v5428 = vld [vmem:[%s5400 + $0x6c] sm:$0xf]
      %v5429 = vld [vmem:[%s5400 + $0x70] sm:$0xf]
      %v5430 = vld [vmem:[%s5400 + $0x74] sm:$0xf]
      %v5431 = vld [vmem:[%s5400 + $0x78] sm:$0xf]
      %v5432 = vld [vmem:[%s5400 + $0x7c] sm:$0xf]
      %v5433 = vld [vmem:[%s5400 + $0x80] sm:$0xf]
      %v5434 = vld [vmem:[%s5400 + $0x84] sm:$0xf]
      %v5435 = vld [vmem:[%s5400 + $0x88] sm:$0xf]
      %v5436 = vld [vmem:[%s5400 + $0x8c] sm:$0xf]
      %v5473 = vunpack.c.l.b16 %v5401
      %v5474 = vunpack.c.l.b16 %v5402
      %v5475 = vunpack.c.l.b16 %v5403
      %v5476 = vunpack.c.l.b16 %v5404
      %v5477 = vunpack.c.l.b16 %v5405
      %v5478 = vunpack.c.l.b16 %v5406
      %v5479 = vunpack.c.l.b16 %v5407
      %v5480 = vunpack.c.l.b16 %v5408
      %v5481 = vunpack.c.l.b16 %v5409
      %v5482 = vunpack.c.l.b16 %v5410
      %v5483 = vunpack.c.l.b16 %v5411
      %v5484 = vunpack.c.l.b16 %v5412
      %v5485 = vunpack.c.l.b16 %v5413
      %v5486 = vunpack.c.l.b16 %v5414
      %v5487 = vunpack.c.l.b16 %v5415
      %v5488 = vunpack.c.l.b16 %v5416
      %v5489 = vunpack.c.l.b16 %v5417
      %v5490 = vunpack.c.l.b16 %v5418
      %v5491 = vunpack.c.l.b16 %v5419
      %v5492 = vunpack.c.l.b16 %v5420
      %v5493 = vunpack.c.l.b16 %v5421
      %v5494 = vunpack.c.l.b16 %v5422
      %v5495 = vunpack.c.l.b16 %v5423
      %v5496 = vunpack.c.l.b16 %v5424
      %v5497 = vunpack.c.l.b16 %v5425
      %v5498 = vunpack.c.l.b16 %v5426
      %v5499 = vunpack.c.l.b16 %v5427
      %v5500 = vunpack.c.l.b16 %v5428
      %v5501 = vunpack.c.l.b16 %v5429
      %v5502 = vunpack.c.l.b16 %v5430
      %v5503 = vunpack.c.l.b16 %v5431
      %v5504 = vunpack.c.l.b16 %v5432
      %v5505 = vunpack.c.l.b16 %v5433
      %v5506 = vunpack.c.l.b16 %v5434
      %v5507 = vunpack.c.l.b16 %v5435
      %v5508 = vunpack.c.l.b16 %v5436
      %v5509 = vpack.c.b16 %v5474, %v5473
      %v5510 = vpack.c.b16 %v5476, %v5475
      %v5511 = vpack.c.b16 %v5478, %v5477
      %v5512 = vpack.c.b16 %v5480, %v5479
      %v5513 = vpack.c.b16 %v5482, %v5481
      %v5514 = vpack.c.b16 %v5484, %v5483
      %v5515 = vpack.c.b16 %v5486, %v5485
      %v5516 = vpack.c.b16 %v5488, %v5487
      %v5517 = vpack.c.b16 %v5490, %v5489
      %v5518 = vpack.c.b16 %v5492, %v5491
      %v5519 = vpack.c.b16 %v5494, %v5493
      %v5520 = vpack.c.b16 %v5496, %v5495
      %v5521 = vpack.c.b16 %v5498, %v5497
      %v5522 = vpack.c.b16 %v5500, %v5499
      %v5523 = vpack.c.b16 %v5502, %v5501
      %v5524 = vpack.c.b16 %v5504, %v5503
      %v5525 = vpack.c.b16 %v5506, %v5505
      %v5526 = vpack.c.b16 %v5508, %v5507
      %v5546 = vsel %vm1403, %v4914, 0
      %v5549 = vsel %vm1403, %v4917, 0
      %v5552 = vsel %vm1403, %v4920, 0
      %v5555 = vsel %vm1403, %v4923, 0
      %v5558 = vsel %vm1403, %v4926, 0
      %v5561 = vsel %vm1403, %v4929, 0
      %v5564 = vsel %vm1403, %v4932, 0
      %v5567 = vsel %vm1403, %v4935, 0
      %v5570 = vsel %vm1403, %v4938, 0
      %v5573 = vsel %vm1403, %v4941, 0
      %v5576 = vsel %vm1403, %v4944, 0
      %v5579 = vsel %vm1403, %v4947, 0
      %v5582 = vsel %vm1403, %v4950, 0
      %v5585 = vsel %vm1403, %v4953, 0
      %v5588 = vsel %vm1403, %v5040, 0
      %v5591 = vsel %vm1403, %v5159, 0
      %5593 = vmatprep.subr.bf16.mxu0 0
      %5594 = vmatpush1.bf16.msra.mxu0 %v5509
      %5595 = vmatprep.subr.bf16.mxu0 0
      %5596 = vmatpush1.bf16.msra.mxu0 %v5510
      %5597 = vmatprep.subr.bf16.mxu0 0
      %5598 = vmatpush1.bf16.msra.mxu0 %v5511
      %5599 = vmatprep.subr.bf16.mxu0 0
      %5600 = vmatpush1.bf16.msra.mxu0 %v5512
      %5601 = vmatprep.subr.bf16.mxu0 0
      %5602 = vmatpush1.bf16.msra.mxu0 %v5513
      %5603 = vmatprep.subr.bf16.mxu0 0
      %5604 = vmatpush1.bf16.msra.mxu0 %v5514
      %5605 = vmatprep.subr.bf16.mxu0 0
      %5606 = vmatpush1.bf16.msra.mxu0 %v5515
      %5607 = vmatprep.subr.bf16.mxu0 0
      %5608 = vmatpush1.bf16.msra.mxu0 %v5516
      %5609 = vmatprep.subr.bf16.mxu0 0
      %5610 = vmatpush1.bf16.msra.mxu0 %v5517
      %5611 = vmatprep.subr.bf16.mxu0 0
      %5612 = vmatpush1.bf16.msra.mxu0 %v5518
      %5613 = vmatprep.subr.bf16.mxu0 0
      %5614 = vmatpush1.bf16.msra.mxu0 %v5519
      %5615 = vmatprep.subr.bf16.mxu0 0
      %5616 = vmatpush1.bf16.msra.mxu0 %v5520
      %5617 = vmatprep.subr.bf16.mxu0 0
      %5618 = vmatpush1.bf16.msra.mxu0 %v5521
      %5619 = vmatprep.subr.bf16.mxu0 0
      %5620 = vmatpush1.bf16.msra.mxu0 %v5522
      %5621 = vmatprep.subr.bf16.mxu0 0
      %5622 = vmatpush1.bf16.msra.mxu0 %v5523
      %5623 = vmatprep.subr.bf16.mxu0 0
      %5624 = vmatpush1.bf16.msra.mxu0 %v5524
      %5625 = vmatprep.mubr.bf16.mxu0 %v5353
      %5626 = vmatmul.mubr.bf16.gmra.mrb[0].mxu0 %v5225
      %v5627 = vpop.f32.mrb[0].mxu0
      %v5628 = vadd.f32 0.0, %v5627
      %v5629 = vpop.f32.mrb[0].mxu0
      %v5630 = vpop.f32.mrb[0].mxu0
      %v5631 = vadd.f32 0.0, %v5630
      %v5632 = vpop.f32.mrb[0].mxu0
      %5633 = vmatprep.mubr.bf16.mxu0 %v5356
      %5634 = vmatmul.mubr.bf16.gmra.mrb[0].mxu0 %v5228
      %v5635 = vpop.f32.mrb[0].mxu0
      %v5636 = vadd.f32 0.0, %v5635
      %v5637 = vpop.f32.mrb[0].mxu0
      %v5638 = vpop.f32.mrb[0].mxu0
      %v5639 = vadd.f32 0.0, %v5638
      %v5640 = vpop.f32.mrb[0].mxu0
      %5641 = vmatprep.mubr.bf16.mxu0 %v5359
      %5642 = vmatmul.mubr.bf16.gmra.mrb[0].mxu0 %v5231
      %v5643 = vpop.f32.mrb[0].mxu0
      %v5644 = vadd.f32 0.0, %v5643
      %v5645 = vpop.f32.mrb[0].mxu0
      %v5646 = vpop.f32.mrb[0].mxu0
      %v5647 = vadd.f32 0.0, %v5646
      %v5648 = vpop.f32.mrb[0].mxu0
      %5649 = vmatprep.mubr.bf16.mxu0 %v5362
      %5650 = vmatmul.mubr.bf16.gmra.mrb[0].mxu0 %v5234
      %v5651 = vpop.f32.mrb[0].mxu0
      %v5652 = vadd.f32 0.0, %v5651
      %v5653 = vpop.f32.mrb[0].mxu0
      %v5654 = vpop.f32.mrb[0].mxu0
      %v5655 = vadd.f32 0.0, %v5654
      %v5656 = vpop.f32.mrb[0].mxu0
      %5657 = vmatprep.mubr.bf16.mxu0 %v5365
      %5658 = vmatmul.mubr.bf16.gmra.mrb[0].mxu0 %v5237
      %v5659 = vpop.f32.mrb[0].mxu0
      %v5660 = vadd.f32 0.0, %v5659
      %v5661 = vpop.f32.mrb[0].mxu0
      %v5662 = vpop.f32.mrb[0].mxu0
      %v5663 = vadd.f32 0.0, %v5662
      %v5664 = vpop.f32.mrb[0].mxu0
      %5665 = vmatprep.mubr.bf16.mxu0 %v5368
      %5666 = vmatmul.mubr.bf16.gmra.mrb[0].mxu0 %v5240
      %v5667 = vpop.f32.mrb[0].mxu0
      %v5668 = vadd.f32 0.0, %v5667
      %v5669 = vpop.f32.mrb[0].mxu0
      %v5670 = vpop.f32.mrb[0].mxu0
      %v5671 = vadd.f32 0.0, %v5670
      %v5672 = vpop.f32.mrb[0].mxu0
      %5673 = vmatprep.mubr.bf16.mxu0 %v5371
      %5674 = vmatmul.mubr.bf16.gmra.mrb[0].mxu0 %v5243
      %v5675 = vpop.f32.mrb[0].mxu0
      %v5676 = vadd.f32 0.0, %v5675
      %v5677 = vpop.f32.mrb[0].mxu0
      %v5678 = vpop.f32.mrb[0].mxu0
      %v5679 = vadd.f32 0.0, %v5678
      %v5680 = vpop.f32.mrb[0].mxu0
      %5681 = vmatprep.mubr.bf16.mxu0 %v5374
      %5682 = vmatmul.mubr.bf16.gmra.mrb[0].mxu0 %v5246
      %v5683 = vpop.f32.mrb[0].mxu0
      %v5684 = vadd.f32 0.0, %v5683
      %v5685 = vpop.f32.mrb[0].mxu0
      %v5686 = vpop.f32.mrb[0].mxu0
      %v5687 = vadd.f32 0.0, %v5686
      %v5688 = vpop.f32.mrb[0].mxu0
      %5689 = vmatprep.mubr.bf16.mxu0 %v5377
      %5690 = vmatmul.mubr.bf16.gmra.mrb[0].mxu0 %v5249
      %v5691 = vpop.f32.mrb[0].mxu0
      %v5692 = vadd.f32 0.0, %v5691
      %v5693 = vpop.f32.mrb[0].mxu0
      %v5694 = vpop.f32.mrb[0].mxu0
      %v5695 = vadd.f32 0.0, %v5694
      %v5696 = vpop.f32.mrb[0].mxu0
      %5697 = vmatprep.mubr.bf16.mxu0 %v5380
      %5698 = vmatmul.mubr.bf16.gmra.mrb[0].mxu0 %v5252
      %v5699 = vpop.f32.mrb[0].mxu0
      %v5700 = vadd.f32 0.0, %v5699
      %v5701 = vpop.f32.mrb[0].mxu0
      %v5702 = vpop.f32.mrb[0].mxu0
      %v5703 = vadd.f32 0.0, %v5702
      %v5704 = vpop.f32.mrb[0].mxu0
      %5705 = vmatprep.mubr.bf16.mxu0 %v5383
      %5706 = vmatmul.mubr.bf16.gmra.mrb[0].mxu0 %v5255
      %v5707 = vpop.f32.mrb[0].mxu0
      %v5708 = vadd.f32 0.0, %v5707
      %v5709 = vpop.f32.mrb[0].mxu0
      %v5710 = vpop.f32.mrb[0].mxu0
      %v5711 = vadd.f32 0.0, %v5710
      %v5712 = vpop.f32.mrb[0].mxu0
      %5713 = vmatprep.mubr.bf16.mxu0 %v5386
      %5714 = vmatmul.mubr.bf16.gmra.mrb[0].mxu0 %v5258
      %v5715 = vpop.f32.mrb[0].mxu0
      %v5716 = vadd.f32 0.0, %v5715
      %v5717 = vpop.f32.mrb[0].mxu0
      %v5718 = vpop.f32.mrb[0].mxu0
      %v5719 = vadd.f32 0.0, %v5718
      %v5720 = vpop.f32.mrb[0].mxu0
      %5721 = vmatprep.mubr.bf16.mxu0 %v5389
      %5722 = vmatmul.mubr.bf16.gmra.mrb[0].mxu0 %v5261
      %v5723 = vpop.f32.mrb[0].mxu0
      %v5724 = vadd.f32 0.0, %v5723
      %v5725 = vpop.f32.mrb[0].mxu0
      %v5726 = vpop.f32.mrb[0].mxu0
      %v5727 = vadd.f32 0.0, %v5726
      %v5728 = vpop.f32.mrb[0].mxu0
      %5729 = vmatprep.mubr.bf16.mxu0 %v5392
      %5730 = vmatmul.mubr.bf16.gmra.mrb[0].mxu0 %v5264
      %v5731 = vpop.f32.mrb[0].mxu0
      %v5732 = vadd.f32 0.0, %v5731
      %v5733 = vpop.f32.mrb[0].mxu0
      %v5734 = vpop.f32.mrb[0].mxu0
      %v5735 = vadd.f32 0.0, %v5734
      %v5736 = vpop.f32.mrb[0].mxu0
      %5737 = vmatprep.mubr.bf16.mxu0 %v5395
      %5738 = vmatmul.mubr.bf16.gmra.mrb[0].mxu0 %v5267
      %v5739 = vpop.f32.mrb[0].mxu0
      %v5740 = vadd.f32 0.0, %v5739
      %v5741 = vpop.f32.mrb[0].mxu0
      %v5742 = vpop.f32.mrb[0].mxu0
      %v5743 = vadd.f32 0.0, %v5742
      %v5744 = vpop.f32.mrb[0].mxu0
      %5745 = vmatprep.mubr.bf16.mxu0 %v5398
      %5746 = vmatmul.mubr.bf16.gmra.mrb[0].mxu0 %v5270
      %v5747 = vpop.f32.mrb[0].mxu0
      %v5748 = vadd.f32 0.0, %v5747
      %v5749 = vpop.f32.mrb[0].mxu0
      %v5750 = vpop.f32.mrb[0].mxu0
      %v5751 = vadd.f32 0.0, %v5750
      %v5752 = vpop.f32.mrb[0].mxu0
      %5753 = vdwg.mxu0
      %5754 = vmatprep.subr.bf16.mxu0 0
      %5755 = vmatpush1.bf16.msra.mxu0 %v5525
      %5756 = vmatprep.subr.bf16.mxu0 0
      %5757 = vmatpush1.bf16.msra.mxu0 %v5526
      %5758 = vmatprep.subr.bf16.mxu0 0
      %5759 = vmatpush1.bf16.msra.mxu0 0
      %5760 = vmatprep.subr.bf16.mxu0 0
      %5761 = vmatpush1.bf16.msra.mxu0 0
      %5762 = vmatprep.subr.bf16.mxu0 0
      %5763 = vmatpush1.bf16.msra.mxu0 0
      %5764 = vmatprep.subr.bf16.mxu0 0
      %5765 = vmatpush1.bf16.msra.mxu0 0
      %5766 = vmatprep.subr.bf16.mxu0 0
      %5767 = vmatpush1.bf16.msra.mxu0 0
      %5768 = vmatprep.subr.bf16.mxu0 0
      %5769 = vmatpush1.bf16.msra.mxu0 0
      %5770 = vmatprep.subr.bf16.mxu0 0
      %5771 = vmatpush1.bf16.msra.mxu0 0
      %5772 = vmatprep.subr.bf16.mxu0 0
      %5773 = vmatpush1.bf16.msra.mxu0 0
      %5774 = vmatprep.subr.bf16.mxu0 0
      %5775 = vmatpush1.bf16.msra.mxu0 0
      %5776 = vmatprep.subr.bf16.mxu0 0
      %5777 = vmatpush1.bf16.msra.mxu0 0
      %5778 = vmatprep.subr.bf16.mxu0 0
      %5779 = vmatpush1.bf16.msra.mxu0 0
      %5780 = vmatprep.subr.bf16.mxu0 0
      %5781 = vmatpush1.bf16.msra.mxu0 0
      %5782 = vmatprep.subr.bf16.mxu0 0
      %5783 = vmatpush1.bf16.msra.mxu0 0
      %5784 = vmatprep.subr.bf16.mxu0 0
      %5785 = vmatpush1.bf16.msra.mxu0 0
      %5786 = vmatprep.mubr.bf16.mxu0 0
      %5787 = vmatmul.mubr.bf16.gmra.mrb[0].mxu0 %v5546
      %v5788 = vpop.f32.mrb[0].mxu0
      %v5789 = vadd.f32 %v5628, %v5788
      %v5790 = vpop.f32.mrb[0].mxu0
      %v5791 = vpop.f32.mrb[0].mxu0
      %v5792 = vadd.f32 %v5631, %v5791
      %v5793 = vpop.f32.mrb[0].mxu0
      %5794 = vmatprep.mubr.bf16.mxu0 0
      %5795 = vmatmul.mubr.bf16.gmra.mrb[0].mxu0 %v5549
      %v5796 = vpop.f32.mrb[0].mxu0
      %v5797 = vadd.f32 %v5636, %v5796
      %v5798 = vpop.f32.mrb[0].mxu0
      %v5799 = vpop.f32.mrb[0].mxu0
      %v5800 = vadd.f32 %v5639, %v5799
      %v5801 = vpop.f32.mrb[0].mxu0
      %5802 = vmatprep.mubr.bf16.mxu0 0
      %5803 = vmatmul.mubr.bf16.gmra.mrb[0].mxu0 %v5552
      %v5804 = vpop.f32.mrb[0].mxu0
      %v5805 = vadd.f32 %v5644, %v5804
      %v5806 = vpop.f32.mrb[0].mxu0
      %v5807 = vpop.f32.mrb[0].mxu0
      %v5808 = vadd.f32 %v5647, %v5807
      %v5809 = vpop.f32.mrb[0].mxu0
      %5810 = vmatprep.mubr.bf16.mxu0 0
      %5811 = vmatmul.mubr.bf16.gmra.mrb[0].mxu0 %v5555
      %v5812 = vpop.f32.mrb[0].mxu0
      %v5813 = vadd.f32 %v5652, %v5812
      %v5814 = vpop.f32.mrb[0].mxu0
      %v5815 = vpop.f32.mrb[0].mxu0
      %v5816 = vadd.f32 %v5655, %v5815
      %v5817 = vpop.f32.mrb[0].mxu0
      %5818 = vmatprep.mubr.bf16.mxu0 0
      %5819 = vmatmul.mubr.bf16.gmra.mrb[0].mxu0 %v5558
      %v5820 = vpop.f32.mrb[0].mxu0
      %v5821 = vadd.f32 %v5660, %v5820
      %v5822 = vpop.f32.mrb[0].mxu0
      %v5823 = vpop.f32.mrb[0].mxu0
      %v5824 = vadd.f32 %v5663, %v5823
      %v5825 = vpop.f32.mrb[0].mxu0
      %5826 = vmatprep.mubr.bf16.mxu0 0
      %5827 = vmatmul.mubr.bf16.gmra.mrb[0].mxu0 %v5561
      %v5828 = vpop.f32.mrb[0].mxu0
      %v5829 = vadd.f32 %v5668, %v5828
      %v5830 = vpop.f32.mrb[0].mxu0
      %v5831 = vpop.f32.mrb[0].mxu0
      %v5832 = vadd.f32 %v5671, %v5831
      %v5833 = vpop.f32.mrb[0].mxu0
      %5834 = vmatprep.mubr.bf16.mxu0 0
      %5835 = vmatmul.mubr.bf16.gmra.mrb[0].mxu0 %v5564
      %v5836 = vpop.f32.mrb[0].mxu0
      %v5837 = vadd.f32 %v5676, %v5836
      %v5838 = vpop.f32.mrb[0].mxu0
      %v5839 = vpop.f32.mrb[0].mxu0
      %v5840 = vadd.f32 %v5679, %v5839
      %v5841 = vpop.f32.mrb[0].mxu0
      %5842 = vmatprep.mubr.bf16.mxu0 0
      %5843 = vmatmul.mubr.bf16.gmra.mrb[0].mxu0 %v5567
      %v5844 = vpop.f32.mrb[0].mxu0
      %v5845 = vadd.f32 %v5684, %v5844
      %v5846 = vpop.f32.mrb[0].mxu0
      %v5847 = vpop.f32.mrb[0].mxu0
      %v5848 = vadd.f32 %v5687, %v5847
      %v5849 = vpop.f32.mrb[0].mxu0
      %5850 = vmatprep.mubr.bf16.mxu0 0
      %5851 = vmatmul.mubr.bf16.gmra.mrb[0].mxu0 %v5570
      %v5852 = vpop.f32.mrb[0].mxu0
      %v5853 = vadd.f32 %v5692, %v5852
      %v5854 = vpop.f32.mrb[0].mxu0
      %v5855 = vpop.f32.mrb[0].mxu0
      %v5856 = vadd.f32 %v5695, %v5855
      %v5857 = vpop.f32.mrb[0].mxu0
      %5858 = vmatprep.mubr.bf16.mxu0 0
      %5859 = vmatmul.mubr.bf16.gmra.mrb[0].mxu0 %v5573
      %v5860 = vpop.f32.mrb[0].mxu0
      %v5861 = vadd.f32 %v5700, %v5860
      %v5862 = vpop.f32.mrb[0].mxu0
      %v5863 = vpop.f32.mrb[0].mxu0
      %v5864 = vadd.f32 %v5703, %v5863
      %v5865 = vpop.f32.mrb[0].mxu0
      %5866 = vmatprep.mubr.bf16.mxu0 0
      %5867 = vmatmul.mubr.bf16.gmra.mrb[0].mxu0 %v5576
      %v5868 = vpop.f32.mrb[0].mxu0
      %v5869 = vadd.f32 %v5708, %v5868
      %v5870 = vpop.f32.mrb[0].mxu0
      %v5871 = vpop.f32.mrb[0].mxu0
      %v5872 = vadd.f32 %v5711, %v5871
      %v5873 = vpop.f32.mrb[0].mxu0
      %5874 = vmatprep.mubr.bf16.mxu0 0
      %5875 = vmatmul.mubr.bf16.gmra.mrb[0].mxu0 %v5579
      %v5876 = vpop.f32.mrb[0].mxu0
      %v5877 = vadd.f32 %v5716, %v5876
      %v5878 = vpop.f32.mrb[0].mxu0
      %v5879 = vpop.f32.mrb[0].mxu0
      %v5880 = vadd.f32 %v5719, %v5879
      %v5881 = vpop.f32.mrb[0].mxu0
      %5882 = vmatprep.mubr.bf16.mxu0 0
      %5883 = vmatmul.mubr.bf16.gmra.mrb[0].mxu0 %v5582
      %v5884 = vpop.f32.mrb[0].mxu0
      %v5885 = vadd.f32 %v5724, %v5884
      %v5886 = vpop.f32.mrb[0].mxu0
      %v5887 = vpop.f32.mrb[0].mxu0
      %v5888 = vadd.f32 %v5727, %v5887
      %v5889 = vpop.f32.mrb[0].mxu0
      %5890 = vmatprep.mubr.bf16.mxu0 0
      %5891 = vmatmul.mubr.bf16.gmra.mrb[0].mxu0 %v5585
      %v5892 = vpop.f32.mrb[0].mxu0
      %v5893 = vadd.f32 %v5732, %v5892
      %v5894 = vpop.f32.mrb[0].mxu0
      %v5895 = vpop.f32.mrb[0].mxu0
      %v5896 = vadd.f32 %v5735, %v5895
      %v5897 = vpop.f32.mrb[0].mxu0
      %5898 = vmatprep.mubr.bf16.mxu0 0
      %5899 = vmatmul.mubr.bf16.gmra.mrb[0].mxu0 %v5588
      %v5900 = vpop.f32.mrb[0].mxu0
      %v5901 = vadd.f32 %v5740, %v5900
      %v5902 = vpop.f32.mrb[0].mxu0
      %v5903 = vpop.f32.mrb[0].mxu0
      %v5904 = vadd.f32 %v5743, %v5903
      %v5905 = vpop.f32.mrb[0].mxu0
      %5906 = vmatprep.mubr.bf16.mxu0 0
      %5907 = vmatmul.mubr.bf16.gmra.mrb[0].mxu0 %v5591
      %v5908 = vpop.f32.mrb[0].mxu0
      %v5909 = vadd.f32 %v5748, %v5908
      %v5910 = vpop.f32.mrb[0].mxu0
      %v5911 = vpop.f32.mrb[0].mxu0
      %v5912 = vadd.f32 %v5751, %v5911
      %v5913 = vpop.f32.mrb[0].mxu0
      %5914 = vdwg.mxu0
      %v5915 = vmax.f32 %v5789, 0.0
      %v5916 = vmax.f32 %v5792, 0.0
      %v5917 = vmax.f32 %v5797, 0.0
      %v5918 = vmax.f32 %v5800, 0.0
      %v5919 = vmax.f32 %v5805, 0.0
      %v5920 = vmax.f32 %v5808, 0.0
      %v5921 = vmax.f32 %v5813, 0.0
      %v5922 = vmax.f32 %v5816, 0.0
      %v5923 = vmax.f32 %v5821, 0.0
      %v5924 = vmax.f32 %v5824, 0.0
      %v5925 = vmax.f32 %v5829, 0.0
      %v5926 = vmax.f32 %v5832, 0.0
      %v5927 = vmax.f32 %v5837, 0.0
      %v5928 = vmax.f32 %v5840, 0.0
      %v5929 = vmax.f32 %v5845, 0.0
      %v5930 = vmax.f32 %v5848, 0.0
      %v5931 = vmax.f32 %v5853, 0.0
      %v5932 = vmax.f32 %v5856, 0.0
      %v5933 = vmax.f32 %v5861, 0.0
      %v5934 = vmax.f32 %v5864, 0.0
      %v5935 = vmax.f32 %v5869, 0.0
      %v5936 = vmax.f32 %v5872, 0.0
      %v5937 = vmax.f32 %v5877, 0.0
      %v5938 = vmax.f32 %v5880, 0.0
      %v5939 = vmax.f32 %v5885, 0.0
      %v5940 = vmax.f32 %v5888, 0.0
      %v5941 = vmax.f32 %v5893, 0.0
      %v5942 = vmax.f32 %v5896, 0.0
      %v5943 = vmax.f32 %v5901, 0.0
      %v5944 = vmax.f32 %v5904, 0.0
      %v5945 = vmax.f32 %v5909, 0.0
      %v5946 = vmax.f32 %v5912, 0.0
      %v5947 = vpack.c.bf16 %v5916, %v5915
      %v5948 = vpack.c.bf16 %v5918, %v5917
      %v5949 = vpack.c.bf16 %v5920, %v5919
      %v5950 = vpack.c.bf16 %v5922, %v5921
      %v5951 = vpack.c.bf16 %v5924, %v5923
      %v5952 = vpack.c.bf16 %v5926, %v5925
      %v5953 = vpack.c.bf16 %v5928, %v5927
      %v5954 = vpack.c.bf16 %v5930, %v5929
      %v5955 = vpack.c.bf16 %v5932, %v5931
      %v5956 = vpack.c.bf16 %v5934, %v5933
      %v5957 = vpack.c.bf16 %v5936, %v5935
      %v5958 = vpack.c.bf16 %v5938, %v5937
      %v5959 = vpack.c.bf16 %v5940, %v5939
      %v5960 = vpack.c.bf16 %v5942, %v5941
      %v5961 = vpack.c.bf16 %v5944, %v5943
      %v5962 = vpack.c.bf16 %v5946, %v5945
      %s5963 = scalar_lea.vmem %s4, 4
      %v5964 = vld [vmem:[%s5963] sm:$0xf]
      %v5966 = vsel %vm1205, %v5947, 0
      %v5969 = vsel %vm1205, %v5948, 0
      %v5972 = vsel %vm1205, %v5949, 0
      %v5975 = vsel %vm1205, %v5950, 0
      %v5978 = vsel %vm1205, %v5951, 0
      %v5981 = vsel %vm1205, %v5952, 0
      %v5984 = vsel %vm1205, %v5953, 0
      %v5987 = vsel %vm1205, %v5954, 0
      %v5990 = vsel %vm1205, %v5955, 0
      %v5993 = vsel %vm1205, %v5956, 0
      %v5996 = vsel %vm1205, %v5957, 0
      %v5999 = vsel %vm1205, %v5958, 0
      %v6002 = vsel %vm1205, %v5959, 0
      %v6005 = vsel %vm1205, %v5960, 0
      %v6008 = vsel %vm1205, %v5961, 0
      %v6011 = vsel %vm1205, %v5962, 0
      %v6014 = vsel %vm3743, %v5964, 0
      %6016 = vmatprep.subr.bf16.mxu0 0
      %6017 = vmatpush1.bf16.msra.mxu0 %v6014
      %6018 = vmatprep.subr.bf16.mxu0 0
      %6019 = vmatpush1.bf16.msra.mxu0 0
      %6020 = vmatprep.subr.bf16.mxu0 0
      %6021 = vmatpush1.bf16.msra.mxu0 0
      %6022 = vmatprep.subr.bf16.mxu0 0
      %6023 = vmatpush1.bf16.msra.mxu0 0
      %6024 = vmatprep.subr.bf16.mxu0 0
      %6025 = vmatpush1.bf16.msra.mxu0 0
      %6026 = vmatprep.subr.bf16.mxu0 0
      %6027 = vmatpush1.bf16.msra.mxu0 0
      %6028 = vmatprep.subr.bf16.mxu0 0
      %6029 = vmatpush1.bf16.msra.mxu0 0
      %6030 = vmatprep.subr.bf16.mxu0 0
      %6031 = vmatpush1.bf16.msra.mxu0 0
      %6032 = vmatprep.subr.bf16.mxu0 0
      %6033 = vmatpush1.bf16.msra.mxu0 0
      %6034 = vmatprep.subr.bf16.mxu0 0
      %6035 = vmatpush1.bf16.msra.mxu0 0
      %6036 = vmatprep.subr.bf16.mxu0 0
      %6037 = vmatpush1.bf16.msra.mxu0 0
      %6038 = vmatprep.subr.bf16.mxu0 0
      %6039 = vmatpush1.bf16.msra.mxu0 0
      %6040 = vmatprep.subr.bf16.mxu0 0
      %6041 = vmatpush1.bf16.msra.mxu0 0
      %6042 = vmatprep.subr.bf16.mxu0 0
      %6043 = vmatpush1.bf16.msra.mxu0 0
      %6044 = vmatprep.subr.bf16.mxu0 0
      %6045 = vmatpush1.bf16.msra.mxu0 0
      %6046 = vmatprep.subr.bf16.mxu0 0
      %6047 = vmatpush1.bf16.msra.mxu0 0
      %6048 = vmatprep.mubr.bf16.mxu0 0
      %6049 = vmatmul.mubr.bf16.gmra.mrb[0].mxu0 %v5966
      %v6050 = vpop.f32.mrb[0].mxu0
      %v6051 = vadd.f32 0.0, %v6050
      %v6052 = vpop.f32.mrb[0].mxu0
      %v6053 = vpop.f32.mrb[0].mxu0
      %v6054 = vadd.f32 0.0, %v6053
      %v6055 = vpop.f32.mrb[0].mxu0
      %6056 = vmatprep.mubr.bf16.mxu0 0
      %6057 = vmatmul.mubr.bf16.gmra.mrb[0].mxu0 %v5969
      %v6058 = vpop.f32.mrb[0].mxu0
      %v6059 = vadd.f32 0.0, %v6058
      %v6060 = vpop.f32.mrb[0].mxu0
      %v6061 = vpop.f32.mrb[0].mxu0
      %v6062 = vadd.f32 0.0, %v6061
      %v6063 = vpop.f32.mrb[0].mxu0
      %6064 = vmatprep.mubr.bf16.mxu0 0
      %6065 = vmatmul.mubr.bf16.gmra.mrb[0].mxu0 %v5972
      %v6066 = vpop.f32.mrb[0].mxu0
      %v6067 = vadd.f32 0.0, %v6066
      %v6068 = vpop.f32.mrb[0].mxu0
      %v6069 = vpop.f32.mrb[0].mxu0
      %v6070 = vadd.f32 0.0, %v6069
      %v6071 = vpop.f32.mrb[0].mxu0
      %6072 = vmatprep.mubr.bf16.mxu0 0
      %6073 = vmatmul.mubr.bf16.gmra.mrb[0].mxu0 %v5975
      %v6074 = vpop.f32.mrb[0].mxu0
      %v6075 = vadd.f32 0.0, %v6074
      %v6076 = vpop.f32.mrb[0].mxu0
      %v6077 = vpop.f32.mrb[0].mxu0
      %v6078 = vadd.f32 0.0, %v6077
      %v6079 = vpop.f32.mrb[0].mxu0
      %6080 = vmatprep.mubr.bf16.mxu0 0
      %6081 = vmatmul.mubr.bf16.gmra.mrb[0].mxu0 %v5978
      %v6082 = vpop.f32.mrb[0].mxu0
      %v6083 = vadd.f32 0.0, %v6082
      %v6084 = vpop.f32.mrb[0].mxu0
      %v6085 = vpop.f32.mrb[0].mxu0
      %v6086 = vadd.f32 0.0, %v6085
      %v6087 = vpop.f32.mrb[0].mxu0
      %6088 = vmatprep.mubr.bf16.mxu0 0
      %6089 = vmatmul.mubr.bf16.gmra.mrb[0].mxu0 %v5981
      %v6090 = vpop.f32.mrb[0].mxu0
      %v6091 = vadd.f32 0.0, %v6090
      %v6092 = vpop.f32.mrb[0].mxu0
      %v6093 = vpop.f32.mrb[0].mxu0
      %v6094 = vadd.f32 0.0, %v6093
      %v6095 = vpop.f32.mrb[0].mxu0
      %6096 = vmatprep.mubr.bf16.mxu0 0
      %6097 = vmatmul.mubr.bf16.gmra.mrb[0].mxu0 %v5984
      %v6098 = vpop.f32.mrb[0].mxu0
      %v6099 = vadd.f32 0.0, %v6098
      %v6100 = vpop.f32.mrb[0].mxu0
      %v6101 = vpop.f32.mrb[0].mxu0
      %v6102 = vadd.f32 0.0, %v6101
      %v6103 = vpop.f32.mrb[0].mxu0
      %6104 = vmatprep.mubr.bf16.mxu0 0
      %6105 = vmatmul.mubr.bf16.gmra.mrb[0].mxu0 %v5987
      %v6106 = vpop.f32.mrb[0].mxu0
      %v6107 = vadd.f32 0.0, %v6106
      %v6108 = vpop.f32.mrb[0].mxu0
      %v6109 = vpop.f32.mrb[0].mxu0
      %v6110 = vadd.f32 0.0, %v6109
      %v6111 = vpop.f32.mrb[0].mxu0
      %6112 = vmatprep.mubr.bf16.mxu0 0
      %6113 = vmatmul.mubr.bf16.gmra.mrb[0].mxu0 %v5990
      %v6114 = vpop.f32.mrb[0].mxu0
      %v6115 = vadd.f32 0.0, %v6114
      %v6116 = vpop.f32.mrb[0].mxu0
      %v6117 = vpop.f32.mrb[0].mxu0
      %v6118 = vadd.f32 0.0, %v6117
      %v6119 = vpop.f32.mrb[0].mxu0
      %6120 = vmatprep.mubr.bf16.mxu0 0
      %6121 = vmatmul.mubr.bf16.gmra.mrb[0].mxu0 %v5993
      %v6122 = vpop.f32.mrb[0].mxu0
      %v6123 = vadd.f32 0.0, %v6122
      %v6124 = vpop.f32.mrb[0].mxu0
      %v6125 = vpop.f32.mrb[0].mxu0
      %v6126 = vadd.f32 0.0, %v6125
      %v6127 = vpop.f32.mrb[0].mxu0
      %6128 = vmatprep.mubr.bf16.mxu0 0
      %6129 = vmatmul.mubr.bf16.gmra.mrb[0].mxu0 %v5996
      %v6130 = vpop.f32.mrb[0].mxu0
      %v6131 = vadd.f32 0.0, %v6130
      %v6132 = vpop.f32.mrb[0].mxu0
      %v6133 = vpop.f32.mrb[0].mxu0
      %v6134 = vadd.f32 0.0, %v6133
      %v6135 = vpop.f32.mrb[0].mxu0
      %6136 = vmatprep.mubr.bf16.mxu0 0
      %6137 = vmatmul.mubr.bf16.gmra.mrb[0].mxu0 %v5999
      %v6138 = vpop.f32.mrb[0].mxu0
      %v6139 = vadd.f32 0.0, %v6138
      %v6140 = vpop.f32.mrb[0].mxu0
      %v6141 = vpop.f32.mrb[0].mxu0
      %v6142 = vadd.f32 0.0, %v6141
      %v6143 = vpop.f32.mrb[0].mxu0
      %6144 = vmatprep.mubr.bf16.mxu0 0
      %6145 = vmatmul.mubr.bf16.gmra.mrb[0].mxu0 %v6002
      %v6146 = vpop.f32.mrb[0].mxu0
      %v6147 = vadd.f32 0.0, %v6146
      %v6148 = vpop.f32.mrb[0].mxu0
      %v6149 = vpop.f32.mrb[0].mxu0
      %v6150 = vadd.f32 0.0, %v6149
      %v6151 = vpop.f32.mrb[0].mxu0
      %6152 = vmatprep.mubr.bf16.mxu0 0
      %6153 = vmatmul.mubr.bf16.gmra.mrb[0].mxu0 %v6005
      %v6154 = vpop.f32.mrb[0].mxu0
      %v6155 = vadd.f32 0.0, %v6154
      %v6156 = vpop.f32.mrb[0].mxu0
      %v6157 = vpop.f32.mrb[0].mxu0
      %v6158 = vadd.f32 0.0, %v6157
      %v6159 = vpop.f32.mrb[0].mxu0
      %6160 = vmatprep.mubr.bf16.mxu0 0
      %6161 = vmatmul.mubr.bf16.gmra.mrb[0].mxu0 %v6008
      %v6162 = vpop.f32.mrb[0].mxu0
      %v6163 = vadd.f32 0.0, %v6162
      %v6164 = vpop.f32.mrb[0].mxu0
      %v6165 = vpop.f32.mrb[0].mxu0
      %v6166 = vadd.f32 0.0, %v6165
      %v6167 = vpop.f32.mrb[0].mxu0
      %6168 = vmatprep.mubr.bf16.mxu0 0
      %6169 = vmatmul.mubr.bf16.gmra.mrb[0].mxu0 %v6011
      %v6170 = vpop.f32.mrb[0].mxu0
      %v6171 = vadd.f32 0.0, %v6170
      %v6172 = vpop.f32.mrb[0].mxu0
      %v6173 = vpop.f32.mrb[0].mxu0
      %v6174 = vadd.f32 0.0, %v6173
      %v6175 = vpop.f32.mrb[0].mxu0
      %6176 = vdwg.mxu0
      %v6177 = vadd.f32 %v3908, %v6051
      %v6178 = vadd.f32 %v3909, %v6054
      %v6179 = vadd.f32 %v3910, %v6059
      %v6180 = vadd.f32 %v3911, %v6062
      %v6181 = vadd.f32 %v3912, %v6067
      %v6182 = vadd.f32 %v3913, %v6070
      %v6183 = vadd.f32 %v3914, %v6075
      %v6184 = vadd.f32 %v3915, %v6078
      %v6185 = vadd.f32 %v3916, %v6083
      %v6186 = vadd.f32 %v3917, %v6086
      %v6187 = vadd.f32 %v3918, %v6091
      %v6188 = vadd.f32 %v3919, %v6094
      %v6189 = vadd.f32 %v3920, %v6099
      %v6190 = vadd.f32 %v3921, %v6102
      %v6191 = vadd.f32 %v3922, %v6107
      %v6192 = vadd.f32 %v3923, %v6110
      %v6193 = vadd.f32 %v3924, %v6115
      %v6194 = vadd.f32 %v3925, %v6118
      %v6195 = vadd.f32 %v3926, %v6123
      %v6196 = vadd.f32 %v3927, %v6126
      %v6197 = vadd.f32 %v3928, %v6131
      %v6198 = vadd.f32 %v3929, %v6134
      %v6199 = vadd.f32 %v3930, %v6139
      %v6200 = vadd.f32 %v3931, %v6142
      %v6201 = vadd.f32 %v3932, %v6147
      %v6202 = vadd.f32 %v3933, %v6150
      %v6203 = vadd.f32 %v3934, %v6155
      %v6204 = vadd.f32 %v3935, %v6158
      %v6205 = vadd.f32 %v3936, %v6163
      %v6206 = vadd.f32 %v3937, %v6166
      %v6207 = vadd.f32 %v3938, %v6171
      %v6208 = vadd.f32 %v3939, %v6174
      %v6209 = vmax.f32 %v6177, 0.0
      %v6210 = vmax.f32 %v6178, 0.0
      %v6211 = vmax.f32 %v6179, 0.0
      %v6212 = vmax.f32 %v6180, 0.0
      %v6213 = vmax.f32 %v6181, 0.0
      %v6214 = vmax.f32 %v6182, 0.0
      %v6215 = vmax.f32 %v6183, 0.0
      %v6216 = vmax.f32 %v6184, 0.0
      %v6217 = vmax.f32 %v6185, 0.0
      %v6218 = vmax.f32 %v6186, 0.0
      %v6219 = vmax.f32 %v6187, 0.0
      %v6220 = vmax.f32 %v6188, 0.0
      %v6221 = vmax.f32 %v6189, 0.0
      %v6222 = vmax.f32 %v6190, 0.0
      %v6223 = vmax.f32 %v6191, 0.0
      %v6224 = vmax.f32 %v6192, 0.0
      %v6225 = vmax.f32 %v6193, 0.0
      %v6226 = vmax.f32 %v6194, 0.0
      %v6227 = vmax.f32 %v6195, 0.0
      %v6228 = vmax.f32 %v6196, 0.0
      %v6229 = vmax.f32 %v6197, 0.0
      %v6230 = vmax.f32 %v6198, 0.0
      %v6231 = vmax.f32 %v6199, 0.0
      %v6232 = vmax.f32 %v6200, 0.0
      %v6233 = vmax.f32 %v6201, 0.0
      %v6234 = vmax.f32 %v6202, 0.0
      %v6235 = vmax.f32 %v6203, 0.0
      %v6236 = vmax.f32 %v6204, 0.0
      %v6237 = vmax.f32 %v6205, 0.0
      %v6238 = vmax.f32 %v6206, 0.0
      %v6239 = vmax.f32 %v6207, 0.0
      %v6240 = vmax.f32 %v6208, 0.0
      %v6241 = vpack.c.bf16 %v6210, %v6209
      %v6242 = vpack.c.bf16 %v6212, %v6211
      %v6243 = vpack.c.bf16 %v6214, %v6213
      %v6244 = vpack.c.bf16 %v6216, %v6215
      %v6245 = vpack.c.bf16 %v6218, %v6217
      %v6246 = vpack.c.bf16 %v6220, %v6219
      %v6247 = vpack.c.bf16 %v6222, %v6221
      %v6248 = vpack.c.bf16 %v6224, %v6223
      %v6249 = vpack.c.bf16 %v6226, %v6225
      %v6250 = vpack.c.bf16 %v6228, %v6227
      %v6251 = vpack.c.bf16 %v6230, %v6229
      %v6252 = vpack.c.bf16 %v6232, %v6231
      %v6253 = vpack.c.bf16 %v6234, %v6233
      %v6254 = vpack.c.bf16 %v6236, %v6235
      %v6255 = vpack.c.bf16 %v6238, %v6237
      %v6256 = vpack.c.bf16 %v6240, %v6239
      %v6273 = vunpack.c.l.b16 %v6241
      %v6274 = vunpack.c.h.b16 %v6241
      %v6275 = vunpack.c.l.b16 %v6242
      %v6276 = vunpack.c.h.b16 %v6242
      %v6277 = vunpack.c.l.b16 %v6243
      %v6278 = vunpack.c.h.b16 %v6243
      %v6279 = vunpack.c.l.b16 %v6244
      %v6280 = vunpack.c.h.b16 %v6244
      %v6281 = vunpack.c.l.b16 %v6245
      %v6282 = vunpack.c.h.b16 %v6245
      %v6283 = vunpack.c.l.b16 %v6246
      %v6284 = vunpack.c.h.b16 %v6246
      %v6285 = vunpack.c.l.b16 %v6247
      %v6286 = vunpack.c.h.b16 %v6247
      %v6287 = vunpack.c.l.b16 %v6248
      %v6288 = vunpack.c.h.b16 %v6248
      %v6289 = vunpack.c.l.b16 %v6249
      %v6290 = vunpack.c.h.b16 %v6249
      %v6291 = vunpack.c.l.b16 %v6250
      %v6292 = vunpack.c.h.b16 %v6250
      %v6293 = vunpack.c.l.b16 %v6251
      %v6294 = vunpack.c.h.b16 %v6251
      %v6295 = vunpack.c.l.b16 %v6252
      %v6296 = vunpack.c.h.b16 %v6252
      %v6297 = vunpack.c.l.b16 %v6253
      %v6298 = vunpack.c.h.b16 %v6253
      %v6299 = vunpack.c.l.b16 %v6254
      %v6300 = vunpack.c.h.b16 %v6254
      %v6301 = vunpack.c.l.b16 %v6255
      %v6302 = vunpack.c.h.b16 %v6255
      %v6303 = vunpack.c.l.b16 %v6256
      %v6304 = vunpack.c.h.b16 %v6256
      %v6305 = vpack.c.b16 %v6273, %v6273
      %v6306 = vpack.c.b16 %v6274, %v6274
      %v6307 = vpack.c.b16 %v6275, %v6275
      %v6308 = vpack.c.b16 %v6276, %v6276
      %v6309 = vpack.c.b16 %v6277, %v6277
      %v6310 = vpack.c.b16 %v6278, %v6278
      %v6311 = vpack.c.b16 %v6279, %v6279
      %v6312 = vpack.c.b16 %v6280, %v6280
      %v6313 = vpack.c.b16 %v6281, %v6281
      %v6314 = vpack.c.b16 %v6282, %v6282
      %v6315 = vpack.c.b16 %v6283, %v6283
      %v6316 = vpack.c.b16 %v6284, %v6284
      %v6317 = vpack.c.b16 %v6285, %v6285
      %v6318 = vpack.c.b16 %v6286, %v6286
      %v6319 = vpack.c.b16 %v6287, %v6287
      %v6320 = vpack.c.b16 %v6288, %v6288
      %v6321 = vpack.c.b16 %v6289, %v6289
      %v6322 = vpack.c.b16 %v6290, %v6290
      %v6323 = vpack.c.b16 %v6291, %v6291
      %v6324 = vpack.c.b16 %v6292, %v6292
      %v6325 = vpack.c.b16 %v6293, %v6293
      %v6326 = vpack.c.b16 %v6294, %v6294
      %v6327 = vpack.c.b16 %v6295, %v6295
      %v6328 = vpack.c.b16 %v6296, %v6296
      %v6329 = vpack.c.b16 %v6297, %v6297
      %v6330 = vpack.c.b16 %v6298, %v6298
      %v6331 = vpack.c.b16 %v6299, %v6299
      %v6332 = vpack.c.b16 %v6300, %v6300
      %v6333 = vpack.c.b16 %v6301, %v6301
      %v6334 = vpack.c.b16 %v6302, %v6302
      %v6335 = vpack.c.b16 %v6303, %v6303
      %v6336 = vpack.c.b16 %v6304, %v6304
      %v6338 = vshrl.u32 %v6305, 16
      %v6340 = vrot.slane %v6338, 7
      %v6341 = vshll.u32 %v6305, 16
      %v6343 = vor.u32 %v6340, %v6341
      %v6344 = vrot.slane %v6340, 4
      %v6346 = vshrl.u32 %v6306, 16
      %v6348 = vrot.slane %v6346, 7
      %v6349 = vshll.u32 %v6306, 16
      %v6351 = vor.u32 %v6348, %v6349
      %v6352 = vsel %vm1791, %v6344, %v6351
      %v6353 = vrot.slane %v6348, 4
      %v6355 = vshrl.u32 %v6307, 16
      %v6357 = vrot.slane %v6355, 7
      %v6358 = vshll.u32 %v6307, 16
      %v6360 = vor.u32 %v6357, %v6358
      %v6361 = vrot.slane %v6357, 4
      %v6363 = vshrl.u32 %v6308, 16
      %v6365 = vrot.slane %v6363, 7
      %v6366 = vshll.u32 %v6308, 16
      %v6368 = vor.u32 %v6365, %v6366
      %v6369 = vsel %vm1791, %v6361, %v6368
      %v6370 = vrot.slane %v6365, 4
      %v6372 = vshrl.u32 %v6309, 16
      %v6374 = vrot.slane %v6372, 7
      %v6375 = vshll.u32 %v6309, 16
      %v6377 = vor.u32 %v6374, %v6375
      %v6378 = vrot.slane %v6374, 4
      %v6380 = vshrl.u32 %v6310, 16
      %v6382 = vrot.slane %v6380, 7
      %v6383 = vshll.u32 %v6310, 16
      %v6385 = vor.u32 %v6382, %v6383
      %v6386 = vsel %vm1791, %v6378, %v6385
      %v6387 = vrot.slane %v6382, 4
      %v6389 = vshrl.u32 %v6311, 16
      %v6391 = vrot.slane %v6389, 7
      %v6392 = vshll.u32 %v6311, 16
      %v6394 = vor.u32 %v6391, %v6392
      %v6395 = vrot.slane %v6391, 4
      %v6397 = vshrl.u32 %v6312, 16
      %v6399 = vrot.slane %v6397, 7
      %v6400 = vshll.u32 %v6312, 16
      %v6402 = vor.u32 %v6399, %v6400
      %v6403 = vsel %vm1791, %v6395, %v6402
      %v6404 = vrot.slane %v6399, 4
      %v6406 = vshrl.u32 %v6313, 16
      %v6408 = vrot.slane %v6406, 7
      %v6409 = vshll.u32 %v6313, 16
      %v6411 = vor.u32 %v6408, %v6409
      %v6412 = vrot.slane %v6408, 4
      %v6414 = vshrl.u32 %v6314, 16
      %v6416 = vrot.slane %v6414, 7
      %v6417 = vshll.u32 %v6314, 16
      %v6419 = vor.u32 %v6416, %v6417
      %v6420 = vsel %vm1791, %v6412, %v6419
      %v6421 = vrot.slane %v6416, 4
      %v6423 = vshrl.u32 %v6315, 16
      %v6425 = vrot.slane %v6423, 7
      %v6426 = vshll.u32 %v6315, 16
      %v6428 = vor.u32 %v6425, %v6426
      %v6429 = vrot.slane %v6425, 4
      %v6431 = vshrl.u32 %v6316, 16
      %v6433 = vrot.slane %v6431, 7
      %v6434 = vshll.u32 %v6316, 16
      %v6436 = vor.u32 %v6433, %v6434
      %v6437 = vsel %vm1791, %v6429, %v6436
      %v6438 = vrot.slane %v6433, 4
      %v6440 = vshrl.u32 %v6317, 16
      %v6442 = vrot.slane %v6440, 7
      %v6443 = vshll.u32 %v6317, 16
      %v6445 = vor.u32 %v6442, %v6443
      %v6446 = vrot.slane %v6442, 4
      %v6448 = vshrl.u32 %v6318, 16
      %v6450 = vrot.slane %v6448, 7
      %v6451 = vshll.u32 %v6318, 16
      %v6453 = vor.u32 %v6450, %v6451
      %v6454 = vsel %vm1791, %v6446, %v6453
      %v6455 = vrot.slane %v6450, 4
      %v6457 = vshrl.u32 %v6319, 16
      %v6459 = vrot.slane %v6457, 7
      %v6460 = vshll.u32 %v6319, 16
      %v6462 = vor.u32 %v6459, %v6460
      %v6463 = vrot.slane %v6459, 4
      %v6465 = vshrl.u32 %v6320, 16
      %v6467 = vrot.slane %v6465, 7
      %v6468 = vshll.u32 %v6320, 16
      %v6470 = vor.u32 %v6467, %v6468
      %v6471 = vsel %vm1791, %v6463, %v6470
      %v6472 = vrot.slane %v6467, 4
      %v6474 = vshrl.u32 %v6321, 16
      %v6476 = vrot.slane %v6474, 7
      %v6477 = vshll.u32 %v6321, 16
      %v6479 = vor.u32 %v6476, %v6477
      %v6480 = vrot.slane %v6476, 4
      %v6482 = vshrl.u32 %v6322, 16
      %v6484 = vrot.slane %v6482, 7
      %v6485 = vshll.u32 %v6322, 16
      %v6487 = vor.u32 %v6484, %v6485
      %v6488 = vsel %vm1791, %v6480, %v6487
      %v6489 = vrot.slane %v6484, 4
      %v6491 = vshrl.u32 %v6323, 16
      %v6493 = vrot.slane %v6491, 7
      %v6494 = vshll.u32 %v6323, 16
      %v6496 = vor.u32 %v6493, %v6494
      %v6497 = vrot.slane %v6493, 4
      %v6499 = vshrl.u32 %v6324, 16
      %v6501 = vrot.slane %v6499, 7
      %v6502 = vshll.u32 %v6324, 16
      %v6504 = vor.u32 %v6501, %v6502
      %v6505 = vsel %vm1791, %v6497, %v6504
      %v6506 = vrot.slane %v6501, 4
      %v6508 = vshrl.u32 %v6325, 16
      %v6510 = vrot.slane %v6508, 7
      %v6511 = vshll.u32 %v6325, 16
      %v6513 = vor.u32 %v6510, %v6511
      %v6514 = vrot.slane %v6510, 4
      %v6516 = vshrl.u32 %v6326, 16
      %v6518 = vrot.slane %v6516, 7
      %v6519 = vshll.u32 %v6326, 16
      %v6521 = vor.u32 %v6518, %v6519
      %v6522 = vsel %vm1791, %v6514, %v6521
      %v6523 = vrot.slane %v6518, 4
      %v6525 = vshrl.u32 %v6327, 16
      %v6527 = vrot.slane %v6525, 7
      %v6528 = vshll.u32 %v6327, 16
      %v6530 = vor.u32 %v6527, %v6528
      %v6531 = vrot.slane %v6527, 4
      %v6533 = vshrl.u32 %v6328, 16
      %v6535 = vrot.slane %v6533, 7
      %v6536 = vshll.u32 %v6328, 16
      %v6538 = vor.u32 %v6535, %v6536
      %v6539 = vsel %vm1791, %v6531, %v6538
      %v6540 = vrot.slane %v6535, 4
      %v6542 = vshrl.u32 %v6329, 16
      %v6544 = vrot.slane %v6542, 7
      %v6545 = vshll.u32 %v6329, 16
      %v6547 = vor.u32 %v6544, %v6545
      %v6548 = vrot.slane %v6544, 4
      %v6550 = vshrl.u32 %v6330, 16
      %v6552 = vrot.slane %v6550, 7
      %v6553 = vshll.u32 %v6330, 16
      %v6555 = vor.u32 %v6552, %v6553
      %v6556 = vsel %vm1791, %v6548, %v6555
      %v6557 = vrot.slane %v6552, 4
      %v6559 = vshrl.u32 %v6331, 16
      %v6561 = vrot.slane %v6559, 7
      %v6562 = vshll.u32 %v6331, 16
      %v6564 = vor.u32 %v6561, %v6562
      %v6565 = vrot.slane %v6561, 4
      %v6567 = vshrl.u32 %v6332, 16
      %v6569 = vrot.slane %v6567, 7
      %v6570 = vshll.u32 %v6332, 16
      %v6572 = vor.u32 %v6569, %v6570
      %v6573 = vsel %vm1791, %v6565, %v6572
      %v6574 = vrot.slane %v6569, 4
      %v6576 = vshrl.u32 %v6333, 16
      %v6578 = vrot.slane %v6576, 7
      %v6579 = vshll.u32 %v6333, 16
      %v6581 = vor.u32 %v6578, %v6579
      %v6582 = vrot.slane %v6578, 4
      %v6584 = vshrl.u32 %v6334, 16
      %v6586 = vrot.slane %v6584, 7
      %v6587 = vshll.u32 %v6334, 16
      %v6589 = vor.u32 %v6586, %v6587
      %v6590 = vsel %vm1791, %v6582, %v6589
      %v6591 = vrot.slane %v6586, 4
      %v6593 = vshrl.u32 %v6335, 16
      %v6595 = vrot.slane %v6593, 7
      %v6596 = vshll.u32 %v6335, 16
      %v6598 = vor.u32 %v6595, %v6596
      %v6599 = vrot.slane %v6595, 4
      %v6601 = vshrl.u32 %v6336, 16
      %v6603 = vrot.slane %v6601, 7
      %v6604 = vshll.u32 %v6336, 16
      %v6606 = vor.u32 %v6603, %v6604
      %v6607 = vsel %vm1791, %v6599, %v6606
      %v6608 = vrot.slane %v6603, 4
      %v6657 = vld [vmem:[%s2112] sm:$0xf]
      %v6658 = vsel %vm2115, %v6343, %v6657
      %6659 = vst [vmem:[%s2112] sm:$0xf] %v6658
      %6660 = vst.msk [vmem:[%s2112 + $0x4] sm:$0xf] %vm334, %v6352
      %v6661 = vld [vmem:[%s2112 + $0x8] sm:$0x1]
      %v6662 = vsel %vm2121, %v6353, %v6661
      %6663 = vst [vmem:[%s2112 + $0x8] sm:$0x1] %v6662
      %v6664 = vld [vmem:[%s2112 + $0xc] sm:$0xf]
      %v6665 = vsel %vm2115, %v6360, %v6664
      %6666 = vst [vmem:[%s2112 + $0xc] sm:$0xf] %v6665
      %6667 = vst.msk [vmem:[%s2112 + $0x10] sm:$0xf] %vm334, %v6369
      %v6668 = vld [vmem:[%s2112 + $0x14] sm:$0x1]
      %v6669 = vsel %vm2121, %v6370, %v6668
      %6670 = vst [vmem:[%s2112 + $0x14] sm:$0x1] %v6669
      %v6671 = vld [vmem:[%s2112 + $0x18] sm:$0xf]
      %v6672 = vsel %vm2115, %v6377, %v6671
      %6673 = vst [vmem:[%s2112 + $0x18] sm:$0xf] %v6672
      %6674 = vst.msk [vmem:[%s2112 + $0x1c] sm:$0xf] %vm334, %v6386
      %v6675 = vld [vmem:[%s2112 + $0x20] sm:$0x1]
      %v6676 = vsel %vm2121, %v6387, %v6675
      %6677 = vst [vmem:[%s2112 + $0x20] sm:$0x1] %v6676
      %v6678 = vld [vmem:[%s2112 + $0x24] sm:$0xf]
      %v6679 = vsel %vm2115, %v6394, %v6678
      %6680 = vst [vmem:[%s2112 + $0x24] sm:$0xf] %v6679
      %6681 = vst.msk [vmem:[%s2112 + $0x28] sm:$0xf] %vm334, %v6403
      %v6682 = vld [vmem:[%s2112 + $0x2c] sm:$0x1]
      %v6683 = vsel %vm2121, %v6404, %v6682
      %6684 = vst [vmem:[%s2112 + $0x2c] sm:$0x1] %v6683
      %v6685 = vld [vmem:[%s2112 + $0x30] sm:$0xf]
      %v6686 = vsel %vm2115, %v6411, %v6685
      %6687 = vst [vmem:[%s2112 + $0x30] sm:$0xf] %v6686
      %6688 = vst.msk [vmem:[%s2112 + $0x34] sm:$0xf] %vm334, %v6420
      %v6689 = vld [vmem:[%s2112 + $0x38] sm:$0x1]
      %v6690 = vsel %vm2121, %v6421, %v6689
      %6691 = vst [vmem:[%s2112 + $0x38] sm:$0x1] %v6690
      %v6692 = vld [vmem:[%s2112 + $0x3c] sm:$0xf]
      %v6693 = vsel %vm2115, %v6428, %v6692
      %6694 = vst [vmem:[%s2112 + $0x3c] sm:$0xf] %v6693
      %6695 = vst.msk [vmem:[%s2112 + $0x40] sm:$0xf] %vm334, %v6437
      %v6696 = vld [vmem:[%s2112 + $0x44] sm:$0x1]
      %v6697 = vsel %vm2121, %v6438, %v6696
      %6698 = vst [vmem:[%s2112 + $0x44] sm:$0x1] %v6697
      %v6699 = vld [vmem:[%s2112 + $0x48] sm:$0xf]
      %v6700 = vsel %vm2115, %v6445, %v6699
      %6701 = vst [vmem:[%s2112 + $0x48] sm:$0xf] %v6700
      %6702 = vst.msk [vmem:[%s2112 + $0x4c] sm:$0xf] %vm334, %v6454
      %v6703 = vld [vmem:[%s2112 + $0x50] sm:$0x1]
      %v6704 = vsel %vm2121, %v6455, %v6703
      %6705 = vst [vmem:[%s2112 + $0x50] sm:$0x1] %v6704
      %v6706 = vld [vmem:[%s2112 + $0x54] sm:$0xf]
      %v6707 = vsel %vm2115, %v6462, %v6706
      %6708 = vst [vmem:[%s2112 + $0x54] sm:$0xf] %v6707
      %6709 = vst.msk [vmem:[%s2112 + $0x58] sm:$0xf] %vm334, %v6471
      %v6710 = vld [vmem:[%s2112 + $0x5c] sm:$0x1]
      %v6711 = vsel %vm2121, %v6472, %v6710
      %6712 = vst [vmem:[%s2112 + $0x5c] sm:$0x1] %v6711
      %v6713 = vld [vmem:[%s2112 + $0x60] sm:$0xf]
      %v6714 = vsel %vm2115, %v6479, %v6713
      %6715 = vst [vmem:[%s2112 + $0x60] sm:$0xf] %v6714
      %6716 = vst.msk [vmem:[%s2112 + $0x64] sm:$0xf] %vm334, %v6488
      %v6717 = vld [vmem:[%s2112 + $0x68] sm:$0x1]
      %v6718 = vsel %vm2121, %v6489, %v6717
      %6719 = vst [vmem:[%s2112 + $0x68] sm:$0x1] %v6718
      %v6720 = vld [vmem:[%s2112 + $0x6c] sm:$0xf]
      %v6721 = vsel %vm2115, %v6496, %v6720
      %6722 = vst [vmem:[%s2112 + $0x6c] sm:$0xf] %v6721
      %6723 = vst.msk [vmem:[%s2112 + $0x70] sm:$0xf] %vm334, %v6505
      %v6724 = vld [vmem:[%s2112 + $0x74] sm:$0x1]
      %v6725 = vsel %vm2121, %v6506, %v6724
      %6726 = vst [vmem:[%s2112 + $0x74] sm:$0x1] %v6725
      %v6727 = vld [vmem:[%s2112 + $0x78] sm:$0xf]
      %v6728 = vsel %vm2115, %v6513, %v6727
      %6729 = vst [vmem:[%s2112 + $0x78] sm:$0xf] %v6728
      %6730 = vst.msk [vmem:[%s2112 + $0x7c] sm:$0xf] %vm334, %v6522
      %v6731 = vld [vmem:[%s2112 + $0x80] sm:$0x1]
      %v6732 = vsel %vm2121, %v6523, %v6731
      %6733 = vst [vmem:[%s2112 + $0x80] sm:$0x1] %v6732
      %v6734 = vld [vmem:[%s2112 + $0x84] sm:$0xf]
      %v6735 = vsel %vm2115, %v6530, %v6734
      %6736 = vst [vmem:[%s2112 + $0x84] sm:$0xf] %v6735
      %6737 = vst.msk [vmem:[%s2112 + $0x88] sm:$0xf] %vm334, %v6539
      %v6738 = vld [vmem:[%s2112 + $0x8c] sm:$0x1]
      %v6739 = vsel %vm2121, %v6540, %v6738
      %6740 = vst [vmem:[%s2112 + $0x8c] sm:$0x1] %v6739
      %v6741 = vld [vmem:[%s2112 + $0x90] sm:$0xf]
      %v6742 = vsel %vm2115, %v6547, %v6741
      %6743 = vst [vmem:[%s2112 + $0x90] sm:$0xf] %v6742
      %6744 = vst.msk [vmem:[%s2112 + $0x94] sm:$0xf] %vm334, %v6556
      %v6745 = vld [vmem:[%s2112 + $0x98] sm:$0x1]
      %v6746 = vsel %vm2121, %v6557, %v6745
      %6747 = vst [vmem:[%s2112 + $0x98] sm:$0x1] %v6746
      %v6748 = vld [vmem:[%s2112 + $0x9c] sm:$0xf]
      %v6749 = vsel %vm2115, %v6564, %v6748
      %6750 = vst [vmem:[%s2112 + $0x9c] sm:$0xf] %v6749
      %6751 = vst.msk [vmem:[%s2112 + $0xa0] sm:$0xf] %vm334, %v6573
      %v6752 = vld [vmem:[%s2112 + $0xa4] sm:$0x1]
      %v6753 = vsel %vm2121, %v6574, %v6752
      %6754 = vst [vmem:[%s2112 + $0xa4] sm:$0x1] %v6753
      %v6755 = vld [vmem:[%s2112 + $0xa8] sm:$0xf]
      %v6756 = vsel %vm2115, %v6581, %v6755
      %6757 = vst [vmem:[%s2112 + $0xa8] sm:$0xf] %v6756
      %6758 = vst.msk [vmem:[%s2112 + $0xac] sm:$0xf] %vm334, %v6590
      %v6759 = vld [vmem:[%s2112 + $0xb0] sm:$0x1]
      %v6760 = vsel %vm2121, %v6591, %v6759
      %6761 = vst [vmem:[%s2112 + $0xb0] sm:$0x1] %v6760
      %v6762 = vld [vmem:[%s2112 + $0xb4] sm:$0xf]
      %v6763 = vsel %vm2115, %v6598, %v6762
      %6764 = vst [vmem:[%s2112 + $0xb4] sm:$0xf] %v6763
      %6765 = vst.msk [vmem:[%s2112 + $0xb8] sm:$0xf] %vm334, %v6607
      %v6766 = vld [vmem:[%s2112 + $0xbc] sm:$0x1]
      %v6767 = vsel %vm2121, %v6608, %v6766
      %6768 = vst [vmem:[%s2112 + $0xbc] sm:$0x1] %v6767
      %v6769 = vld [vmem:[#allocation2] sm:$0xf]
      %v6770 = vld [vmem:[#allocation2 + $0x4] sm:$0xf]
      %v6771 = vld [vmem:[#allocation2 + $0x8] sm:$0x1]
      %v6772 = vld [vmem:[#allocation2 + $0xc] sm:$0xf]
      %v6773 = vld [vmem:[#allocation2 + $0x10] sm:$0xf]
      %v6774 = vld [vmem:[#allocation2 + $0x14] sm:$0x1]
      %v6775 = vld [vmem:[#allocation2 + $0x18] sm:$0xf]
      %v6776 = vld [vmem:[#allocation2 + $0x1c] sm:$0xf]
      %v6777 = vld [vmem:[#allocation2 + $0x20] sm:$0x1]
      %v6778 = vld [vmem:[#allocation2 + $0x24] sm:$0xf]
      %v6779 = vld [vmem:[#allocation2 + $0x28] sm:$0xf]
      %v6780 = vld [vmem:[#allocation2 + $0x2c] sm:$0x1]
      %v6781 = vld [vmem:[#allocation2 + $0x30] sm:$0xf]
      %v6782 = vld [vmem:[#allocation2 + $0x34] sm:$0xf]
      %v6783 = vld [vmem:[#allocation2 + $0x38] sm:$0x1]
      %v6784 = vld [vmem:[#allocation2 + $0x3c] sm:$0xf]
      %v6785 = vld [vmem:[#allocation2 + $0x40] sm:$0xf]
      %v6786 = vld [vmem:[#allocation2 + $0x44] sm:$0x1]
      %v6787 = vld [vmem:[#allocation2 + $0x48] sm:$0xf]
      %v6788 = vld [vmem:[#allocation2 + $0x4c] sm:$0xf]
      %v6789 = vld [vmem:[#allocation2 + $0x50] sm:$0x1]
      %v6790 = vld [vmem:[#allocation2 + $0x54] sm:$0xf]
      %v6791 = vld [vmem:[#allocation2 + $0x58] sm:$0xf]
      %v6792 = vld [vmem:[#allocation2 + $0x5c] sm:$0x1]
      %v6793 = vld [vmem:[#allocation2 + $0x60] sm:$0xf]
      %v6794 = vld [vmem:[#allocation2 + $0x64] sm:$0xf]
      %v6795 = vld [vmem:[#allocation2 + $0x68] sm:$0x1]
      %v6796 = vld [vmem:[#allocation2 + $0x6c] sm:$0xf]
      %v6797 = vld [vmem:[#allocation2 + $0x70] sm:$0xf]
      %v6798 = vld [vmem:[#allocation2 + $0x74] sm:$0x1]
      %v6799 = vld [vmem:[#allocation2 + $0x78] sm:$0xf]
      %v6800 = vld [vmem:[#allocation2 + $0x7c] sm:$0xf]
      %v6801 = vld [vmem:[#allocation2 + $0x80] sm:$0x1]
      %v6802 = vld [vmem:[#allocation2 + $0x84] sm:$0xf]
      %v6803 = vld [vmem:[#allocation2 + $0x88] sm:$0xf]
      %v6804 = vld [vmem:[#allocation2 + $0x8c] sm:$0x1]
      %v6805 = vld [vmem:[#allocation2 + $0x90] sm:$0xf]
      %v6806 = vld [vmem:[#allocation2 + $0x94] sm:$0xf]
      %v6807 = vld [vmem:[#allocation2 + $0x98] sm:$0x1]
      %v6808 = vld [vmem:[#allocation2 + $0x9c] sm:$0xf]
      %v6809 = vld [vmem:[#allocation2 + $0xa0] sm:$0xf]
      %v6810 = vld [vmem:[#allocation2 + $0xa4] sm:$0x1]
      %v6811 = vld [vmem:[#allocation2 + $0xa8] sm:$0xf]
      %v6812 = vld [vmem:[#allocation2 + $0xac] sm:$0xf]
      %v6813 = vld [vmem:[#allocation2 + $0xb0] sm:$0x1]
      %v6814 = vld [vmem:[#allocation2 + $0xb4] sm:$0xf]
      %v6815 = vld [vmem:[#allocation2 + $0xb8] sm:$0xf]
      %v6816 = vld [vmem:[#allocation2 + $0xbc] sm:$0x1]
      %v6817 = vld [vmem:[#allocation2 + $0xc0] sm:$0xf]
      %v6818 = vld [vmem:[#allocation2 + $0xc4] sm:$0xf]
      %v6819 = vld [vmem:[#allocation2 + $0xc8] sm:$0x1]
      %v6820 = vld [vmem:[#allocation2 + $0xcc] sm:$0xf]
      %v6821 = vld [vmem:[#allocation2 + $0xd0] sm:$0xf]
      %v6822 = vld [vmem:[#allocation2 + $0xd4] sm:$0x1]
      %v6855 = vunpack.c.l.b16 %v6769
      %v6856 = vunpack.c.l.b16 %v6770
      %v6857 = vunpack.c.l.b16 %v6772
      %v6858 = vunpack.c.l.b16 %v6773
      %v6859 = vunpack.c.l.b16 %v6775
      %v6860 = vunpack.c.l.b16 %v6776
      %v6861 = vunpack.c.l.b16 %v6778
      %v6862 = vunpack.c.l.b16 %v6779
      %v6863 = vunpack.c.l.b16 %v6781
      %v6864 = vunpack.c.l.b16 %v6782
      %v6865 = vunpack.c.l.b16 %v6784
      %v6866 = vunpack.c.l.b16 %v6785
      %v6867 = vunpack.c.l.b16 %v6787
      %v6868 = vunpack.c.l.b16 %v6788
      %v6869 = vunpack.c.l.b16 %v6790
      %v6870 = vunpack.c.l.b16 %v6791
      %v6871 = vunpack.c.l.b16 %v6793
      %v6872 = vunpack.c.l.b16 %v6794
      %v6873 = vunpack.c.l.b16 %v6796
      %v6874 = vunpack.c.l.b16 %v6797
      %v6875 = vunpack.c.l.b16 %v6799
      %v6876 = vunpack.c.l.b16 %v6800
      %v6877 = vunpack.c.l.b16 %v6802
      %v6878 = vunpack.c.l.b16 %v6803
      %v6879 = vunpack.c.l.b16 %v6805
      %v6880 = vunpack.c.l.b16 %v6806
      %v6881 = vunpack.c.l.b16 %v6808
      %v6882 = vunpack.c.l.b16 %v6809
      %v6883 = vunpack.c.l.b16 %v6811
      %v6884 = vunpack.c.l.b16 %v6812
      %v6885 = vunpack.c.l.b16 %v6814
      %v6886 = vunpack.c.l.b16 %v6815
      %v6887 = vpack.c.b16 %v6856, %v6855
      %v6888 = vpack.c.b16 %v6858, %v6857
      %v6889 = vpack.c.b16 %v6860, %v6859
      %v6890 = vpack.c.b16 %v6862, %v6861
      %v6891 = vpack.c.b16 %v6864, %v6863
      %v6892 = vpack.c.b16 %v6866, %v6865
      %v6893 = vpack.c.b16 %v6868, %v6867
      %v6894 = vpack.c.b16 %v6870, %v6869
      %v6895 = vpack.c.b16 %v6872, %v6871
      %v6896 = vpack.c.b16 %v6874, %v6873
      %v6897 = vpack.c.b16 %v6876, %v6875
      %v6898 = vpack.c.b16 %v6878, %v6877
      %v6899 = vpack.c.b16 %v6880, %v6879
      %v6900 = vpack.c.b16 %v6882, %v6881
      %v6901 = vpack.c.b16 %v6884, %v6883
      %v6902 = vpack.c.b16 %v6886, %v6885
      %v6919 = vunpack.c.l.b16 %v6771
      %v6920 = vunpack.c.l.b16 %v6774
      %v6921 = vunpack.c.l.b16 %v6777
      %v6922 = vunpack.c.l.b16 %v6780
      %v6923 = vunpack.c.l.b16 %v6783
      %v6924 = vunpack.c.l.b16 %v6786
      %v6925 = vunpack.c.l.b16 %v6789
      %v6926 = vunpack.c.l.b16 %v6792
      %v6927 = vunpack.c.l.b16 %v6795
      %v6928 = vunpack.c.l.b16 %v6798
      %v6929 = vunpack.c.l.b16 %v6801
      %v6930 = vunpack.c.l.b16 %v6804
      %v6931 = vunpack.c.l.b16 %v6807
      %v6932 = vunpack.c.l.b16 %v6810
      %v6933 = vunpack.c.l.b16 %v6813
      %v6934 = vunpack.c.l.b16 %v6816
      %v6935 = vpack.c.b16 %v6919, %v6919
      %v6936 = vpack.c.b16 %v6920, %v6920
      %v6937 = vpack.c.b16 %v6921, %v6921
      %v6938 = vpack.c.b16 %v6922, %v6922
      %v6939 = vpack.c.b16 %v6923, %v6923
      %v6940 = vpack.c.b16 %v6924, %v6924
      %v6941 = vpack.c.b16 %v6925, %v6925
      %v6942 = vpack.c.b16 %v6926, %v6926
      %v6943 = vpack.c.b16 %v6927, %v6927
      %v6944 = vpack.c.b16 %v6928, %v6928
      %v6945 = vpack.c.b16 %v6929, %v6929
      %v6946 = vpack.c.b16 %v6930, %v6930
      %v6947 = vpack.c.b16 %v6931, %v6931
      %v6948 = vpack.c.b16 %v6932, %v6932
      %v6949 = vpack.c.b16 %v6933, %v6933
      %v6950 = vpack.c.b16 %v6934, %v6934
      %v6952 = vshrl.u32 %v6887, 16
      %v6954 = vshll.u32 %v6887, 16
      %v6956 = vrot.slane %v6954, 1
      %v6957 = vor.u32 %v6952, %v6956
      %v6959 = vshll.u32 %v6935, 16
      %v6961 = vrot.slane %v6959, 1
      %v6962 = vsel %vm628, %v6957, %v6961
      %v6964 = vshrl.u32 %v6888, 16
      %v6966 = vshll.u32 %v6888, 16
      %v6968 = vrot.slane %v6966, 1
      %v6969 = vor.u32 %v6964, %v6968
      %v6971 = vshll.u32 %v6936, 16
      %v6973 = vrot.slane %v6971, 1
      %v6974 = vsel %vm628, %v6969, %v6973
      %v6976 = vshrl.u32 %v6889, 16
      %v6978 = vshll.u32 %v6889, 16
      %v6980 = vrot.slane %v6978, 1
      %v6981 = vor.u32 %v6976, %v6980
      %v6983 = vshll.u32 %v6937, 16
      %v6985 = vrot.slane %v6983, 1
      %v6986 = vsel %vm628, %v6981, %v6985
      %v6988 = vshrl.u32 %v6890, 16
      %v6990 = vshll.u32 %v6890, 16
      %v6992 = vrot.slane %v6990, 1
      %v6993 = vor.u32 %v6988, %v6992
      %v6995 = vshll.u32 %v6938, 16
      %v6997 = vrot.slane %v6995, 1
      %v6998 = vsel %vm628, %v6993, %v6997
      %v7000 = vshrl.u32 %v6891, 16
      %v7002 = vshll.u32 %v6891, 16
      %v7004 = vrot.slane %v7002, 1
      %v7005 = vor.u32 %v7000, %v7004
      %v7007 = vshll.u32 %v6939, 16
      %v7009 = vrot.slane %v7007, 1
      %v7010 = vsel %vm628, %v7005, %v7009
      %v7012 = vshrl.u32 %v6892, 16
      %v7014 = vshll.u32 %v6892, 16
      %v7016 = vrot.slane %v7014, 1
      %v7017 = vor.u32 %v7012, %v7016
      %v7019 = vshll.u32 %v6940, 16
      %v7021 = vrot.slane %v7019, 1
      %v7022 = vsel %vm628, %v7017, %v7021
      %v7024 = vshrl.u32 %v6893, 16
      %v7026 = vshll.u32 %v6893, 16
      %v7028 = vrot.slane %v7026, 1
      %v7029 = vor.u32 %v7024, %v7028
      %v7031 = vshll.u32 %v6941, 16
      %v7033 = vrot.slane %v7031, 1
      %v7034 = vsel %vm628, %v7029, %v7033
      %v7036 = vshrl.u32 %v6894, 16
      %v7038 = vshll.u32 %v6894, 16
      %v7040 = vrot.slane %v7038, 1
      %v7041 = vor.u32 %v7036, %v7040
      %v7043 = vshll.u32 %v6942, 16
      %v7045 = vrot.slane %v7043, 1
      %v7046 = vsel %vm628, %v7041, %v7045
      %v7048 = vshrl.u32 %v6895, 16
      %v7050 = vshll.u32 %v6895, 16
      %v7052 = vrot.slane %v7050, 1
      %v7053 = vor.u32 %v7048, %v7052
      %v7055 = vshll.u32 %v6943, 16
      %v7057 = vrot.slane %v7055, 1
      %v7058 = vsel %vm628, %v7053, %v7057
      %v7060 = vshrl.u32 %v6896, 16
      %v7062 = vshll.u32 %v6896, 16
      %v7064 = vrot.slane %v7062, 1
      %v7065 = vor.u32 %v7060, %v7064
      %v7067 = vshll.u32 %v6944, 16
      %v7069 = vrot.slane %v7067, 1
      %v7070 = vsel %vm628, %v7065, %v7069
      %v7072 = vshrl.u32 %v6897, 16
      %v7074 = vshll.u32 %v6897, 16
      %v7076 = vrot.slane %v7074, 1
      %v7077 = vor.u32 %v7072, %v7076
      %v7079 = vshll.u32 %v6945, 16
      %v7081 = vrot.slane %v7079, 1
      %v7082 = vsel %vm628, %v7077, %v7081
      %v7084 = vshrl.u32 %v6898, 16
      %v7086 = vshll.u32 %v6898, 16
      %v7088 = vrot.slane %v7086, 1
      %v7089 = vor.u32 %v7084, %v7088
      %v7091 = vshll.u32 %v6946, 16
      %v7093 = vrot.slane %v7091, 1
      %v7094 = vsel %vm628, %v7089, %v7093
      %v7096 = vshrl.u32 %v6899, 16
      %v7098 = vshll.u32 %v6899, 16
      %v7100 = vrot.slane %v7098, 1
      %v7101 = vor.u32 %v7096, %v7100
      %v7103 = vshll.u32 %v6947, 16
      %v7105 = vrot.slane %v7103, 1
      %v7106 = vsel %vm628, %v7101, %v7105
      %v7108 = vshrl.u32 %v6900, 16
      %v7110 = vshll.u32 %v6900, 16
      %v7112 = vrot.slane %v7110, 1
      %v7113 = vor.u32 %v7108, %v7112
      %v7115 = vshll.u32 %v6948, 16
      %v7117 = vrot.slane %v7115, 1
      %v7118 = vsel %vm628, %v7113, %v7117
      %v7120 = vshrl.u32 %v6901, 16
      %v7122 = vshll.u32 %v6901, 16
      %v7124 = vrot.slane %v7122, 1
      %v7125 = vor.u32 %v7120, %v7124
      %v7127 = vshll.u32 %v6949, 16
      %v7129 = vrot.slane %v7127, 1
      %v7130 = vsel %vm628, %v7125, %v7129
      %v7132 = vshrl.u32 %v6902, 16
      %v7134 = vshll.u32 %v6902, 16
      %v7136 = vrot.slane %v7134, 1
      %v7137 = vor.u32 %v7132, %v7136
      %v7139 = vshll.u32 %v6950, 16
      %v7141 = vrot.slane %v7139, 1
      %v7142 = vsel %vm628, %v7137, %v7141
      %7143 = vrot.lane.b32.xlu0 %v6962, 32
      %v7144 = vpop.permute.xlu0 %7143
      %7145 = vrot.lane.b32.xlu0 %v6974, 32
      %v7146 = vpop.permute.xlu0 %7145
      %7147 = vrot.lane.b32.xlu0 %v6986, 32
      %v7148 = vpop.permute.xlu0 %7147
      %7149 = vrot.lane.b32.xlu0 %v6998, 32
      %v7150 = vpop.permute.xlu0 %7149
      %7151 = vrot.lane.b32.xlu0 %v7010, 32
      %v7152 = vpop.permute.xlu0 %7151
      %7153 = vrot.lane.b32.xlu0 %v7022, 32
      %v7154 = vpop.permute.xlu0 %7153
      %7155 = vrot.lane.b32.xlu0 %v7034, 32
      %v7156 = vpop.permute.xlu0 %7155
      %7157 = vrot.lane.b32.xlu0 %v7046, 32
      %v7158 = vpop.permute.xlu0 %7157
      %7159 = vrot.lane.b32.xlu0 %v7058, 32
      %v7160 = vpop.permute.xlu0 %7159
      %7161 = vrot.lane.b32.xlu0 %v7070, 32
      %v7162 = vpop.permute.xlu0 %7161
      %7163 = vrot.lane.b32.xlu0 %v7082, 32
      %v7164 = vpop.permute.xlu0 %7163
      %7165 = vrot.lane.b32.xlu0 %v7094, 32
      %v7166 = vpop.permute.xlu0 %7165
      %7167 = vrot.lane.b32.xlu0 %v7106, 32
      %v7168 = vpop.permute.xlu0 %7167
      %7169 = vrot.lane.b32.xlu0 %v7118, 32
      %v7170 = vpop.permute.xlu0 %7169
      %7171 = vrot.lane.b32.xlu0 %v7130, 32
      %v7172 = vpop.permute.xlu0 %7171
      %7173 = vrot.lane.b32.xlu0 %v7142, 32
      %v7174 = vpop.permute.xlu0 %7173
      %v7175 = vrot.slane %v6887, 1
      %v7176 = vrot.slane %v6935, 1
      %v7177 = vsel %vm853, %v7175, %v7176
      %v7178 = vrot.slane %v6888, 1
      %v7179 = vrot.slane %v6936, 1
      %v7180 = vsel %vm853, %v7178, %v7179
      %v7181 = vrot.slane %v6889, 1
      %v7182 = vrot.slane %v6937, 1
      %v7183 = vsel %vm853, %v7181, %v7182
      %v7184 = vrot.slane %v6890, 1
      %v7185 = vrot.slane %v6938, 1
      %v7186 = vsel %vm853, %v7184, %v7185
      %v7187 = vrot.slane %v6891, 1
      %v7188 = vrot.slane %v6939, 1
      %v7189 = vsel %vm853, %v7187, %v7188
      %v7190 = vrot.slane %v6892, 1
      %v7191 = vrot.slane %v6940, 1
      %v7192 = vsel %vm853, %v7190, %v7191
      %v7193 = vrot.slane %v6893, 1
      %v7194 = vrot.slane %v6941, 1
      %v7195 = vsel %vm853, %v7193, %v7194
      %v7196 = vrot.slane %v6894, 1
      %v7197 = vrot.slane %v6942, 1
      %v7198 = vsel %vm853, %v7196, %v7197
      %v7199 = vrot.slane %v6895, 1
      %v7200 = vrot.slane %v6943, 1
      %v7201 = vsel %vm853, %v7199, %v7200
      %v7202 = vrot.slane %v6896, 1
      %v7203 = vrot.slane %v6944, 1
      %v7204 = vsel %vm853, %v7202, %v7203
      %v7205 = vrot.slane %v6897, 1
      %v7206 = vrot.slane %v6945, 1
      %v7207 = vsel %vm853, %v7205, %v7206
      %v7208 = vrot.slane %v6898, 1
      %v7209 = vrot.slane %v6946, 1
      %v7210 = vsel %vm853, %v7208, %v7209
      %v7211 = vrot.slane %v6899, 1
      %v7212 = vrot.slane %v6947, 1
      %v7213 = vsel %vm853, %v7211, %v7212
      %v7214 = vrot.slane %v6900, 1
      %v7215 = vrot.slane %v6948, 1
      %v7216 = vsel %vm853, %v7214, %v7215
      %v7217 = vrot.slane %v6901, 1
      %v7218 = vrot.slane %v6949, 1
      %v7219 = vsel %vm853, %v7217, %v7218
      %v7220 = vrot.slane %v6902, 1
      %v7221 = vrot.slane %v6950, 1
      %v7222 = vsel %vm853, %v7220, %v7221
      %7223 = vrot.lane.b32.xlu0 %v7177, 64
      %v7224 = vpop.permute.xlu0 %7223
      %7225 = vrot.lane.b32.xlu0 %v7180, 64
      %v7226 = vpop.permute.xlu0 %7225
      %7227 = vrot.lane.b32.xlu0 %v7183, 64
      %v7228 = vpop.permute.xlu0 %7227
      %7229 = vrot.lane.b32.xlu0 %v7186, 64
      %v7230 = vpop.permute.xlu0 %7229
      %7231 = vrot.lane.b32.xlu0 %v7189, 64
      %v7232 = vpop.permute.xlu0 %7231
      %7233 = vrot.lane.b32.xlu0 %v7192, 64
      %v7234 = vpop.permute.xlu0 %7233
      %7235 = vrot.lane.b32.xlu0 %v7195, 64
      %v7236 = vpop.permute.xlu0 %7235
      %7237 = vrot.lane.b32.xlu0 %v7198, 64
      %v7238 = vpop.permute.xlu0 %7237
      %7239 = vrot.lane.b32.xlu0 %v7201, 64
      %v7240 = vpop.permute.xlu0 %7239
      %7241 = vrot.lane.b32.xlu0 %v7204, 64
      %v7242 = vpop.permute.xlu0 %7241
      %7243 = vrot.lane.b32.xlu0 %v7207, 64
      %v7244 = vpop.permute.xlu0 %7243
      %7245 = vrot.lane.b32.xlu0 %v7210, 64
      %v7246 = vpop.permute.xlu0 %7245
      %7247 = vrot.lane.b32.xlu0 %v7213, 64
      %v7248 = vpop.permute.xlu0 %7247
      %7249 = vrot.lane.b32.xlu0 %v7216, 64
      %v7250 = vpop.permute.xlu0 %7249
      %7251 = vrot.lane.b32.xlu0 %v7219, 64
      %v7252 = vpop.permute.xlu0 %7251
      %7253 = vrot.lane.b32.xlu0 %v7222, 64
      %v7254 = vpop.permute.xlu0 %7253
      %v7257 = vunpack.c.l.b16 %v6817
      %v7258 = vunpack.c.l.b16 %v6818
      %v7259 = vpack.c.b16 %v7258, %v7257
      %7260 = vrot.lane.b32.xlu0 %v6888, 96
      %v7261 = vpop.permute.xlu0 %7260
      %7262 = vrot.lane.b32.xlu0 %v6889, 96
      %v7263 = vpop.permute.xlu0 %7262
      %7264 = vrot.lane.b32.xlu0 %v6890, 96
      %v7265 = vpop.permute.xlu0 %7264
      %7266 = vrot.lane.b32.xlu0 %v6891, 96
      %v7267 = vpop.permute.xlu0 %7266
      %7268 = vrot.lane.b32.xlu0 %v6892, 96
      %v7269 = vpop.permute.xlu0 %7268
      %7270 = vrot.lane.b32.xlu0 %v6893, 96
      %v7271 = vpop.permute.xlu0 %7270
      %7272 = vrot.lane.b32.xlu0 %v6894, 96
      %v7273 = vpop.permute.xlu0 %7272
      %7274 = vrot.lane.b32.xlu0 %v6895, 96
      %v7275 = vpop.permute.xlu0 %7274
      %7276 = vrot.lane.b32.xlu0 %v6896, 96
      %v7277 = vpop.permute.xlu0 %7276
      %7278 = vrot.lane.b32.xlu0 %v6897, 96
      %v7279 = vpop.permute.xlu0 %7278
      %7280 = vrot.lane.b32.xlu0 %v6898, 96
      %v7281 = vpop.permute.xlu0 %7280
      %7282 = vrot.lane.b32.xlu0 %v6899, 96
      %v7283 = vpop.permute.xlu0 %7282
      %7284 = vrot.lane.b32.xlu0 %v6900, 96
      %v7285 = vpop.permute.xlu0 %7284
      %7286 = vrot.lane.b32.xlu0 %v6901, 96
      %v7287 = vpop.permute.xlu0 %7286
      %7288 = vrot.lane.b32.xlu0 %v6902, 96
      %v7289 = vpop.permute.xlu0 %7288
      %7290 = vrot.lane.b32.xlu0 %v7259, 96
      %v7291 = vpop.permute.xlu0 %7290
      %v7293 = vunpack.c.l.b16 %v6819
      %v7294 = vpack.c.b16 %v7293, %v7293
      %v7296 = vshrl.u32 %v7259, 16
      %v7298 = vshll.u32 %v7259, 16
      %v7300 = vrot.slane %v7298, 1
      %v7301 = vor.u32 %v7296, %v7300
      %v7303 = vshll.u32 %v7294, 16
      %v7305 = vrot.slane %v7303, 1
      %v7306 = vsel %vm628, %v7301, %v7305
      %v7307 = vrot.slane %v7259, 1
      %v7308 = vrot.slane %v7294, 1
      %v7309 = vsel %vm853, %v7307, %v7308
      %7310 = vrot.lane.b32.xlu0 %v7180, 32
      %v7311 = vpop.permute.xlu0 %7310
      %7312 = vrot.lane.b32.xlu0 %v7183, 32
      %v7313 = vpop.permute.xlu0 %7312
      %7314 = vrot.lane.b32.xlu0 %v7186, 32
      %v7315 = vpop.permute.xlu0 %7314
      %7316 = vrot.lane.b32.xlu0 %v7189, 32
      %v7317 = vpop.permute.xlu0 %7316
      %7318 = vrot.lane.b32.xlu0 %v7192, 32
      %v7319 = vpop.permute.xlu0 %7318
      %7320 = vrot.lane.b32.xlu0 %v7195, 32
      %v7321 = vpop.permute.xlu0 %7320
      %7322 = vrot.lane.b32.xlu0 %v7198, 32
      %v7323 = vpop.permute.xlu0 %7322
      %7324 = vrot.lane.b32.xlu0 %v7201, 32
      %v7325 = vpop.permute.xlu0 %7324
      %7326 = vrot.lane.b32.xlu0 %v7204, 32
      %v7327 = vpop.permute.xlu0 %7326
      %7328 = vrot.lane.b32.xlu0 %v7207, 32
      %v7329 = vpop.permute.xlu0 %7328
      %7330 = vrot.lane.b32.xlu0 %v7210, 32
      %v7331 = vpop.permute.xlu0 %7330
      %7332 = vrot.lane.b32.xlu0 %v7213, 32
      %v7333 = vpop.permute.xlu0 %7332
      %7334 = vrot.lane.b32.xlu0 %v7216, 32
      %v7335 = vpop.permute.xlu0 %7334
      %7336 = vrot.lane.b32.xlu0 %v7219, 32
      %v7337 = vpop.permute.xlu0 %7336
      %7338 = vrot.lane.b32.xlu0 %v7222, 32
      %v7339 = vpop.permute.xlu0 %7338
      %7340 = vrot.lane.b32.xlu0 %v7309, 32
      %v7341 = vpop.permute.xlu0 %7340
      %v7344 = vunpack.c.l.b16 %v6820
      %v7345 = vunpack.c.l.b16 %v6821
      %v7346 = vpack.c.b16 %v7345, %v7344
      %7347 = vrot.lane.b32.xlu0 %v6889, 64
      %v7348 = vpop.permute.xlu0 %7347
      %7349 = vrot.lane.b32.xlu0 %v6890, 64
      %v7350 = vpop.permute.xlu0 %7349
      %7351 = vrot.lane.b32.xlu0 %v6891, 64
      %v7352 = vpop.permute.xlu0 %7351
      %7353 = vrot.lane.b32.xlu0 %v6892, 64
      %v7354 = vpop.permute.xlu0 %7353
      %7355 = vrot.lane.b32.xlu0 %v6893, 64
      %v7356 = vpop.permute.xlu0 %7355
      %7357 = vrot.lane.b32.xlu0 %v6894, 64
      %v7358 = vpop.permute.xlu0 %7357
      %7359 = vrot.lane.b32.xlu0 %v6895, 64
      %v7360 = vpop.permute.xlu0 %7359
      %7361 = vrot.lane.b32.xlu0 %v6896, 64
      %v7362 = vpop.permute.xlu0 %7361
      %7363 = vrot.lane.b32.xlu0 %v6897, 64
      %v7364 = vpop.permute.xlu0 %7363
      %7365 = vrot.lane.b32.xlu0 %v6898, 64
      %v7366 = vpop.permute.xlu0 %7365
      %7367 = vrot.lane.b32.xlu0 %v6899, 64
      %v7368 = vpop.permute.xlu0 %7367
      %7369 = vrot.lane.b32.xlu0 %v6900, 64
      %v7370 = vpop.permute.xlu0 %7369
      %7371 = vrot.lane.b32.xlu0 %v6901, 64
      %v7372 = vpop.permute.xlu0 %7371
      %7373 = vrot.lane.b32.xlu0 %v6902, 64
      %v7374 = vpop.permute.xlu0 %7373
      %7375 = vrot.lane.b32.xlu0 %v7259, 64
      %v7376 = vpop.permute.xlu0 %7375
      %7377 = vrot.lane.b32.xlu0 %v7346, 64
      %v7378 = vpop.permute.xlu0 %7377
      %v7380 = vunpack.c.l.b16 %v6822
      %v7381 = vpack.c.b16 %v7380, %v7380
      %v7383 = vshrl.u32 %v7346, 16
      %v7385 = vshll.u32 %v7346, 16
      %v7387 = vrot.slane %v7385, 1
      %v7388 = vor.u32 %v7383, %v7387
      %v7390 = vshll.u32 %v7381, 16
      %v7392 = vrot.slane %v7390, 1
      %v7393 = vsel %vm628, %v7388, %v7392
      %7394 = vrot.lane.b32.xlu0 %v6986, 96
      %v7395 = vpop.permute.xlu0 %7394
      %7396 = vrot.lane.b32.xlu0 %v6998, 96
      %v7397 = vpop.permute.xlu0 %7396
      %7398 = vrot.lane.b32.xlu0 %v7010, 96
      %v7399 = vpop.permute.xlu0 %7398
      %7400 = vrot.lane.b32.xlu0 %v7022, 96
      %v7401 = vpop.permute.xlu0 %7400
      %7402 = vrot.lane.b32.xlu0 %v7034, 96
      %v7403 = vpop.permute.xlu0 %7402
      %7404 = vrot.lane.b32.xlu0 %v7046, 96
      %v7405 = vpop.permute.xlu0 %7404
      %7406 = vrot.lane.b32.xlu0 %v7058, 96
      %v7407 = vpop.permute.xlu0 %7406
      %7408 = vrot.lane.b32.xlu0 %v7070, 96
      %v7409 = vpop.permute.xlu0 %7408
      %7410 = vrot.lane.b32.xlu0 %v7082, 96
      %v7411 = vpop.permute.xlu0 %7410
      %7412 = vrot.lane.b32.xlu0 %v7094, 96
      %v7413 = vpop.permute.xlu0 %7412
      %7414 = vrot.lane.b32.xlu0 %v7106, 96
      %v7415 = vpop.permute.xlu0 %7414
      %7416 = vrot.lane.b32.xlu0 %v7118, 96
      %v7417 = vpop.permute.xlu0 %7416
      %7418 = vrot.lane.b32.xlu0 %v7130, 96
      %v7419 = vpop.permute.xlu0 %7418
      %7420 = vrot.lane.b32.xlu0 %v7142, 96
      %v7421 = vpop.permute.xlu0 %7420
      %7422 = vrot.lane.b32.xlu0 %v7306, 96
      %v7423 = vpop.permute.xlu0 %7422
      %7424 = vrot.lane.b32.xlu0 %v7393, 96
      %v7425 = vpop.permute.xlu0 %7424
      %v7426 = vrot.slane %v7346, 1
      %v7427 = vrot.slane %v7381, 1
      %v7428 = vsel %vm853, %v7426, %v7427
      %v7430 = vsel %vm1403, %v6887, %v7144
      %v7432 = vsel %vm1403, %v6888, %v7146
      %v7434 = vsel %vm1403, %v6889, %v7148
      %v7436 = vsel %vm1403, %v6890, %v7150
      %v7438 = vsel %vm1403, %v6891, %v7152
      %v7440 = vsel %vm1403, %v6892, %v7154
      %v7442 = vsel %vm1403, %v6893, %v7156
      %v7444 = vsel %vm1403, %v6894, %v7158
      %v7446 = vsel %vm1403, %v6895, %v7160
      %v7448 = vsel %vm1403, %v6896, %v7162
      %v7450 = vsel %vm1403, %v6897, %v7164
      %v7452 = vsel %vm1403, %v6898, %v7166
      %v7454 = vsel %vm1403, %v6899, %v7168
      %v7456 = vsel %vm1403, %v6900, %v7170
      %v7458 = vsel %vm1403, %v6901, %v7172
      %v7460 = vsel %vm1403, %v6902, %v7174
      %v7462 = vsel %vm2922, %v7430, %v7224
      %v7464 = vsel %vm2922, %v7432, %v7226
      %v7466 = vsel %vm2922, %v7434, %v7228
      %v7468 = vsel %vm2922, %v7436, %v7230
      %v7470 = vsel %vm2922, %v7438, %v7232
      %v7472 = vsel %vm2922, %v7440, %v7234
      %v7474 = vsel %vm2922, %v7442, %v7236
      %v7476 = vsel %vm2922, %v7444, %v7238
      %v7478 = vsel %vm2922, %v7446, %v7240
      %v7480 = vsel %vm2922, %v7448, %v7242
      %v7482 = vsel %vm2922, %v7450, %v7244
      %v7484 = vsel %vm2922, %v7452, %v7246
      %v7486 = vsel %vm2922, %v7454, %v7248
      %v7488 = vsel %vm2922, %v7456, %v7250
      %v7490 = vsel %vm2922, %v7458, %v7252
      %v7492 = vsel %vm2922, %v7460, %v7254
      %v7494 = vsel %vm2955, %v7462, %v7261
      %v7497 = vsel %vm2955, %v7464, %v7263
      %v7500 = vsel %vm2955, %v7466, %v7265
      %v7503 = vsel %vm2955, %v7468, %v7267
      %v7506 = vsel %vm2955, %v7470, %v7269
      %v7509 = vsel %vm2955, %v7472, %v7271
      %v7512 = vsel %vm2955, %v7474, %v7273
      %v7515 = vsel %vm2955, %v7476, %v7275
      %v7518 = vsel %vm2955, %v7478, %v7277
      %v7521 = vsel %vm2955, %v7480, %v7279
      %v7524 = vsel %vm2955, %v7482, %v7281
      %v7527 = vsel %vm2955, %v7484, %v7283
      %v7530 = vsel %vm2955, %v7486, %v7285
      %v7533 = vsel %vm2955, %v7488, %v7287
      %v7536 = vsel %vm2955, %v7490, %v7289
      %v7539 = vsel %vm2955, %v7492, %v7291
      %v7543 = vsel %vm1403, %v6974, %v7311
      %v7546 = vsel %vm1403, %v6986, %v7313
      %v7549 = vsel %vm1403, %v6998, %v7315
      %v7552 = vsel %vm1403, %v7010, %v7317
      %v7555 = vsel %vm1403, %v7022, %v7319
      %v7558 = vsel %vm1403, %v7034, %v7321
      %v7561 = vsel %vm1403, %v7046, %v7323
      %v7564 = vsel %vm1403, %v7058, %v7325
      %v7567 = vsel %vm1403, %v7070, %v7327
      %v7570 = vsel %vm1403, %v7082, %v7329
      %v7573 = vsel %vm1403, %v7094, %v7331
      %v7576 = vsel %vm1403, %v7106, %v7333
      %v7579 = vsel %vm1403, %v7118, %v7335
      %v7582 = vsel %vm1403, %v7130, %v7337
      %v7585 = vsel %vm1403, %v7142, %v7339
      %v7588 = vsel %vm1403, %v7306, %v7341
      %v7590 = vsel %vm2922, %v7543, %v7348
      %v7592 = vsel %vm2922, %v7546, %v7350
      %v7594 = vsel %vm2922, %v7549, %v7352
      %v7596 = vsel %vm2922, %v7552, %v7354
      %v7598 = vsel %vm2922, %v7555, %v7356
      %v7600 = vsel %vm2922, %v7558, %v7358
      %v7602 = vsel %vm2922, %v7561, %v7360
      %v7604 = vsel %vm2922, %v7564, %v7362
      %v7606 = vsel %vm2922, %v7567, %v7364
      %v7608 = vsel %vm2922, %v7570, %v7366
      %v7610 = vsel %vm2922, %v7573, %v7368
      %v7612 = vsel %vm2922, %v7576, %v7370
      %v7614 = vsel %vm2922, %v7579, %v7372
      %v7616 = vsel %vm2922, %v7582, %v7374
      %v7618 = vsel %vm2922, %v7585, %v7376
      %v7620 = vsel %vm2922, %v7588, %v7378
      %v7622 = vsel %vm2955, %v7590, %v7395
      %v7625 = vsel %vm2955, %v7592, %v7397
      %v7628 = vsel %vm2955, %v7594, %v7399
      %v7631 = vsel %vm2955, %v7596, %v7401
      %v7634 = vsel %vm2955, %v7598, %v7403
      %v7637 = vsel %vm2955, %v7600, %v7405
      %v7640 = vsel %vm2955, %v7602, %v7407
      %v7643 = vsel %vm2955, %v7604, %v7409
      %v7646 = vsel %vm2955, %v7606, %v7411
      %v7649 = vsel %vm2955, %v7608, %v7413
      %v7652 = vsel %vm2955, %v7610, %v7415
      %v7655 = vsel %vm2955, %v7612, %v7417
      %v7658 = vsel %vm2955, %v7614, %v7419
      %v7661 = vsel %vm2955, %v7616, %v7421
      %v7664 = vsel %vm2955, %v7618, %v7423
      %v7667 = vsel %vm2955, %v7620, %v7425
      %v7669 = vld [vmem:[%s5] sm:$0xf]
      %v7670 = vld [vmem:[%s5 + $0x4] sm:$0xf]
      %v7671 = vld [vmem:[%s5 + $0x8] sm:$0xf]
      %v7672 = vld [vmem:[%s5 + $0xc] sm:$0xf]
      %v7673 = vld [vmem:[%s5 + $0x10] sm:$0xf]
      %v7674 = vld [vmem:[%s5 + $0x14] sm:$0xf]
      %v7675 = vld [vmem:[%s5 + $0x18] sm:$0xf]
      %v7676 = vld [vmem:[%s5 + $0x1c] sm:$0xf]
      %v7677 = vld [vmem:[%s5 + $0x20] sm:$0xf]
      %v7678 = vld [vmem:[%s5 + $0x24] sm:$0xf]
      %v7679 = vld [vmem:[%s5 + $0x28] sm:$0xf]
      %v7680 = vld [vmem:[%s5 + $0x2c] sm:$0xf]
      %v7681 = vld [vmem:[%s5 + $0x30] sm:$0xf]
      %v7682 = vld [vmem:[%s5 + $0x34] sm:$0xf]
      %v7683 = vld [vmem:[%s5 + $0x38] sm:$0xf]
      %v7684 = vld [vmem:[%s5 + $0x3c] sm:$0xf]
      %v7685 = vld [vmem:[%s5 + $0x40] sm:$0xf]
      %v7686 = vld [vmem:[%s5 + $0x44] sm:$0xf]
      %v7687 = vld [vmem:[%s5 + $0x48] sm:$0xf]
      %v7688 = vld [vmem:[%s5 + $0x4c] sm:$0xf]
      %v7689 = vld [vmem:[%s5 + $0x50] sm:$0xf]
      %v7690 = vld [vmem:[%s5 + $0x54] sm:$0xf]
      %v7691 = vld [vmem:[%s5 + $0x58] sm:$0xf]
      %v7692 = vld [vmem:[%s5 + $0x5c] sm:$0xf]
      %v7693 = vld [vmem:[%s5 + $0x60] sm:$0xf]
      %v7694 = vld [vmem:[%s5 + $0x64] sm:$0xf]
      %v7695 = vld [vmem:[%s5 + $0x68] sm:$0xf]
      %v7696 = vld [vmem:[%s5 + $0x6c] sm:$0xf]
      %v7697 = vld [vmem:[%s5 + $0x70] sm:$0xf]
      %v7698 = vld [vmem:[%s5 + $0x74] sm:$0xf]
      %v7699 = vld [vmem:[%s5 + $0x78] sm:$0xf]
      %v7700 = vld [vmem:[%s5 + $0x7c] sm:$0xf]
      %v7701 = vld [vmem:[%s5 + $0x80] sm:$0xf]
      %v7702 = vld [vmem:[%s5 + $0x84] sm:$0xf]
      %v7703 = vld [vmem:[%s5 + $0x88] sm:$0xf]
      %v7704 = vld [vmem:[%s5 + $0x8c] sm:$0xf]
      %v7705 = vld [vmem:[%s6] sm:$0x1]
      %v7707 = vlaneseq
      %v7708 = vshrl.u32 %v7707, 7
      %v7709 = vsub.s32 0, %v7708
      %v7710 = vrot.slane %v7705, %v7709
      %v7748 = vunpack.c.l.b16 %v7669
      %v7749 = vunpack.c.l.b16 %v7670
      %v7750 = vunpack.c.l.b16 %v7671
      %v7751 = vunpack.c.l.b16 %v7672
      %v7752 = vunpack.c.l.b16 %v7673
      %v7753 = vunpack.c.l.b16 %v7674
      %v7754 = vunpack.c.l.b16 %v7675
      %v7755 = vunpack.c.l.b16 %v7676
      %v7756 = vunpack.c.l.b16 %v7677
      %v7757 = vunpack.c.l.b16 %v7678
      %v7758 = vunpack.c.l.b16 %v7679
      %v7759 = vunpack.c.l.b16 %v7680
      %v7760 = vunpack.c.l.b16 %v7681
      %v7761 = vunpack.c.l.b16 %v7682
      %v7762 = vunpack.c.l.b16 %v7683
      %v7763 = vunpack.c.l.b16 %v7684
      %v7764 = vunpack.c.l.b16 %v7685
      %v7765 = vunpack.c.l.b16 %v7686
      %v7766 = vunpack.c.l.b16 %v7687
      %v7767 = vunpack.c.l.b16 %v7688
      %v7768 = vunpack.c.l.b16 %v7689
      %v7769 = vunpack.c.l.b16 %v7690
      %v7770 = vunpack.c.l.b16 %v7691
      %v7771 = vunpack.c.l.b16 %v7692
      %v7772 = vunpack.c.l.b16 %v7693
      %v7773 = vunpack.c.l.b16 %v7694
      %v7774 = vunpack.c.l.b16 %v7695
      %v7775 = vunpack.c.l.b16 %v7696
      %v7776 = vunpack.c.l.b16 %v7697
      %v7777 = vunpack.c.l.b16 %v7698
      %v7778 = vunpack.c.l.b16 %v7699
      %v7779 = vunpack.c.l.b16 %v7700
      %v7780 = vunpack.c.l.b16 %v7701
      %v7781 = vunpack.c.l.b16 %v7702
      %v7782 = vunpack.c.l.b16 %v7703
      %v7783 = vunpack.c.l.b16 %v7704
      %v7784 = vpack.c.b16 %v7749, %v7748
      %v7785 = vpack.c.b16 %v7751, %v7750
      %v7786 = vpack.c.b16 %v7753, %v7752
      %v7787 = vpack.c.b16 %v7755, %v7754
      %v7788 = vpack.c.b16 %v7757, %v7756
      %v7789 = vpack.c.b16 %v7759, %v7758
      %v7790 = vpack.c.b16 %v7761, %v7760
      %v7791 = vpack.c.b16 %v7763, %v7762
      %v7792 = vpack.c.b16 %v7765, %v7764
      %v7793 = vpack.c.b16 %v7767, %v7766
      %v7794 = vpack.c.b16 %v7769, %v7768
      %v7795 = vpack.c.b16 %v7771, %v7770
      %v7796 = vpack.c.b16 %v7773, %v7772
      %v7797 = vpack.c.b16 %v7775, %v7774
      %v7798 = vpack.c.b16 %v7777, %v7776
      %v7799 = vpack.c.b16 %v7779, %v7778
      %v7800 = vpack.c.b16 %v7781, %v7780
      %v7801 = vpack.c.b16 %v7783, %v7782
      %v7821 = vsel %vm1403, %v7183, 0
      %v7824 = vsel %vm1403, %v7186, 0
      %v7827 = vsel %vm1403, %v7189, 0
      %v7830 = vsel %vm1403, %v7192, 0
      %v7833 = vsel %vm1403, %v7195, 0
      %v7836 = vsel %vm1403, %v7198, 0
      %v7839 = vsel %vm1403, %v7201, 0
      %v7842 = vsel %vm1403, %v7204, 0
      %v7845 = vsel %vm1403, %v7207, 0
      %v7848 = vsel %vm1403, %v7210, 0
      %v7851 = vsel %vm1403, %v7213, 0
      %v7854 = vsel %vm1403, %v7216, 0
      %v7857 = vsel %vm1403, %v7219, 0
      %v7860 = vsel %vm1403, %v7222, 0
      %v7863 = vsel %vm1403, %v7309, 0
      %v7866 = vsel %vm1403, %v7428, 0
      %7868 = vmatprep.subr.bf16.mxu0 0
      %7869 = vmatpush1.bf16.msra.mxu0 %v7784
      %7870 = vmatprep.subr.bf16.mxu0 0
      %7871 = vmatpush1.bf16.msra.mxu0 %v7785
      %7872 = vmatprep.subr.bf16.mxu0 0
      %7873 = vmatpush1.bf16.msra.mxu0 %v7786
      %7874 = vmatprep.subr.bf16.mxu0 0
      %7875 = vmatpush1.bf16.msra.mxu0 %v7787
      %7876 = vmatprep.subr.bf16.mxu0 0
      %7877 = vmatpush1.bf16.msra.mxu0 %v7788
      %7878 = vmatprep.subr.bf16.mxu0 0
      %7879 = vmatpush1.bf16.msra.mxu0 %v7789
      %7880 = vmatprep.subr.bf16.mxu0 0
      %7881 = vmatpush1.bf16.msra.mxu0 %v7790
      %7882 = vmatprep.subr.bf16.mxu0 0
      %7883 = vmatpush1.bf16.msra.mxu0 %v7791
      %7884 = vmatprep.subr.bf16.mxu0 0
      %7885 = vmatpush1.bf16.msra.mxu0 %v7792
      %7886 = vmatprep.subr.bf16.mxu0 0
      %7887 = vmatpush1.bf16.msra.mxu0 %v7793
      %7888 = vmatprep.subr.bf16.mxu0 0
      %7889 = vmatpush1.bf16.msra.mxu0 %v7794
      %7890 = vmatprep.subr.bf16.mxu0 0
      %7891 = vmatpush1.bf16.msra.mxu0 %v7795
      %7892 = vmatprep.subr.bf16.mxu0 0
      %7893 = vmatpush1.bf16.msra.mxu0 %v7796
      %7894 = vmatprep.subr.bf16.mxu0 0
      %7895 = vmatpush1.bf16.msra.mxu0 %v7797
      %7896 = vmatprep.subr.bf16.mxu0 0
      %7897 = vmatpush1.bf16.msra.mxu0 %v7798
      %7898 = vmatprep.subr.bf16.mxu0 0
      %7899 = vmatpush1.bf16.msra.mxu0 %v7799
      %7900 = vmatprep.mubr.bf16.mxu0 %v7622
      %7901 = vmatmul.mubr.bf16.gmra.mrb[0].mxu0 %v7494
      %v7902 = vpop.f32.mrb[0].mxu0
      %v7903 = vadd.f32 %v7710, %v7902
      %v7904 = vpop.f32.mrb[0].mxu0
      %v7905 = vpop.f32.mrb[0].mxu0
      %v7906 = vadd.f32 %v7710, %v7905
      %v7907 = vpop.f32.mrb[0].mxu0
      %7908 = vmatprep.mubr.bf16.mxu0 %v7625
      %7909 = vmatmul.mubr.bf16.gmra.mrb[0].mxu0 %v7497
      %v7910 = vpop.f32.mrb[0].mxu0
      %v7911 = vadd.f32 %v7710, %v7910
      %v7912 = vpop.f32.mrb[0].mxu0
      %v7913 = vpop.f32.mrb[0].mxu0
      %v7914 = vadd.f32 %v7710, %v7913
      %v7915 = vpop.f32.mrb[0].mxu0
      %7916 = vmatprep.mubr.bf16.mxu0 %v7628
      %7917 = vmatmul.mubr.bf16.gmra.mrb[0].mxu0 %v7500
      %v7918 = vpop.f32.mrb[0].mxu0
      %v7919 = vadd.f32 %v7710, %v7918
      %v7920 = vpop.f32.mrb[0].mxu0
      %v7921 = vpop.f32.mrb[0].mxu0
      %v7922 = vadd.f32 %v7710, %v7921
      %v7923 = vpop.f32.mrb[0].mxu0
      %7924 = vmatprep.mubr.bf16.mxu0 %v7631
      %7925 = vmatmul.mubr.bf16.gmra.mrb[0].mxu0 %v7503
      %v7926 = vpop.f32.mrb[0].mxu0
      %v7927 = vadd.f32 %v7710, %v7926
      %v7928 = vpop.f32.mrb[0].mxu0
      %v7929 = vpop.f32.mrb[0].mxu0
      %v7930 = vadd.f32 %v7710, %v7929
      %v7931 = vpop.f32.mrb[0].mxu0
      %7932 = vmatprep.mubr.bf16.mxu0 %v7634
      %7933 = vmatmul.mubr.bf16.gmra.mrb[0].mxu0 %v7506
      %v7934 = vpop.f32.mrb[0].mxu0
      %v7935 = vadd.f32 %v7710, %v7934
      %v7936 = vpop.f32.mrb[0].mxu0
      %v7937 = vpop.f32.mrb[0].mxu0
      %v7938 = vadd.f32 %v7710, %v7937
      %v7939 = vpop.f32.mrb[0].mxu0
      %7940 = vmatprep.mubr.bf16.mxu0 %v7637
      %7941 = vmatmul.mubr.bf16.gmra.mrb[0].mxu0 %v7509
      %v7942 = vpop.f32.mrb[0].mxu0
      %v7943 = vadd.f32 %v7710, %v7942
      %v7944 = vpop.f32.mrb[0].mxu0
      %v7945 = vpop.f32.mrb[0].mxu0
      %v7946 = vadd.f32 %v7710, %v7945
      %v7947 = vpop.f32.mrb[0].mxu0
      %7948 = vmatprep.mubr.bf16.mxu0 %v7640
      %7949 = vmatmul.mubr.bf16.gmra.mrb[0].mxu0 %v7512
      %v7950 = vpop.f32.mrb[0].mxu0
      %v7951 = vadd.f32 %v7710, %v7950
      %v7952 = vpop.f32.mrb[0].mxu0
      %v7953 = vpop.f32.mrb[0].mxu0
      %v7954 = vadd.f32 %v7710, %v7953
      %v7955 = vpop.f32.mrb[0].mxu0
      %7956 = vmatprep.mubr.bf16.mxu0 %v7643
      %7957 = vmatmul.mubr.bf16.gmra.mrb[0].mxu0 %v7515
      %v7958 = vpop.f32.mrb[0].mxu0
      %v7959 = vadd.f32 %v7710, %v7958
      %v7960 = vpop.f32.mrb[0].mxu0
      %v7961 = vpop.f32.mrb[0].mxu0
      %v7962 = vadd.f32 %v7710, %v7961
      %v7963 = vpop.f32.mrb[0].mxu0
      %7964 = vmatprep.mubr.bf16.mxu0 %v7646
      %7965 = vmatmul.mubr.bf16.gmra.mrb[0].mxu0 %v7518
      %v7966 = vpop.f32.mrb[0].mxu0
      %v7967 = vadd.f32 %v7710, %v7966
      %v7968 = vpop.f32.mrb[0].mxu0
      %v7969 = vpop.f32.mrb[0].mxu0
      %v7970 = vadd.f32 %v7710, %v7969
      %v7971 = vpop.f32.mrb[0].mxu0
      %7972 = vmatprep.mubr.bf16.mxu0 %v7649
      %7973 = vmatmul.mubr.bf16.gmra.mrb[0].mxu0 %v7521
      %v7974 = vpop.f32.mrb[0].mxu0
      %v7975 = vadd.f32 %v7710, %v7974
      %v7976 = vpop.f32.mrb[0].mxu0
      %v7977 = vpop.f32.mrb[0].mxu0
      %v7978 = vadd.f32 %v7710, %v7977
      %v7979 = vpop.f32.mrb[0].mxu0
      %7980 = vmatprep.mubr.bf16.mxu0 %v7652
      %7981 = vmatmul.mubr.bf16.gmra.mrb[0].mxu0 %v7524
      %v7982 = vpop.f32.mrb[0].mxu0
      %v7983 = vadd.f32 %v7710, %v7982
      %v7984 = vpop.f32.mrb[0].mxu0
      %v7985 = vpop.f32.mrb[0].mxu0
      %v7986 = vadd.f32 %v7710, %v7985
      %v7987 = vpop.f32.mrb[0].mxu0
      %7988 = vmatprep.mubr.bf16.mxu0 %v7655
      %7989 = vmatmul.mubr.bf16.gmra.mrb[0].mxu0 %v7527
      %v7990 = vpop.f32.mrb[0].mxu0
      %v7991 = vadd.f32 %v7710, %v7990
      %v7992 = vpop.f32.mrb[0].mxu0
      %v7993 = vpop.f32.mrb[0].mxu0
      %v7994 = vadd.f32 %v7710, %v7993
      %v7995 = vpop.f32.mrb[0].mxu0
      %7996 = vmatprep.mubr.bf16.mxu0 %v7658
      %7997 = vmatmul.mubr.bf16.gmra.mrb[0].mxu0 %v7530
      %v7998 = vpop.f32.mrb[0].mxu0
      %v7999 = vadd.f32 %v7710, %v7998
      %v8000 = vpop.f32.mrb[0].mxu0
      %v8001 = vpop.f32.mrb[0].mxu0
      %v8002 = vadd.f32 %v7710, %v8001
      %v8003 = vpop.f32.mrb[0].mxu0
      %8004 = vmatprep.mubr.bf16.mxu0 %v7661
      %8005 = vmatmul.mubr.bf16.gmra.mrb[0].mxu0 %v7533
      %v8006 = vpop.f32.mrb[0].mxu0
      %v8007 = vadd.f32 %v7710, %v8006
      %v8008 = vpop.f32.mrb[0].mxu0
      %v8009 = vpop.f32.mrb[0].mxu0
      %v8010 = vadd.f32 %v7710, %v8009
      %v8011 = vpop.f32.mrb[0].mxu0
      %8012 = vmatprep.mubr.bf16.mxu0 %v7664
      %8013 = vmatmul.mubr.bf16.gmra.mrb[0].mxu0 %v7536
      %v8014 = vpop.f32.mrb[0].mxu0
      %v8015 = vadd.f32 %v7710, %v8014
      %v8016 = vpop.f32.mrb[0].mxu0
      %v8017 = vpop.f32.mrb[0].mxu0
      %v8018 = vadd.f32 %v7710, %v8017
      %v8019 = vpop.f32.mrb[0].mxu0
      %8020 = vmatprep.mubr.bf16.mxu0 %v7667
      %8021 = vmatmul.mubr.bf16.gmra.mrb[0].mxu0 %v7539
      %v8022 = vpop.f32.mrb[0].mxu0
      %v8023 = vadd.f32 %v7710, %v8022
      %v8024 = vpop.f32.mrb[0].mxu0
      %v8025 = vpop.f32.mrb[0].mxu0
      %v8026 = vadd.f32 %v7710, %v8025
      %v8027 = vpop.f32.mrb[0].mxu0
      %8028 = vdwg.mxu0
      %8029 = vmatprep.subr.bf16.mxu0 0
      %8030 = vmatpush1.bf16.msra.mxu0 %v7800
      %8031 = vmatprep.subr.bf16.mxu0 0
      %8032 = vmatpush1.bf16.msra.mxu0 %v7801
      %8033 = vmatprep.subr.bf16.mxu0 0
      %8034 = vmatpush1.bf16.msra.mxu0 0
      %8035 = vmatprep.subr.bf16.mxu0 0
      %8036 = vmatpush1.bf16.msra.mxu0 0
      %8037 = vmatprep.subr.bf16.mxu0 0
      %8038 = vmatpush1.bf16.msra.mxu0 0
      %8039 = vmatprep.subr.bf16.mxu0 0
      %8040 = vmatpush1.bf16.msra.mxu0 0
      %8041 = vmatprep.subr.bf16.mxu0 0
      %8042 = vmatpush1.bf16.msra.mxu0 0
      %8043 = vmatprep.subr.bf16.mxu0 0
      %8044 = vmatpush1.bf16.msra.mxu0 0
      %8045 = vmatprep.subr.bf16.mxu0 0
      %8046 = vmatpush1.bf16.msra.mxu0 0
      %8047 = vmatprep.subr.bf16.mxu0 0
      %8048 = vmatpush1.bf16.msra.mxu0 0
      %8049 = vmatprep.subr.bf16.mxu0 0
      %8050 = vmatpush1.bf16.msra.mxu0 0
      %8051 = vmatprep.subr.bf16.mxu0 0
      %8052 = vmatpush1.bf16.msra.mxu0 0
      %8053 = vmatprep.subr.bf16.mxu0 0
      %8054 = vmatpush1.bf16.msra.mxu0 0
      %8055 = vmatprep.subr.bf16.mxu0 0
      %8056 = vmatpush1.bf16.msra.mxu0 0
      %8057 = vmatprep.subr.bf16.mxu0 0
      %8058 = vmatpush1.bf16.msra.mxu0 0
      %8059 = vmatprep.subr.bf16.mxu0 0
      %8060 = vmatpush1.bf16.msra.mxu0 0
      %8061 = vmatprep.mubr.bf16.mxu0 0
      %8062 = vmatmul.mubr.bf16.gmra.mrb[0].mxu0 %v7821
      %v8063 = vpop.f32.mrb[0].mxu0
      %v8064 = vadd.f32 %v7903, %v8063
      %v8065 = vpop.f32.mrb[0].mxu0
      %v8066 = vpop.f32.mrb[0].mxu0
      %v8067 = vadd.f32 %v7906, %v8066
      %v8068 = vpop.f32.mrb[0].mxu0
      %8069 = vmatprep.mubr.bf16.mxu0 0
      %8070 = vmatmul.mubr.bf16.gmra.mrb[0].mxu0 %v7824
      %v8071 = vpop.f32.mrb[0].mxu0
      %v8072 = vadd.f32 %v7911, %v8071
      %v8073 = vpop.f32.mrb[0].mxu0
      %v8074 = vpop.f32.mrb[0].mxu0
      %v8075 = vadd.f32 %v7914, %v8074
      %v8076 = vpop.f32.mrb[0].mxu0
      %8077 = vmatprep.mubr.bf16.mxu0 0
      %8078 = vmatmul.mubr.bf16.gmra.mrb[0].mxu0 %v7827
      %v8079 = vpop.f32.mrb[0].mxu0
      %v8080 = vadd.f32 %v7919, %v8079
      %v8081 = vpop.f32.mrb[0].mxu0
      %v8082 = vpop.f32.mrb[0].mxu0
      %v8083 = vadd.f32 %v7922, %v8082
      %v8084 = vpop.f32.mrb[0].mxu0
      %8085 = vmatprep.mubr.bf16.mxu0 0
      %8086 = vmatmul.mubr.bf16.gmra.mrb[0].mxu0 %v7830
      %v8087 = vpop.f32.mrb[0].mxu0
      %v8088 = vadd.f32 %v7927, %v8087
      %v8089 = vpop.f32.mrb[0].mxu0
      %v8090 = vpop.f32.mrb[0].mxu0
      %v8091 = vadd.f32 %v7930, %v8090
      %v8092 = vpop.f32.mrb[0].mxu0
      %8093 = vmatprep.mubr.bf16.mxu0 0
      %8094 = vmatmul.mubr.bf16.gmra.mrb[0].mxu0 %v7833
      %v8095 = vpop.f32.mrb[0].mxu0
      %v8096 = vadd.f32 %v7935, %v8095
      %v8097 = vpop.f32.mrb[0].mxu0
      %v8098 = vpop.f32.mrb[0].mxu0
      %v8099 = vadd.f32 %v7938, %v8098
      %v8100 = vpop.f32.mrb[0].mxu0
      %8101 = vmatprep.mubr.bf16.mxu0 0
      %8102 = vmatmul.mubr.bf16.gmra.mrb[0].mxu0 %v7836
      %v8103 = vpop.f32.mrb[0].mxu0
      %v8104 = vadd.f32 %v7943, %v8103
      %v8105 = vpop.f32.mrb[0].mxu0
      %v8106 = vpop.f32.mrb[0].mxu0
      %v8107 = vadd.f32 %v7946, %v8106
      %v8108 = vpop.f32.mrb[0].mxu0
      %8109 = vmatprep.mubr.bf16.mxu0 0
      %8110 = vmatmul.mubr.bf16.gmra.mrb[0].mxu0 %v7839
      %v8111 = vpop.f32.mrb[0].mxu0
      %v8112 = vadd.f32 %v7951, %v8111
      %v8113 = vpop.f32.mrb[0].mxu0
      %v8114 = vpop.f32.mrb[0].mxu0
      %v8115 = vadd.f32 %v7954, %v8114
      %v8116 = vpop.f32.mrb[0].mxu0
      %8117 = vmatprep.mubr.bf16.mxu0 0
      %8118 = vmatmul.mubr.bf16.gmra.mrb[0].mxu0 %v7842
      %v8119 = vpop.f32.mrb[0].mxu0
      %v8120 = vadd.f32 %v7959, %v8119
      %v8121 = vpop.f32.mrb[0].mxu0
      %v8122 = vpop.f32.mrb[0].mxu0
      %v8123 = vadd.f32 %v7962, %v8122
      %v8124 = vpop.f32.mrb[0].mxu0
      %8125 = vmatprep.mubr.bf16.mxu0 0
      %8126 = vmatmul.mubr.bf16.gmra.mrb[0].mxu0 %v7845
      %v8127 = vpop.f32.mrb[0].mxu0
      %v8128 = vadd.f32 %v7967, %v8127
      %v8129 = vpop.f32.mrb[0].mxu0
      %v8130 = vpop.f32.mrb[0].mxu0
      %v8131 = vadd.f32 %v7970, %v8130
      %v8132 = vpop.f32.mrb[0].mxu0
      %8133 = vmatprep.mubr.bf16.mxu0 0
      %8134 = vmatmul.mubr.bf16.gmra.mrb[0].mxu0 %v7848
      %v8135 = vpop.f32.mrb[0].mxu0
      %v8136 = vadd.f32 %v7975, %v8135
      %v8137 = vpop.f32.mrb[0].mxu0
      %v8138 = vpop.f32.mrb[0].mxu0
      %v8139 = vadd.f32 %v7978, %v8138
      %v8140 = vpop.f32.mrb[0].mxu0
      %8141 = vmatprep.mubr.bf16.mxu0 0
      %8142 = vmatmul.mubr.bf16.gmra.mrb[0].mxu0 %v7851
      %v8143 = vpop.f32.mrb[0].mxu0
      %v8144 = vadd.f32 %v7983, %v8143
      %v8145 = vpop.f32.mrb[0].mxu0
      %v8146 = vpop.f32.mrb[0].mxu0
      %v8147 = vadd.f32 %v7986, %v8146
      %v8148 = vpop.f32.mrb[0].mxu0
      %8149 = vmatprep.mubr.bf16.mxu0 0
      %8150 = vmatmul.mubr.bf16.gmra.mrb[0].mxu0 %v7854
      %v8151 = vpop.f32.mrb[0].mxu0
      %v8152 = vadd.f32 %v7991, %v8151
      %v8153 = vpop.f32.mrb[0].mxu0
      %v8154 = vpop.f32.mrb[0].mxu0
      %v8155 = vadd.f32 %v7994, %v8154
      %v8156 = vpop.f32.mrb[0].mxu0
      %8157 = vmatprep.mubr.bf16.mxu0 0
      %8158 = vmatmul.mubr.bf16.gmra.mrb[0].mxu0 %v7857
      %v8159 = vpop.f32.mrb[0].mxu0
      %v8160 = vadd.f32 %v7999, %v8159
      %v8161 = vpop.f32.mrb[0].mxu0
      %v8162 = vpop.f32.mrb[0].mxu0
      %v8163 = vadd.f32 %v8002, %v8162
      %v8164 = vpop.f32.mrb[0].mxu0
      %8165 = vmatprep.mubr.bf16.mxu0 0
      %8166 = vmatmul.mubr.bf16.gmra.mrb[0].mxu0 %v7860
      %v8167 = vpop.f32.mrb[0].mxu0
      %v8168 = vadd.f32 %v8007, %v8167
      %v8169 = vpop.f32.mrb[0].mxu0
      %v8170 = vpop.f32.mrb[0].mxu0
      %v8171 = vadd.f32 %v8010, %v8170
      %v8172 = vpop.f32.mrb[0].mxu0
      %8173 = vmatprep.mubr.bf16.mxu0 0
      %8174 = vmatmul.mubr.bf16.gmra.mrb[0].mxu0 %v7863
      %v8175 = vpop.f32.mrb[0].mxu0
      %v8176 = vadd.f32 %v8015, %v8175
      %v8177 = vpop.f32.mrb[0].mxu0
      %v8178 = vpop.f32.mrb[0].mxu0
      %v8179 = vadd.f32 %v8018, %v8178
      %v8180 = vpop.f32.mrb[0].mxu0
      %8181 = vmatprep.mubr.bf16.mxu0 0
      %8182 = vmatmul.mubr.bf16.gmra.mrb[0].mxu0 %v7866
      %v8183 = vpop.f32.mrb[0].mxu0
      %v8184 = vadd.f32 %v8023, %v8183
      %v8185 = vpop.f32.mrb[0].mxu0
      %v8186 = vpop.f32.mrb[0].mxu0
      %v8187 = vadd.f32 %v8026, %v8186
      %v8188 = vpop.f32.mrb[0].mxu0
      %8189 = vdwg.mxu0
      %v8190 = vmax.f32 %v8064, 0.0
      %v8191 = vmax.f32 %v8067, 0.0
      %v8192 = vmax.f32 %v8072, 0.0
      %v8193 = vmax.f32 %v8075, 0.0
      %v8194 = vmax.f32 %v8080, 0.0
      %v8195 = vmax.f32 %v8083, 0.0
      %v8196 = vmax.f32 %v8088, 0.0
      %v8197 = vmax.f32 %v8091, 0.0
      %v8198 = vmax.f32 %v8096, 0.0
      %v8199 = vmax.f32 %v8099, 0.0
      %v8200 = vmax.f32 %v8104, 0.0
      %v8201 = vmax.f32 %v8107, 0.0
      %v8202 = vmax.f32 %v8112, 0.0
      %v8203 = vmax.f32 %v8115, 0.0
      %v8204 = vmax.f32 %v8120, 0.0
      %v8205 = vmax.f32 %v8123, 0.0
      %v8206 = vmax.f32 %v8128, 0.0
      %v8207 = vmax.f32 %v8131, 0.0
      %v8208 = vmax.f32 %v8136, 0.0
      %v8209 = vmax.f32 %v8139, 0.0
      %v8210 = vmax.f32 %v8144, 0.0
      %v8211 = vmax.f32 %v8147, 0.0
      %v8212 = vmax.f32 %v8152, 0.0
      %v8213 = vmax.f32 %v8155, 0.0
      %v8214 = vmax.f32 %v8160, 0.0
      %v8215 = vmax.f32 %v8163, 0.0
      %v8216 = vmax.f32 %v8168, 0.0
      %v8217 = vmax.f32 %v8171, 0.0
      %v8218 = vmax.f32 %v8176, 0.0
      %v8219 = vmax.f32 %v8179, 0.0
      %v8220 = vmax.f32 %v8184, 0.0
      %v8221 = vmax.f32 %v8187, 0.0
      %v8222 = vpack.c.bf16 %v8191, %v8190
      %v8223 = vpack.c.bf16 %v8193, %v8192
      %v8224 = vpack.c.bf16 %v8195, %v8194
      %v8225 = vpack.c.bf16 %v8197, %v8196
      %v8226 = vpack.c.bf16 %v8199, %v8198
      %v8227 = vpack.c.bf16 %v8201, %v8200
      %v8228 = vpack.c.bf16 %v8203, %v8202
      %v8229 = vpack.c.bf16 %v8205, %v8204
      %v8230 = vpack.c.bf16 %v8207, %v8206
      %v8231 = vpack.c.bf16 %v8209, %v8208
      %v8232 = vpack.c.bf16 %v8211, %v8210
      %v8233 = vpack.c.bf16 %v8213, %v8212
      %v8234 = vpack.c.bf16 %v8215, %v8214
      %v8235 = vpack.c.bf16 %v8217, %v8216
      %v8236 = vpack.c.bf16 %v8219, %v8218
      %v8237 = vpack.c.bf16 %v8221, %v8220
      %v8254 = vunpack.c.l.b16 %v8222
      %v8255 = vunpack.c.h.b16 %v8222
      %v8256 = vunpack.c.l.b16 %v8223
      %v8257 = vunpack.c.h.b16 %v8223
      %v8258 = vunpack.c.l.b16 %v8224
      %v8259 = vunpack.c.h.b16 %v8224
      %v8260 = vunpack.c.l.b16 %v8225
      %v8261 = vunpack.c.h.b16 %v8225
      %v8262 = vunpack.c.l.b16 %v8226
      %v8263 = vunpack.c.h.b16 %v8226
      %v8264 = vunpack.c.l.b16 %v8227
      %v8265 = vunpack.c.h.b16 %v8227
      %v8266 = vunpack.c.l.b16 %v8228
      %v8267 = vunpack.c.h.b16 %v8228
      %v8268 = vunpack.c.l.b16 %v8229
      %v8269 = vunpack.c.h.b16 %v8229
      %v8270 = vunpack.c.l.b16 %v8230
      %v8271 = vunpack.c.h.b16 %v8230
      %v8272 = vunpack.c.l.b16 %v8231
      %v8273 = vunpack.c.h.b16 %v8231
      %v8274 = vunpack.c.l.b16 %v8232
      %v8275 = vunpack.c.h.b16 %v8232
      %v8276 = vunpack.c.l.b16 %v8233
      %v8277 = vunpack.c.h.b16 %v8233
      %v8278 = vunpack.c.l.b16 %v8234
      %v8279 = vunpack.c.h.b16 %v8234
      %v8280 = vunpack.c.l.b16 %v8235
      %v8281 = vunpack.c.h.b16 %v8235
      %v8282 = vunpack.c.l.b16 %v8236
      %v8283 = vunpack.c.h.b16 %v8236
      %v8284 = vunpack.c.l.b16 %v8237
      %v8285 = vunpack.c.h.b16 %v8237
      %v8286 = vpack.c.b16 %v8254, %v8254
      %v8287 = vpack.c.b16 %v8255, %v8255
      %v8288 = vpack.c.b16 %v8256, %v8256
      %v8289 = vpack.c.b16 %v8257, %v8257
      %v8290 = vpack.c.b16 %v8258, %v8258
      %v8291 = vpack.c.b16 %v8259, %v8259
      %v8292 = vpack.c.b16 %v8260, %v8260
      %v8293 = vpack.c.b16 %v8261, %v8261
      %v8294 = vpack.c.b16 %v8262, %v8262
      %v8295 = vpack.c.b16 %v8263, %v8263
      %v8296 = vpack.c.b16 %v8264, %v8264
      %v8297 = vpack.c.b16 %v8265, %v8265
      %v8298 = vpack.c.b16 %v8266, %v8266
      %v8299 = vpack.c.b16 %v8267, %v8267
      %v8300 = vpack.c.b16 %v8268, %v8268
      %v8301 = vpack.c.b16 %v8269, %v8269
      %v8302 = vpack.c.b16 %v8270, %v8270
      %v8303 = vpack.c.b16 %v8271, %v8271
      %v8304 = vpack.c.b16 %v8272, %v8272
      %v8305 = vpack.c.b16 %v8273, %v8273
      %v8306 = vpack.c.b16 %v8274, %v8274
      %v8307 = vpack.c.b16 %v8275, %v8275
      %v8308 = vpack.c.b16 %v8276, %v8276
      %v8309 = vpack.c.b16 %v8277, %v8277
      %v8310 = vpack.c.b16 %v8278, %v8278
      %v8311 = vpack.c.b16 %v8279, %v8279
      %v8312 = vpack.c.b16 %v8280, %v8280
      %v8313 = vpack.c.b16 %v8281, %v8281
      %v8314 = vpack.c.b16 %v8282, %v8282
      %v8315 = vpack.c.b16 %v8283, %v8283
      %v8316 = vpack.c.b16 %v8284, %v8284
      %v8317 = vpack.c.b16 %v8285, %v8285
      %v8319 = vshrl.u32 %v8286, 16
      %v8321 = vrot.slane %v8319, 7
      %v8322 = vshll.u32 %v8286, 16
      %v8324 = vor.u32 %v8321, %v8322
      %v8325 = vrot.slane %v8321, 4
      %v8327 = vshrl.u32 %v8287, 16
      %v8329 = vrot.slane %v8327, 7
      %v8330 = vshll.u32 %v8287, 16
      %v8332 = vor.u32 %v8329, %v8330
      %v8333 = vsel %vm1791, %v8325, %v8332
      %v8334 = vrot.slane %v8329, 4
      %v8336 = vshrl.u32 %v8288, 16
      %v8338 = vrot.slane %v8336, 7
      %v8339 = vshll.u32 %v8288, 16
      %v8341 = vor.u32 %v8338, %v8339
      %v8342 = vrot.slane %v8338, 4
      %v8344 = vshrl.u32 %v8289, 16
      %v8346 = vrot.slane %v8344, 7
      %v8347 = vshll.u32 %v8289, 16
      %v8349 = vor.u32 %v8346, %v8347
      %v8350 = vsel %vm1791, %v8342, %v8349
      %v8351 = vrot.slane %v8346, 4
      %v8353 = vshrl.u32 %v8290, 16
      %v8355 = vrot.slane %v8353, 7
      %v8356 = vshll.u32 %v8290, 16
      %v8358 = vor.u32 %v8355, %v8356
      %v8359 = vrot.slane %v8355, 4
      %v8361 = vshrl.u32 %v8291, 16
      %v8363 = vrot.slane %v8361, 7
      %v8364 = vshll.u32 %v8291, 16
      %v8366 = vor.u32 %v8363, %v8364
      %v8367 = vsel %vm1791, %v8359, %v8366
      %v8368 = vrot.slane %v8363, 4
      %v8370 = vshrl.u32 %v8292, 16
      %v8372 = vrot.slane %v8370, 7
      %v8373 = vshll.u32 %v8292, 16
      %v8375 = vor.u32 %v8372, %v8373
      %v8376 = vrot.slane %v8372, 4
      %v8378 = vshrl.u32 %v8293, 16
      %v8380 = vrot.slane %v8378, 7
      %v8381 = vshll.u32 %v8293, 16
      %v8383 = vor.u32 %v8380, %v8381
      %v8384 = vsel %vm1791, %v8376, %v8383
      %v8385 = vrot.slane %v8380, 4
      %v8387 = vshrl.u32 %v8294, 16
      %v8389 = vrot.slane %v8387, 7
      %v8390 = vshll.u32 %v8294, 16
      %v8392 = vor.u32 %v8389, %v8390
      %v8393 = vrot.slane %v8389, 4
      %v8395 = vshrl.u32 %v8295, 16
      %v8397 = vrot.slane %v8395, 7
      %v8398 = vshll.u32 %v8295, 16
      %v8400 = vor.u32 %v8397, %v8398
      %v8401 = vsel %vm1791, %v8393, %v8400
      %v8402 = vrot.slane %v8397, 4
      %v8404 = vshrl.u32 %v8296, 16
      %v8406 = vrot.slane %v8404, 7
      %v8407 = vshll.u32 %v8296, 16
      %v8409 = vor.u32 %v8406, %v8407
      %v8410 = vrot.slane %v8406, 4
      %v8412 = vshrl.u32 %v8297, 16
      %v8414 = vrot.slane %v8412, 7
      %v8415 = vshll.u32 %v8297, 16
      %v8417 = vor.u32 %v8414, %v8415
      %v8418 = vsel %vm1791, %v8410, %v8417
      %v8419 = vrot.slane %v8414, 4
      %v8421 = vshrl.u32 %v8298, 16
      %v8423 = vrot.slane %v8421, 7
      %v8424 = vshll.u32 %v8298, 16
      %v8426 = vor.u32 %v8423, %v8424
      %v8427 = vrot.slane %v8423, 4
      %v8429 = vshrl.u32 %v8299, 16
      %v8431 = vrot.slane %v8429, 7
      %v8432 = vshll.u32 %v8299, 16
      %v8434 = vor.u32 %v8431, %v8432
      %v8435 = vsel %vm1791, %v8427, %v8434
      %v8436 = vrot.slane %v8431, 4
      %v8438 = vshrl.u32 %v8300, 16
      %v8440 = vrot.slane %v8438, 7
      %v8441 = vshll.u32 %v8300, 16
      %v8443 = vor.u32 %v8440, %v8441
      %v8444 = vrot.slane %v8440, 4
      %v8446 = vshrl.u32 %v8301, 16
      %v8448 = vrot.slane %v8446, 7
      %v8449 = vshll.u32 %v8301, 16
      %v8451 = vor.u32 %v8448, %v8449
      %v8452 = vsel %vm1791, %v8444, %v8451
      %v8453 = vrot.slane %v8448, 4
      %v8455 = vshrl.u32 %v8302, 16
      %v8457 = vrot.slane %v8455, 7
      %v8458 = vshll.u32 %v8302, 16
      %v8460 = vor.u32 %v8457, %v8458
      %v8461 = vrot.slane %v8457, 4
      %v8463 = vshrl.u32 %v8303, 16
      %v8465 = vrot.slane %v8463, 7
      %v8466 = vshll.u32 %v8303, 16
      %v8468 = vor.u32 %v8465, %v8466
      %v8469 = vsel %vm1791, %v8461, %v8468
      %v8470 = vrot.slane %v8465, 4
      %v8472 = vshrl.u32 %v8304, 16
      %v8474 = vrot.slane %v8472, 7
      %v8475 = vshll.u32 %v8304, 16
      %v8477 = vor.u32 %v8474, %v8475
      %v8478 = vrot.slane %v8474, 4
      %v8480 = vshrl.u32 %v8305, 16
      %v8482 = vrot.slane %v8480, 7
      %v8483 = vshll.u32 %v8305, 16
      %v8485 = vor.u32 %v8482, %v8483
      %v8486 = vsel %vm1791, %v8478, %v8485
      %v8487 = vrot.slane %v8482, 4
      %v8489 = vshrl.u32 %v8306, 16
      %v8491 = vrot.slane %v8489, 7
      %v8492 = vshll.u32 %v8306, 16
      %v8494 = vor.u32 %v8491, %v8492
      %v8495 = vrot.slane %v8491, 4
      %v8497 = vshrl.u32 %v8307, 16
      %v8499 = vrot.slane %v8497, 7
      %v8500 = vshll.u32 %v8307, 16
      %v8502 = vor.u32 %v8499, %v8500
      %v8503 = vsel %vm1791, %v8495, %v8502
      %v8504 = vrot.slane %v8499, 4
      %v8506 = vshrl.u32 %v8308, 16
      %v8508 = vrot.slane %v8506, 7
      %v8509 = vshll.u32 %v8308, 16
      %v8511 = vor.u32 %v8508, %v8509
      %v8512 = vrot.slane %v8508, 4
      %v8514 = vshrl.u32 %v8309, 16
      %v8516 = vrot.slane %v8514, 7
      %v8517 = vshll.u32 %v8309, 16
      %v8519 = vor.u32 %v8516, %v8517
      %v8520 = vsel %vm1791, %v8512, %v8519
      %v8521 = vrot.slane %v8516, 4
      %v8523 = vshrl.u32 %v8310, 16
      %v8525 = vrot.slane %v8523, 7
      %v8526 = vshll.u32 %v8310, 16
      %v8528 = vor.u32 %v8525, %v8526
      %v8529 = vrot.slane %v8525, 4
      %v8531 = vshrl.u32 %v8311, 16
      %v8533 = vrot.slane %v8531, 7
      %v8534 = vshll.u32 %v8311, 16
      %v8536 = vor.u32 %v8533, %v8534
      %v8537 = vsel %vm1791, %v8529, %v8536
      %v8538 = vrot.slane %v8533, 4
      %v8540 = vshrl.u32 %v8312, 16
      %v8542 = vrot.slane %v8540, 7
      %v8543 = vshll.u32 %v8312, 16
      %v8545 = vor.u32 %v8542, %v8543
      %v8546 = vrot.slane %v8542, 4
      %v8548 = vshrl.u32 %v8313, 16
      %v8550 = vrot.slane %v8548, 7
      %v8551 = vshll.u32 %v8313, 16
      %v8553 = vor.u32 %v8550, %v8551
      %v8554 = vsel %vm1791, %v8546, %v8553
      %v8555 = vrot.slane %v8550, 4
      %v8557 = vshrl.u32 %v8314, 16
      %v8559 = vrot.slane %v8557, 7
      %v8560 = vshll.u32 %v8314, 16
      %v8562 = vor.u32 %v8559, %v8560
      %v8563 = vrot.slane %v8559, 4
      %v8565 = vshrl.u32 %v8315, 16
      %v8567 = vrot.slane %v8565, 7
      %v8568 = vshll.u32 %v8315, 16
      %v8570 = vor.u32 %v8567, %v8568
      %v8571 = vsel %vm1791, %v8563, %v8570
      %v8572 = vrot.slane %v8567, 4
      %v8574 = vshrl.u32 %v8316, 16
      %v8576 = vrot.slane %v8574, 7
      %v8577 = vshll.u32 %v8316, 16
      %v8579 = vor.u32 %v8576, %v8577
      %v8580 = vrot.slane %v8576, 4
      %v8582 = vshrl.u32 %v8317, 16
      %v8584 = vrot.slane %v8582, 7
      %v8585 = vshll.u32 %v8317, 16
      %v8587 = vor.u32 %v8584, %v8585
      %v8588 = vsel %vm1791, %v8580, %v8587
      %v8589 = vrot.slane %v8584, 4
      %s8638 = scalar_lea.vmem [#allocation3], 12
      %vm8639 = vcmask 519168
      %vm8640 = vmand %vm8639, %vm2114
      %v8641 = vld [vmem:[%s8638] sm:$0xf]
      %v8642 = vsel %vm8640, %v8324, %v8641
      %8643 = vst [vmem:[%s8638] sm:$0xf] %v8642
      %8644 = vst.msk [vmem:[%s8638 + $0x4] sm:$0xf] %vm390, %v8333
      %vm8645 = vcmask 516096
      %vm8646 = vmand %vm8645, %vm1789
      %v8647 = vld [vmem:[%s8638 + $0x8] sm:$0x1]
      %v8648 = vsel %vm8646, %v8334, %v8647
      %8649 = vst [vmem:[%s8638 + $0x8] sm:$0x1] %v8648
      %v8650 = vld [vmem:[%s8638 + $0xc] sm:$0xf]
      %v8651 = vsel %vm8640, %v8341, %v8650
      %8652 = vst [vmem:[%s8638 + $0xc] sm:$0xf] %v8651
      %8653 = vst.msk [vmem:[%s8638 + $0x10] sm:$0xf] %vm390, %v8350
      %v8654 = vld [vmem:[%s8638 + $0x14] sm:$0x1]
      %v8655 = vsel %vm8646, %v8351, %v8654
      %8656 = vst [vmem:[%s8638 + $0x14] sm:$0x1] %v8655
      %v8657 = vld [vmem:[%s8638 + $0x18] sm:$0xf]
      %v8658 = vsel %vm8640, %v8358, %v8657
      %8659 = vst [vmem:[%s8638 + $0x18] sm:$0xf] %v8658
      %8660 = vst.msk [vmem:[%s8638 + $0x1c] sm:$0xf] %vm390, %v8367
      %v8661 = vld [vmem:[%s8638 + $0x20] sm:$0x1]
      %v8662 = vsel %vm8646, %v8368, %v8661
      %8663 = vst [vmem:[%s8638 + $0x20] sm:$0x1] %v8662
      %v8664 = vld [vmem:[%s8638 + $0x24] sm:$0xf]
      %v8665 = vsel %vm8640, %v8375, %v8664
      %8666 = vst [vmem:[%s8638 + $0x24] sm:$0xf] %v8665
      %8667 = vst.msk [vmem:[%s8638 + $0x28] sm:$0xf] %vm390, %v8384
      %v8668 = vld [vmem:[%s8638 + $0x2c] sm:$0x1]
      %v8669 = vsel %vm8646, %v8385, %v8668
      %8670 = vst [vmem:[%s8638 + $0x2c] sm:$0x1] %v8669
      %v8671 = vld [vmem:[%s8638 + $0x30] sm:$0xf]
      %v8672 = vsel %vm8640, %v8392, %v8671
      %8673 = vst [vmem:[%s8638 + $0x30] sm:$0xf] %v8672
      %8674 = vst.msk [vmem:[%s8638 + $0x34] sm:$0xf] %vm390, %v8401
      %v8675 = vld [vmem:[%s8638 + $0x38] sm:$0x1]
      %v8676 = vsel %vm8646, %v8402, %v8675
      %8677 = vst [vmem:[%s8638 + $0x38] sm:$0x1] %v8676
      %v8678 = vld [vmem:[%s8638 + $0x3c] sm:$0xf]
      %v8679 = vsel %vm8640, %v8409, %v8678
      %8680 = vst [vmem:[%s8638 + $0x3c] sm:$0xf] %v8679
      %8681 = vst.msk [vmem:[%s8638 + $0x40] sm:$0xf] %vm390, %v8418
      %v8682 = vld [vmem:[%s8638 + $0x44] sm:$0x1]
      %v8683 = vsel %vm8646, %v8419, %v8682
      %8684 = vst [vmem:[%s8638 + $0x44] sm:$0x1] %v8683
      %v8685 = vld [vmem:[%s8638 + $0x48] sm:$0xf]
      %v8686 = vsel %vm8640, %v8426, %v8685
      %8687 = vst [vmem:[%s8638 + $0x48] sm:$0xf] %v8686
      %8688 = vst.msk [vmem:[%s8638 + $0x4c] sm:$0xf] %vm390, %v8435
      %v8689 = vld [vmem:[%s8638 + $0x50] sm:$0x1]
      %v8690 = vsel %vm8646, %v8436, %v8689
      %8691 = vst [vmem:[%s8638 + $0x50] sm:$0x1] %v8690
      %v8692 = vld [vmem:[%s8638 + $0x54] sm:$0xf]
      %v8693 = vsel %vm8640, %v8443, %v8692
      %8694 = vst [vmem:[%s8638 + $0x54] sm:$0xf] %v8693
      %8695 = vst.msk [vmem:[%s8638 + $0x58] sm:$0xf] %vm390, %v8452
      %v8696 = vld [vmem:[%s8638 + $0x5c] sm:$0x1]
      %v8697 = vsel %vm8646, %v8453, %v8696
      %8698 = vst [vmem:[%s8638 + $0x5c] sm:$0x1] %v8697
      %v8699 = vld [vmem:[%s8638 + $0x60] sm:$0xf]
      %v8700 = vsel %vm8640, %v8460, %v8699
      %8701 = vst [vmem:[%s8638 + $0x60] sm:$0xf] %v8700
      %8702 = vst.msk [vmem:[%s8638 + $0x64] sm:$0xf] %vm390, %v8469
      %v8703 = vld [vmem:[%s8638 + $0x68] sm:$0x1]
      %v8704 = vsel %vm8646, %v8470, %v8703
      %8705 = vst [vmem:[%s8638 + $0x68] sm:$0x1] %v8704
      %v8706 = vld [vmem:[%s8638 + $0x6c] sm:$0xf]
      %v8707 = vsel %vm8640, %v8477, %v8706
      %8708 = vst [vmem:[%s8638 + $0x6c] sm:$0xf] %v8707
      %8709 = vst.msk [vmem:[%s8638 + $0x70] sm:$0xf] %vm390, %v8486
      %v8710 = vld [vmem:[%s8638 + $0x74] sm:$0x1]
      %v8711 = vsel %vm8646, %v8487, %v8710
      %8712 = vst [vmem:[%s8638 + $0x74] sm:$0x1] %v8711
      %v8713 = vld [vmem:[%s8638 + $0x78] sm:$0xf]
      %v8714 = vsel %vm8640, %v8494, %v8713
      %8715 = vst [vmem:[%s8638 + $0x78] sm:$0xf] %v8714
      %8716 = vst.msk [vmem:[%s8638 + $0x7c] sm:$0xf] %vm390, %v8503
      %v8717 = vld [vmem:[%s8638 + $0x80] sm:$0x1]
      %v8718 = vsel %vm8646, %v8504, %v8717
      %8719 = vst [vmem:[%s8638 + $0x80] sm:$0x1] %v8718
      %v8720 = vld [vmem:[%s8638 + $0x84] sm:$0xf]
      %v8721 = vsel %vm8640, %v8511, %v8720
      %8722 = vst [vmem:[%s8638 + $0x84] sm:$0xf] %v8721
      %8723 = vst.msk [vmem:[%s8638 + $0x88] sm:$0xf] %vm390, %v8520
      %v8724 = vld [vmem:[%s8638 + $0x8c] sm:$0x1]
      %v8725 = vsel %vm8646, %v8521, %v8724
      %8726 = vst [vmem:[%s8638 + $0x8c] sm:$0x1] %v8725
      %v8727 = vld [vmem:[%s8638 + $0x90] sm:$0xf]
      %v8728 = vsel %vm8640, %v8528, %v8727
      %8729 = vst [vmem:[%s8638 + $0x90] sm:$0xf] %v8728
      %8730 = vst.msk [vmem:[%s8638 + $0x94] sm:$0xf] %vm390, %v8537
      %v8731 = vld [vmem:[%s8638 + $0x98] sm:$0x1]
      %v8732 = vsel %vm8646, %v8538, %v8731
      %8733 = vst [vmem:[%s8638 + $0x98] sm:$0x1] %v8732
      %v8734 = vld [vmem:[%s8638 + $0x9c] sm:$0xf]
      %v8735 = vsel %vm8640, %v8545, %v8734
      %8736 = vst [vmem:[%s8638 + $0x9c] sm:$0xf] %v8735
      %8737 = vst.msk [vmem:[%s8638 + $0xa0] sm:$0xf] %vm390, %v8554
      %v8738 = vld [vmem:[%s8638 + $0xa4] sm:$0x1]
      %v8739 = vsel %vm8646, %v8555, %v8738
      %8740 = vst [vmem:[%s8638 + $0xa4] sm:$0x1] %v8739
      %v8741 = vld [vmem:[%s8638 + $0xa8] sm:$0xf]
      %v8742 = vsel %vm8640, %v8562, %v8741
      %8743 = vst [vmem:[%s8638 + $0xa8] sm:$0xf] %v8742
      %8744 = vst.msk [vmem:[%s8638 + $0xac] sm:$0xf] %vm390, %v8571
      %v8745 = vld [vmem:[%s8638 + $0xb0] sm:$0x1]
      %v8746 = vsel %vm8646, %v8572, %v8745
      %8747 = vst [vmem:[%s8638 + $0xb0] sm:$0x1] %v8746
      %v8748 = vld [vmem:[%s8638 + $0xb4] sm:$0xf]
      %v8749 = vsel %vm8640, %v8579, %v8748
      %8750 = vst [vmem:[%s8638 + $0xb4] sm:$0xf] %v8749
      %8751 = vst.msk [vmem:[%s8638 + $0xb8] sm:$0xf] %vm390, %v8588
      %v8752 = vld [vmem:[%s8638 + $0xbc] sm:$0x1]
      %v8753 = vsel %vm8646, %v8589, %v8752
      %8754 = vst [vmem:[%s8638 + $0xbc] sm:$0x1] %v8753
      %v8755 = vld [vmem:[#allocation3] sm:$0xf]
      %v8756 = vld [vmem:[#allocation3 + $0x4] sm:$0xf]
      %v8757 = vld [vmem:[#allocation3 + $0x8] sm:$0x1]
      %v8758 = vld [vmem:[#allocation3 + $0xc] sm:$0xf]
      %v8759 = vld [vmem:[#allocation3 + $0x10] sm:$0xf]
      %v8760 = vld [vmem:[#allocation3 + $0x14] sm:$0x1]
      %v8761 = vld [vmem:[#allocation3 + $0x18] sm:$0xf]
      %v8762 = vld [vmem:[#allocation3 + $0x1c] sm:$0xf]
      %v8763 = vld [vmem:[#allocation3 + $0x20] sm:$0x1]
      %v8764 = vld [vmem:[#allocation3 + $0x24] sm:$0xf]
      %v8765 = vld [vmem:[#allocation3 + $0x28] sm:$0xf]
      %v8766 = vld [vmem:[#allocation3 + $0x2c] sm:$0x1]
      %v8767 = vld [vmem:[#allocation3 + $0x30] sm:$0xf]
      %v8768 = vld [vmem:[#allocation3 + $0x34] sm:$0xf]
      %v8769 = vld [vmem:[#allocation3 + $0x38] sm:$0x1]
      %v8770 = vld [vmem:[#allocation3 + $0x3c] sm:$0xf]
      %v8771 = vld [vmem:[#allocation3 + $0x40] sm:$0xf]
      %v8772 = vld [vmem:[#allocation3 + $0x44] sm:$0x1]
      %v8773 = vld [vmem:[#allocation3 + $0x48] sm:$0xf]
      %v8774 = vld [vmem:[#allocation3 + $0x4c] sm:$0xf]
      %v8775 = vld [vmem:[#allocation3 + $0x50] sm:$0x1]
      %v8776 = vld [vmem:[#allocation3 + $0x54] sm:$0xf]
      %v8777 = vld [vmem:[#allocation3 + $0x58] sm:$0xf]
      %v8778 = vld [vmem:[#allocation3 + $0x5c] sm:$0x1]
      %v8779 = vld [vmem:[#allocation3 + $0x60] sm:$0xf]
      %v8780 = vld [vmem:[#allocation3 + $0x64] sm:$0xf]
      %v8781 = vld [vmem:[#allocation3 + $0x68] sm:$0x1]
      %v8782 = vld [vmem:[#allocation3 + $0x6c] sm:$0xf]
      %v8783 = vld [vmem:[#allocation3 + $0x70] sm:$0xf]
      %v8784 = vld [vmem:[#allocation3 + $0x74] sm:$0x1]
      %v8785 = vld [vmem:[#allocation3 + $0x78] sm:$0xf]
      %v8786 = vld [vmem:[#allocation3 + $0x7c] sm:$0xf]
      %v8787 = vld [vmem:[#allocation3 + $0x80] sm:$0x1]
      %v8788 = vld [vmem:[#allocation3 + $0x84] sm:$0xf]
      %v8789 = vld [vmem:[#allocation3 + $0x88] sm:$0xf]
      %v8790 = vld [vmem:[#allocation3 + $0x8c] sm:$0x1]
      %v8791 = vld [vmem:[#allocation3 + $0x90] sm:$0xf]
      %v8792 = vld [vmem:[#allocation3 + $0x94] sm:$0xf]
      %v8793 = vld [vmem:[#allocation3 + $0x98] sm:$0x1]
      %v8794 = vld [vmem:[#allocation3 + $0x9c] sm:$0xf]
      %v8795 = vld [vmem:[#allocation3 + $0xa0] sm:$0xf]
      %v8796 = vld [vmem:[#allocation3 + $0xa4] sm:$0x1]
      %v8797 = vld [vmem:[#allocation3 + $0xa8] sm:$0xf]
      %v8798 = vld [vmem:[#allocation3 + $0xac] sm:$0xf]
      %v8799 = vld [vmem:[#allocation3 + $0xb0] sm:$0x1]
      %v8800 = vld [vmem:[#allocation3 + $0xb4] sm:$0xf]
      %v8801 = vld [vmem:[#allocation3 + $0xb8] sm:$0xf]
      %v8802 = vld [vmem:[#allocation3 + $0xbc] sm:$0x1]
      %v8803 = vld [vmem:[#allocation3 + $0xc0] sm:$0xf]
      %v8804 = vld [vmem:[#allocation3 + $0xc4] sm:$0xf]
      %v8805 = vld [vmem:[#allocation3 + $0xc8] sm:$0x1]
      %v8806 = vld [vmem:[#allocation3 + $0xcc] sm:$0xf]
      %v8807 = vld [vmem:[#allocation3 + $0xd0] sm:$0xf]
      %v8808 = vld [vmem:[#allocation3 + $0xd4] sm:$0x1]
      %v8841 = vunpack.c.l.b16 %v8755
      %v8842 = vunpack.c.l.b16 %v8756
      %v8843 = vunpack.c.l.b16 %v8758
      %v8844 = vunpack.c.l.b16 %v8759
      %v8845 = vunpack.c.l.b16 %v8761
      %v8846 = vunpack.c.l.b16 %v8762
      %v8847 = vunpack.c.l.b16 %v8764
      %v8848 = vunpack.c.l.b16 %v8765
      %v8849 = vunpack.c.l.b16 %v8767
      %v8850 = vunpack.c.l.b16 %v8768
      %v8851 = vunpack.c.l.b16 %v8770
      %v8852 = vunpack.c.l.b16 %v8771
      %v8853 = vunpack.c.l.b16 %v8773
      %v8854 = vunpack.c.l.b16 %v8774
      %v8855 = vunpack.c.l.b16 %v8776
      %v8856 = vunpack.c.l.b16 %v8777
      %v8857 = vunpack.c.l.b16 %v8779
      %v8858 = vunpack.c.l.b16 %v8780
      %v8859 = vunpack.c.l.b16 %v8782
      %v8860 = vunpack.c.l.b16 %v8783
      %v8861 = vunpack.c.l.b16 %v8785
      %v8862 = vunpack.c.l.b16 %v8786
      %v8863 = vunpack.c.l.b16 %v8788
      %v8864 = vunpack.c.l.b16 %v8789
      %v8865 = vunpack.c.l.b16 %v8791
      %v8866 = vunpack.c.l.b16 %v8792
      %v8867 = vunpack.c.l.b16 %v8794
      %v8868 = vunpack.c.l.b16 %v8795
      %v8869 = vunpack.c.l.b16 %v8797
      %v8870 = vunpack.c.l.b16 %v8798
      %v8871 = vunpack.c.l.b16 %v8800
      %v8872 = vunpack.c.l.b16 %v8801
      %v8873 = vpack.c.b16 %v8842, %v8841
      %v8874 = vpack.c.b16 %v8844, %v8843
      %v8875 = vpack.c.b16 %v8846, %v8845
      %v8876 = vpack.c.b16 %v8848, %v8847
      %v8877 = vpack.c.b16 %v8850, %v8849
      %v8878 = vpack.c.b16 %v8852, %v8851
      %v8879 = vpack.c.b16 %v8854, %v8853
      %v8880 = vpack.c.b16 %v8856, %v8855
      %v8881 = vpack.c.b16 %v8858, %v8857
      %v8882 = vpack.c.b16 %v8860, %v8859
      %v8883 = vpack.c.b16 %v8862, %v8861
      %v8884 = vpack.c.b16 %v8864, %v8863
      %v8885 = vpack.c.b16 %v8866, %v8865
      %v8886 = vpack.c.b16 %v8868, %v8867
      %v8887 = vpack.c.b16 %v8870, %v8869
      %v8888 = vpack.c.b16 %v8872, %v8871
      %v8905 = vunpack.c.l.b16 %v8757
      %v8906 = vunpack.c.l.b16 %v8760
      %v8907 = vunpack.c.l.b16 %v8763
      %v8908 = vunpack.c.l.b16 %v8766
      %v8909 = vunpack.c.l.b16 %v8769
      %v8910 = vunpack.c.l.b16 %v8772
      %v8911 = vunpack.c.l.b16 %v8775
      %v8912 = vunpack.c.l.b16 %v8778
      %v8913 = vunpack.c.l.b16 %v8781
      %v8914 = vunpack.c.l.b16 %v8784
      %v8915 = vunpack.c.l.b16 %v8787
      %v8916 = vunpack.c.l.b16 %v8790
      %v8917 = vunpack.c.l.b16 %v8793
      %v8918 = vunpack.c.l.b16 %v8796
      %v8919 = vunpack.c.l.b16 %v8799
      %v8920 = vunpack.c.l.b16 %v8802
      %v8921 = vpack.c.b16 %v8905, %v8905
      %v8922 = vpack.c.b16 %v8906, %v8906
      %v8923 = vpack.c.b16 %v8907, %v8907
      %v8924 = vpack.c.b16 %v8908, %v8908
      %v8925 = vpack.c.b16 %v8909, %v8909
      %v8926 = vpack.c.b16 %v8910, %v8910
      %v8927 = vpack.c.b16 %v8911, %v8911
      %v8928 = vpack.c.b16 %v8912, %v8912
      %v8929 = vpack.c.b16 %v8913, %v8913
      %v8930 = vpack.c.b16 %v8914, %v8914
      %v8931 = vpack.c.b16 %v8915, %v8915
      %v8932 = vpack.c.b16 %v8916, %v8916
      %v8933 = vpack.c.b16 %v8917, %v8917
      %v8934 = vpack.c.b16 %v8918, %v8918
      %v8935 = vpack.c.b16 %v8919, %v8919
      %v8936 = vpack.c.b16 %v8920, %v8920
      %v8938 = vshrl.u32 %v8873, 16
      %v8940 = vshll.u32 %v8873, 16
      %v8942 = vrot.slane %v8940, 1
      %v8943 = vor.u32 %v8938, %v8942
      %v8945 = vshll.u32 %v8921, 16
      %v8947 = vrot.slane %v8945, 1
      %v8948 = vsel %vm628, %v8943, %v8947
      %v8950 = vshrl.u32 %v8874, 16
      %v8952 = vshll.u32 %v8874, 16
      %v8954 = vrot.slane %v8952, 1
      %v8955 = vor.u32 %v8950, %v8954
      %v8957 = vshll.u32 %v8922, 16
      %v8959 = vrot.slane %v8957, 1
      %v8960 = vsel %vm628, %v8955, %v8959
      %v8962 = vshrl.u32 %v8875, 16
      %v8964 = vshll.u32 %v8875, 16
      %v8966 = vrot.slane %v8964, 1
      %v8967 = vor.u32 %v8962, %v8966
      %v8969 = vshll.u32 %v8923, 16
      %v8971 = vrot.slane %v8969, 1
      %v8972 = vsel %vm628, %v8967, %v8971
      %v8974 = vshrl.u32 %v8876, 16
      %v8976 = vshll.u32 %v8876, 16
      %v8978 = vrot.slane %v8976, 1
      %v8979 = vor.u32 %v8974, %v8978
      %v8981 = vshll.u32 %v8924, 16
      %v8983 = vrot.slane %v8981, 1
      %v8984 = vsel %vm628, %v8979, %v8983
      %v8986 = vshrl.u32 %v8877, 16
      %v8988 = vshll.u32 %v8877, 16
      %v8990 = vrot.slane %v8988, 1
      %v8991 = vor.u32 %v8986, %v8990
      %v8993 = vshll.u32 %v8925, 16
      %v8995 = vrot.slane %v8993, 1
      %v8996 = vsel %vm628, %v8991, %v8995
      %v8998 = vshrl.u32 %v8878, 16
      %v9000 = vshll.u32 %v8878, 16
      %v9002 = vrot.slane %v9000, 1
      %v9003 = vor.u32 %v8998, %v9002
      %v9005 = vshll.u32 %v8926, 16
      %v9007 = vrot.slane %v9005, 1
      %v9008 = vsel %vm628, %v9003, %v9007
      %v9010 = vshrl.u32 %v8879, 16
      %v9012 = vshll.u32 %v8879, 16
      %v9014 = vrot.slane %v9012, 1
      %v9015 = vor.u32 %v9010, %v9014
      %v9017 = vshll.u32 %v8927, 16
      %v9019 = vrot.slane %v9017, 1
      %v9020 = vsel %vm628, %v9015, %v9019
      %v9022 = vshrl.u32 %v8880, 16
      %v9024 = vshll.u32 %v8880, 16
      %v9026 = vrot.slane %v9024, 1
      %v9027 = vor.u32 %v9022, %v9026
      %v9029 = vshll.u32 %v8928, 16
      %v9031 = vrot.slane %v9029, 1
      %v9032 = vsel %vm628, %v9027, %v9031
      %v9034 = vshrl.u32 %v8881, 16
      %v9036 = vshll.u32 %v8881, 16
      %v9038 = vrot.slane %v9036, 1
      %v9039 = vor.u32 %v9034, %v9038
      %v9041 = vshll.u32 %v8929, 16
      %v9043 = vrot.slane %v9041, 1
      %v9044 = vsel %vm628, %v9039, %v9043
      %v9046 = vshrl.u32 %v8882, 16
      %v9048 = vshll.u32 %v8882, 16
      %v9050 = vrot.slane %v9048, 1
      %v9051 = vor.u32 %v9046, %v9050
      %v9053 = vshll.u32 %v8930, 16
      %v9055 = vrot.slane %v9053, 1
      %v9056 = vsel %vm628, %v9051, %v9055
      %v9058 = vshrl.u32 %v8883, 16
      %v9060 = vshll.u32 %v8883, 16
      %v9062 = vrot.slane %v9060, 1
      %v9063 = vor.u32 %v9058, %v9062
      %v9065 = vshll.u32 %v8931, 16
      %v9067 = vrot.slane %v9065, 1
      %v9068 = vsel %vm628, %v9063, %v9067
      %v9070 = vshrl.u32 %v8884, 16
      %v9072 = vshll.u32 %v8884, 16
      %v9074 = vrot.slane %v9072, 1
      %v9075 = vor.u32 %v9070, %v9074
      %v9077 = vshll.u32 %v8932, 16
      %v9079 = vrot.slane %v9077, 1
      %v9080 = vsel %vm628, %v9075, %v9079
      %v9082 = vshrl.u32 %v8885, 16
      %v9084 = vshll.u32 %v8885, 16
      %v9086 = vrot.slane %v9084, 1
      %v9087 = vor.u32 %v9082, %v9086
      %v9089 = vshll.u32 %v8933, 16
      %v9091 = vrot.slane %v9089, 1
      %v9092 = vsel %vm628, %v9087, %v9091
      %v9094 = vshrl.u32 %v8886, 16
      %v9096 = vshll.u32 %v8886, 16
      %v9098 = vrot.slane %v9096, 1
      %v9099 = vor.u32 %v9094, %v9098
      %v9101 = vshll.u32 %v8934, 16
      %v9103 = vrot.slane %v9101, 1
      %v9104 = vsel %vm628, %v9099, %v9103
      %v9106 = vshrl.u32 %v8887, 16
      %v9108 = vshll.u32 %v8887, 16
      %v9110 = vrot.slane %v9108, 1
      %v9111 = vor.u32 %v9106, %v9110
      %v9113 = vshll.u32 %v8935, 16
      %v9115 = vrot.slane %v9113, 1
      %v9116 = vsel %vm628, %v9111, %v9115
      %v9118 = vshrl.u32 %v8888, 16
      %v9120 = vshll.u32 %v8888, 16
      %v9122 = vrot.slane %v9120, 1
      %v9123 = vor.u32 %v9118, %v9122
      %v9125 = vshll.u32 %v8936, 16
      %v9127 = vrot.slane %v9125, 1
      %v9128 = vsel %vm628, %v9123, %v9127
      %9129 = vrot.lane.b32.xlu0 %v8948, 64
      %v9130 = vpop.permute.xlu0 %9129
      %9131 = vrot.lane.b32.xlu0 %v8960, 64
      %v9132 = vpop.permute.xlu0 %9131
      %9133 = vrot.lane.b32.xlu0 %v8972, 64
      %v9134 = vpop.permute.xlu0 %9133
      %9135 = vrot.lane.b32.xlu0 %v8984, 64
      %v9136 = vpop.permute.xlu0 %9135
      %9137 = vrot.lane.b32.xlu0 %v8996, 64
      %v9138 = vpop.permute.xlu0 %9137
      %9139 = vrot.lane.b32.xlu0 %v9008, 64
      %v9140 = vpop.permute.xlu0 %9139
      %9141 = vrot.lane.b32.xlu0 %v9020, 64
      %v9142 = vpop.permute.xlu0 %9141
      %9143 = vrot.lane.b32.xlu0 %v9032, 64
      %v9144 = vpop.permute.xlu0 %9143
      %9145 = vrot.lane.b32.xlu0 %v9044, 64
      %v9146 = vpop.permute.xlu0 %9145
      %9147 = vrot.lane.b32.xlu0 %v9056, 64
      %v9148 = vpop.permute.xlu0 %9147
      %9149 = vrot.lane.b32.xlu0 %v9068, 64
      %v9150 = vpop.permute.xlu0 %9149
      %9151 = vrot.lane.b32.xlu0 %v9080, 64
      %v9152 = vpop.permute.xlu0 %9151
      %9153 = vrot.lane.b32.xlu0 %v9092, 64
      %v9154 = vpop.permute.xlu0 %9153
      %9155 = vrot.lane.b32.xlu0 %v9104, 64
      %v9156 = vpop.permute.xlu0 %9155
      %9157 = vrot.lane.b32.xlu0 %v9116, 64
      %v9158 = vpop.permute.xlu0 %9157
      %9159 = vrot.lane.b32.xlu0 %v9128, 64
      %v9160 = vpop.permute.xlu0 %9159
      %v9161 = vrot.slane %v8873, 1
      %v9162 = vrot.slane %v8921, 1
      %v9163 = vsel %vm853, %v9161, %v9162
      %v9164 = vrot.slane %v8874, 1
      %v9165 = vrot.slane %v8922, 1
      %v9166 = vsel %vm853, %v9164, %v9165
      %v9167 = vrot.slane %v8875, 1
      %v9168 = vrot.slane %v8923, 1
      %v9169 = vsel %vm853, %v9167, %v9168
      %v9170 = vrot.slane %v8876, 1
      %v9171 = vrot.slane %v8924, 1
      %v9172 = vsel %vm853, %v9170, %v9171
      %v9173 = vrot.slane %v8877, 1
      %v9174 = vrot.slane %v8925, 1
      %v9175 = vsel %vm853, %v9173, %v9174
      %v9176 = vrot.slane %v8878, 1
      %v9177 = vrot.slane %v8926, 1
      %v9178 = vsel %vm853, %v9176, %v9177
      %v9179 = vrot.slane %v8879, 1
      %v9180 = vrot.slane %v8927, 1
      %v9181 = vsel %vm853, %v9179, %v9180
      %v9182 = vrot.slane %v8880, 1
      %v9183 = vrot.slane %v8928, 1
      %v9184 = vsel %vm853, %v9182, %v9183
      %v9185 = vrot.slane %v8881, 1
      %v9186 = vrot.slane %v8929, 1
      %v9187 = vsel %vm853, %v9185, %v9186
      %v9188 = vrot.slane %v8882, 1
      %v9189 = vrot.slane %v8930, 1
      %v9190 = vsel %vm853, %v9188, %v9189
      %v9191 = vrot.slane %v8883, 1
      %v9192 = vrot.slane %v8931, 1
      %v9193 = vsel %vm853, %v9191, %v9192
      %v9194 = vrot.slane %v8884, 1
      %v9195 = vrot.slane %v8932, 1
      %v9196 = vsel %vm853, %v9194, %v9195
      %v9197 = vrot.slane %v8885, 1
      %v9198 = vrot.slane %v8933, 1
      %v9199 = vsel %vm853, %v9197, %v9198
      %v9200 = vrot.slane %v8886, 1
      %v9201 = vrot.slane %v8934, 1
      %v9202 = vsel %vm853, %v9200, %v9201
      %v9203 = vrot.slane %v8887, 1
      %v9204 = vrot.slane %v8935, 1
      %v9205 = vsel %vm853, %v9203, %v9204
      %v9206 = vrot.slane %v8888, 1
      %v9207 = vrot.slane %v8936, 1
      %v9208 = vsel %vm853, %v9206, %v9207
      %v9211 = vunpack.c.l.b16 %v8803
      %v9212 = vunpack.c.l.b16 %v8804
      %v9213 = vpack.c.b16 %v9212, %v9211
      %9214 = vrot.lane.b32.xlu0 %v8874, 64
      %v9215 = vpop.permute.xlu0 %9214
      %9216 = vrot.lane.b32.xlu0 %v8875, 64
      %v9217 = vpop.permute.xlu0 %9216
      %9218 = vrot.lane.b32.xlu0 %v8876, 64
      %v9219 = vpop.permute.xlu0 %9218
      %9220 = vrot.lane.b32.xlu0 %v8877, 64
      %v9221 = vpop.permute.xlu0 %9220
      %9222 = vrot.lane.b32.xlu0 %v8878, 64
      %v9223 = vpop.permute.xlu0 %9222
      %9224 = vrot.lane.b32.xlu0 %v8879, 64
      %v9225 = vpop.permute.xlu0 %9224
      %9226 = vrot.lane.b32.xlu0 %v8880, 64
      %v9227 = vpop.permute.xlu0 %9226
      %9228 = vrot.lane.b32.xlu0 %v8881, 64
      %v9229 = vpop.permute.xlu0 %9228
      %9230 = vrot.lane.b32.xlu0 %v8882, 64
      %v9231 = vpop.permute.xlu0 %9230
      %9232 = vrot.lane.b32.xlu0 %v8883, 64
      %v9233 = vpop.permute.xlu0 %9232
      %9234 = vrot.lane.b32.xlu0 %v8884, 64
      %v9235 = vpop.permute.xlu0 %9234
      %9236 = vrot.lane.b32.xlu0 %v8885, 64
      %v9237 = vpop.permute.xlu0 %9236
      %9238 = vrot.lane.b32.xlu0 %v8886, 64
      %v9239 = vpop.permute.xlu0 %9238
      %9240 = vrot.lane.b32.xlu0 %v8887, 64
      %v9241 = vpop.permute.xlu0 %9240
      %9242 = vrot.lane.b32.xlu0 %v8888, 64
      %v9243 = vpop.permute.xlu0 %9242
      %9244 = vrot.lane.b32.xlu0 %v9213, 64
      %v9245 = vpop.permute.xlu0 %9244
      %v9247 = vunpack.c.l.b16 %v8805
      %v9248 = vpack.c.b16 %v9247, %v9247
      %v9250 = vshrl.u32 %v9213, 16
      %v9252 = vshll.u32 %v9213, 16
      %v9254 = vrot.slane %v9252, 1
      %v9255 = vor.u32 %v9250, %v9254
      %v9257 = vshll.u32 %v9248, 16
      %v9259 = vrot.slane %v9257, 1
      %v9260 = vsel %vm628, %v9255, %v9259
      %v9261 = vrot.slane %v9213, 1
      %v9262 = vrot.slane %v9248, 1
      %v9263 = vsel %vm853, %v9261, %v9262
      %9264 = vrot.lane.b32.xlu0 %v9166, 64
      %v9265 = vpop.permute.xlu0 %9264
      %9266 = vrot.lane.b32.xlu0 %v9169, 64
      %v9267 = vpop.permute.xlu0 %9266
      %9268 = vrot.lane.b32.xlu0 %v9172, 64
      %v9269 = vpop.permute.xlu0 %9268
      %9270 = vrot.lane.b32.xlu0 %v9175, 64
      %v9271 = vpop.permute.xlu0 %9270
      %9272 = vrot.lane.b32.xlu0 %v9178, 64
      %v9273 = vpop.permute.xlu0 %9272
      %9274 = vrot.lane.b32.xlu0 %v9181, 64
      %v9275 = vpop.permute.xlu0 %9274
      %9276 = vrot.lane.b32.xlu0 %v9184, 64
      %v9277 = vpop.permute.xlu0 %9276
      %9278 = vrot.lane.b32.xlu0 %v9187, 64
      %v9279 = vpop.permute.xlu0 %9278
      %9280 = vrot.lane.b32.xlu0 %v9190, 64
      %v9281 = vpop.permute.xlu0 %9280
      %9282 = vrot.lane.b32.xlu0 %v9193, 64
      %v9283 = vpop.permute.xlu0 %9282
      %9284 = vrot.lane.b32.xlu0 %v9196, 64
      %v9285 = vpop.permute.xlu0 %9284
      %9286 = vrot.lane.b32.xlu0 %v9199, 64
      %v9287 = vpop.permute.xlu0 %9286
      %9288 = vrot.lane.b32.xlu0 %v9202, 64
      %v9289 = vpop.permute.xlu0 %9288
      %9290 = vrot.lane.b32.xlu0 %v9205, 64
      %v9291 = vpop.permute.xlu0 %9290
      %9292 = vrot.lane.b32.xlu0 %v9208, 64
      %v9293 = vpop.permute.xlu0 %9292
      %9294 = vrot.lane.b32.xlu0 %v9263, 64
      %v9295 = vpop.permute.xlu0 %9294
      %v9298 = vunpack.c.l.b16 %v8806
      %v9299 = vunpack.c.l.b16 %v8807
      %v9300 = vpack.c.b16 %v9299, %v9298
      %v9302 = vunpack.c.l.b16 %v8808
      %v9303 = vpack.c.b16 %v9302, %v9302
      %v9305 = vshrl.u32 %v9300, 16
      %v9307 = vshll.u32 %v9300, 16
      %v9309 = vrot.slane %v9307, 1
      %v9310 = vor.u32 %v9305, %v9309
      %v9312 = vshll.u32 %v9303, 16
      %v9314 = vrot.slane %v9312, 1
      %v9315 = vsel %vm628, %v9310, %v9314
      %9316 = vrot.lane.b32.xlu0 %v9260, 64
      %v9317 = vpop.permute.xlu0 %9316
      %9318 = vrot.lane.b32.xlu0 %v9315, 64
      %v9319 = vpop.permute.xlu0 %9318
      %v9320 = vrot.slane %v9300, 1
      %v9321 = vrot.slane %v9303, 1
      %v9322 = vsel %vm853, %v9320, %v9321
      %v9324 = vsel %vm2922, %v8873, %v9130
      %v9327 = vsel %vm2922, %v8874, %v9132
      %v9330 = vsel %vm2922, %v8875, %v9134
      %v9333 = vsel %vm2922, %v8876, %v9136
      %v9336 = vsel %vm2922, %v8877, %v9138
      %v9339 = vsel %vm2922, %v8878, %v9140
      %v9342 = vsel %vm2922, %v8879, %v9142
      %v9345 = vsel %vm2922, %v8880, %v9144
      %v9348 = vsel %vm2922, %v8881, %v9146
      %v9351 = vsel %vm2922, %v8882, %v9148
      %v9354 = vsel %vm2922, %v8883, %v9150
      %v9357 = vsel %vm2922, %v8884, %v9152
      %v9360 = vsel %vm2922, %v8885, %v9154
      %v9363 = vsel %vm2922, %v8886, %v9156
      %v9366 = vsel %vm2922, %v8887, %v9158
      %v9369 = vsel %vm2922, %v8888, %v9160
      %v9373 = vsel %vm2922, %v9163, %v9215
      %v9377 = vsel %vm2922, %v9166, %v9217
      %v9381 = vsel %vm2922, %v9169, %v9219
      %v9385 = vsel %vm2922, %v9172, %v9221
      %v9389 = vsel %vm2922, %v9175, %v9223
      %v9393 = vsel %vm2922, %v9178, %v9225
      %v9397 = vsel %vm2922, %v9181, %v9227
      %v9401 = vsel %vm2922, %v9184, %v9229
      %v9405 = vsel %vm2922, %v9187, %v9231
      %v9409 = vsel %vm2922, %v9190, %v9233
      %v9413 = vsel %vm2922, %v9193, %v9235
      %v9417 = vsel %vm2922, %v9196, %v9237
      %v9421 = vsel %vm2922, %v9199, %v9239
      %v9425 = vsel %vm2922, %v9202, %v9241
      %v9429 = vsel %vm2922, %v9205, %v9243
      %v9433 = vsel %vm2922, %v9208, %v9245
      %v9437 = vsel %vm2922, %v8960, %v9265
      %v9441 = vsel %vm2922, %v8972, %v9267
      %v9445 = vsel %vm2922, %v8984, %v9269
      %v9449 = vsel %vm2922, %v8996, %v9271
      %v9453 = vsel %vm2922, %v9008, %v9273
      %v9457 = vsel %vm2922, %v9020, %v9275
      %v9461 = vsel %vm2922, %v9032, %v9277
      %v9465 = vsel %vm2922, %v9044, %v9279
      %v9469 = vsel %vm2922, %v9056, %v9281
      %v9473 = vsel %vm2922, %v9068, %v9283
      %v9477 = vsel %vm2922, %v9080, %v9285
      %v9481 = vsel %vm2922, %v9092, %v9287
      %v9485 = vsel %vm2922, %v9104, %v9289
      %v9489 = vsel %vm2922, %v9116, %v9291
      %v9493 = vsel %vm2922, %v9128, %v9293
      %v9497 = vsel %vm2922, %v9260, %v9295
      %v9500 = vsel %vm2922, %v9213, %v9317
      %v9503 = vsel %vm2922, %v9300, %v9319
      %v9505 = vld [vmem:[%s7] sm:$0xf]
      %v9506 = vld [vmem:[%s7 + $0x4] sm:$0xf]
      %v9507 = vld [vmem:[%s7 + $0x8] sm:$0xf]
      %v9508 = vld [vmem:[%s7 + $0xc] sm:$0xf]
      %v9509 = vld [vmem:[%s7 + $0x10] sm:$0xf]
      %v9510 = vld [vmem:[%s7 + $0x14] sm:$0xf]
      %v9511 = vld [vmem:[%s7 + $0x18] sm:$0xf]
      %v9512 = vld [vmem:[%s7 + $0x1c] sm:$0xf]
      %v9513 = vld [vmem:[%s7 + $0x20] sm:$0xf]
      %v9514 = vld [vmem:[%s7 + $0x24] sm:$0xf]
      %v9515 = vld [vmem:[%s7 + $0x28] sm:$0xf]
      %v9516 = vld [vmem:[%s7 + $0x2c] sm:$0xf]
      %v9517 = vld [vmem:[%s7 + $0x30] sm:$0xf]
      %v9518 = vld [vmem:[%s7 + $0x34] sm:$0xf]
      %v9519 = vld [vmem:[%s7 + $0x38] sm:$0xf]
      %v9520 = vld [vmem:[%s7 + $0x3c] sm:$0xf]
      %v9521 = vld [vmem:[%s7 + $0x40] sm:$0xf]
      %v9522 = vld [vmem:[%s7 + $0x44] sm:$0xf]
      %v9523 = vld [vmem:[%s7 + $0x48] sm:$0xf]
      %v9524 = vld [vmem:[%s7 + $0x4c] sm:$0xf]
      %v9525 = vld [vmem:[%s7 + $0x50] sm:$0xf]
      %v9526 = vld [vmem:[%s7 + $0x54] sm:$0xf]
      %v9527 = vld [vmem:[%s7 + $0x58] sm:$0xf]
      %v9528 = vld [vmem:[%s7 + $0x5c] sm:$0xf]
      %v9529 = vld [vmem:[%s7 + $0x60] sm:$0xf]
      %v9530 = vld [vmem:[%s7 + $0x64] sm:$0xf]
      %v9531 = vld [vmem:[%s7 + $0x68] sm:$0xf]
      %v9532 = vld [vmem:[%s7 + $0x6c] sm:$0xf]
      %v9533 = vld [vmem:[%s7 + $0x70] sm:$0xf]
      %v9534 = vld [vmem:[%s7 + $0x74] sm:$0xf]
      %v9535 = vld [vmem:[%s7 + $0x78] sm:$0xf]
      %v9536 = vld [vmem:[%s7 + $0x7c] sm:$0xf]
      %v9537 = vld [vmem:[%s7 + $0x80] sm:$0xf]
      %v9538 = vld [vmem:[%s7 + $0x84] sm:$0xf]
      %v9539 = vld [vmem:[%s7 + $0x88] sm:$0xf]
      %v9540 = vld [vmem:[%s7 + $0x8c] sm:$0xf]
      %v9541 = vld [vmem:[%s7 + $0x90] sm:$0xf]
      %v9542 = vld [vmem:[%s7 + $0x94] sm:$0xf]
      %v9543 = vld [vmem:[%s7 + $0x98] sm:$0xf]
      %v9544 = vld [vmem:[%s7 + $0x9c] sm:$0xf]
      %v9545 = vld [vmem:[%s7 + $0xa0] sm:$0xf]
      %v9546 = vld [vmem:[%s7 + $0xa4] sm:$0xf]
      %v9547 = vld [vmem:[%s7 + $0xa8] sm:$0xf]
      %v9548 = vld [vmem:[%s7 + $0xac] sm:$0xf]
      %v9549 = vld [vmem:[%s7 + $0xb0] sm:$0xf]
      %v9550 = vld [vmem:[%s7 + $0xb4] sm:$0xf]
      %v9551 = vld [vmem:[%s7 + $0xb8] sm:$0xf]
      %v9552 = vld [vmem:[%s7 + $0xbc] sm:$0xf]
      %v9553 = vld [vmem:[%s7 + $0xc0] sm:$0xf]
      %v9554 = vld [vmem:[%s7 + $0xc4] sm:$0xf]
      %v9555 = vld [vmem:[%s7 + $0xc8] sm:$0xf]
      %v9556 = vld [vmem:[%s7 + $0xcc] sm:$0xf]
      %v9557 = vld [vmem:[%s7 + $0xd0] sm:$0xf]
      %v9558 = vld [vmem:[%s7 + $0xd4] sm:$0xf]
      %v9559 = vld [vmem:[%s7 + $0xd8] sm:$0xf]
      %v9560 = vld [vmem:[%s7 + $0xdc] sm:$0xf]
      %v9561 = vld [vmem:[%s7 + $0xe0] sm:$0xf]
      %v9562 = vld [vmem:[%s7 + $0xe4] sm:$0xf]
      %v9563 = vld [vmem:[%s7 + $0xe8] sm:$0xf]
      %v9564 = vld [vmem:[%s7 + $0xec] sm:$0xf]
      %v9565 = vld [vmem:[%s7 + $0xf0] sm:$0xf]
      %v9566 = vld [vmem:[%s7 + $0xf4] sm:$0xf]
      %v9567 = vld [vmem:[%s7 + $0xf8] sm:$0xf]
      %v9568 = vld [vmem:[%s7 + $0xfc] sm:$0xf]
      %v9569 = vld [vmem:[%s7 + $0x100] sm:$0xf]
      %v9570 = vld [vmem:[%s7 + $0x104] sm:$0xf]
      %v9571 = vld [vmem:[%s7 + $0x108] sm:$0xf]
      %v9572 = vld [vmem:[%s7 + $0x10c] sm:$0xf]
      %v9573 = vld [vmem:[%s7 + $0x110] sm:$0xf]
      %v9574 = vld [vmem:[%s7 + $0x114] sm:$0xf]
      %v9575 = vld [vmem:[%s7 + $0x118] sm:$0xf]
      %v9576 = vld [vmem:[%s7 + $0x11c] sm:$0xf]
      %v9577 = vld [vmem:[%s8] sm:$0x1]
      %v9579 = vlaneseq
      %v9580 = vshrl.u32 %v9579, 7
      %v9581 = vsub.s32 0, %v9580
      %v9582 = vrot.slane %v9577, %v9581
      %v9656 = vunpack.c.l.b16 %v9505
      %v9657 = vunpack.c.l.b16 %v9506
      %v9658 = vunpack.c.l.b16 %v9507
      %v9659 = vunpack.c.l.b16 %v9508
      %v9660 = vunpack.c.l.b16 %v9509
      %v9661 = vunpack.c.l.b16 %v9510
      %v9662 = vunpack.c.l.b16 %v9511
      %v9663 = vunpack.c.l.b16 %v9512
      %v9664 = vunpack.c.l.b16 %v9513
      %v9665 = vunpack.c.l.b16 %v9514
      %v9666 = vunpack.c.l.b16 %v9515
      %v9667 = vunpack.c.l.b16 %v9516
      %v9668 = vunpack.c.l.b16 %v9517
      %v9669 = vunpack.c.l.b16 %v9518
      %v9670 = vunpack.c.l.b16 %v9519
      %v9671 = vunpack.c.l.b16 %v9520
      %v9672 = vunpack.c.l.b16 %v9521
      %v9673 = vunpack.c.l.b16 %v9522
      %v9674 = vunpack.c.l.b16 %v9523
      %v9675 = vunpack.c.l.b16 %v9524
      %v9676 = vunpack.c.l.b16 %v9525
      %v9677 = vunpack.c.l.b16 %v9526
      %v9678 = vunpack.c.l.b16 %v9527
      %v9679 = vunpack.c.l.b16 %v9528
      %v9680 = vunpack.c.l.b16 %v9529
      %v9681 = vunpack.c.l.b16 %v9530
      %v9682 = vunpack.c.l.b16 %v9531
      %v9683 = vunpack.c.l.b16 %v9532
      %v9684 = vunpack.c.l.b16 %v9533
      %v9685 = vunpack.c.l.b16 %v9534
      %v9686 = vunpack.c.l.b16 %v9535
      %v9687 = vunpack.c.l.b16 %v9536
      %v9688 = vunpack.c.l.b16 %v9537
      %v9689 = vunpack.c.l.b16 %v9538
      %v9690 = vunpack.c.l.b16 %v9539
      %v9691 = vunpack.c.l.b16 %v9540
      %v9692 = vunpack.c.l.b16 %v9541
      %v9693 = vunpack.c.l.b16 %v9542
      %v9694 = vunpack.c.l.b16 %v9543
      %v9695 = vunpack.c.l.b16 %v9544
      %v9696 = vunpack.c.l.b16 %v9545
      %v9697 = vunpack.c.l.b16 %v9546
      %v9698 = vunpack.c.l.b16 %v9547
      %v9699 = vunpack.c.l.b16 %v9548
      %v9700 = vunpack.c.l.b16 %v9549
      %v9701 = vunpack.c.l.b16 %v9550
      %v9702 = vunpack.c.l.b16 %v9551
      %v9703 = vunpack.c.l.b16 %v9552
      %v9704 = vunpack.c.l.b16 %v9553
      %v9705 = vunpack.c.l.b16 %v9554
      %v9706 = vunpack.c.l.b16 %v9555
      %v9707 = vunpack.c.l.b16 %v9556
      %v9708 = vunpack.c.l.b16 %v9557
      %v9709 = vunpack.c.l.b16 %v9558
      %v9710 = vunpack.c.l.b16 %v9559
      %v9711 = vunpack.c.l.b16 %v9560
      %v9712 = vunpack.c.l.b16 %v9561
      %v9713 = vunpack.c.l.b16 %v9562
      %v9714 = vunpack.c.l.b16 %v9563
      %v9715 = vunpack.c.l.b16 %v9564
      %v9716 = vunpack.c.l.b16 %v9565
      %v9717 = vunpack.c.l.b16 %v9566
      %v9718 = vunpack.c.l.b16 %v9567
      %v9719 = vunpack.c.l.b16 %v9568
      %v9720 = vunpack.c.l.b16 %v9569
      %v9721 = vunpack.c.l.b16 %v9570
      %v9722 = vunpack.c.l.b16 %v9571
      %v9723 = vunpack.c.l.b16 %v9572
      %v9724 = vunpack.c.l.b16 %v9573
      %v9725 = vunpack.c.l.b16 %v9574
      %v9726 = vunpack.c.l.b16 %v9575
      %v9727 = vunpack.c.l.b16 %v9576
      %v9728 = vpack.c.b16 %v9657, %v9656
      %v9729 = vpack.c.b16 %v9659, %v9658
      %v9730 = vpack.c.b16 %v9661, %v9660
      %v9731 = vpack.c.b16 %v9663, %v9662
      %v9732 = vpack.c.b16 %v9665, %v9664
      %v9733 = vpack.c.b16 %v9667, %v9666
      %v9734 = vpack.c.b16 %v9669, %v9668
      %v9735 = vpack.c.b16 %v9671, %v9670
      %v9736 = vpack.c.b16 %v9673, %v9672
      %v9737 = vpack.c.b16 %v9675, %v9674
      %v9738 = vpack.c.b16 %v9677, %v9676
      %v9739 = vpack.c.b16 %v9679, %v9678
      %v9740 = vpack.c.b16 %v9681, %v9680
      %v9741 = vpack.c.b16 %v9683, %v9682
      %v9742 = vpack.c.b16 %v9685, %v9684
      %v9743 = vpack.c.b16 %v9687, %v9686
      %v9744 = vpack.c.b16 %v9689, %v9688
      %v9745 = vpack.c.b16 %v9691, %v9690
      %v9746 = vpack.c.b16 %v9693, %v9692
      %v9747 = vpack.c.b16 %v9695, %v9694
      %v9748 = vpack.c.b16 %v9697, %v9696
      %v9749 = vpack.c.b16 %v9699, %v9698
      %v9750 = vpack.c.b16 %v9701, %v9700
      %v9751 = vpack.c.b16 %v9703, %v9702
      %v9752 = vpack.c.b16 %v9705, %v9704
      %v9753 = vpack.c.b16 %v9707, %v9706
      %v9754 = vpack.c.b16 %v9709, %v9708
      %v9755 = vpack.c.b16 %v9711, %v9710
      %v9756 = vpack.c.b16 %v9713, %v9712
      %v9757 = vpack.c.b16 %v9715, %v9714
      %v9758 = vpack.c.b16 %v9717, %v9716
      %v9759 = vpack.c.b16 %v9719, %v9718
      %v9760 = vpack.c.b16 %v9721, %v9720
      %v9761 = vpack.c.b16 %v9723, %v9722
      %v9762 = vpack.c.b16 %v9725, %v9724
      %v9763 = vpack.c.b16 %v9727, %v9726
      %v9800 = vsel %vm2922, %v9169, 0
      %v9802 = vsel %vm2922, %v9172, 0
      %v9804 = vsel %vm2922, %v9175, 0
      %v9806 = vsel %vm2922, %v9178, 0
      %v9808 = vsel %vm2922, %v9181, 0
      %v9810 = vsel %vm2922, %v9184, 0
      %v9812 = vsel %vm2922, %v9187, 0
      %v9814 = vsel %vm2922, %v9190, 0
      %v9816 = vsel %vm2922, %v9193, 0
      %v9818 = vsel %vm2922, %v9196, 0
      %v9820 = vsel %vm2922, %v9199, 0
      %v9822 = vsel %vm2922, %v9202, 0
      %v9824 = vsel %vm2922, %v9205, 0
      %v9826 = vsel %vm2922, %v9208, 0
      %v9829 = vsel %vm2922, %v9263, 0
      %v9832 = vsel %vm2922, %v9322, 0
      %9834 = vmatprep.subr.bf16.mxu0 0
      %9835 = vmatpush1.bf16.msra.mxu0 %v9728
      %9836 = vmatprep.subr.bf16.mxu0 0
      %9837 = vmatpush1.bf16.msra.mxu0 %v9729
      %9838 = vmatprep.subr.bf16.mxu0 0
      %9839 = vmatpush1.bf16.msra.mxu0 %v9730
      %9840 = vmatprep.subr.bf16.mxu0 0
      %9841 = vmatpush1.bf16.msra.mxu0 %v9731
      %9842 = vmatprep.subr.bf16.mxu0 0
      %9843 = vmatpush1.bf16.msra.mxu0 %v9732
      %9844 = vmatprep.subr.bf16.mxu0 0
      %9845 = vmatpush1.bf16.msra.mxu0 %v9733
      %9846 = vmatprep.subr.bf16.mxu0 0
      %9847 = vmatpush1.bf16.msra.mxu0 %v9734
      %9848 = vmatprep.subr.bf16.mxu0 0
      %9849 = vmatpush1.bf16.msra.mxu0 %v9735
      %9850 = vmatprep.subr.bf16.mxu0 0
      %9851 = vmatpush1.bf16.msra.mxu0 %v9736
      %9852 = vmatprep.subr.bf16.mxu0 0
      %9853 = vmatpush1.bf16.msra.mxu0 %v9737
      %9854 = vmatprep.subr.bf16.mxu0 0
      %9855 = vmatpush1.bf16.msra.mxu0 %v9738
      %9856 = vmatprep.subr.bf16.mxu0 0
      %9857 = vmatpush1.bf16.msra.mxu0 %v9739
      %9858 = vmatprep.subr.bf16.mxu0 0
      %9859 = vmatpush1.bf16.msra.mxu0 %v9740
      %9860 = vmatprep.subr.bf16.mxu0 0
      %9861 = vmatpush1.bf16.msra.mxu0 %v9741
      %9862 = vmatprep.subr.bf16.mxu0 0
      %9863 = vmatpush1.bf16.msra.mxu0 %v9742
      %9864 = vmatprep.subr.bf16.mxu0 0
      %9865 = vmatpush1.bf16.msra.mxu0 %v9743
      %9866 = vmatprep.mubr.bf16.mxu0 %v9373
      %9867 = vmatmul.mubr.bf16.gmra.mrb[0].mxu0 %v9324
      %v9868 = vpop.f32.mrb[0].mxu0
      %v9869 = vadd.f32 %v9582, %v9868
      %v9870 = vpop.f32.mrb[0].mxu0
      %v9871 = vpop.f32.mrb[0].mxu0
      %v9872 = vadd.f32 %v9582, %v9871
      %v9873 = vpop.f32.mrb[0].mxu0
      %9874 = vmatprep.mubr.bf16.mxu0 %v9377
      %9875 = vmatmul.mubr.bf16.gmra.mrb[0].mxu0 %v9327
      %v9876 = vpop.f32.mrb[0].mxu0
      %v9877 = vadd.f32 %v9582, %v9876
      %v9878 = vpop.f32.mrb[0].mxu0
      %v9879 = vpop.f32.mrb[0].mxu0
      %v9880 = vadd.f32 %v9582, %v9879
      %v9881 = vpop.f32.mrb[0].mxu0
      %9882 = vmatprep.mubr.bf16.mxu0 %v9381
      %9883 = vmatmul.mubr.bf16.gmra.mrb[0].mxu0 %v9330
      %v9884 = vpop.f32.mrb[0].mxu0
      %v9885 = vadd.f32 %v9582, %v9884
      %v9886 = vpop.f32.mrb[0].mxu0
      %v9887 = vpop.f32.mrb[0].mxu0
      %v9888 = vadd.f32 %v9582, %v9887
      %v9889 = vpop.f32.mrb[0].mxu0
      %9890 = vmatprep.mubr.bf16.mxu0 %v9385
      %9891 = vmatmul.mubr.bf16.gmra.mrb[0].mxu0 %v9333
      %v9892 = vpop.f32.mrb[0].mxu0
      %v9893 = vadd.f32 %v9582, %v9892
      %v9894 = vpop.f32.mrb[0].mxu0
      %v9895 = vpop.f32.mrb[0].mxu0
      %v9896 = vadd.f32 %v9582, %v9895
      %v9897 = vpop.f32.mrb[0].mxu0
      %9898 = vmatprep.mubr.bf16.mxu0 %v9389
      %9899 = vmatmul.mubr.bf16.gmra.mrb[0].mxu0 %v9336
      %v9900 = vpop.f32.mrb[0].mxu0
      %v9901 = vadd.f32 %v9582, %v9900
      %v9902 = vpop.f32.mrb[0].mxu0
      %v9903 = vpop.f32.mrb[0].mxu0
      %v9904 = vadd.f32 %v9582, %v9903
      %v9905 = vpop.f32.mrb[0].mxu0
      %9906 = vmatprep.mubr.bf16.mxu0 %v9393
      %9907 = vmatmul.mubr.bf16.gmra.mrb[0].mxu0 %v9339
      %v9908 = vpop.f32.mrb[0].mxu0
      %v9909 = vadd.f32 %v9582, %v9908
      %v9910 = vpop.f32.mrb[0].mxu0
      %v9911 = vpop.f32.mrb[0].mxu0
      %v9912 = vadd.f32 %v9582, %v9911
      %v9913 = vpop.f32.mrb[0].mxu0
      %9914 = vmatprep.mubr.bf16.mxu0 %v9397
      %9915 = vmatmul.mubr.bf16.gmra.mrb[0].mxu0 %v9342
      %v9916 = vpop.f32.mrb[0].mxu0
      %v9917 = vadd.f32 %v9582, %v9916
      %v9918 = vpop.f32.mrb[0].mxu0
      %v9919 = vpop.f32.mrb[0].mxu0
      %v9920 = vadd.f32 %v9582, %v9919
      %v9921 = vpop.f32.mrb[0].mxu0
      %9922 = vmatprep.mubr.bf16.mxu0 %v9401
      %9923 = vmatmul.mubr.bf16.gmra.mrb[0].mxu0 %v9345
      %v9924 = vpop.f32.mrb[0].mxu0
      %v9925 = vadd.f32 %v9582, %v9924
      %v9926 = vpop.f32.mrb[0].mxu0
      %v9927 = vpop.f32.mrb[0].mxu0
      %v9928 = vadd.f32 %v9582, %v9927
      %v9929 = vpop.f32.mrb[0].mxu0
      %9930 = vmatprep.mubr.bf16.mxu0 %v9405
      %9931 = vmatmul.mubr.bf16.gmra.mrb[0].mxu0 %v9348
      %v9932 = vpop.f32.mrb[0].mxu0
      %v9933 = vadd.f32 %v9582, %v9932
      %v9934 = vpop.f32.mrb[0].mxu0
      %v9935 = vpop.f32.mrb[0].mxu0
      %v9936 = vadd.f32 %v9582, %v9935
      %v9937 = vpop.f32.mrb[0].mxu0
      %9938 = vmatprep.mubr.bf16.mxu0 %v9409
      %9939 = vmatmul.mubr.bf16.gmra.mrb[0].mxu0 %v9351
      %v9940 = vpop.f32.mrb[0].mxu0
      %v9941 = vadd.f32 %v9582, %v9940
      %v9942 = vpop.f32.mrb[0].mxu0
      %v9943 = vpop.f32.mrb[0].mxu0
      %v9944 = vadd.f32 %v9582, %v9943
      %v9945 = vpop.f32.mrb[0].mxu0
      %9946 = vmatprep.mubr.bf16.mxu0 %v9413
      %9947 = vmatmul.mubr.bf16.gmra.mrb[0].mxu0 %v9354
      %v9948 = vpop.f32.mrb[0].mxu0
      %v9949 = vadd.f32 %v9582, %v9948
      %v9950 = vpop.f32.mrb[0].mxu0
      %v9951 = vpop.f32.mrb[0].mxu0
      %v9952 = vadd.f32 %v9582, %v9951
      %v9953 = vpop.f32.mrb[0].mxu0
      %9954 = vmatprep.mubr.bf16.mxu0 %v9417
      %9955 = vmatmul.mubr.bf16.gmra.mrb[0].mxu0 %v9357
      %v9956 = vpop.f32.mrb[0].mxu0
      %v9957 = vadd.f32 %v9582, %v9956
      %v9958 = vpop.f32.mrb[0].mxu0
      %v9959 = vpop.f32.mrb[0].mxu0
      %v9960 = vadd.f32 %v9582, %v9959
      %v9961 = vpop.f32.mrb[0].mxu0
      %9962 = vmatprep.mubr.bf16.mxu0 %v9421
      %9963 = vmatmul.mubr.bf16.gmra.mrb[0].mxu0 %v9360
      %v9964 = vpop.f32.mrb[0].mxu0
      %v9965 = vadd.f32 %v9582, %v9964
      %v9966 = vpop.f32.mrb[0].mxu0
      %v9967 = vpop.f32.mrb[0].mxu0
      %v9968 = vadd.f32 %v9582, %v9967
      %v9969 = vpop.f32.mrb[0].mxu0
      %9970 = vmatprep.mubr.bf16.mxu0 %v9425
      %9971 = vmatmul.mubr.bf16.gmra.mrb[0].mxu0 %v9363
      %v9972 = vpop.f32.mrb[0].mxu0
      %v9973 = vadd.f32 %v9582, %v9972
      %v9974 = vpop.f32.mrb[0].mxu0
      %v9975 = vpop.f32.mrb[0].mxu0
      %v9976 = vadd.f32 %v9582, %v9975
      %v9977 = vpop.f32.mrb[0].mxu0
      %9978 = vmatprep.mubr.bf16.mxu0 %v9429
      %9979 = vmatmul.mubr.bf16.gmra.mrb[0].mxu0 %v9366
      %v9980 = vpop.f32.mrb[0].mxu0
      %v9981 = vadd.f32 %v9582, %v9980
      %v9982 = vpop.f32.mrb[0].mxu0
      %v9983 = vpop.f32.mrb[0].mxu0
      %v9984 = vadd.f32 %v9582, %v9983
      %v9985 = vpop.f32.mrb[0].mxu0
      %9986 = vmatprep.mubr.bf16.mxu0 %v9433
      %9987 = vmatmul.mubr.bf16.gmra.mrb[0].mxu0 %v9369
      %v9988 = vpop.f32.mrb[0].mxu0
      %v9989 = vadd.f32 %v9582, %v9988
      %v9990 = vpop.f32.mrb[0].mxu0
      %v9991 = vpop.f32.mrb[0].mxu0
      %v9992 = vadd.f32 %v9582, %v9991
      %v9993 = vpop.f32.mrb[0].mxu0
      %9994 = vdwg.mxu0
      %9995 = vmatprep.subr.bf16.mxu0 0
      %9996 = vmatpush1.bf16.msra.mxu0 %v9744
      %9997 = vmatprep.subr.bf16.mxu0 0
      %9998 = vmatpush1.bf16.msra.mxu0 %v9745
      %9999 = vmatprep.subr.bf16.mxu0 0
      %10000 = vmatpush1.bf16.msra.mxu0 %v9746
      %10001 = vmatprep.subr.bf16.mxu0 0
      %10002 = vmatpush1.bf16.msra.mxu0 %v9747
      %10003 = vmatprep.subr.bf16.mxu0 0
      %10004 = vmatpush1.bf16.msra.mxu0 %v9748
      %10005 = vmatprep.subr.bf16.mxu0 0
      %10006 = vmatpush1.bf16.msra.mxu0 %v9749
      %10007 = vmatprep.subr.bf16.mxu0 0
      %10008 = vmatpush1.bf16.msra.mxu0 %v9750
      %10009 = vmatprep.subr.bf16.mxu0 0
      %10010 = vmatpush1.bf16.msra.mxu0 %v9751
      %10011 = vmatprep.subr.bf16.mxu0 0
      %10012 = vmatpush1.bf16.msra.mxu0 %v9752
      %10013 = vmatprep.subr.bf16.mxu0 0
      %10014 = vmatpush1.bf16.msra.mxu0 %v9753
      %10015 = vmatprep.subr.bf16.mxu0 0
      %10016 = vmatpush1.bf16.msra.mxu0 %v9754
      %10017 = vmatprep.subr.bf16.mxu0 0
      %10018 = vmatpush1.bf16.msra.mxu0 %v9755
      %10019 = vmatprep.subr.bf16.mxu0 0
      %10020 = vmatpush1.bf16.msra.mxu0 %v9756
      %10021 = vmatprep.subr.bf16.mxu0 0
      %10022 = vmatpush1.bf16.msra.mxu0 %v9757
      %10023 = vmatprep.subr.bf16.mxu0 0
      %10024 = vmatpush1.bf16.msra.mxu0 %v9758
      %10025 = vmatprep.subr.bf16.mxu0 0
      %10026 = vmatpush1.bf16.msra.mxu0 %v9759
      %10027 = vmatprep.mubr.bf16.mxu0 %v9330
      %10028 = vmatmul.mubr.bf16.gmra.mrb[0].mxu0 %v9437
      %v10029 = vpop.f32.mrb[0].mxu0
      %v10030 = vadd.f32 %v9869, %v10029
      %v10031 = vpop.f32.mrb[0].mxu0
      %v10032 = vpop.f32.mrb[0].mxu0
      %v10033 = vadd.f32 %v9872, %v10032
      %v10034 = vpop.f32.mrb[0].mxu0
      %10035 = vmatprep.mubr.bf16.mxu0 %v9333
      %10036 = vmatmul.mubr.bf16.gmra.mrb[0].mxu0 %v9441
      %v10037 = vpop.f32.mrb[0].mxu0
      %v10038 = vadd.f32 %v9877, %v10037
      %v10039 = vpop.f32.mrb[0].mxu0
      %v10040 = vpop.f32.mrb[0].mxu0
      %v10041 = vadd.f32 %v9880, %v10040
      %v10042 = vpop.f32.mrb[0].mxu0
      %10043 = vmatprep.mubr.bf16.mxu0 %v9336
      %10044 = vmatmul.mubr.bf16.gmra.mrb[0].mxu0 %v9445
      %v10045 = vpop.f32.mrb[0].mxu0
      %v10046 = vadd.f32 %v9885, %v10045
      %v10047 = vpop.f32.mrb[0].mxu0
      %v10048 = vpop.f32.mrb[0].mxu0
      %v10049 = vadd.f32 %v9888, %v10048
      %v10050 = vpop.f32.mrb[0].mxu0
      %10051 = vmatprep.mubr.bf16.mxu0 %v9339
      %10052 = vmatmul.mubr.bf16.gmra.mrb[0].mxu0 %v9449
      %v10053 = vpop.f32.mrb[0].mxu0
      %v10054 = vadd.f32 %v9893, %v10053
      %v10055 = vpop.f32.mrb[0].mxu0
      %v10056 = vpop.f32.mrb[0].mxu0
      %v10057 = vadd.f32 %v9896, %v10056
      %v10058 = vpop.f32.mrb[0].mxu0
      %10059 = vmatprep.mubr.bf16.mxu0 %v9342
      %10060 = vmatmul.mubr.bf16.gmra.mrb[0].mxu0 %v9453
      %v10061 = vpop.f32.mrb[0].mxu0
      %v10062 = vadd.f32 %v9901, %v10061
      %v10063 = vpop.f32.mrb[0].mxu0
      %v10064 = vpop.f32.mrb[0].mxu0
      %v10065 = vadd.f32 %v9904, %v10064
      %v10066 = vpop.f32.mrb[0].mxu0
      %10067 = vmatprep.mubr.bf16.mxu0 %v9345
      %10068 = vmatmul.mubr.bf16.gmra.mrb[0].mxu0 %v9457
      %v10069 = vpop.f32.mrb[0].mxu0
      %v10070 = vadd.f32 %v9909, %v10069
      %v10071 = vpop.f32.mrb[0].mxu0
      %v10072 = vpop.f32.mrb[0].mxu0
      %v10073 = vadd.f32 %v9912, %v10072
      %v10074 = vpop.f32.mrb[0].mxu0
      %10075 = vmatprep.mubr.bf16.mxu0 %v9348
      %10076 = vmatmul.mubr.bf16.gmra.mrb[0].mxu0 %v9461
      %v10077 = vpop.f32.mrb[0].mxu0
      %v10078 = vadd.f32 %v9917, %v10077
      %v10079 = vpop.f32.mrb[0].mxu0
      %v10080 = vpop.f32.mrb[0].mxu0
      %v10081 = vadd.f32 %v9920, %v10080
      %v10082 = vpop.f32.mrb[0].mxu0
      %10083 = vmatprep.mubr.bf16.mxu0 %v9351
      %10084 = vmatmul.mubr.bf16.gmra.mrb[0].mxu0 %v9465
      %v10085 = vpop.f32.mrb[0].mxu0
      %v10086 = vadd.f32 %v9925, %v10085
      %v10087 = vpop.f32.mrb[0].mxu0
      %v10088 = vpop.f32.mrb[0].mxu0
      %v10089 = vadd.f32 %v9928, %v10088
      %v10090 = vpop.f32.mrb[0].mxu0
      %10091 = vmatprep.mubr.bf16.mxu0 %v9354
      %10092 = vmatmul.mubr.bf16.gmra.mrb[0].mxu0 %v9469
      %v10093 = vpop.f32.mrb[0].mxu0
      %v10094 = vadd.f32 %v9933, %v10093
      %v10095 = vpop.f32.mrb[0].mxu0
      %v10096 = vpop.f32.mrb[0].mxu0
      %v10097 = vadd.f32 %v9936, %v10096
      %v10098 = vpop.f32.mrb[0].mxu0
      %10099 = vmatprep.mubr.bf16.mxu0 %v9357
      %10100 = vmatmul.mubr.bf16.gmra.mrb[0].mxu0 %v9473
      %v10101 = vpop.f32.mrb[0].mxu0
      %v10102 = vadd.f32 %v9941, %v10101
      %v10103 = vpop.f32.mrb[0].mxu0
      %v10104 = vpop.f32.mrb[0].mxu0
      %v10105 = vadd.f32 %v9944, %v10104
      %v10106 = vpop.f32.mrb[0].mxu0
      %10107 = vmatprep.mubr.bf16.mxu0 %v9360
      %10108 = vmatmul.mubr.bf16.gmra.mrb[0].mxu0 %v9477
      %v10109 = vpop.f32.mrb[0].mxu0
      %v10110 = vadd.f32 %v9949, %v10109
      %v10111 = vpop.f32.mrb[0].mxu0
      %v10112 = vpop.f32.mrb[0].mxu0
      %v10113 = vadd.f32 %v9952, %v10112
      %v10114 = vpop.f32.mrb[0].mxu0
      %10115 = vmatprep.mubr.bf16.mxu0 %v9363
      %10116 = vmatmul.mubr.bf16.gmra.mrb[0].mxu0 %v9481
      %v10117 = vpop.f32.mrb[0].mxu0
      %v10118 = vadd.f32 %v9957, %v10117
      %v10119 = vpop.f32.mrb[0].mxu0
      %v10120 = vpop.f32.mrb[0].mxu0
      %v10121 = vadd.f32 %v9960, %v10120
      %v10122 = vpop.f32.mrb[0].mxu0
      %10123 = vmatprep.mubr.bf16.mxu0 %v9366
      %10124 = vmatmul.mubr.bf16.gmra.mrb[0].mxu0 %v9485
      %v10125 = vpop.f32.mrb[0].mxu0
      %v10126 = vadd.f32 %v9965, %v10125
      %v10127 = vpop.f32.mrb[0].mxu0
      %v10128 = vpop.f32.mrb[0].mxu0
      %v10129 = vadd.f32 %v9968, %v10128
      %v10130 = vpop.f32.mrb[0].mxu0
      %10131 = vmatprep.mubr.bf16.mxu0 %v9369
      %10132 = vmatmul.mubr.bf16.gmra.mrb[0].mxu0 %v9489
      %v10133 = vpop.f32.mrb[0].mxu0
      %v10134 = vadd.f32 %v9973, %v10133
      %v10135 = vpop.f32.mrb[0].mxu0
      %v10136 = vpop.f32.mrb[0].mxu0
      %v10137 = vadd.f32 %v9976, %v10136
      %v10138 = vpop.f32.mrb[0].mxu0
      %10139 = vmatprep.mubr.bf16.mxu0 %v9500
      %10140 = vmatmul.mubr.bf16.gmra.mrb[0].mxu0 %v9493
      %v10141 = vpop.f32.mrb[0].mxu0
      %v10142 = vadd.f32 %v9981, %v10141
      %v10143 = vpop.f32.mrb[0].mxu0
      %v10144 = vpop.f32.mrb[0].mxu0
      %v10145 = vadd.f32 %v9984, %v10144
      %v10146 = vpop.f32.mrb[0].mxu0
      %10147 = vmatprep.mubr.bf16.mxu0 %v9503
      %10148 = vmatmul.mubr.bf16.gmra.mrb[0].mxu0 %v9497
      %v10149 = vpop.f32.mrb[0].mxu0
      %v10150 = vadd.f32 %v9989, %v10149
      %v10151 = vpop.f32.mrb[0].mxu0
      %v10152 = vpop.f32.mrb[0].mxu0
      %v10153 = vadd.f32 %v9992, %v10152
      %v10154 = vpop.f32.mrb[0].mxu0
      %10155 = vdwg.mxu0
      %10156 = vmatprep.subr.bf16.mxu0 0
      %10157 = vmatpush1.bf16.msra.mxu0 %v9760
      %10158 = vmatprep.subr.bf16.mxu0 0
      %10159 = vmatpush1.bf16.msra.mxu0 %v9761
      %10160 = vmatprep.subr.bf16.mxu0 0
      %10161 = vmatpush1.bf16.msra.mxu0 %v9762
      %10162 = vmatprep.subr.bf16.mxu0 0
      %10163 = vmatpush1.bf16.msra.mxu0 %v9763
      %10164 = vmatprep.subr.bf16.mxu0 0
      %10165 = vmatpush1.bf16.msra.mxu0 0
      %10166 = vmatprep.subr.bf16.mxu0 0
      %10167 = vmatpush1.bf16.msra.mxu0 0
      %10168 = vmatprep.subr.bf16.mxu0 0
      %10169 = vmatpush1.bf16.msra.mxu0 0
      %10170 = vmatprep.subr.bf16.mxu0 0
      %10171 = vmatpush1.bf16.msra.mxu0 0
      %10172 = vmatprep.subr.bf16.mxu0 0
      %10173 = vmatpush1.bf16.msra.mxu0 0
      %10174 = vmatprep.subr.bf16.mxu0 0
      %10175 = vmatpush1.bf16.msra.mxu0 0
      %10176 = vmatprep.subr.bf16.mxu0 0
      %10177 = vmatpush1.bf16.msra.mxu0 0
      %10178 = vmatprep.subr.bf16.mxu0 0
      %10179 = vmatpush1.bf16.msra.mxu0 0
      %10180 = vmatprep.subr.bf16.mxu0 0
      %10181 = vmatpush1.bf16.msra.mxu0 0
      %10182 = vmatprep.subr.bf16.mxu0 0
      %10183 = vmatpush1.bf16.msra.mxu0 0
      %10184 = vmatprep.subr.bf16.mxu0 0
      %10185 = vmatpush1.bf16.msra.mxu0 0
      %10186 = vmatprep.subr.bf16.mxu0 0
      %10187 = vmatpush1.bf16.msra.mxu0 0
      %10188 = vmatprep.mubr.bf16.mxu0 0
      %10189 = vmatmul.mubr.bf16.gmra.mrb[0].mxu0 %v9800
      %v10190 = vpop.f32.mrb[0].mxu0
      %v10191 = vadd.f32 %v10030, %v10190
      %v10192 = vpop.f32.mrb[0].mxu0
      %v10193 = vpop.f32.mrb[0].mxu0
      %v10194 = vadd.f32 %v10033, %v10193
      %v10195 = vpop.f32.mrb[0].mxu0
      %10196 = vmatprep.mubr.bf16.mxu0 0
      %10197 = vmatmul.mubr.bf16.gmra.mrb[0].mxu0 %v9802
      %v10198 = vpop.f32.mrb[0].mxu0
      %v10199 = vadd.f32 %v10038, %v10198
      %v10200 = vpop.f32.mrb[0].mxu0
      %v10201 = vpop.f32.mrb[0].mxu0
      %v10202 = vadd.f32 %v10041, %v10201
      %v10203 = vpop.f32.mrb[0].mxu0
      %10204 = vmatprep.mubr.bf16.mxu0 0
      %10205 = vmatmul.mubr.bf16.gmra.mrb[0].mxu0 %v9804
      %v10206 = vpop.f32.mrb[0].mxu0
      %v10207 = vadd.f32 %v10046, %v10206
      %v10208 = vpop.f32.mrb[0].mxu0
      %v10209 = vpop.f32.mrb[0].mxu0
      %v10210 = vadd.f32 %v10049, %v10209
      %v10211 = vpop.f32.mrb[0].mxu0
      %10212 = vmatprep.mubr.bf16.mxu0 0
      %10213 = vmatmul.mubr.bf16.gmra.mrb[0].mxu0 %v9806
      %v10214 = vpop.f32.mrb[0].mxu0
      %v10215 = vadd.f32 %v10054, %v10214
      %v10216 = vpop.f32.mrb[0].mxu0
      %v10217 = vpop.f32.mrb[0].mxu0
      %v10218 = vadd.f32 %v10057, %v10217
      %v10219 = vpop.f32.mrb[0].mxu0
      %10220 = vmatprep.mubr.bf16.mxu0 0
      %10221 = vmatmul.mubr.bf16.gmra.mrb[0].mxu0 %v9808
      %v10222 = vpop.f32.mrb[0].mxu0
      %v10223 = vadd.f32 %v10062, %v10222
      %v10224 = vpop.f32.mrb[0].mxu0
      %v10225 = vpop.f32.mrb[0].mxu0
      %v10226 = vadd.f32 %v10065, %v10225
      %v10227 = vpop.f32.mrb[0].mxu0
      %10228 = vmatprep.mubr.bf16.mxu0 0
      %10229 = vmatmul.mubr.bf16.gmra.mrb[0].mxu0 %v9810
      %v10230 = vpop.f32.mrb[0].mxu0
      %v10231 = vadd.f32 %v10070, %v10230
      %v10232 = vpop.f32.mrb[0].mxu0
      %v10233 = vpop.f32.mrb[0].mxu0
      %v10234 = vadd.f32 %v10073, %v10233
      %v10235 = vpop.f32.mrb[0].mxu0
      %10236 = vmatprep.mubr.bf16.mxu0 0
      %10237 = vmatmul.mubr.bf16.gmra.mrb[0].mxu0 %v9812
      %v10238 = vpop.f32.mrb[0].mxu0
      %v10239 = vadd.f32 %v10078, %v10238
      %v10240 = vpop.f32.mrb[0].mxu0
      %v10241 = vpop.f32.mrb[0].mxu0
      %v10242 = vadd.f32 %v10081, %v10241
      %v10243 = vpop.f32.mrb[0].mxu0
      %10244 = vmatprep.mubr.bf16.mxu0 0
      %10245 = vmatmul.mubr.bf16.gmra.mrb[0].mxu0 %v9814
      %v10246 = vpop.f32.mrb[0].mxu0
      %v10247 = vadd.f32 %v10086, %v10246
      %v10248 = vpop.f32.mrb[0].mxu0
      %v10249 = vpop.f32.mrb[0].mxu0
      %v10250 = vadd.f32 %v10089, %v10249
      %v10251 = vpop.f32.mrb[0].mxu0
      %10252 = vmatprep.mubr.bf16.mxu0 0
      %10253 = vmatmul.mubr.bf16.gmra.mrb[0].mxu0 %v9816
      %v10254 = vpop.f32.mrb[0].mxu0
      %v10255 = vadd.f32 %v10094, %v10254
      %v10256 = vpop.f32.mrb[0].mxu0
      %v10257 = vpop.f32.mrb[0].mxu0
      %v10258 = vadd.f32 %v10097, %v10257
      %v10259 = vpop.f32.mrb[0].mxu0
      %10260 = vmatprep.mubr.bf16.mxu0 0
      %10261 = vmatmul.mubr.bf16.gmra.mrb[0].mxu0 %v9818
      %v10262 = vpop.f32.mrb[0].mxu0
      %v10263 = vadd.f32 %v10102, %v10262
      %v10264 = vpop.f32.mrb[0].mxu0
      %v10265 = vpop.f32.mrb[0].mxu0
      %v10266 = vadd.f32 %v10105, %v10265
      %v10267 = vpop.f32.mrb[0].mxu0
      %10268 = vmatprep.mubr.bf16.mxu0 0
      %10269 = vmatmul.mubr.bf16.gmra.mrb[0].mxu0 %v9820
      %v10270 = vpop.f32.mrb[0].mxu0
      %v10271 = vadd.f32 %v10110, %v10270
      %v10272 = vpop.f32.mrb[0].mxu0
      %v10273 = vpop.f32.mrb[0].mxu0
      %v10274 = vadd.f32 %v10113, %v10273
      %v10275 = vpop.f32.mrb[0].mxu0
      %10276 = vmatprep.mubr.bf16.mxu0 0
      %10277 = vmatmul.mubr.bf16.gmra.mrb[0].mxu0 %v9822
      %v10278 = vpop.f32.mrb[0].mxu0
      %v10279 = vadd.f32 %v10118, %v10278
      %v10280 = vpop.f32.mrb[0].mxu0
      %v10281 = vpop.f32.mrb[0].mxu0
      %v10282 = vadd.f32 %v10121, %v10281
      %v10283 = vpop.f32.mrb[0].mxu0
      %10284 = vmatprep.mubr.bf16.mxu0 0
      %10285 = vmatmul.mubr.bf16.gmra.mrb[0].mxu0 %v9824
      %v10286 = vpop.f32.mrb[0].mxu0
      %v10287 = vadd.f32 %v10126, %v10286
      %v10288 = vpop.f32.mrb[0].mxu0
      %v10289 = vpop.f32.mrb[0].mxu0
      %v10290 = vadd.f32 %v10129, %v10289
      %v10291 = vpop.f32.mrb[0].mxu0
      %10292 = vmatprep.mubr.bf16.mxu0 0
      %10293 = vmatmul.mubr.bf16.gmra.mrb[0].mxu0 %v9826
      %v10294 = vpop.f32.mrb[0].mxu0
      %v10295 = vadd.f32 %v10134, %v10294
      %v10296 = vpop.f32.mrb[0].mxu0
      %v10297 = vpop.f32.mrb[0].mxu0
      %v10298 = vadd.f32 %v10137, %v10297
      %v10299 = vpop.f32.mrb[0].mxu0
      %10300 = vmatprep.mubr.bf16.mxu0 0
      %10301 = vmatmul.mubr.bf16.gmra.mrb[0].mxu0 %v9829
      %v10302 = vpop.f32.mrb[0].mxu0
      %v10303 = vadd.f32 %v10142, %v10302
      %v10304 = vpop.f32.mrb[0].mxu0
      %v10305 = vpop.f32.mrb[0].mxu0
      %v10306 = vadd.f32 %v10145, %v10305
      %v10307 = vpop.f32.mrb[0].mxu0
      %10308 = vmatprep.mubr.bf16.mxu0 0
      %10309 = vmatmul.mubr.bf16.gmra.mrb[0].mxu0 %v9832
      %v10310 = vpop.f32.mrb[0].mxu0
      %v10311 = vadd.f32 %v10150, %v10310
      %v10312 = vpop.f32.mrb[0].mxu0
      %v10313 = vpop.f32.mrb[0].mxu0
      %v10314 = vadd.f32 %v10153, %v10313
      %v10315 = vpop.f32.mrb[0].mxu0
      %10316 = vdwg.mxu0
      %vm10317 = vcmask 392192
      %10318 = vst.msk [vmem:[%s332] sm:$0xff] %vm10317, %v10191
      %10319 = vst.msk [vmem:[%s332 + $0x8] sm:$0xff] %vm10317, %v10194
      %10320 = vst.msk [vmem:[%s332 + $0x10] sm:$0xff] %vm10317, %v10199
      %10321 = vst.msk [vmem:[%s332 + $0x18] sm:$0xff] %vm10317, %v10202
      %10322 = vst.msk [vmem:[%s332 + $0x20] sm:$0xff] %vm10317, %v10207
      %10323 = vst.msk [vmem:[%s332 + $0x28] sm:$0xff] %vm10317, %v10210
      %10324 = vst.msk [vmem:[%s332 + $0x30] sm:$0xff] %vm10317, %v10215
      %10325 = vst.msk [vmem:[%s332 + $0x38] sm:$0xff] %vm10317, %v10218
      %10326 = vst.msk [vmem:[%s332 + $0x40] sm:$0xff] %vm10317, %v10223
      %10327 = vst.msk [vmem:[%s332 + $0x48] sm:$0xff] %vm10317, %v10226
      %10328 = vst.msk [vmem:[%s332 + $0x50] sm:$0xff] %vm10317, %v10231
      %10329 = vst.msk [vmem:[%s332 + $0x58] sm:$0xff] %vm10317, %v10234
      %10330 = vst.msk [vmem:[%s332 + $0x60] sm:$0xff] %vm10317, %v10239
      %10331 = vst.msk [vmem:[%s332 + $0x68] sm:$0xff] %vm10317, %v10242
      %10332 = vst.msk [vmem:[%s332 + $0x70] sm:$0xff] %vm10317, %v10247
      %10333 = vst.msk [vmem:[%s332 + $0x78] sm:$0xff] %vm10317, %v10250
      %10334 = vst.msk [vmem:[%s332 + $0x80] sm:$0xff] %vm10317, %v10255
      %10335 = vst.msk [vmem:[%s332 + $0x88] sm:$0xff] %vm10317, %v10258
      %10336 = vst.msk [vmem:[%s332 + $0x90] sm:$0xff] %vm10317, %v10263
      %10337 = vst.msk [vmem:[%s332 + $0x98] sm:$0xff] %vm10317, %v10266
      %10338 = vst.msk [vmem:[%s332 + $0xa0] sm:$0xff] %vm10317, %v10271
      %10339 = vst.msk [vmem:[%s332 + $0xa8] sm:$0xff] %vm10317, %v10274
      %10340 = vst.msk [vmem:[%s332 + $0xb0] sm:$0xff] %vm10317, %v10279
      %10341 = vst.msk [vmem:[%s332 + $0xb8] sm:$0xff] %vm10317, %v10282
      %10342 = vst.msk [vmem:[%s332 + $0xc0] sm:$0xff] %vm10317, %v10287
      %10343 = vst.msk [vmem:[%s332 + $0xc8] sm:$0xff] %vm10317, %v10290
      %10344 = vst.msk [vmem:[%s332 + $0xd0] sm:$0xff] %vm10317, %v10295
      %10345 = vst.msk [vmem:[%s332 + $0xd8] sm:$0xff] %vm10317, %v10298
      %10346 = vst.msk [vmem:[%s332 + $0xe0] sm:$0xff] %vm10317, %v10303
      %10347 = vst.msk [vmem:[%s332 + $0xe8] sm:$0xff] %vm10317, %v10306
      %10348 = vst.msk [vmem:[%s332 + $0xf0] sm:$0xff] %vm10317, %v10311
      %10349 = vst.msk [vmem:[%s332 + $0xf8] sm:$0xff] %vm10317, %v10314
      %p10350 = scmp.lt.s32.totalorder %s20, 1
      %s10351 = scalar_select %p10350, %s20, 1
      %s10352 = smul.addr %s10351, 32
      %s10353 = smul.addr %s10352, 8
      %s10354 = scalar_lea.vmem %s9, %s10353
      // Predicated region
      $region57: #{decoder_forward.1} parent=55 // pred_check
        %p10355 = pneg %p232
      $region58: #{decoder_forward.1} parent=55 // pred_check_branch
        %10357 = sbr.rel (%p10355) target = $region60
      $region59: #{decoder_forward.1} parent=55 // pred_region
        _
      $region60: #{decoder_forward.1} parent=55 // pred_fallthru
        _
    $region56: #{decoder_forward.1} parent=5 // pred_fallthru
      _
    %p10358 = scmp.le.s32.totalorder 2, %s15
    // Predicated region
    $region61: #{decoder_forward.1} parent=5 // pred_check
      %p10359 = pneg %p10358
    $region62: #{decoder_forward.1} parent=5 // pred_check_branch
      %10361 = sbr.rel (%p10359) target = $region64
    $region63: #{decoder_forward.1} parent=5 // pred_region
      %s10362 = ssub.s32 %s15, 2
      // Predicated region
      $region65: #{decoder_forward.1} parent=63 // pred_check
        %p10363 = pneg %p238
      $region66: #{decoder_forward.1} parent=63 // pred_check_branch
        %10365 = sbr.rel (%p10363) target = $region68
      $region67: #{decoder_forward.1} parent=63 // pred_region
        %p10366 = scmp.lt.s32.totalorder %s21, 1
        %s10367 = scalar_select %p10366, %s21, 1
        %s10368 = smul.addr %s10367, 32
        %s10369 = smul.addr %s10368, 8
        %s10370 = scalar_lea.vmem %s9, %s10369
      $region68: #{decoder_forward.1} parent=63 // pred_fallthru
        _
    $region64: #{decoder_forward.1} parent=5 // pred_fallthru
      _
  $region6: #{decoder_forward.1} parent=0 // loop_footer
    %s19 = sadd.s32 1, %s15
  $region7: #{decoder_forward.1} parent=0 // loop_footer_branch
    %14 = sbr.rel target = $region3
  $region8: #{decoder_forward.1} parent=0 // loop_exit
    _

</llo_original>
